<compile_context>
chip_gen: v7x
topology: tpu7x:2x2x1
jax: 0.10.0
libtpu: 0.0.40
codegen_flags: <defaults>
</compile_context>

<pallas_src>
import functools

import jax
import jax.numpy as jnp
from jax.experimental import pallas as pl
from jax.experimental.pallas import tpu as pltpu

_VMEM_LIMIT = 32 * 1024 * 1024


# ----------------------------------------------------------------------------
# Pallas kernels
# ----------------------------------------------------------------------------
def tapconv_kernel(x_ref, w_ref, b_ref, o_ref, *, offsets, m_out, relu):
    """Conv as a sum of per-tap 2-D matmuls (in-kernel patch gather).

    x_ref: (1, M_in, K)   row-flattened padded input for one batch element
    w_ref: (T, K, N)      per-tap weight matrices (bf16)
    b_ref: (1, N)         bias (f32)
    o_ref: (1, m_out, N)  row-flattened output (garbage columns sliced off by
                          the wrapper)
    """
    n = o_ref.shape[-1]
    acc = jnp.zeros((m_out, n), jnp.float32)
    for t, off in enumerate(offsets):
        xt = x_ref[0, off:off + m_out, :]                  # static 2-D window
        acc = acc + jnp.dot(xt, w_ref[t], preferred_element_type=jnp.float32)
    acc = acc + b_ref[...]                                 # f32 epilogue
    if relu:
        acc = jnp.maximum(acc, 0.0)
    o_ref[0] = acc.astype(o_ref.dtype)


def bottleneck_kernel(x_ref, w3_ref, b3_ref, wh_ref, bh_ref, eps_ref,
                      wd_ref, bd_ref, heads_ref, hd_ref,
                      *, latent_dim, ws3, hh, ww, batch):
    """Fused enc_conv3 + [mu|logvar] heads + reparameterize + dec_fc(+ReLU).

    x_ref:   (B, (hh+2)*ws3, 4*C2)  space-to-depth-flattened conv3 input
    w3_ref:  (4, 4*C2, 128)         conv3 tap weights
    wh_ref:  (feat, 2L)             concatenated mu|logvar head weights
    wd_ref:  (L, feat)              dec_fc weights (columns in NHWC order)
    """
    n3 = b3_ref.shape[-1]
    rows = []
    for nb in range(batch):                                # small static batch
        acc = jnp.zeros((hh * ws3, n3), jnp.float32)
        for a in range(2):
            for b in range(2):
                off = a * ws3 + b
                acc = acc + jnp.dot(x_ref[nb, off:off + hh * ws3, :],
                                    w3_ref[a * 2 + b],
                                    preferred_element_type=jnp.float32)
        acc = jnp.maximum(acc + b3_ref[...], 0.0)
        # valid conv3 rows, concatenated in NHWC (y, x, c) flatten order
        rows.append(jnp.concatenate(
            [acc[y * ws3 + xc: y * ws3 + xc + 1, :]
             for y in range(hh) for xc in range(ww)], axis=1))
    h = jnp.concatenate(rows, axis=0).astype(jnp.bfloat16)         # (B, feat)

    heads = jnp.dot(h, wh_ref[...],
                    preferred_element_type=jnp.float32) + bh_ref[...]
    heads_ref[...] = heads                       # single (B, 2L) f32 slab
    mu = heads[:, :latent_dim]
    logvar = heads[:, latent_dim:]
    z = mu + eps_ref[...] * jnp.exp(0.5 * logvar)           # reparameterize (f32)
    hd = jnp.dot(z.astype(jnp.bfloat16), wd_ref[...],
                 preferred_element_type=jnp.float32) + bd_ref[...]
    hd_ref[...] = jnp.maximum(hd, 0.0).astype(hd_ref.dtype)


# ----------------------------------------------------------------------------
# pallas_call wrappers
# ----------------------------------------------------------------------------
def pallas_tapconv(x, w, b, *, offsets, m_out, relu, out_dtype):
    B, m_in, K = x.shape
    T, _, N = w.shape
    kern = functools.partial(tapconv_kernel, offsets=tuple(offsets),
                             m_out=m_out, relu=relu)
    return pl.pallas_call(
        kern,
        out_shape=jax.ShapeDtypeStruct((B, m_out, N), out_dtype),
        grid=(B,),
        in_specs=[
            pl.BlockSpec((1, m_in, K), lambda i: (i, 0, 0)),
            pl.BlockSpec((T, K, N), lambda i: (0, 0, 0)),
            pl.BlockSpec((1, N), lambda i: (0, 0)),
        ],
        out_specs=pl.BlockSpec((1, m_out, N), lambda i: (i, 0, 0)),
        compiler_params=pltpu.CompilerParams(
            dimension_semantics=("parallel",),
            vmem_limit_bytes=_VMEM_LIMIT),
    )(x, w, b)


def pallas_bottleneck(x3, w3, b3, wh, bh, eps, wd, bd, *, latent_dim, ws3, hh, ww):
    B, m_in, K3 = x3.shape
    N3 = b3.shape[-1]
    feat, L2 = wh.shape
    Fd = wd.shape[-1]
    kern = functools.partial(bottleneck_kernel, latent_dim=latent_dim,
                             ws3=ws3, hh=hh, ww=ww, batch=B)
    return pl.pallas_call(
        kern,
        out_shape=(jax.ShapeDtypeStruct((B, L2), jnp.float32),
                   jax.ShapeDtypeStruct((B, Fd), jnp.bfloat16)),
        in_specs=[
            pl.BlockSpec((B, m_in, K3), lambda: (0, 0, 0)),
            pl.BlockSpec((4, K3, N3), lambda: (0, 0, 0)),
            pl.BlockSpec((1, N3), lambda: (0, 0)),
            pl.BlockSpec((feat, L2), lambda: (0, 0)),
            pl.BlockSpec((1, L2), lambda: (0, 0)),
            pl.BlockSpec((B, latent_dim), lambda: (0, 0)),
            pl.BlockSpec((latent_dim, Fd), lambda: (0, 0)),
            pl.BlockSpec((1, Fd), lambda: (0, 0)),
        ],
        out_specs=(pl.BlockSpec((B, L2), lambda: (0, 0)),
                   pl.BlockSpec((B, Fd), lambda: (0, 0))),
        compiler_params=pltpu.CompilerParams(vmem_limit_bytes=_VMEM_LIMIT),
    )(x3, w3, b3, wh, bh, eps, wd, bd)


# ----------------------------------------------------------------------------
# XLA glue: 1x-byte bf16 relayouts only (no patch expansion, no weight math)
# ----------------------------------------------------------------------------
def _enc_offsets(ws):
    return tuple(a * ws + b for a in range(2) for b in range(2))


def _dec_offsets(ws):
    return tuple(a * ws + b for a in range(3) for b in range(3))


def _pad_s2d_flatten(x):
    """NHWC (B,H,W,C) -> row-flattened space-to-depth of the zero-padded image:
    (B, (H/2+2)*(W/2+1), 4C), channel order = (row-parity, col-parity, c)."""
    B, H, W, C = x.shape
    xp = jnp.pad(x, ((0, 0), (1, 3), (1, 1), (0, 0)))
    hs, ws = (H + 4) // 2, (W + 2) // 2
    xs = xp.reshape(B, hs, 2, ws, 2, C).transpose(0, 1, 3, 2, 4, 5)
    return xs.reshape(B, hs * ws, 4 * C), ws


def _pad_flatten(x):
    """NHWC (B,S,S,C) -> row-flattened zero-padded image (B,(S+3)*(S+2),C)."""
    B, S, _, C = x.shape
    xp = jnp.pad(x, ((0, 0), (1, 2), (1, 1), (0, 0)))
    return xp.reshape(B, (S + 3) * (S + 2), C), S + 2


def _unflatten_valid(y, oh, ow, ws):
    B, _, N = y.shape
    return y.reshape(B, oh, ws, N)[:, :, :ow, :]


def _depth_to_space(y):
    """Sub-pixel packed (B,S,S,4C) (parity-major channels) -> (B,2S,2S,C)."""
    B, S, _, C4 = y.shape
    C = C4 // 4
    y = y.reshape(B, S, S, 2, 2, C).transpose(0, 1, 3, 2, 4, 5)
    return y.reshape(B, 2 * S, 2 * S, C)


# ----------------------------------------------------------------------------
# Parameters: PyTorch-layout init + one-time (outside jit) preparation
# ----------------------------------------------------------------------------
def init_vae_params(key, in_channels, latent_dim, H, W):
    feat = 128 * (H // 8) * (W // 8)
    ks = jax.random.split(key, 20)
    scale = 0.05

    def conv_w(k, cout, cin, kk):
        return scale * jax.random.normal(k, (cout, cin, kk, kk), jnp.float32)

    def deconv_w(k, cin, cout, kk):
        return scale * jax.random.normal(k, (cin, cout, kk, kk), jnp.float32)

    def lin_w(k, cin, cout):
        return scale * jax.random.normal(k, (cin, cout), jnp.float32)

    return {
        "enc_conv1_w": conv_w(ks[0], 32, in_channels, 4),
        "enc_conv1_b": scale * jax.random.normal(ks[1], (32,), jnp.float32),
        "enc_conv2_w": conv_w(ks[2], 64, 32, 4),
        "enc_conv2_b": scale * jax.random.normal(ks[3], (64,), jnp.float32),
        "enc_conv3_w": conv_w(ks[4], 128, 64, 4),
        "enc_conv3_b": scale * jax.random.normal(ks[5], (128,), jnp.float32),
        "enc_fc_mu_w": lin_w(ks[6], feat, latent_dim),
        "enc_fc_mu_b": scale * jax.random.normal(ks[7], (latent_dim,), jnp.float32),
        "enc_fc_logvar_w": lin_w(ks[8], feat, latent_dim),
        "enc_fc_logvar_b": scale * jax.random.normal(ks[9], (latent_dim,), jnp.float32),
        "dec_fc_w": lin_w(ks[10], latent_dim, feat),
        "dec_fc_b": scale * jax.random.normal(ks[11], (feat,), jnp.float32),
        "dec_deconv1_w": deconv_w(ks[12], 128, 64, 4),
        "dec_deconv1_b": scale * jax.random.normal(ks[13], (64,), jnp.float32),
        "dec_deconv2_w": deconv_w(ks[14], 64, 32, 4),
        "dec_deconv2_b": scale * jax.random.normal(ks[15], (32,), jnp.float32),
        "dec_deconv3_w": deconv_w(ks[16], 32, in_channels, 4),
        "dec_deconv3_b": scale * jax.random.normal(ks[17], (in_channels,), jnp.float32),
        "dec_deconv4_w": deconv_w(ks[18], in_channels, in_channels, 4),
        "dec_deconv4_b": scale * jax.random.normal(ks[19], (in_channels,), jnp.float32),
    }


def prepare_vae_params(params, H, W):
    """All static weight transforms, hoisted out of the jitted forward."""
    bf16, f32 = jnp.bfloat16, jnp.float32

    def conv_s2(w):            # (Cout,Cin,4,4) -> (4, 4*Cin, Cout), tap=(a,b)
        cout, cin = w.shape[0], w.shape[1]
        wt = jnp.transpose(w, (2, 3, 1, 0)).reshape(2, 2, 2, 2, cin, cout)
        return wt.transpose(0, 2, 1, 3, 4, 5).reshape(4, 4 * cin, cout).astype(bf16)

    def deconv_s2(w_t):        # (Cin,Cout,4,4) -> (9, Cin, 4*Cout), tap=(pr,pc)
        cin, cout = w_t.shape[0], w_t.shape[1]
        wm = jnp.zeros((3, 3, cin, 4, cout), w_t.dtype)
        for py in range(2):
            for px in range(2):
                par = py * 2 + px
                for ky in (py, py + 2):
                    for kx in (px, px + 2):
                        wm = wm.at[(py + ky) // 2, (px + kx) // 2, :, par, :].set(
                            w_t[:, :, 3 - ky, 3 - kx])
        return wm.reshape(9, cin, 4 * cout).astype(bf16)

    def b1(b):
        return b.reshape(1, -1).astype(f32)

    def b4(b):
        return jnp.tile(b, 4).reshape(1, -1).astype(f32)

    hh, ww = H // 8, W // 8
    feat = 128 * hh * ww
    # fold PyTorch's NCHW flatten order into the fc weights (acts stay NHWC)
    wh = jnp.concatenate([params["enc_fc_mu_w"], params["enc_fc_logvar_w"]], axis=1)
    l2 = wh.shape[1]
    wh = wh.reshape(128, hh, ww, l2).transpose(1, 2, 0, 3).reshape(feat, l2)
    bh = jnp.concatenate([params["enc_fc_mu_b"], params["enc_fc_logvar_b"]])
    wd = params["dec_fc_w"]
    ld = wd.shape[0]
    wd = wd.reshape(ld, 128, hh, ww).transpose(0, 2, 3, 1).reshape(ld, feat)
    bd = params["dec_fc_b"].reshape(128, hh, ww).transpose(1, 2, 0).reshape(feat)

    return {
        "c1_w": conv_s2(params["enc_conv1_w"]), "c1_b": b1(params["enc_conv1_b"]),
        "c2_w": conv_s2(params["enc_conv2_w"]), "c2_b": b1(params["enc_conv2_b"]),
        "c3_w": conv_s2(params["enc_conv3_w"]), "c3_b": b1(params["enc_conv3_b"]),
        "heads_w": wh.astype(bf16), "heads_b": bh.reshape(1, -1).astype(f32),
        "dfc_w": wd.astype(bf16), "dfc_b": bd.reshape(1, -1).astype(f32),
        "d1_w": deconv_s2(params["dec_deconv1_w"]), "d1_b": b4(params["dec_deconv1_b"]),
        "d2_w": deconv_s2(params["dec_deconv2_w"]), "d2_b": b4(params["dec_deconv2_b"]),
        "d3_w": deconv_s2(params["dec_deconv3_w"]), "d3_b": b4(params["dec_deconv3_b"]),
        "d4_w": deconv_s2(params["dec_deconv4_w"]), "d4_b": b4(params["dec_deconv4_b"]),
    }


# ----------------------------------------------------------------------------
# Forward pass
# ----------------------------------------------------------------------------
def vae_forward(p, x, eps):
    B = x.shape[0]
    L = eps.shape[1]
    hh, ww = x.shape[2] // 8, x.shape[3] // 8
    xh = jnp.transpose(x, (0, 2, 3, 1)).astype(jnp.bfloat16)   # NCHW->NHWC bf16

    # ---- encoder (stride-2 convs as 2x2-tap convs on space-to-depth input) ---
    x1, ws1 = _pad_s2d_flatten(xh)
    oh1 = xh.shape[1] // 2
    h1 = pallas_tapconv(x1, p["c1_w"], p["c1_b"], offsets=_enc_offsets(ws1),
                        m_out=oh1 * ws1, relu=True, out_dtype=jnp.bfloat16)
    h1 = _unflatten_valid(h1, oh1, ws1 - 1, ws1)               # (B,H/2,W/2,32)

    x2, ws2 = _pad_s2d_flatten(h1)
    oh2 = h1.shape[1] // 2
    h2 = pallas_tapconv(x2, p["c2_w"], p["c2_b"], offsets=_enc_offsets(ws2),
                        m_out=oh2 * ws2, relu=True, out_dtype=jnp.bfloat16)
    h2 = _unflatten_valid(h2, oh2, ws2 - 1, ws2)               # (B,H/4,W/4,64)

    # ---- fused conv3 + mu/logvar heads + reparameterize + dec_fc -------------
    x3, ws3 = _pad_s2d_flatten(h2)
    heads, hd = pallas_bottleneck(x3, p["c3_w"], p["c3_b"], p["heads_w"],
                                  p["heads_b"], eps.astype(jnp.float32),
                                  p["dfc_w"], p["dfc_b"],
                                  latent_dim=L, ws3=ws3, hh=hh, ww=ww)
    mu, logvar = heads[:, :L], heads[:, L:]

    # ---- decoder (sub-pixel deconvs: 3x3-tap convs -> packed parity output) --
    h = hd.reshape(B, hh, ww, 128)          # NHWC (dec_fc columns pre-permuted)
    for name, relu, dt in (("d1", True, jnp.bfloat16), ("d2", True, jnp.bfloat16),
                           ("d3", True, jnp.bfloat16), ("d4", False, jnp.float32)):
        S = h.shape[1]
        xd, wsd = _pad_flatten(h)
        od = pallas_tapconv(xd, p[name + "_w"], p[name + "_b"],
                            offsets=_dec_offsets(wsd), m_out=S * wsd,
                            relu=relu, out_dtype=dt)
        od = _unflatten_valid(od, S, S, wsd)                   # (B,S,S,4*Cout)
        h = _depth_to_space(od)                                # (B,2S,2S,Cout)

    logits = jnp.transpose(h, (0, 3, 1, 2))                    # NHWC -> NCHW
    return logits, mu, logvar


# ----------------------------------------------------------------------------
# Pure-JAX f32 reference with PyTorch semantics (validates the kernel math)
# ----------------------------------------------------------------------------
def vae_reference(params, x, eps, H, W):
    dn = ("NCHW", "OIHW", "NCHW")

    def conv(x, w, b):                      # Conv2d(k=4, s=2, p=1)
        y = jax.lax.conv_general_dilated(x, w, (2, 2), ((1, 1), (1, 1)),
                                         dimension_numbers=dn)
        return y + b.reshape(1, -1, 1, 1)

    def deconv(x, w_t, b):                  # ConvTranspose2d(k=4, s=2, p=1)
        w_eq = jnp.transpose(w_t[:, :, ::-1, ::-1], (1, 0, 2, 3))
        y = jax.lax.conv_general_dilated(x, w_eq, (1, 1), ((2, 2), (2, 2)),
                                         lhs_dilation=(2, 2),
                                         dimension_numbers=dn)
        return y + b.reshape(1, -1, 1, 1)

    relu = lambda t: jnp.maximum(t, 0.0)
    h = relu(conv(x, params["enc_conv1_w"], params["enc_conv1_b"]))
    h = relu(conv(h, params["enc_conv2_w"], params["enc_conv2_b"]))
    h = relu(conv(h, params["enc_conv3_w"], params["enc_conv3_b"]))
    hf = h.reshape(x.shape[0], -1)
    mu = hf @ params["enc_fc_mu_w"] + params["enc_fc_mu_b"]
    logvar = hf @ params["enc_fc_logvar_w"] + params["enc_fc_logvar_b"]
    z = mu + eps * jnp.exp(0.5 * logvar)
    hd = relu(z @ params["dec_fc_w"] + params["dec_fc_b"])
    hd = hd.reshape(x.shape[0], 128, H // 8, W // 8)
    hd = relu(deconv(hd, params["dec_deconv1_w"], params["dec_deconv1_b"]))
    hd = relu(deconv(hd, params["dec_deconv2_w"], params["dec_deconv2_b"]))
    hd = relu(deconv(hd, params["dec_deconv3_w"], params["dec_deconv3_b"]))
    logits = deconv(hd, params["dec_deconv4_w"], params["dec_deconv4_b"])
    return logits, mu, logvar


if __name__ == "__main__":
    B, C, H, W = 2, 4, 16, 16
    latent_dim = 32

    key = jax.random.PRNGKey(0)
    kx, keps, kp = jax.random.split(key, 3)
    x = jax.random.normal(kx, (B, C, H, W), jnp.float32)
    eps = jax.random.normal(keps, (B, latent_dim), jnp.float32)
    params = init_vae_params(kp, C, latent_dim, H, W)
    prepared = prepare_vae_params(params, H, W)     # hoisted: runs once, not per step

    fwd = jax.jit(vae_forward)
    logits, mu, logvar = fwd(prepared, x, eps)
    jax.block_until_ready((logits, mu, logvar))

    assert logits.shape == (B, C, 2 * H, 2 * W)     # /8 then 4 stride-2 deconvs -> x2
    assert mu.shape == (B, latent_dim) and logvar.shape == (B, latent_dim)
    assert bool(jnp.all(jnp.isfinite(logits))) and bool(jnp.all(jnp.isfinite(mu)))

    # numerical validation against the f32 PyTorch-semantics reference
    logits_r, mu_r, logvar_r = vae_reference(params, x, eps, H, W)
    assert bool(jnp.allclose(mu, mu_r, atol=3e-2, rtol=3e-2))
    assert bool(jnp.allclose(logvar, logvar_r, atol=3e-2, rtol=3e-2))
    assert bool(jnp.allclose(logits, logits_r, atol=3e-2, rtol=3e-2))

    print("KERNEL_OK")
</pallas_src>

<mosaic_0001>
module attributes {stable_mosaic.version = 11 : i64} {
  func.func @tapconv_kernel(%arg0: i32, %arg1: memref<1x90x16xbf16, #tpu.memory_space<vmem>>, %arg2: memref<4x16x32xbf16, #tpu.memory_space<vmem>>, %arg3: memref<1x32xf32, #tpu.memory_space<vmem>>, %arg4: memref<1x72x32xbf16, #tpu.memory_space<vmem>>) attributes {dimension_semantics = [#tpu.dimension_semantics<parallel>], iteration_bounds = array<i64: 2>, scalar_prefetch = 0 : i64, scratch_operands = 0 : i64, tpu.core_type = #tpu.core_type<tc>, window_params = [{transform_indices = @transform_0, window_bounds = array<i64: 1, 90, 16>}, {pipeline_mode = #tpu.pipeline_mode<synchronous>, transform_indices = @transform_1, window_bounds = array<i64: 4, 16, 32>}, {pipeline_mode = #tpu.pipeline_mode<synchronous>, transform_indices = @transform_2, window_bounds = array<i64: 1, 32>}, {transform_indices = @transform_3, window_bounds = array<i64: 1, 72, 32>}]} {
    %cst = arith.constant 0.000000e+00 : f32
    %0 = vector.broadcast %cst : f32 to vector<72x32xf32>
    %c0 = arith.constant 0 : index
    %c0_0 = arith.constant 0 : index
    %c0_1 = arith.constant 0 : index
    %1 = vector.load %arg1[%c0, %c0_0, %c0_1] : memref<1x90x16xbf16, #tpu.memory_space<vmem>>, vector<1x72x16xbf16>
    %2 = vector.shape_cast %1 : vector<1x72x16xbf16> to vector<72x16xbf16>
    %c0_2 = arith.constant 0 : index
    %c0_3 = arith.constant 0 : index
    %c0_4 = arith.constant 0 : index
    %3 = vector.load %arg2[%c0_2, %c0_3, %c0_4] : memref<4x16x32xbf16, #tpu.memory_space<vmem>>, vector<1x16x32xbf16>
    %4 = vector.shape_cast %3 : vector<1x16x32xbf16> to vector<16x32xbf16>
    %cst_5 = arith.constant dense<0.000000e+00> : vector<72x32xf32>
    %5 = tpu.matmul %2, %4, %cst_5 {dimension_numbers = #tpu.dot_dimension_numbers<[1], [0], [0], [1], [0, 0, 1, 1], [], []>} : vector<72x16xbf16>, vector<16x32xbf16>, vector<72x32xf32> -> vector<72x32xf32>
    %6 = arith.addf %0, %5 : vector<72x32xf32>
    %c0_6 = arith.constant 0 : index
    %c1 = arith.constant 1 : index
    %c0_7 = arith.constant 0 : index
    %7 = vector.load %arg1[%c0_6, %c1, %c0_7] : memref<1x90x16xbf16, #tpu.memory_space<vmem>>, vector<1x72x16xbf16>
    %8 = vector.shape_cast %7 : vector<1x72x16xbf16> to vector<72x16xbf16>
    %c1_8 = arith.constant 1 : index
    %c0_9 = arith.constant 0 : index
    %c0_10 = arith.constant 0 : index
    %9 = vector.load %arg2[%c1_8, %c0_9, %c0_10] : memref<4x16x32xbf16, #tpu.memory_space<vmem>>, vector<1x16x32xbf16>
    %10 = vector.shape_cast %9 : vector<1x16x32xbf16> to vector<16x32xbf16>
    %cst_11 = arith.constant dense<0.000000e+00> : vector<72x32xf32>
    %11 = tpu.matmul %8, %10, %cst_11 {dimension_numbers = #tpu.dot_dimension_numbers<[1], [0], [0], [1], [0, 0, 1, 1], [], []>} : vector<72x16xbf16>, vector<16x32xbf16>, vector<72x32xf32> -> vector<72x32xf32>
    %12 = arith.addf %6, %11 : vector<72x32xf32>
    %c0_12 = arith.constant 0 : index
    %c9 = arith.constant 9 : index
    %c0_13 = arith.constant 0 : index
    %13 = vector.load %arg1[%c0_12, %c9, %c0_13] : memref<1x90x16xbf16, #tpu.memory_space<vmem>>, vector<1x72x16xbf16>
    %14 = vector.shape_cast %13 : vector<1x72x16xbf16> to vector<72x16xbf16>
    %c2 = arith.constant 2 : index
    %c0_14 = arith.constant 0 : index
    %c0_15 = arith.constant 0 : index
    %15 = vector.load %arg2[%c2, %c0_14, %c0_15] : memref<4x16x32xbf16, #tpu.memory_space<vmem>>, vector<1x16x32xbf16>
    %16 = vector.shape_cast %15 : vector<1x16x32xbf16> to vector<16x32xbf16>
    %cst_16 = arith.constant dense<0.000000e+00> : vector<72x32xf32>
    %17 = tpu.matmul %14, %16, %cst_16 {dimension_numbers = #tpu.dot_dimension_numbers<[1], [0], [0], [1], [0, 0, 1, 1], [], []>} : vector<72x16xbf16>, vector<16x32xbf16>, vector<72x32xf32> -> vector<72x32xf32>
    %18 = arith.addf %12, %17 : vector<72x32xf32>
    %c0_17 = arith.constant 0 : index
    %c10 = arith.constant 10 : index
    %c0_18 = arith.constant 0 : index
    %19 = vector.load %arg1[%c0_17, %c10, %c0_18] : memref<1x90x16xbf16, #tpu.memory_space<vmem>>, vector<1x72x16xbf16>
    %20 = vector.shape_cast %19 : vector<1x72x16xbf16> to vector<72x16xbf16>
    %c3 = arith.constant 3 : index
    %c0_19 = arith.constant 0 : index
    %c0_20 = arith.constant 0 : index
    %21 = vector.load %arg2[%c3, %c0_19, %c0_20] : memref<4x16x32xbf16, #tpu.memory_space<vmem>>, vector<1x16x32xbf16>
    %22 = vector.shape_cast %21 : vector<1x16x32xbf16> to vector<16x32xbf16>
    %cst_21 = arith.constant dense<0.000000e+00> : vector<72x32xf32>
    %23 = tpu.matmul %20, %22, %cst_21 {dimension_numbers = #tpu.dot_dimension_numbers<[1], [0], [0], [1], [0, 0, 1, 1], [], []>} : vector<72x16xbf16>, vector<16x32xbf16>, vector<72x32xf32> -> vector<72x32xf32>
    %24 = arith.addf %18, %23 : vector<72x32xf32>
    %c0_22 = arith.constant 0 : index
    %c0_23 = arith.constant 0 : index
    %25 = vector.load %arg3[%c0_22, %c0_23] : memref<1x32xf32, #tpu.memory_space<vmem>>, vector<1x32xf32>
    %26 = vector.broadcast %25 : vector<1x32xf32> to vector<72x32xf32>
    %27 = arith.addf %24, %26 : vector<72x32xf32>
    %cst_24 = arith.constant 0.000000e+00 : f32
    %28 = vector.broadcast %cst_24 : f32 to vector<72x32xf32>
    %29 = arith.maximumf %27, %28 : vector<72x32xf32>
    %30 = arith.truncf %29 : vector<72x32xf32> to vector<72x32xbf16>
    %c0_25 = arith.constant 0 : index
    %c0_26 = arith.constant 0 : index
    %c0_27 = arith.constant 0 : index
    %31 = vector.load %arg4[%c0_25, %c0_26, %c0_27] : memref<1x72x32xbf16, #tpu.memory_space<vmem>>, vector<1x72x32xbf16>
    %32 = vector.shape_cast %31 : vector<1x72x32xbf16> to vector<72x32xbf16>
    %33 = vector.shape_cast %30 : vector<72x32xbf16> to vector<1x72x32xbf16>
    tpu.vector_store %arg4[%c0_25, %c0_26, %c0_27], %33 {strides = array<i32>} : memref<1x72x32xbf16, #tpu.memory_space<vmem>>, vector<1x72x32xbf16>,
    return
  }
  func.func @transform_0(%arg0: i32) -> (i32, i32, i32) {
    %c0_i32 = arith.constant 0 : i32
    %c0_i32_0 = arith.constant 0 : i32
    %c0_i32_1 = arith.constant 0 : i32
    return %arg0, %c0_i32, %c0_i32_0 : i32, i32, i32
  }
  func.func @transform_1(%arg0: i32) -> (i32, i32, i32) {
    %c0_i32 = arith.constant 0 : i32
    %c0_i32_0 = arith.constant 0 : i32
    %c0_i32_1 = arith.constant 0 : i32
    %c0_i32_2 = arith.constant 0 : i32
    return %c0_i32, %c0_i32_0, %c0_i32_1 : i32, i32, i32
  }
  func.func @transform_2(%arg0: i32) -> (i32, i32) {
    %c0_i32 = arith.constant 0 : i32
    %c0_i32_0 = arith.constant 0 : i32
    %c0_i32_1 = arith.constant 0 : i32
    return %c0_i32, %c0_i32_0 : i32, i32
  }
  func.func @transform_3(%arg0: i32) -> (i32, i32, i32) {
    %c0_i32 = arith.constant 0 : i32
    %c0_i32_0 = arith.constant 0 : i32
    %c0_i32_1 = arith.constant 0 : i32
    return %arg0, %c0_i32, %c0_i32_0 : i32, i32, i32
  }
}

module attributes {stable_mosaic.version = 11 : i64} {
  func.func @tapconv_kernel(%arg0: i32, %arg1: memref<1x30x128xbf16, #tpu.memory_space<vmem>>, %arg2: memref<4x128x64xbf16, #tpu.memory_space<vmem>>, %arg3: memref<1x64xf32, #tpu.memory_space<vmem>>, %arg4: memref<1x20x64xbf16, #tpu.memory_space<vmem>>) attributes {dimension_semantics = [#tpu.dimension_semantics<parallel>], iteration_bounds = array<i64: 2>, scalar_prefetch = 0 : i64, scratch_operands = 0 : i64, tpu.core_type = #tpu.core_type<tc>, window_params = [{transform_indices = @transform_0, window_bounds = array<i64: 1, 30, 128>}, {pipeline_mode = #tpu.pipeline_mode<synchronous>, transform_indices = @transform_1, window_bounds = array<i64: 4, 128, 64>}, {pipeline_mode = #tpu.pipeline_mode<synchronous>, transform_indices = @transform_2, window_bounds = array<i64: 1, 64>}, {transform_indices = @transform_3, window_bounds = array<i64: 1, 20, 64>}]} {
    %cst = arith.constant 0.000000e+00 : f32
    %0 = vector.broadcast %cst : f32 to vector<20x64xf32>
    %c0 = arith.constant 0 : index
    %c0_0 = arith.constant 0 : index
    %c0_1 = arith.constant 0 : index
    %1 = vector.load %arg1[%c0, %c0_0, %c0_1] : memref<1x30x128xbf16, #tpu.memory_space<vmem>>, vector<1x20x128xbf16>
    %2 = vector.shape_cast %1 : vector<1x20x128xbf16> to vector<20x128xbf16>
    %c0_2 = arith.constant 0 : index
    %c0_3 = arith.constant 0 : index
    %c0_4 = arith.constant 0 : index
    %3 = vector.load %arg2[%c0_2, %c0_3, %c0_4] : memref<4x128x64xbf16, #tpu.memory_space<vmem>>, vector<1x128x64xbf16>
    %4 = vector.shape_cast %3 : vector<1x128x64xbf16> to vector<128x64xbf16>
    %cst_5 = arith.constant dense<0.000000e+00> : vector<20x64xf32>
    %5 = tpu.matmul %2, %4, %cst_5 {dimension_numbers = #tpu.dot_dimension_numbers<[1], [0], [0], [1], [0, 0, 1, 1], [], []>} : vector<20x128xbf16>, vector<128x64xbf16>, vector<20x64xf32> -> vector<20x64xf32>
    %6 = arith.addf %0, %5 : vector<20x64xf32>
    %c0_6 = arith.constant 0 : index
    %c1 = arith.constant 1 : index
    %c0_7 = arith.constant 0 : index
    %7 = vector.load %arg1[%c0_6, %c1, %c0_7] : memref<1x30x128xbf16, #tpu.memory_space<vmem>>, vector<1x20x128xbf16>
    %8 = vector.shape_cast %7 : vector<1x20x128xbf16> to vector<20x128xbf16>
    %c1_8 = arith.constant 1 : index
    %c0_9 = arith.constant 0 : index
    %c0_10 = arith.constant 0 : index
    %9 = vector.load %arg2[%c1_8, %c0_9, %c0_10] : memref<4x128x64xbf16, #tpu.memory_space<vmem>>, vector<1x128x64xbf16>
    %10 = vector.shape_cast %9 : vector<1x128x64xbf16> to vector<128x64xbf16>
    %cst_11 = arith.constant dense<0.000000e+00> : vector<20x64xf32>
    %11 = tpu.matmul %8, %10, %cst_11 {dimension_numbers = #tpu.dot_dimension_numbers<[1], [0], [0], [1], [0, 0, 1, 1], [], []>} : vector<20x128xbf16>, vector<128x64xbf16>, vector<20x64xf32> -> vector<20x64xf32>
    %12 = arith.addf %6, %11 : vector<20x64xf32>
    %c0_12 = arith.constant 0 : index
    %c5 = arith.constant 5 : index
    %c0_13 = arith.constant 0 : index
    %13 = vector.load %arg1[%c0_12, %c5, %c0_13] : memref<1x30x128xbf16, #tpu.memory_space<vmem>>, vector<1x20x128xbf16>
    %14 = vector.shape_cast %13 : vector<1x20x128xbf16> to vector<20x128xbf16>
    %c2 = arith.constant 2 : index
    %c0_14 = arith.constant 0 : index
    %c0_15 = arith.constant 0 : index
    %15 = vector.load %arg2[%c2, %c0_14, %c0_15] : memref<4x128x64xbf16, #tpu.memory_space<vmem>>, vector<1x128x64xbf16>
    %16 = vector.shape_cast %15 : vector<1x128x64xbf16> to vector<128x64xbf16>
    %cst_16 = arith.constant dense<0.000000e+00> : vector<20x64xf32>
    %17 = tpu.matmul %14, %16, %cst_16 {dimension_numbers = #tpu.dot_dimension_numbers<[1], [0], [0], [1], [0, 0, 1, 1], [], []>} : vector<20x128xbf16>, vector<128x64xbf16>, vector<20x64xf32> -> vector<20x64xf32>
    %18 = arith.addf %12, %17 : vector<20x64xf32>
    %c0_17 = arith.constant 0 : index
    %c6 = arith.constant 6 : index
    %c0_18 = arith.constant 0 : index
    %19 = vector.load %arg1[%c0_17, %c6, %c0_18] : memref<1x30x128xbf16, #tpu.memory_space<vmem>>, vector<1x20x128xbf16>
    %20 = vector.shape_cast %19 : vector<1x20x128xbf16> to vector<20x128xbf16>
    %c3 = arith.constant 3 : index
    %c0_19 = arith.constant 0 : index
    %c0_20 = arith.constant 0 : index
    %21 = vector.load %arg2[%c3, %c0_19, %c0_20] : memref<4x128x64xbf16, #tpu.memory_space<vmem>>, vector<1x128x64xbf16>
    %22 = vector.shape_cast %21 : vector<1x128x64xbf16> to vector<128x64xbf16>
    %cst_21 = arith.constant dense<0.000000e+00> : vector<20x64xf32>
    %23 = tpu.matmul %20, %22, %cst_21 {dimension_numbers = #tpu.dot_dimension_numbers<[1], [0], [0], [1], [0, 0, 1, 1], [], []>} : vector<20x128xbf16>, vector<128x64xbf16>, vector<20x64xf32> -> vector<20x64xf32>
    %24 = arith.addf %18, %23 : vector<20x64xf32>
    %c0_22 = arith.constant 0 : index
    %c0_23 = arith.constant 0 : index
    %25 = vector.load %arg3[%c0_22, %c0_23] : memref<1x64xf32, #tpu.memory_space<vmem>>, vector<1x64xf32>
    %26 = vector.broadcast %25 : vector<1x64xf32> to vector<20x64xf32>
    %27 = arith.addf %24, %26 : vector<20x64xf32>
    %cst_24 = arith.constant 0.000000e+00 : f32
    %28 = vector.broadcast %cst_24 : f32 to vector<20x64xf32>
    %29 = arith.maximumf %27, %28 : vector<20x64xf32>
    %30 = arith.truncf %29 : vector<20x64xf32> to vector<20x64xbf16>
    %c0_25 = arith.constant 0 : index
    %c0_26 = arith.constant 0 : index
    %c0_27 = arith.constant 0 : index
    %31 = vector.load %arg4[%c0_25, %c0_26, %c0_27] : memref<1x20x64xbf16, #tpu.memory_space<vmem>>, vector<1x20x64xbf16>
    %32 = vector.shape_cast %31 : vector<1x20x64xbf16> to vector<20x64xbf16>
    %33 = vector.shape_cast %30 : vector<20x64xbf16> to vector<1x20x64xbf16>
    tpu.vector_store %arg4[%c0_25, %c0_26, %c0_27], %33 {strides = array<i32>} : memref<1x20x64xbf16, #tpu.memory_space<vmem>>, vector<1x20x64xbf16>,
    return
  }
  func.func @transform_0(%arg0: i32) -> (i32, i32, i32) {
    %c0_i32 = arith.constant 0 : i32
    %c0_i32_0 = arith.constant 0 : i32
    %c0_i32_1 = arith.constant 0 : i32
    return %arg0, %c0_i32, %c0_i32_0 : i32, i32, i32
  }
  func.func @transform_1(%arg0: i32) -> (i32, i32, i32) {
    %c0_i32 = arith.constant 0 : i32
    %c0_i32_0 = arith.constant 0 : i32
    %c0_i32_1 = arith.constant 0 : i32
    %c0_i32_2 = arith.constant 0 : i32
    return %c0_i32, %c0_i32_0, %c0_i32_1 : i32, i32, i32
  }
  func.func @transform_2(%arg0: i32) -> (i32, i32) {
    %c0_i32 = arith.constant 0 : i32
    %c0_i32_0 = arith.constant 0 : i32
    %c0_i32_1 = arith.constant 0 : i32
    return %c0_i32, %c0_i32_0 : i32, i32
  }
  func.func @transform_3(%arg0: i32) -> (i32, i32, i32) {
    %c0_i32 = arith.constant 0 : i32
    %c0_i32_0 = arith.constant 0 : i32
    %c0_i32_1 = arith.constant 0 : i32
    return %arg0, %c0_i32, %c0_i32_0 : i32, i32, i32
  }
}

module attributes {stable_mosaic.version = 11 : i64} {
  func.func @bottleneck_kernel(%arg0: memref<2x12x256xbf16, #tpu.memory_space<vmem>>, %arg1: memref<4x256x128xbf16, #tpu.memory_space<vmem>>, %arg2: memref<1x128xf32, #tpu.memory_space<vmem>>, %arg3: memref<512x64xbf16, #tpu.memory_space<vmem>>, %arg4: memref<1x64xf32, #tpu.memory_space<vmem>>, %arg5: memref<2x32xf32, #tpu.memory_space<vmem>>, %arg6: memref<32x512xbf16, #tpu.memory_space<vmem>>, %arg7: memref<1x512xf32, #tpu.memory_space<vmem>>, %arg8: memref<2x64xf32, #tpu.memory_space<vmem>>, %arg9: memref<2x512xbf16, #tpu.memory_space<vmem>>) attributes {dimension_semantics = [], scalar_prefetch = 0 : i64, scratch_operands = 0 : i64, tpu.core_type = #tpu.core_type<tc>} {
    %cst = arith.constant 0.000000e+00 : f32
    %0 = vector.broadcast %cst : f32 to vector<6x128xf32>
    %c0 = arith.constant 0 : index
    %c0_0 = arith.constant 0 : index
    %c0_1 = arith.constant 0 : index
    %1 = vector.load %arg0[%c0, %c0_0, %c0_1] : memref<2x12x256xbf16, #tpu.memory_space<vmem>>, vector<1x6x256xbf16>
    %2 = vector.shape_cast %1 : vector<1x6x256xbf16> to vector<6x256xbf16>
    %c0_2 = arith.constant 0 : index
    %c0_3 = arith.constant 0 : index
    %c0_4 = arith.constant 0 : index
    %3 = vector.load %arg1[%c0_2, %c0_3, %c0_4] : memref<4x256x128xbf16, #tpu.memory_space<vmem>>, vector<1x256x128xbf16>
    %4 = vector.shape_cast %3 : vector<1x256x128xbf16> to vector<256x128xbf16>
    %cst_5 = arith.constant dense<0.000000e+00> : vector<6x128xf32>
    %5 = tpu.matmul %2, %4, %cst_5 {dimension_numbers = #tpu.dot_dimension_numbers<[1], [0], [0], [1], [0, 0, 1, 1], [], []>} : vector<6x256xbf16>, vector<256x128xbf16>, vector<6x128xf32> -> vector<6x128xf32>
    %6 = arith.addf %0, %5 : vector<6x128xf32>
    %c0_6 = arith.constant 0 : index
    %c1 = arith.constant 1 : index
    %c0_7 = arith.constant 0 : index
    %7 = vector.load %arg0[%c0_6, %c1, %c0_7] : memref<2x12x256xbf16, #tpu.memory_space<vmem>>, vector<1x6x256xbf16>
    %8 = vector.shape_cast %7 : vector<1x6x256xbf16> to vector<6x256xbf16>
    %c1_8 = arith.constant 1 : index
    %c0_9 = arith.constant 0 : index
    %c0_10 = arith.constant 0 : index
    %9 = vector.load %arg1[%c1_8, %c0_9, %c0_10] : memref<4x256x128xbf16, #tpu.memory_space<vmem>>, vector<1x256x128xbf16>
    %10 = vector.shape_cast %9 : vector<1x256x128xbf16> to vector<256x128xbf16>
    %cst_11 = arith.constant dense<0.000000e+00> : vector<6x128xf32>
    %11 = tpu.matmul %8, %10, %cst_11 {dimension_numbers = #tpu.dot_dimension_numbers<[1], [0], [0], [1], [0, 0, 1, 1], [], []>} : vector<6x256xbf16>, vector<256x128xbf16>, vector<6x128xf32> -> vector<6x128xf32>
    %12 = arith.addf %6, %11 : vector<6x128xf32>
    %c0_12 = arith.constant 0 : index
    %c3 = arith.constant 3 : index
    %c0_13 = arith.constant 0 : index
    %13 = vector.load %arg0[%c0_12, %c3, %c0_13] : memref<2x12x256xbf16, #tpu.memory_space<vmem>>, vector<1x6x256xbf16>
    %14 = vector.shape_cast %13 : vector<1x6x256xbf16> to vector<6x256xbf16>
    %c2 = arith.constant 2 : index
    %c0_14 = arith.constant 0 : index
    %c0_15 = arith.constant 0 : index
    %15 = vector.load %arg1[%c2, %c0_14, %c0_15] : memref<4x256x128xbf16, #tpu.memory_space<vmem>>, vector<1x256x128xbf16>
    %16 = vector.shape_cast %15 : vector<1x256x128xbf16> to vector<256x128xbf16>
    %cst_16 = arith.constant dense<0.000000e+00> : vector<6x128xf32>
    %17 = tpu.matmul %14, %16, %cst_16 {dimension_numbers = #tpu.dot_dimension_numbers<[1], [0], [0], [1], [0, 0, 1, 1], [], []>} : vector<6x256xbf16>, vector<256x128xbf16>, vector<6x128xf32> -> vector<6x128xf32>
    %18 = arith.addf %12, %17 : vector<6x128xf32>
    %c0_17 = arith.constant 0 : index
    %c4 = arith.constant 4 : index
    %c0_18 = arith.constant 0 : index
    %19 = vector.load %arg0[%c0_17, %c4, %c0_18] : memref<2x12x256xbf16, #tpu.memory_space<vmem>>, vector<1x6x256xbf16>
    %20 = vector.shape_cast %19 : vector<1x6x256xbf16> to vector<6x256xbf16>
    %c3_19 = arith.constant 3 : index
    %c0_20 = arith.constant 0 : index
    %c0_21 = arith.constant 0 : index
    %21 = vector.load %arg1[%c3_19, %c0_20, %c0_21] : memref<4x256x128xbf16, #tpu.memory_space<vmem>>, vector<1x256x128xbf16>
    %22 = vector.shape_cast %21 : vector<1x256x128xbf16> to vector<256x128xbf16>
    %cst_22 = arith.constant dense<0.000000e+00> : vector<6x128xf32>
    %23 = tpu.matmul %20, %22, %cst_22 {dimension_numbers = #tpu.dot_dimension_numbers<[1], [0], [0], [1], [0, 0, 1, 1], [], []>} : vector<6x256xbf16>, vector<256x128xbf16>, vector<6x128xf32> -> vector<6x128xf32>
    %24 = arith.addf %18, %23 : vector<6x128xf32>
    %c0_23 = arith.constant 0 : index
    %c0_24 = arith.constant 0 : index
    %25 = vector.load %arg2[%c0_23, %c0_24] : memref<1x128xf32, #tpu.memory_space<vmem>>, vector<1x128xf32>
    %26 = vector.broadcast %25 : vector<1x128xf32> to vector<6x128xf32>
    %27 = arith.addf %24, %26 : vector<6x128xf32>
    %cst_25 = arith.constant 0.000000e+00 : f32
    %28 = vector.broadcast %cst_25 : f32 to vector<6x128xf32>
    %29 = arith.maximumf %27, %28 : vector<6x128xf32>
    %30 = vector.extract_strided_slice %29 {offsets = [0, 0], sizes = [1, 128], strides = [1, 1]} : vector<6x128xf32> to vector<1x128xf32>
    %31 = vector.extract_strided_slice %29 {offsets = [1, 0], sizes = [1, 128], strides = [1, 1]} : vector<6x128xf32> to vector<1x128xf32>
    %32 = vector.extract_strided_slice %29 {offsets = [3, 0], sizes = [1, 128], strides = [1, 1]} : vector<6x128xf32> to vector<1x128xf32>
    %33 = vector.extract_strided_slice %29 {offsets = [4, 0], sizes = [1, 128], strides = [1, 1]} : vector<6x128xf32> to vector<1x128xf32>
    %34 = tpu.concatenate %30, %31, %32, %33 in 1 : vector<1x128xf32>, vector<1x128xf32>, vector<1x128xf32>, vector<1x128xf32> -> vector<1x512xf32>
    %cst_26 = arith.constant 0.000000e+00 : f32
    %35 = vector.broadcast %cst_26 : f32 to vector<6x128xf32>
    %c1_27 = arith.constant 1 : index
    %c0_28 = arith.constant 0 : index
    %c0_29 = arith.constant 0 : index
    %36 = vector.load %arg0[%c1_27, %c0_28, %c0_29] : memref<2x12x256xbf16, #tpu.memory_space<vmem>>, vector<1x6x256xbf16>
    %37 = vector.shape_cast %36 : vector<1x6x256xbf16> to vector<6x256xbf16>
    %c0_30 = arith.constant 0 : index
    %c0_31 = arith.constant 0 : index
    %c0_32 = arith.constant 0 : index
    %38 = vector.load %arg1[%c0_30, %c0_31, %c0_32] : memref<4x256x128xbf16, #tpu.memory_space<vmem>>, vector<1x256x128xbf16>
    %39 = vector.shape_cast %38 : vector<1x256x128xbf16> to vector<256x128xbf16>
    %cst_33 = arith.constant dense<0.000000e+00> : vector<6x128xf32>
    %40 = tpu.matmul %37, %39, %cst_33 {dimension_numbers = #tpu.dot_dimension_numbers<[1], [0], [0], [1], [0, 0, 1, 1], [], []>} : vector<6x256xbf16>, vector<256x128xbf16>, vector<6x128xf32> -> vector<6x128xf32>
    %41 = arith.addf %35, %40 : vector<6x128xf32>
    %c1_34 = arith.constant 1 : index
    %c1_35 = arith.constant 1 : index
    %c0_36 = arith.constant 0 : index
    %42 = vector.load %arg0[%c1_34, %c1_35, %c0_36] : memref<2x12x256xbf16, #tpu.memory_space<vmem>>, vector<1x6x256xbf16>
    %43 = vector.shape_cast %42 : vector<1x6x256xbf16> to vector<6x256xbf16>
    %c1_37 = arith.constant 1 : index
    %c0_38 = arith.constant 0 : index
    %c0_39 = arith.constant 0 : index
    %44 = vector.load %arg1[%c1_37, %c0_38, %c0_39] : memref<4x256x128xbf16, #tpu.memory_space<vmem>>, vector<1x256x128xbf16>
    %45 = vector.shape_cast %44 : vector<1x256x128xbf16> to vector<256x128xbf16>
    %cst_40 = arith.constant dense<0.000000e+00> : vector<6x128xf32>
    %46 = tpu.matmul %43, %45, %cst_40 {dimension_numbers = #tpu.dot_dimension_numbers<[1], [0], [0], [1], [0, 0, 1, 1], [], []>} : vector<6x256xbf16>, vector<256x128xbf16>, vector<6x128xf32> -> vector<6x128xf32>
    %47 = arith.addf %41, %46 : vector<6x128xf32>
    %c1_41 = arith.constant 1 : index
    %c3_42 = arith.constant 3 : index
    %c0_43 = arith.constant 0 : index
    %48 = vector.load %arg0[%c1_41, %c3_42, %c0_43] : memref<2x12x256xbf16, #tpu.memory_space<vmem>>, vector<1x6x256xbf16>
    %49 = vector.shape_cast %48 : vector<1x6x256xbf16> to vector<6x256xbf16>
    %c2_44 = arith.constant 2 : index
    %c0_45 = arith.constant 0 : index
    %c0_46 = arith.constant 0 : index
    %50 = vector.load %arg1[%c2_44, %c0_45, %c0_46] : memref<4x256x128xbf16, #tpu.memory_space<vmem>>, vector<1x256x128xbf16>
    %51 = vector.shape_cast %50 : vector<1x256x128xbf16> to vector<256x128xbf16>
    %cst_47 = arith.constant dense<0.000000e+00> : vector<6x128xf32>
    %52 = tpu.matmul %49, %51, %cst_47 {dimension_numbers = #tpu.dot_dimension_numbers<[1], [0], [0], [1], [0, 0, 1, 1], [], []>} : vector<6x256xbf16>, vector<256x128xbf16>, vector<6x128xf32> -> vector<6x128xf32>
    %53 = arith.addf %47, %52 : vector<6x128xf32>
    %c1_48 = arith.constant 1 : index
    %c4_49 = arith.constant 4 : index
    %c0_50 = arith.constant 0 : index
    %54 = vector.load %arg0[%c1_48, %c4_49, %c0_50] : memref<2x12x256xbf16, #tpu.memory_space<vmem>>, vector<1x6x256xbf16>
    %55 = vector.shape_cast %54 : vector<1x6x256xbf16> to vector<6x256xbf16>
    %c3_51 = arith.constant 3 : index
    %c0_52 = arith.constant 0 : index
    %c0_53 = arith.constant 0 : index
    %56 = vector.load %arg1[%c3_51, %c0_52, %c0_53] : memref<4x256x128xbf16, #tpu.memory_space<vmem>>, vector<1x256x128xbf16>
    %57 = vector.shape_cast %56 : vector<1x256x128xbf16> to vector<256x128xbf16>
    %cst_54 = arith.constant dense<0.000000e+00> : vector<6x128xf32>
    %58 = tpu.matmul %55, %57, %cst_54 {dimension_numbers = #tpu.dot_dimension_numbers<[1], [0], [0], [1], [0, 0, 1, 1], [], []>} : vector<6x256xbf16>, vector<256x128xbf16>, vector<6x128xf32> -> vector<6x128xf32>
    %59 = arith.addf %53, %58 : vector<6x128xf32>
    %c0_55 = arith.constant 0 : index
    %c0_56 = arith.constant 0 : index
    %60 = vector.load %arg2[%c0_55, %c0_56] : memref<1x128xf32, #tpu.memory_space<vmem>>, vector<1x128xf32>
    %61 = vector.broadcast %60 : vector<1x128xf32> to vector<6x128xf32>
    %62 = arith.addf %59, %61 : vector<6x128xf32>
    %cst_57 = arith.constant 0.000000e+00 : f32
    %63 = vector.broadcast %cst_57 : f32 to vector<6x128xf32>
    %64 = arith.maximumf %62, %63 : vector<6x128xf32>
    %65 = vector.extract_strided_slice %64 {offsets = [0, 0], sizes = [1, 128], strides = [1, 1]} : vector<6x128xf32> to vector<1x128xf32>
    %66 = vector.extract_strided_slice %64 {offsets = [1, 0], sizes = [1, 128], strides = [1, 1]} : vector<6x128xf32> to vector<1x128xf32>
    %67 = vector.extract_strided_slice %64 {offsets = [3, 0], sizes = [1, 128], strides = [1, 1]} : vector<6x128xf32> to vector<1x128xf32>
    %68 = vector.extract_strided_slice %64 {offsets = [4, 0], sizes = [1, 128], strides = [1, 1]} : vector<6x128xf32> to vector<1x128xf32>
    %69 = tpu.concatenate %65, %66, %67, %68 in 1 : vector<1x128xf32>, vector<1x128xf32>, vector<1x128xf32>, vector<1x128xf32> -> vector<1x512xf32>
    %70 = tpu.concatenate %34, %69 in 0 : vector<1x512xf32>, vector<1x512xf32> -> vector<2x512xf32>
    %71 = arith.truncf %70 : vector<2x512xf32> to vector<2x512xbf16>
    %c0_58 = arith.constant 0 : index
    %c0_59 = arith.constant 0 : index
    %72 = vector.load %arg3[%c0_58, %c0_59] : memref<512x64xbf16, #tpu.memory_space<vmem>>, vector<512x64xbf16>
    %cst_60 = arith.constant dense<0.000000e+00> : vector<2x64xf32>
    %73 = tpu.matmul %71, %72, %cst_60 {dimension_numbers = #tpu.dot_dimension_numbers<[1], [0], [0], [1], [0, 0, 1, 1], [], []>} : vector<2x512xbf16>, vector<512x64xbf16>, vector<2x64xf32> -> vector<2x64xf32>
    %c0_61 = arith.constant 0 : index
    %c0_62 = arith.constant 0 : index
    %74 = vector.load %arg4[%c0_61, %c0_62] : memref<1x64xf32, #tpu.memory_space<vmem>>, vector<1x64xf32>
    %75 = vector.broadcast %74 : vector<1x64xf32> to vector<2x64xf32>
    %76 = arith.addf %73, %75 : vector<2x64xf32>
    %c0_63 = arith.constant 0 : index
    %c0_64 = arith.constant 0 : index
    %77 = vector.load %arg8[%c0_63, %c0_64] : memref<2x64xf32, #tpu.memory_space<vmem>>, vector<2x64xf32>
    tpu.vector_store %arg8[%c0_63, %c0_64], %76 {strides = array<i32>} : memref<2x64xf32, #tpu.memory_space<vmem>>, vector<2x64xf32>,
    %78 = vector.extract_strided_slice %76 {offsets = [0, 0], sizes = [2, 32], strides = [1, 1]} : vector<2x64xf32> to vector<2x32xf32>
    %79 = vector.extract_strided_slice %76 {offsets = [0, 32], sizes = [2, 32], strides = [1, 1]} : vector<2x64xf32> to vector<2x32xf32>
    %c0_65 = arith.constant 0 : index
    %c0_66 = arith.constant 0 : index
    %80 = vector.load %arg5[%c0_65, %c0_66] : memref<2x32xf32, #tpu.memory_space<vmem>>, vector<2x32xf32>
    %cst_67 = arith.constant 5.000000e-01 : f32
    %81 = vector.broadcast %cst_67 : f32 to vector<2x32xf32>
    %82 = arith.mulf %81, %79 : vector<2x32xf32>
    %83 = math.exp %82 : vector<2x32xf32>
    %84 = arith.mulf %80, %83 : vector<2x32xf32>
    %85 = arith.addf %78, %84 : vector<2x32xf32>
    %86 = arith.truncf %85 : vector<2x32xf32> to vector<2x32xbf16>
    %c0_68 = arith.constant 0 : index
    %c0_69 = arith.constant 0 : index
    %87 = vector.load %arg6[%c0_68, %c0_69] : memref<32x512xbf16, #tpu.memory_space<vmem>>, vector<32x512xbf16>
    %cst_70 = arith.constant dense<0.000000e+00> : vector<2x512xf32>
    %88 = tpu.matmul %86, %87, %cst_70 {dimension_numbers = #tpu.dot_dimension_numbers<[1], [0], [0], [1], [0, 0, 1, 1], [], []>} : vector<2x32xbf16>, vector<32x512xbf16>, vector<2x512xf32> -> vector<2x512xf32>
    %c0_71 = arith.constant 0 : index
    %c0_72 = arith.constant 0 : index
    %89 = vector.load %arg7[%c0_71, %c0_72] : memref<1x512xf32, #tpu.memory_space<vmem>>, vector<1x512xf32>
    %90 = vector.broadcast %89 : vector<1x512xf32> to vector<2x512xf32>
    %91 = arith.addf %88, %90 : vector<2x512xf32>
    %cst_73 = arith.constant 0.000000e+00 : f32
    %92 = vector.broadcast %cst_73 : f32 to vector<2x512xf32>
    %93 = arith.maximumf %91, %92 : vector<2x512xf32>
    %94 = arith.truncf %93 : vector<2x512xf32> to vector<2x512xbf16>
    %c0_74 = arith.constant 0 : index
    %c0_75 = arith.constant 0 : index
    %95 = vector.load %arg9[%c0_74, %c0_75] : memref<2x512xbf16, #tpu.memory_space<vmem>>, vector<2x512xbf16>
    tpu.vector_store %arg9[%c0_74, %c0_75], %94 {strides = array<i32>} : memref<2x512xbf16, #tpu.memory_space<vmem>>, vector<2x512xbf16>,
    return
  }
}

module attributes {stable_mosaic.version = 11 : i64} {
  func.func @tapconv_kernel(%arg0: i32, %arg1: memref<1x20x128xbf16, #tpu.memory_space<vmem>>, %arg2: memref<9x128x256xbf16, #tpu.memory_space<vmem>>, %arg3: memref<1x256xf32, #tpu.memory_space<vmem>>, %arg4: memref<1x8x256xbf16, #tpu.memory_space<vmem>>) attributes {dimension_semantics = [#tpu.dimension_semantics<parallel>], iteration_bounds = array<i64: 2>, scalar_prefetch = 0 : i64, scratch_operands = 0 : i64, tpu.core_type = #tpu.core_type<tc>, window_params = [{transform_indices = @transform_0, window_bounds = array<i64: 1, 20, 128>}, {pipeline_mode = #tpu.pipeline_mode<synchronous>, transform_indices = @transform_1, window_bounds = array<i64: 9, 128, 256>}, {pipeline_mode = #tpu.pipeline_mode<synchronous>, transform_indices = @transform_2, window_bounds = array<i64: 1, 256>}, {transform_indices = @transform_3, window_bounds = array<i64: 1, 8, 256>}]} {
    %cst = arith.constant 0.000000e+00 : f32
    %0 = vector.broadcast %cst : f32 to vector<8x256xf32>
    %c0 = arith.constant 0 : index
    %c0_0 = arith.constant 0 : index
    %c0_1 = arith.constant 0 : index
    %1 = vector.load %arg1[%c0, %c0_0, %c0_1] : memref<1x20x128xbf16, #tpu.memory_space<vmem>>, vector<1x8x128xbf16>
    %2 = vector.shape_cast %1 : vector<1x8x128xbf16> to vector<8x128xbf16>
    %c0_2 = arith.constant 0 : index
    %c0_3 = arith.constant 0 : index
    %c0_4 = arith.constant 0 : index
    %3 = vector.load %arg2[%c0_2, %c0_3, %c0_4] : memref<9x128x256xbf16, #tpu.memory_space<vmem>>, vector<1x128x256xbf16>
    %4 = vector.shape_cast %3 : vector<1x128x256xbf16> to vector<128x256xbf16>
    %cst_5 = arith.constant dense<0.000000e+00> : vector<8x256xf32>
    %5 = tpu.matmul %2, %4, %cst_5 {dimension_numbers = #tpu.dot_dimension_numbers<[1], [0], [0], [1], [0, 0, 1, 1], [], []>} : vector<8x128xbf16>, vector<128x256xbf16>, vector<8x256xf32> -> vector<8x256xf32>
    %6 = arith.addf %0, %5 : vector<8x256xf32>
    %c0_6 = arith.constant 0 : index
    %c1 = arith.constant 1 : index
    %c0_7 = arith.constant 0 : index
    %7 = vector.load %arg1[%c0_6, %c1, %c0_7] : memref<1x20x128xbf16, #tpu.memory_space<vmem>>, vector<1x8x128xbf16>
    %8 = vector.shape_cast %7 : vector<1x8x128xbf16> to vector<8x128xbf16>
    %c1_8 = arith.constant 1 : index
    %c0_9 = arith.constant 0 : index
    %c0_10 = arith.constant 0 : index
    %9 = vector.load %arg2[%c1_8, %c0_9, %c0_10] : memref<9x128x256xbf16, #tpu.memory_space<vmem>>, vector<1x128x256xbf16>
    %10 = vector.shape_cast %9 : vector<1x128x256xbf16> to vector<128x256xbf16>
    %cst_11 = arith.constant dense<0.000000e+00> : vector<8x256xf32>
    %11 = tpu.matmul %8, %10, %cst_11 {dimension_numbers = #tpu.dot_dimension_numbers<[1], [0], [0], [1], [0, 0, 1, 1], [], []>} : vector<8x128xbf16>, vector<128x256xbf16>, vector<8x256xf32> -> vector<8x256xf32>
    %12 = arith.addf %6, %11 : vector<8x256xf32>
    %c0_12 = arith.constant 0 : index
    %c2 = arith.constant 2 : index
    %c0_13 = arith.constant 0 : index
    %13 = vector.load %arg1[%c0_12, %c2, %c0_13] : memref<1x20x128xbf16, #tpu.memory_space<vmem>>, vector<1x8x128xbf16>
    %14 = vector.shape_cast %13 : vector<1x8x128xbf16> to vector<8x128xbf16>
    %c2_14 = arith.constant 2 : index
    %c0_15 = arith.constant 0 : index
    %c0_16 = arith.constant 0 : index
    %15 = vector.load %arg2[%c2_14, %c0_15, %c0_16] : memref<9x128x256xbf16, #tpu.memory_space<vmem>>, vector<1x128x256xbf16>
    %16 = vector.shape_cast %15 : vector<1x128x256xbf16> to vector<128x256xbf16>
    %cst_17 = arith.constant dense<0.000000e+00> : vector<8x256xf32>
    %17 = tpu.matmul %14, %16, %cst_17 {dimension_numbers = #tpu.dot_dimension_numbers<[1], [0], [0], [1], [0, 0, 1, 1], [], []>} : vector<8x128xbf16>, vector<128x256xbf16>, vector<8x256xf32> -> vector<8x256xf32>
    %18 = arith.addf %12, %17 : vector<8x256xf32>
    %c0_18 = arith.constant 0 : index
    %c4 = arith.constant 4 : index
    %c0_19 = arith.constant 0 : index
    %19 = vector.load %arg1[%c0_18, %c4, %c0_19] : memref<1x20x128xbf16, #tpu.memory_space<vmem>>, vector<1x8x128xbf16>
    %20 = vector.shape_cast %19 : vector<1x8x128xbf16> to vector<8x128xbf16>
    %c3 = arith.constant 3 : index
    %c0_20 = arith.constant 0 : index
    %c0_21 = arith.constant 0 : index
    %21 = vector.load %arg2[%c3, %c0_20, %c0_21] : memref<9x128x256xbf16, #tpu.memory_space<vmem>>, vector<1x128x256xbf16>
    %22 = vector.shape_cast %21 : vector<1x128x256xbf16> to vector<128x256xbf16>
    %cst_22 = arith.constant dense<0.000000e+00> : vector<8x256xf32>
    %23 = tpu.matmul %20, %22, %cst_22 {dimension_numbers = #tpu.dot_dimension_numbers<[1], [0], [0], [1], [0, 0, 1, 1], [], []>} : vector<8x128xbf16>, vector<128x256xbf16>, vector<8x256xf32> -> vector<8x256xf32>
    %24 = arith.addf %18, %23 : vector<8x256xf32>
    %c0_23 = arith.constant 0 : index
    %c5 = arith.constant 5 : index
    %c0_24 = arith.constant 0 : index
    %25 = vector.load %arg1[%c0_23, %c5, %c0_24] : memref<1x20x128xbf16, #tpu.memory_space<vmem>>, vector<1x8x128xbf16>
    %26 = vector.shape_cast %25 : vector<1x8x128xbf16> to vector<8x128xbf16>
    %c4_25 = arith.constant 4 : index
    %c0_26 = arith.constant 0 : index
    %c0_27 = arith.constant 0 : index
    %27 = vector.load %arg2[%c4_25, %c0_26, %c0_27] : memref<9x128x256xbf16, #tpu.memory_space<vmem>>, vector<1x128x256xbf16>
    %28 = vector.shape_cast %27 : vector<1x128x256xbf16> to vector<128x256xbf16>
    %cst_28 = arith.constant dense<0.000000e+00> : vector<8x256xf32>
    %29 = tpu.matmul %26, %28, %cst_28 {dimension_numbers = #tpu.dot_dimension_numbers<[1], [0], [0], [1], [0, 0, 1, 1], [], []>} : vector<8x128xbf16>, vector<128x256xbf16>, vector<8x256xf32> -> vector<8x256xf32>
    %30 = arith.addf %24, %29 : vector<8x256xf32>
    %c0_29 = arith.constant 0 : index
    %c6 = arith.constant 6 : index
    %c0_30 = arith.constant 0 : index
    %31 = vector.load %arg1[%c0_29, %c6, %c0_30] : memref<1x20x128xbf16, #tpu.memory_space<vmem>>, vector<1x8x128xbf16>
    %32 = vector.shape_cast %31 : vector<1x8x128xbf16> to vector<8x128xbf16>
    %c5_31 = arith.constant 5 : index
    %c0_32 = arith.constant 0 : index
    %c0_33 = arith.constant 0 : index
    %33 = vector.load %arg2[%c5_31, %c0_32, %c0_33] : memref<9x128x256xbf16, #tpu.memory_space<vmem>>, vector<1x128x256xbf16>
    %34 = vector.shape_cast %33 : vector<1x128x256xbf16> to vector<128x256xbf16>
    %cst_34 = arith.constant dense<0.000000e+00> : vector<8x256xf32>
    %35 = tpu.matmul %32, %34, %cst_34 {dimension_numbers = #tpu.dot_dimension_numbers<[1], [0], [0], [1], [0, 0, 1, 1], [], []>} : vector<8x128xbf16>, vector<128x256xbf16>, vector<8x256xf32> -> vector<8x256xf32>
    %36 = arith.addf %30, %35 : vector<8x256xf32>
    %c0_35 = arith.constant 0 : index
    %c8 = arith.constant 8 : index
    %c0_36 = arith.constant 0 : index
    %37 = vector.load %arg1[%c0_35, %c8, %c0_36] : memref<1x20x128xbf16, #tpu.memory_space<vmem>>, vector<1x8x128xbf16>
    %38 = vector.shape_cast %37 : vector<1x8x128xbf16> to vector<8x128xbf16>
    %c6_37 = arith.constant 6 : index
    %c0_38 = arith.constant 0 : index
    %c0_39 = arith.constant 0 : index
    %39 = vector.load %arg2[%c6_37, %c0_38, %c0_39] : memref<9x128x256xbf16, #tpu.memory_space<vmem>>, vector<1x128x256xbf16>
    %40 = vector.shape_cast %39 : vector<1x128x256xbf16> to vector<128x256xbf16>
    %cst_40 = arith.constant dense<0.000000e+00> : vector<8x256xf32>
    %41 = tpu.matmul %38, %40, %cst_40 {dimension_numbers = #tpu.dot_dimension_numbers<[1], [0], [0], [1], [0, 0, 1, 1], [], []>} : vector<8x128xbf16>, vector<128x256xbf16>, vector<8x256xf32> -> vector<8x256xf32>
    %42 = arith.addf %36, %41 : vector<8x256xf32>
    %c0_41 = arith.constant 0 : index
    %c9 = arith.constant 9 : index
    %c0_42 = arith.constant 0 : index
    %43 = vector.load %arg1[%c0_41, %c9, %c0_42] : memref<1x20x128xbf16, #tpu.memory_space<vmem>>, vector<1x8x128xbf16>
    %44 = vector.shape_cast %43 : vector<1x8x128xbf16> to vector<8x128xbf16>
    %c7 = arith.constant 7 : index
    %c0_43 = arith.constant 0 : index
    %c0_44 = arith.constant 0 : index
    %45 = vector.load %arg2[%c7, %c0_43, %c0_44] : memref<9x128x256xbf16, #tpu.memory_space<vmem>>, vector<1x128x256xbf16>
    %46 = vector.shape_cast %45 : vector<1x128x256xbf16> to vector<128x256xbf16>
    %cst_45 = arith.constant dense<0.000000e+00> : vector<8x256xf32>
    %47 = tpu.matmul %44, %46, %cst_45 {dimension_numbers = #tpu.dot_dimension_numbers<[1], [0], [0], [1], [0, 0, 1, 1], [], []>} : vector<8x128xbf16>, vector<128x256xbf16>, vector<8x256xf32> -> vector<8x256xf32>
    %48 = arith.addf %42, %47 : vector<8x256xf32>
    %c0_46 = arith.constant 0 : index
    %c10 = arith.constant 10 : index
    %c0_47 = arith.constant 0 : index
    %49 = vector.load %arg1[%c0_46, %c10, %c0_47] : memref<1x20x128xbf16, #tpu.memory_space<vmem>>, vector<1x8x128xbf16>
    %50 = vector.shape_cast %49 : vector<1x8x128xbf16> to vector<8x128xbf16>
    %c8_48 = arith.constant 8 : index
    %c0_49 = arith.constant 0 : index
    %c0_50 = arith.constant 0 : index
    %51 = vector.load %arg2[%c8_48, %c0_49, %c0_50] : memref<9x128x256xbf16, #tpu.memory_space<vmem>>, vector<1x128x256xbf16>
    %52 = vector.shape_cast %51 : vector<1x128x256xbf16> to vector<128x256xbf16>
    %cst_51 = arith.constant dense<0.000000e+00> : vector<8x256xf32>
    %53 = tpu.matmul %50, %52, %cst_51 {dimension_numbers = #tpu.dot_dimension_numbers<[1], [0], [0], [1], [0, 0, 1, 1], [], []>} : vector<8x128xbf16>, vector<128x256xbf16>, vector<8x256xf32> -> vector<8x256xf32>
    %54 = arith.addf %48, %53 : vector<8x256xf32>
    %c0_52 = arith.constant 0 : index
    %c0_53 = arith.constant 0 : index
    %55 = vector.load %arg3[%c0_52, %c0_53] : memref<1x256xf32, #tpu.memory_space<vmem>>, vector<1x256xf32>
    %56 = vector.broadcast %55 : vector<1x256xf32> to vector<8x256xf32>
    %57 = arith.addf %54, %56 : vector<8x256xf32>
    %cst_54 = arith.constant 0.000000e+00 : f32
    %58 = vector.broadcast %cst_54 : f32 to vector<8x256xf32>
    %59 = arith.maximumf %57, %58 : vector<8x256xf32>
    %60 = arith.truncf %59 : vector<8x256xf32> to vector<8x256xbf16>
    %c0_55 = arith.constant 0 : index
    %c0_56 = arith.constant 0 : index
    %c0_57 = arith.constant 0 : index
    %61 = vector.load %arg4[%c0_55, %c0_56, %c0_57] : memref<1x8x256xbf16, #tpu.memory_space<vmem>>, vector<1x8x256xbf16>
    %62 = vector.shape_cast %61 : vector<1x8x256xbf16> to vector<8x256xbf16>
    %63 = vector.shape_cast %60 : vector<8x256xbf16> to vector<1x8x256xbf16>
    tpu.vector_store %arg4[%c0_55, %c0_56, %c0_57], %63 {strides = array<i32>} : memref<1x8x256xbf16, #tpu.memory_space<vmem>>, vector<1x8x256xbf16>,
    return
  }
  func.func @transform_0(%arg0: i32) -> (i32, i32, i32) {
    %c0_i32 = arith.constant 0 : i32
    %c0_i32_0 = arith.constant 0 : i32
    %c0_i32_1 = arith.constant 0 : i32
    return %arg0, %c0_i32, %c0_i32_0 : i32, i32, i32
  }
  func.func @transform_1(%arg0: i32) -> (i32, i32, i32) {
    %c0_i32 = arith.constant 0 : i32
    %c0_i32_0 = arith.constant 0 : i32
    %c0_i32_1 = arith.constant 0 : i32
    %c0_i32_2 = arith.constant 0 : i32
    return %c0_i32, %c0_i32_0, %c0_i32_1 : i32, i32, i32
  }
  func.func @transform_2(%arg0: i32) -> (i32, i32) {
    %c0_i32 = arith.constant 0 : i32
    %c0_i32_0 = arith.constant 0 : i32
    %c0_i32_1 = arith.constant 0 : i32
    return %c0_i32, %c0_i32_0 : i32, i32
  }
  func.func @transform_3(%arg0: i32) -> (i32, i32, i32) {
    %c0_i32 = arith.constant 0 : i32
    %c0_i32_0 = arith.constant 0 : i32
    %c0_i32_1 = arith.constant 0 : i32
    return %arg0, %c0_i32, %c0_i32_0 : i32, i32, i32
  }
}

module attributes {stable_mosaic.version = 11 : i64} {
  func.func @tapconv_kernel(%arg0: i32, %arg1: memref<1x42x64xbf16, #tpu.memory_space<vmem>>, %arg2: memref<9x64x128xbf16, #tpu.memory_space<vmem>>, %arg3: memref<1x128xf32, #tpu.memory_space<vmem>>, %arg4: memref<1x24x128xbf16, #tpu.memory_space<vmem>>) attributes {dimension_semantics = [#tpu.dimension_semantics<parallel>], iteration_bounds = array<i64: 2>, scalar_prefetch = 0 : i64, scratch_operands = 0 : i64, tpu.core_type = #tpu.core_type<tc>, window_params = [{transform_indices = @transform_0, window_bounds = array<i64: 1, 42, 64>}, {pipeline_mode = #tpu.pipeline_mode<synchronous>, transform_indices = @transform_1, window_bounds = array<i64: 9, 64, 128>}, {pipeline_mode = #tpu.pipeline_mode<synchronous>, transform_indices = @transform_2, window_bounds = array<i64: 1, 128>}, {transform_indices = @transform_3, window_bounds = array<i64: 1, 24, 128>}]} {
    %cst = arith.constant 0.000000e+00 : f32
    %0 = vector.broadcast %cst : f32 to vector<24x128xf32>
    %c0 = arith.constant 0 : index
    %c0_0 = arith.constant 0 : index
    %c0_1 = arith.constant 0 : index
    %1 = vector.load %arg1[%c0, %c0_0, %c0_1] : memref<1x42x64xbf16, #tpu.memory_space<vmem>>, vector<1x24x64xbf16>
    %2 = vector.shape_cast %1 : vector<1x24x64xbf16> to vector<24x64xbf16>
    %c0_2 = arith.constant 0 : index
    %c0_3 = arith.constant 0 : index
    %c0_4 = arith.constant 0 : index
    %3 = vector.load %arg2[%c0_2, %c0_3, %c0_4] : memref<9x64x128xbf16, #tpu.memory_space<vmem>>, vector<1x64x128xbf16>
    %4 = vector.shape_cast %3 : vector<1x64x128xbf16> to vector<64x128xbf16>
    %cst_5 = arith.constant dense<0.000000e+00> : vector<24x128xf32>
    %5 = tpu.matmul %2, %4, %cst_5 {dimension_numbers = #tpu.dot_dimension_numbers<[1], [0], [0], [1], [0, 0, 1, 1], [], []>} : vector<24x64xbf16>, vector<64x128xbf16>, vector<24x128xf32> -> vector<24x128xf32>
    %6 = arith.addf %0, %5 : vector<24x128xf32>
    %c0_6 = arith.constant 0 : index
    %c1 = arith.constant 1 : index
    %c0_7 = arith.constant 0 : index
    %7 = vector.load %arg1[%c0_6, %c1, %c0_7] : memref<1x42x64xbf16, #tpu.memory_space<vmem>>, vector<1x24x64xbf16>
    %8 = vector.shape_cast %7 : vector<1x24x64xbf16> to vector<24x64xbf16>
    %c1_8 = arith.constant 1 : index
    %c0_9 = arith.constant 0 : index
    %c0_10 = arith.constant 0 : index
    %9 = vector.load %arg2[%c1_8, %c0_9, %c0_10] : memref<9x64x128xbf16, #tpu.memory_space<vmem>>, vector<1x64x128xbf16>
    %10 = vector.shape_cast %9 : vector<1x64x128xbf16> to vector<64x128xbf16>
    %cst_11 = arith.constant dense<0.000000e+00> : vector<24x128xf32>
    %11 = tpu.matmul %8, %10, %cst_11 {dimension_numbers = #tpu.dot_dimension_numbers<[1], [0], [0], [1], [0, 0, 1, 1], [], []>} : vector<24x64xbf16>, vector<64x128xbf16>, vector<24x128xf32> -> vector<24x128xf32>
    %12 = arith.addf %6, %11 : vector<24x128xf32>
    %c0_12 = arith.constant 0 : index
    %c2 = arith.constant 2 : index
    %c0_13 = arith.constant 0 : index
    %13 = vector.load %arg1[%c0_12, %c2, %c0_13] : memref<1x42x64xbf16, #tpu.memory_space<vmem>>, vector<1x24x64xbf16>
    %14 = vector.shape_cast %13 : vector<1x24x64xbf16> to vector<24x64xbf16>
    %c2_14 = arith.constant 2 : index
    %c0_15 = arith.constant 0 : index
    %c0_16 = arith.constant 0 : index
    %15 = vector.load %arg2[%c2_14, %c0_15, %c0_16] : memref<9x64x128xbf16, #tpu.memory_space<vmem>>, vector<1x64x128xbf16>
    %16 = vector.shape_cast %15 : vector<1x64x128xbf16> to vector<64x128xbf16>
    %cst_17 = arith.constant dense<0.000000e+00> : vector<24x128xf32>
    %17 = tpu.matmul %14, %16, %cst_17 {dimension_numbers = #tpu.dot_dimension_numbers<[1], [0], [0], [1], [0, 0, 1, 1], [], []>} : vector<24x64xbf16>, vector<64x128xbf16>, vector<24x128xf32> -> vector<24x128xf32>
    %18 = arith.addf %12, %17 : vector<24x128xf32>
    %c0_18 = arith.constant 0 : index
    %c6 = arith.constant 6 : index
    %c0_19 = arith.constant 0 : index
    %19 = vector.load %arg1[%c0_18, %c6, %c0_19] : memref<1x42x64xbf16, #tpu.memory_space<vmem>>, vector<1x24x64xbf16>
    %20 = vector.shape_cast %19 : vector<1x24x64xbf16> to vector<24x64xbf16>
    %c3 = arith.constant 3 : index
    %c0_20 = arith.constant 0 : index
    %c0_21 = arith.constant 0 : index
    %21 = vector.load %arg2[%c3, %c0_20, %c0_21] : memref<9x64x128xbf16, #tpu.memory_space<vmem>>, vector<1x64x128xbf16>
    %22 = vector.shape_cast %21 : vector<1x64x128xbf16> to vector<64x128xbf16>
    %cst_22 = arith.constant dense<0.000000e+00> : vector<24x128xf32>
    %23 = tpu.matmul %20, %22, %cst_22 {dimension_numbers = #tpu.dot_dimension_numbers<[1], [0], [0], [1], [0, 0, 1, 1], [], []>} : vector<24x64xbf16>, vector<64x128xbf16>, vector<24x128xf32> -> vector<24x128xf32>
    %24 = arith.addf %18, %23 : vector<24x128xf32>
    %c0_23 = arith.constant 0 : index
    %c7 = arith.constant 7 : index
    %c0_24 = arith.constant 0 : index
    %25 = vector.load %arg1[%c0_23, %c7, %c0_24] : memref<1x42x64xbf16, #tpu.memory_space<vmem>>, vector<1x24x64xbf16>
    %26 = vector.shape_cast %25 : vector<1x24x64xbf16> to vector<24x64xbf16>
    %c4 = arith.constant 4 : index
    %c0_25 = arith.constant 0 : index
    %c0_26 = arith.constant 0 : index
    %27 = vector.load %arg2[%c4, %c0_25, %c0_26] : memref<9x64x128xbf16, #tpu.memory_space<vmem>>, vector<1x64x128xbf16>
    %28 = vector.shape_cast %27 : vector<1x64x128xbf16> to vector<64x128xbf16>
    %cst_27 = arith.constant dense<0.000000e+00> : vector<24x128xf32>
    %29 = tpu.matmul %26, %28, %cst_27 {dimension_numbers = #tpu.dot_dimension_numbers<[1], [0], [0], [1], [0, 0, 1, 1], [], []>} : vector<24x64xbf16>, vector<64x128xbf16>, vector<24x128xf32> -> vector<24x128xf32>
    %30 = arith.addf %24, %29 : vector<24x128xf32>
    %c0_28 = arith.constant 0 : index
    %c8 = arith.constant 8 : index
    %c0_29 = arith.constant 0 : index
    %31 = vector.load %arg1[%c0_28, %c8, %c0_29] : memref<1x42x64xbf16, #tpu.memory_space<vmem>>, vector<1x24x64xbf16>
    %32 = vector.shape_cast %31 : vector<1x24x64xbf16> to vector<24x64xbf16>
    %c5 = arith.constant 5 : index
    %c0_30 = arith.constant 0 : index
    %c0_31 = arith.constant 0 : index
    %33 = vector.load %arg2[%c5, %c0_30, %c0_31] : memref<9x64x128xbf16, #tpu.memory_space<vmem>>, vector<1x64x128xbf16>
    %34 = vector.shape_cast %33 : vector<1x64x128xbf16> to vector<64x128xbf16>
    %cst_32 = arith.constant dense<0.000000e+00> : vector<24x128xf32>
    %35 = tpu.matmul %32, %34, %cst_32 {dimension_numbers = #tpu.dot_dimension_numbers<[1], [0], [0], [1], [0, 0, 1, 1], [], []>} : vector<24x64xbf16>, vector<64x128xbf16>, vector<24x128xf32> -> vector<24x128xf32>
    %36 = arith.addf %30, %35 : vector<24x128xf32>
    %c0_33 = arith.constant 0 : index
    %c12 = arith.constant 12 : index
    %c0_34 = arith.constant 0 : index
    %37 = vector.load %arg1[%c0_33, %c12, %c0_34] : memref<1x42x64xbf16, #tpu.memory_space<vmem>>, vector<1x24x64xbf16>
    %38 = vector.shape_cast %37 : vector<1x24x64xbf16> to vector<24x64xbf16>
    %c6_35 = arith.constant 6 : index
    %c0_36 = arith.constant 0 : index
    %c0_37 = arith.constant 0 : index
    %39 = vector.load %arg2[%c6_35, %c0_36, %c0_37] : memref<9x64x128xbf16, #tpu.memory_space<vmem>>, vector<1x64x128xbf16>
    %40 = vector.shape_cast %39 : vector<1x64x128xbf16> to vector<64x128xbf16>
    %cst_38 = arith.constant dense<0.000000e+00> : vector<24x128xf32>
    %41 = tpu.matmul %38, %40, %cst_38 {dimension_numbers = #tpu.dot_dimension_numbers<[1], [0], [0], [1], [0, 0, 1, 1], [], []>} : vector<24x64xbf16>, vector<64x128xbf16>, vector<24x128xf32> -> vector<24x128xf32>
    %42 = arith.addf %36, %41 : vector<24x128xf32>
    %c0_39 = arith.constant 0 : index
    %c13 = arith.constant 13 : index
    %c0_40 = arith.constant 0 : index
    %43 = vector.load %arg1[%c0_39, %c13, %c0_40] : memref<1x42x64xbf16, #tpu.memory_space<vmem>>, vector<1x24x64xbf16>
    %44 = vector.shape_cast %43 : vector<1x24x64xbf16> to vector<24x64xbf16>
    %c7_41 = arith.constant 7 : index
    %c0_42 = arith.constant 0 : index
    %c0_43 = arith.constant 0 : index
    %45 = vector.load %arg2[%c7_41, %c0_42, %c0_43] : memref<9x64x128xbf16, #tpu.memory_space<vmem>>, vector<1x64x128xbf16>
    %46 = vector.shape_cast %45 : vector<1x64x128xbf16> to vector<64x128xbf16>
    %cst_44 = arith.constant dense<0.000000e+00> : vector<24x128xf32>
    %47 = tpu.matmul %44, %46, %cst_44 {dimension_numbers = #tpu.dot_dimension_numbers<[1], [0], [0], [1], [0, 0, 1, 1], [], []>} : vector<24x64xbf16>, vector<64x128xbf16>, vector<24x128xf32> -> vector<24x128xf32>
    %48 = arith.addf %42, %47 : vector<24x128xf32>
    %c0_45 = arith.constant 0 : index
    %c14 = arith.constant 14 : index
    %c0_46 = arith.constant 0 : index
    %49 = vector.load %arg1[%c0_45, %c14, %c0_46] : memref<1x42x64xbf16, #tpu.memory_space<vmem>>, vector<1x24x64xbf16>
    %50 = vector.shape_cast %49 : vector<1x24x64xbf16> to vector<24x64xbf16>
    %c8_47 = arith.constant 8 : index
    %c0_48 = arith.constant 0 : index
    %c0_49 = arith.constant 0 : index
    %51 = vector.load %arg2[%c8_47, %c0_48, %c0_49] : memref<9x64x128xbf16, #tpu.memory_space<vmem>>, vector<1x64x128xbf16>
    %52 = vector.shape_cast %51 : vector<1x64x128xbf16> to vector<64x128xbf16>
    %cst_50 = arith.constant dense<0.000000e+00> : vector<24x128xf32>
    %53 = tpu.matmul %50, %52, %cst_50 {dimension_numbers = #tpu.dot_dimension_numbers<[1], [0], [0], [1], [0, 0, 1, 1], [], []>} : vector<24x64xbf16>, vector<64x128xbf16>, vector<24x128xf32> -> vector<24x128xf32>
    %54 = arith.addf %48, %53 : vector<24x128xf32>
    %c0_51 = arith.constant 0 : index
    %c0_52 = arith.constant 0 : index
    %55 = vector.load %arg3[%c0_51, %c0_52] : memref<1x128xf32, #tpu.memory_space<vmem>>, vector<1x128xf32>
    %56 = vector.broadcast %55 : vector<1x128xf32> to vector<24x128xf32>
    %57 = arith.addf %54, %56 : vector<24x128xf32>
    %cst_53 = arith.constant 0.000000e+00 : f32
    %58 = vector.broadcast %cst_53 : f32 to vector<24x128xf32>
    %59 = arith.maximumf %57, %58 : vector<24x128xf32>
    %60 = arith.truncf %59 : vector<24x128xf32> to vector<24x128xbf16>
    %c0_54 = arith.constant 0 : index
    %c0_55 = arith.constant 0 : index
    %c0_56 = arith.constant 0 : index
    %61 = vector.load %arg4[%c0_54, %c0_55, %c0_56] : memref<1x24x128xbf16, #tpu.memory_space<vmem>>, vector<1x24x128xbf16>
    %62 = vector.shape_cast %61 : vector<1x24x128xbf16> to vector<24x128xbf16>
    %63 = vector.shape_cast %60 : vector<24x128xbf16> to vector<1x24x128xbf16>
    tpu.vector_store %arg4[%c0_54, %c0_55, %c0_56], %63 {strides = array<i32>} : memref<1x24x128xbf16, #tpu.memory_space<vmem>>, vector<1x24x128xbf16>,
    return
  }
  func.func @transform_0(%arg0: i32) -> (i32, i32, i32) {
    %c0_i32 = arith.constant 0 : i32
    %c0_i32_0 = arith.constant 0 : i32
    %c0_i32_1 = arith.constant 0 : i32
    return %arg0, %c0_i32, %c0_i32_0 : i32, i32, i32
  }
  func.func @transform_1(%arg0: i32) -> (i32, i32, i32) {
    %c0_i32 = arith.constant 0 : i32
    %c0_i32_0 = arith.constant 0 : i32
    %c0_i32_1 = arith.constant 0 : i32
    %c0_i32_2 = arith.constant 0 : i32
    return %c0_i32, %c0_i32_0, %c0_i32_1 : i32, i32, i32
  }
  func.func @transform_2(%arg0: i32) -> (i32, i32) {
    %c0_i32 = arith.constant 0 : i32
    %c0_i32_0 = arith.constant 0 : i32
    %c0_i32_1 = arith.constant 0 : i32
    return %c0_i32, %c0_i32_0 : i32, i32
  }
  func.func @transform_3(%arg0: i32) -> (i32, i32, i32) {
    %c0_i32 = arith.constant 0 : i32
    %c0_i32_0 = arith.constant 0 : i32
    %c0_i32_1 = arith.constant 0 : i32
    return %arg0, %c0_i32, %c0_i32_0 : i32, i32, i32
  }
}

module attributes {stable_mosaic.version = 11 : i64} {
  func.func @tapconv_kernel(%arg0: i32, %arg1: memref<1x110x32xbf16, #tpu.memory_space<vmem>>, %arg2: memref<9x32x16xbf16, #tpu.memory_space<vmem>>, %arg3: memref<1x16xf32, #tpu.memory_space<vmem>>, %arg4: memref<1x80x16xbf16, #tpu.memory_space<vmem>>) attributes {dimension_semantics = [#tpu.dimension_semantics<parallel>], iteration_bounds = array<i64: 2>, scalar_prefetch = 0 : i64, scratch_operands = 0 : i64, tpu.core_type = #tpu.core_type<tc>, window_params = [{transform_indices = @transform_0, window_bounds = array<i64: 1, 110, 32>}, {pipeline_mode = #tpu.pipeline_mode<synchronous>, transform_indices = @transform_1, window_bounds = array<i64: 9, 32, 16>}, {pipeline_mode = #tpu.pipeline_mode<synchronous>, transform_indices = @transform_2, window_bounds = array<i64: 1, 16>}, {transform_indices = @transform_3, window_bounds = array<i64: 1, 80, 16>}]} {
    %cst = arith.constant 0.000000e+00 : f32
    %0 = vector.broadcast %cst : f32 to vector<80x16xf32>
    %c0 = arith.constant 0 : index
    %c0_0 = arith.constant 0 : index
    %c0_1 = arith.constant 0 : index
    %1 = vector.load %arg1[%c0, %c0_0, %c0_1] : memref<1x110x32xbf16, #tpu.memory_space<vmem>>, vector<1x80x32xbf16>
    %2 = vector.shape_cast %1 : vector<1x80x32xbf16> to vector<80x32xbf16>
    %c0_2 = arith.constant 0 : index
    %c0_3 = arith.constant 0 : index
    %c0_4 = arith.constant 0 : index
    %3 = vector.load %arg2[%c0_2, %c0_3, %c0_4] : memref<9x32x16xbf16, #tpu.memory_space<vmem>>, vector<1x32x16xbf16>
    %4 = vector.shape_cast %3 : vector<1x32x16xbf16> to vector<32x16xbf16>
    %cst_5 = arith.constant dense<0.000000e+00> : vector<80x16xf32>
    %5 = tpu.matmul %2, %4, %cst_5 {dimension_numbers = #tpu.dot_dimension_numbers<[1], [0], [0], [1], [0, 0, 1, 1], [], []>} : vector<80x32xbf16>, vector<32x16xbf16>, vector<80x16xf32> -> vector<80x16xf32>
    %6 = arith.addf %0, %5 : vector<80x16xf32>
    %c0_6 = arith.constant 0 : index
    %c1 = arith.constant 1 : index
    %c0_7 = arith.constant 0 : index
    %7 = vector.load %arg1[%c0_6, %c1, %c0_7] : memref<1x110x32xbf16, #tpu.memory_space<vmem>>, vector<1x80x32xbf16>
    %8 = vector.shape_cast %7 : vector<1x80x32xbf16> to vector<80x32xbf16>
    %c1_8 = arith.constant 1 : index
    %c0_9 = arith.constant 0 : index
    %c0_10 = arith.constant 0 : index
    %9 = vector.load %arg2[%c1_8, %c0_9, %c0_10] : memref<9x32x16xbf16, #tpu.memory_space<vmem>>, vector<1x32x16xbf16>
    %10 = vector.shape_cast %9 : vector<1x32x16xbf16> to vector<32x16xbf16>
    %cst_11 = arith.constant dense<0.000000e+00> : vector<80x16xf32>
    %11 = tpu.matmul %8, %10, %cst_11 {dimension_numbers = #tpu.dot_dimension_numbers<[1], [0], [0], [1], [0, 0, 1, 1], [], []>} : vector<80x32xbf16>, vector<32x16xbf16>, vector<80x16xf32> -> vector<80x16xf32>
    %12 = arith.addf %6, %11 : vector<80x16xf32>
    %c0_12 = arith.constant 0 : index
    %c2 = arith.constant 2 : index
    %c0_13 = arith.constant 0 : index
    %13 = vector.load %arg1[%c0_12, %c2, %c0_13] : memref<1x110x32xbf16, #tpu.memory_space<vmem>>, vector<1x80x32xbf16>
    %14 = vector.shape_cast %13 : vector<1x80x32xbf16> to vector<80x32xbf16>
    %c2_14 = arith.constant 2 : index
    %c0_15 = arith.constant 0 : index
    %c0_16 = arith.constant 0 : index
    %15 = vector.load %arg2[%c2_14, %c0_15, %c0_16] : memref<9x32x16xbf16, #tpu.memory_space<vmem>>, vector<1x32x16xbf16>
    %16 = vector.shape_cast %15 : vector<1x32x16xbf16> to vector<32x16xbf16>
    %cst_17 = arith.constant dense<0.000000e+00> : vector<80x16xf32>
    %17 = tpu.matmul %14, %16, %cst_17 {dimension_numbers = #tpu.dot_dimension_numbers<[1], [0], [0], [1], [0, 0, 1, 1], [], []>} : vector<80x32xbf16>, vector<32x16xbf16>, vector<80x16xf32> -> vector<80x16xf32>
    %18 = arith.addf %12, %17 : vector<80x16xf32>
    %c0_18 = arith.constant 0 : index
    %c10 = arith.constant 10 : index
    %c0_19 = arith.constant 0 : index
    %19 = vector.load %arg1[%c0_18, %c10, %c0_19] : memref<1x110x32xbf16, #tpu.memory_space<vmem>>, vector<1x80x32xbf16>
    %20 = vector.shape_cast %19 : vector<1x80x32xbf16> to vector<80x32xbf16>
    %c3 = arith.constant 3 : index
    %c0_20 = arith.constant 0 : index
    %c0_21 = arith.constant 0 : index
    %21 = vector.load %arg2[%c3, %c0_20, %c0_21] : memref<9x32x16xbf16, #tpu.memory_space<vmem>>, vector<1x32x16xbf16>
    %22 = vector.shape_cast %21 : vector<1x32x16xbf16> to vector<32x16xbf16>
    %cst_22 = arith.constant dense<0.000000e+00> : vector<80x16xf32>
    %23 = tpu.matmul %20, %22, %cst_22 {dimension_numbers = #tpu.dot_dimension_numbers<[1], [0], [0], [1], [0, 0, 1, 1], [], []>} : vector<80x32xbf16>, vector<32x16xbf16>, vector<80x16xf32> -> vector<80x16xf32>
    %24 = arith.addf %18, %23 : vector<80x16xf32>
    %c0_23 = arith.constant 0 : index
    %c11 = arith.constant 11 : index
    %c0_24 = arith.constant 0 : index
    %25 = vector.load %arg1[%c0_23, %c11, %c0_24] : memref<1x110x32xbf16, #tpu.memory_space<vmem>>, vector<1x80x32xbf16>
    %26 = vector.shape_cast %25 : vector<1x80x32xbf16> to vector<80x32xbf16>
    %c4 = arith.constant 4 : index
    %c0_25 = arith.constant 0 : index
    %c0_26 = arith.constant 0 : index
    %27 = vector.load %arg2[%c4, %c0_25, %c0_26] : memref<9x32x16xbf16, #tpu.memory_space<vmem>>, vector<1x32x16xbf16>
    %28 = vector.shape_cast %27 : vector<1x32x16xbf16> to vector<32x16xbf16>
    %cst_27 = arith.constant dense<0.000000e+00> : vector<80x16xf32>
    %29 = tpu.matmul %26, %28, %cst_27 {dimension_numbers = #tpu.dot_dimension_numbers<[1], [0], [0], [1], [0, 0, 1, 1], [], []>} : vector<80x32xbf16>, vector<32x16xbf16>, vector<80x16xf32> -> vector<80x16xf32>
    %30 = arith.addf %24, %29 : vector<80x16xf32>
    %c0_28 = arith.constant 0 : index
    %c12 = arith.constant 12 : index
    %c0_29 = arith.constant 0 : index
    %31 = vector.load %arg1[%c0_28, %c12, %c0_29] : memref<1x110x32xbf16, #tpu.memory_space<vmem>>, vector<1x80x32xbf16>
    %32 = vector.shape_cast %31 : vector<1x80x32xbf16> to vector<80x32xbf16>
    %c5 = arith.constant 5 : index
    %c0_30 = arith.constant 0 : index
    %c0_31 = arith.constant 0 : index
    %33 = vector.load %arg2[%c5, %c0_30, %c0_31] : memref<9x32x16xbf16, #tpu.memory_space<vmem>>, vector<1x32x16xbf16>
    %34 = vector.shape_cast %33 : vector<1x32x16xbf16> to vector<32x16xbf16>
    %cst_32 = arith.constant dense<0.000000e+00> : vector<80x16xf32>
    %35 = tpu.matmul %32, %34, %cst_32 {dimension_numbers = #tpu.dot_dimension_numbers<[1], [0], [0], [1], [0, 0, 1, 1], [], []>} : vector<80x32xbf16>, vector<32x16xbf16>, vector<80x16xf32> -> vector<80x16xf32>
    %36 = arith.addf %30, %35 : vector<80x16xf32>
    %c0_33 = arith.constant 0 : index
    %c20 = arith.constant 20 : index
    %c0_34 = arith.constant 0 : index
    %37 = vector.load %arg1[%c0_33, %c20, %c0_34] : memref<1x110x32xbf16, #tpu.memory_space<vmem>>, vector<1x80x32xbf16>
    %38 = vector.shape_cast %37 : vector<1x80x32xbf16> to vector<80x32xbf16>
    %c6 = arith.constant 6 : index
    %c0_35 = arith.constant 0 : index
    %c0_36 = arith.constant 0 : index
    %39 = vector.load %arg2[%c6, %c0_35, %c0_36] : memref<9x32x16xbf16, #tpu.memory_space<vmem>>, vector<1x32x16xbf16>
    %40 = vector.shape_cast %39 : vector<1x32x16xbf16> to vector<32x16xbf16>
    %cst_37 = arith.constant dense<0.000000e+00> : vector<80x16xf32>
    %41 = tpu.matmul %38, %40, %cst_37 {dimension_numbers = #tpu.dot_dimension_numbers<[1], [0], [0], [1], [0, 0, 1, 1], [], []>} : vector<80x32xbf16>, vector<32x16xbf16>, vector<80x16xf32> -> vector<80x16xf32>
    %42 = arith.addf %36, %41 : vector<80x16xf32>
    %c0_38 = arith.constant 0 : index
    %c21 = arith.constant 21 : index
    %c0_39 = arith.constant 0 : index
    %43 = vector.load %arg1[%c0_38, %c21, %c0_39] : memref<1x110x32xbf16, #tpu.memory_space<vmem>>, vector<1x80x32xbf16>
    %44 = vector.shape_cast %43 : vector<1x80x32xbf16> to vector<80x32xbf16>
    %c7 = arith.constant 7 : index
    %c0_40 = arith.constant 0 : index
    %c0_41 = arith.constant 0 : index
    %45 = vector.load %arg2[%c7, %c0_40, %c0_41] : memref<9x32x16xbf16, #tpu.memory_space<vmem>>, vector<1x32x16xbf16>
    %46 = vector.shape_cast %45 : vector<1x32x16xbf16> to vector<32x16xbf16>
    %cst_42 = arith.constant dense<0.000000e+00> : vector<80x16xf32>
    %47 = tpu.matmul %44, %46, %cst_42 {dimension_numbers = #tpu.dot_dimension_numbers<[1], [0], [0], [1], [0, 0, 1, 1], [], []>} : vector<80x32xbf16>, vector<32x16xbf16>, vector<80x16xf32> -> vector<80x16xf32>
    %48 = arith.addf %42, %47 : vector<80x16xf32>
    %c0_43 = arith.constant 0 : index
    %c22 = arith.constant 22 : index
    %c0_44 = arith.constant 0 : index
    %49 = vector.load %arg1[%c0_43, %c22, %c0_44] : memref<1x110x32xbf16, #tpu.memory_space<vmem>>, vector<1x80x32xbf16>
    %50 = vector.shape_cast %49 : vector<1x80x32xbf16> to vector<80x32xbf16>
    %c8 = arith.constant 8 : index
    %c0_45 = arith.constant 0 : index
    %c0_46 = arith.constant 0 : index
    %51 = vector.load %arg2[%c8, %c0_45, %c0_46] : memref<9x32x16xbf16, #tpu.memory_space<vmem>>, vector<1x32x16xbf16>
    %52 = vector.shape_cast %51 : vector<1x32x16xbf16> to vector<32x16xbf16>
    %cst_47 = arith.constant dense<0.000000e+00> : vector<80x16xf32>
    %53 = tpu.matmul %50, %52, %cst_47 {dimension_numbers = #tpu.dot_dimension_numbers<[1], [0], [0], [1], [0, 0, 1, 1], [], []>} : vector<80x32xbf16>, vector<32x16xbf16>, vector<80x16xf32> -> vector<80x16xf32>
    %54 = arith.addf %48, %53 : vector<80x16xf32>
    %c0_48 = arith.constant 0 : index
    %c0_49 = arith.constant 0 : index
    %55 = vector.load %arg3[%c0_48, %c0_49] : memref<1x16xf32, #tpu.memory_space<vmem>>, vector<1x16xf32>
    %56 = vector.broadcast %55 : vector<1x16xf32> to vector<80x16xf32>
    %57 = arith.addf %54, %56 : vector<80x16xf32>
    %cst_50 = arith.constant 0.000000e+00 : f32
    %58 = vector.broadcast %cst_50 : f32 to vector<80x16xf32>
    %59 = arith.maximumf %57, %58 : vector<80x16xf32>
    %60 = arith.truncf %59 : vector<80x16xf32> to vector<80x16xbf16>
    %c0_51 = arith.constant 0 : index
    %c0_52 = arith.constant 0 : index
    %c0_53 = arith.constant 0 : index
    %61 = vector.load %arg4[%c0_51, %c0_52, %c0_53] : memref<1x80x16xbf16, #tpu.memory_space<vmem>>, vector<1x80x16xbf16>
    %62 = vector.shape_cast %61 : vector<1x80x16xbf16> to vector<80x16xbf16>
    %63 = vector.shape_cast %60 : vector<80x16xbf16> to vector<1x80x16xbf16>
    tpu.vector_store %arg4[%c0_51, %c0_52, %c0_53], %63 {strides = array<i32>} : memref<1x80x16xbf16, #tpu.memory_space<vmem>>, vector<1x80x16xbf16>,
    return
  }
  func.func @transform_0(%arg0: i32) -> (i32, i32, i32) {
    %c0_i32 = arith.constant 0 : i32
    %c0_i32_0 = arith.constant 0 : i32
    %c0_i32_1 = arith.constant 0 : i32
    return %arg0, %c0_i32, %c0_i32_0 : i32, i32, i32
  }
  func.func @transform_1(%arg0: i32) -> (i32, i32, i32) {
    %c0_i32 = arith.constant 0 : i32
    %c0_i32_0 = arith.constant 0 : i32
    %c0_i32_1 = arith.constant 0 : i32
    %c0_i32_2 = arith.constant 0 : i32
    return %c0_i32, %c0_i32_0, %c0_i32_1 : i32, i32, i32
  }
  func.func @transform_2(%arg0: i32) -> (i32, i32) {
    %c0_i32 = arith.constant 0 : i32
    %c0_i32_0 = arith.constant 0 : i32
    %c0_i32_1 = arith.constant 0 : i32
    return %c0_i32, %c0_i32_0 : i32, i32
  }
  func.func @transform_3(%arg0: i32) -> (i32, i32, i32) {
    %c0_i32 = arith.constant 0 : i32
    %c0_i32_0 = arith.constant 0 : i32
    %c0_i32_1 = arith.constant 0 : i32
    return %arg0, %c0_i32, %c0_i32_0 : i32, i32, i32
  }
}

module attributes {stable_mosaic.version = 11 : i64} {
  func.func @tapconv_kernel(%arg0: i32, %arg1: memref<1x342x4xbf16, #tpu.memory_space<vmem>>, %arg2: memref<9x4x16xbf16, #tpu.memory_space<vmem>>, %arg3: memref<1x16xf32, #tpu.memory_space<vmem>>, %arg4: memref<1x288x16xf32, #tpu.memory_space<vmem>>) attributes {dimension_semantics = [#tpu.dimension_semantics<parallel>], iteration_bounds = array<i64: 2>, scalar_prefetch = 0 : i64, scratch_operands = 0 : i64, tpu.core_type = #tpu.core_type<tc>, window_params = [{transform_indices = @transform_0, window_bounds = array<i64: 1, 342, 4>}, {pipeline_mode = #tpu.pipeline_mode<synchronous>, transform_indices = @transform_1, window_bounds = array<i64: 9, 4, 16>}, {pipeline_mode = #tpu.pipeline_mode<synchronous>, transform_indices = @transform_2, window_bounds = array<i64: 1, 16>}, {transform_indices = @transform_3, window_bounds = array<i64: 1, 288, 16>}]} {
    %cst = arith.constant 0.000000e+00 : f32
    %0 = vector.broadcast %cst : f32 to vector<288x16xf32>
    %c0 = arith.constant 0 : index
    %c0_0 = arith.constant 0 : index
    %c0_1 = arith.constant 0 : index
    %1 = vector.load %arg1[%c0, %c0_0, %c0_1] : memref<1x342x4xbf16, #tpu.memory_space<vmem>>, vector<1x288x4xbf16>
    %2 = vector.shape_cast %1 : vector<1x288x4xbf16> to vector<288x4xbf16>
    %c0_2 = arith.constant 0 : index
    %c0_3 = arith.constant 0 : index
    %c0_4 = arith.constant 0 : index
    %3 = vector.load %arg2[%c0_2, %c0_3, %c0_4] : memref<9x4x16xbf16, #tpu.memory_space<vmem>>, vector<1x4x16xbf16>
    %4 = vector.shape_cast %3 : vector<1x4x16xbf16> to vector<4x16xbf16>
    %cst_5 = arith.constant dense<0.000000e+00> : vector<288x16xf32>
    %5 = tpu.matmul %2, %4, %cst_5 {dimension_numbers = #tpu.dot_dimension_numbers<[1], [0], [0], [1], [0, 0, 1, 1], [], []>} : vector<288x4xbf16>, vector<4x16xbf16>, vector<288x16xf32> -> vector<288x16xf32>
    %6 = arith.addf %0, %5 : vector<288x16xf32>
    %c0_6 = arith.constant 0 : index
    %c1 = arith.constant 1 : index
    %c0_7 = arith.constant 0 : index
    %7 = vector.load %arg1[%c0_6, %c1, %c0_7] : memref<1x342x4xbf16, #tpu.memory_space<vmem>>, vector<1x288x4xbf16>
    %8 = vector.shape_cast %7 : vector<1x288x4xbf16> to vector<288x4xbf16>
    %c1_8 = arith.constant 1 : index
    %c0_9 = arith.constant 0 : index
    %c0_10 = arith.constant 0 : index
    %9 = vector.load %arg2[%c1_8, %c0_9, %c0_10] : memref<9x4x16xbf16, #tpu.memory_space<vmem>>, vector<1x4x16xbf16>
    %10 = vector.shape_cast %9 : vector<1x4x16xbf16> to vector<4x16xbf16>
    %cst_11 = arith.constant dense<0.000000e+00> : vector<288x16xf32>
    %11 = tpu.matmul %8, %10, %cst_11 {dimension_numbers = #tpu.dot_dimension_numbers<[1], [0], [0], [1], [0, 0, 1, 1], [], []>} : vector<288x4xbf16>, vector<4x16xbf16>, vector<288x16xf32> -> vector<288x16xf32>
    %12 = arith.addf %6, %11 : vector<288x16xf32>
    %c0_12 = arith.constant 0 : index
    %c2 = arith.constant 2 : index
    %c0_13 = arith.constant 0 : index
    %13 = vector.load %arg1[%c0_12, %c2, %c0_13] : memref<1x342x4xbf16, #tpu.memory_space<vmem>>, vector<1x288x4xbf16>
    %14 = vector.shape_cast %13 : vector<1x288x4xbf16> to vector<288x4xbf16>
    %c2_14 = arith.constant 2 : index
    %c0_15 = arith.constant 0 : index
    %c0_16 = arith.constant 0 : index
    %15 = vector.load %arg2[%c2_14, %c0_15, %c0_16] : memref<9x4x16xbf16, #tpu.memory_space<vmem>>, vector<1x4x16xbf16>
    %16 = vector.shape_cast %15 : vector<1x4x16xbf16> to vector<4x16xbf16>
    %cst_17 = arith.constant dense<0.000000e+00> : vector<288x16xf32>
    %17 = tpu.matmul %14, %16, %cst_17 {dimension_numbers = #tpu.dot_dimension_numbers<[1], [0], [0], [1], [0, 0, 1, 1], [], []>} : vector<288x4xbf16>, vector<4x16xbf16>, vector<288x16xf32> -> vector<288x16xf32>
    %18 = arith.addf %12, %17 : vector<288x16xf32>
    %c0_18 = arith.constant 0 : index
    %c18 = arith.constant 18 : index
    %c0_19 = arith.constant 0 : index
    %19 = vector.load %arg1[%c0_18, %c18, %c0_19] : memref<1x342x4xbf16, #tpu.memory_space<vmem>>, vector<1x288x4xbf16>
    %20 = vector.shape_cast %19 : vector<1x288x4xbf16> to vector<288x4xbf16>
    %c3 = arith.constant 3 : index
    %c0_20 = arith.constant 0 : index
    %c0_21 = arith.constant 0 : index
    %21 = vector.load %arg2[%c3, %c0_20, %c0_21] : memref<9x4x16xbf16, #tpu.memory_space<vmem>>, vector<1x4x16xbf16>
    %22 = vector.shape_cast %21 : vector<1x4x16xbf16> to vector<4x16xbf16>
    %cst_22 = arith.constant dense<0.000000e+00> : vector<288x16xf32>
    %23 = tpu.matmul %20, %22, %cst_22 {dimension_numbers = #tpu.dot_dimension_numbers<[1], [0], [0], [1], [0, 0, 1, 1], [], []>} : vector<288x4xbf16>, vector<4x16xbf16>, vector<288x16xf32> -> vector<288x16xf32>
    %24 = arith.addf %18, %23 : vector<288x16xf32>
    %c0_23 = arith.constant 0 : index
    %c19 = arith.constant 19 : index
    %c0_24 = arith.constant 0 : index
    %25 = vector.load %arg1[%c0_23, %c19, %c0_24] : memref<1x342x4xbf16, #tpu.memory_space<vmem>>, vector<1x288x4xbf16>
    %26 = vector.shape_cast %25 : vector<1x288x4xbf16> to vector<288x4xbf16>
    %c4 = arith.constant 4 : index
    %c0_25 = arith.constant 0 : index
    %c0_26 = arith.constant 0 : index
    %27 = vector.load %arg2[%c4, %c0_25, %c0_26] : memref<9x4x16xbf16, #tpu.memory_space<vmem>>, vector<1x4x16xbf16>
    %28 = vector.shape_cast %27 : vector<1x4x16xbf16> to vector<4x16xbf16>
    %cst_27 = arith.constant dense<0.000000e+00> : vector<288x16xf32>
    %29 = tpu.matmul %26, %28, %cst_27 {dimension_numbers = #tpu.dot_dimension_numbers<[1], [0], [0], [1], [0, 0, 1, 1], [], []>} : vector<288x4xbf16>, vector<4x16xbf16>, vector<288x16xf32> -> vector<288x16xf32>
    %30 = arith.addf %24, %29 : vector<288x16xf32>
    %c0_28 = arith.constant 0 : index
    %c20 = arith.constant 20 : index
    %c0_29 = arith.constant 0 : index
    %31 = vector.load %arg1[%c0_28, %c20, %c0_29] : memref<1x342x4xbf16, #tpu.memory_space<vmem>>, vector<1x288x4xbf16>
    %32 = vector.shape_cast %31 : vector<1x288x4xbf16> to vector<288x4xbf16>
    %c5 = arith.constant 5 : index
    %c0_30 = arith.constant 0 : index
    %c0_31 = arith.constant 0 : index
    %33 = vector.load %arg2[%c5, %c0_30, %c0_31] : memref<9x4x16xbf16, #tpu.memory_space<vmem>>, vector<1x4x16xbf16>
    %34 = vector.shape_cast %33 : vector<1x4x16xbf16> to vector<4x16xbf16>
    %cst_32 = arith.constant dense<0.000000e+00> : vector<288x16xf32>
    %35 = tpu.matmul %32, %34, %cst_32 {dimension_numbers = #tpu.dot_dimension_numbers<[1], [0], [0], [1], [0, 0, 1, 1], [], []>} : vector<288x4xbf16>, vector<4x16xbf16>, vector<288x16xf32> -> vector<288x16xf32>
    %36 = arith.addf %30, %35 : vector<288x16xf32>
    %c0_33 = arith.constant 0 : index
    %c36 = arith.constant 36 : index
    %c0_34 = arith.constant 0 : index
    %37 = vector.load %arg1[%c0_33, %c36, %c0_34] : memref<1x342x4xbf16, #tpu.memory_space<vmem>>, vector<1x288x4xbf16>
    %38 = vector.shape_cast %37 : vector<1x288x4xbf16> to vector<288x4xbf16>
    %c6 = arith.constant 6 : index
    %c0_35 = arith.constant 0 : index
    %c0_36 = arith.constant 0 : index
    %39 = vector.load %arg2[%c6, %c0_35, %c0_36] : memref<9x4x16xbf16, #tpu.memory_space<vmem>>, vector<1x4x16xbf16>
    %40 = vector.shape_cast %39 : vector<1x4x16xbf16> to vector<4x16xbf16>
    %cst_37 = arith.constant dense<0.000000e+00> : vector<288x16xf32>
    %41 = tpu.matmul %38, %40, %cst_37 {dimension_numbers = #tpu.dot_dimension_numbers<[1], [0], [0], [1], [0, 0, 1, 1], [], []>} : vector<288x4xbf16>, vector<4x16xbf16>, vector<288x16xf32> -> vector<288x16xf32>
    %42 = arith.addf %36, %41 : vector<288x16xf32>
    %c0_38 = arith.constant 0 : index
    %c37 = arith.constant 37 : index
    %c0_39 = arith.constant 0 : index
    %43 = vector.load %arg1[%c0_38, %c37, %c0_39] : memref<1x342x4xbf16, #tpu.memory_space<vmem>>, vector<1x288x4xbf16>
    %44 = vector.shape_cast %43 : vector<1x288x4xbf16> to vector<288x4xbf16>
    %c7 = arith.constant 7 : index
    %c0_40 = arith.constant 0 : index
    %c0_41 = arith.constant 0 : index
    %45 = vector.load %arg2[%c7, %c0_40, %c0_41] : memref<9x4x16xbf16, #tpu.memory_space<vmem>>, vector<1x4x16xbf16>
    %46 = vector.shape_cast %45 : vector<1x4x16xbf16> to vector<4x16xbf16>
    %cst_42 = arith.constant dense<0.000000e+00> : vector<288x16xf32>
    %47 = tpu.matmul %44, %46, %cst_42 {dimension_numbers = #tpu.dot_dimension_numbers<[1], [0], [0], [1], [0, 0, 1, 1], [], []>} : vector<288x4xbf16>, vector<4x16xbf16>, vector<288x16xf32> -> vector<288x16xf32>
    %48 = arith.addf %42, %47 : vector<288x16xf32>
    %c0_43 = arith.constant 0 : index
    %c38 = arith.constant 38 : index
    %c0_44 = arith.constant 0 : index
    %49 = vector.load %arg1[%c0_43, %c38, %c0_44] : memref<1x342x4xbf16, #tpu.memory_space<vmem>>, vector<1x288x4xbf16>
    %50 = vector.shape_cast %49 : vector<1x288x4xbf16> to vector<288x4xbf16>
    %c8 = arith.constant 8 : index
    %c0_45 = arith.constant 0 : index
    %c0_46 = arith.constant 0 : index
    %51 = vector.load %arg2[%c8, %c0_45, %c0_46] : memref<9x4x16xbf16, #tpu.memory_space<vmem>>, vector<1x4x16xbf16>
    %52 = vector.shape_cast %51 : vector<1x4x16xbf16> to vector<4x16xbf16>
    %cst_47 = arith.constant dense<0.000000e+00> : vector<288x16xf32>
    %53 = tpu.matmul %50, %52, %cst_47 {dimension_numbers = #tpu.dot_dimension_numbers<[1], [0], [0], [1], [0, 0, 1, 1], [], []>} : vector<288x4xbf16>, vector<4x16xbf16>, vector<288x16xf32> -> vector<288x16xf32>
    %54 = arith.addf %48, %53 : vector<288x16xf32>
    %c0_48 = arith.constant 0 : index
    %c0_49 = arith.constant 0 : index
    %55 = vector.load %arg3[%c0_48, %c0_49] : memref<1x16xf32, #tpu.memory_space<vmem>>, vector<1x16xf32>
    %56 = vector.broadcast %55 : vector<1x16xf32> to vector<288x16xf32>
    %57 = arith.addf %54, %56 : vector<288x16xf32>
    %c0_50 = arith.constant 0 : index
    %c0_51 = arith.constant 0 : index
    %c0_52 = arith.constant 0 : index
    %58 = vector.load %arg4[%c0_50, %c0_51, %c0_52] : memref<1x288x16xf32, #tpu.memory_space<vmem>>, vector<1x288x16xf32>
    %59 = vector.shape_cast %58 : vector<1x288x16xf32> to vector<288x16xf32>
    %60 = vector.shape_cast %57 : vector<288x16xf32> to vector<1x288x16xf32>
    tpu.vector_store %arg4[%c0_50, %c0_51, %c0_52], %60 {strides = array<i32>} : memref<1x288x16xf32, #tpu.memory_space<vmem>>, vector<1x288x16xf32>,
    return
  }
  func.func @transform_0(%arg0: i32) -> (i32, i32, i32) {
    %c0_i32 = arith.constant 0 : i32
    %c0_i32_0 = arith.constant 0 : i32
    %c0_i32_1 = arith.constant 0 : i32
    return %arg0, %c0_i32, %c0_i32_0 : i32, i32, i32
  }
  func.func @transform_1(%arg0: i32) -> (i32, i32, i32) {
    %c0_i32 = arith.constant 0 : i32
    %c0_i32_0 = arith.constant 0 : i32
    %c0_i32_1 = arith.constant 0 : i32
    %c0_i32_2 = arith.constant 0 : i32
    return %c0_i32, %c0_i32_0, %c0_i32_1 : i32, i32, i32
  }
  func.func @transform_2(%arg0: i32) -> (i32, i32) {
    %c0_i32 = arith.constant 0 : i32
    %c0_i32_0 = arith.constant 0 : i32
    %c0_i32_1 = arith.constant 0 : i32
    return %c0_i32, %c0_i32_0 : i32, i32
  }
  func.func @transform_3(%arg0: i32) -> (i32, i32, i32) {
    %c0_i32 = arith.constant 0 : i32
    %c0_i32_0 = arith.constant 0 : i32
    %c0_i32_1 = arith.constant 0 : i32
    return %arg0, %c0_i32, %c0_i32_0 : i32, i32, i32
  }
}

</mosaic_0001>

<llo_original>
// kernel: vae_forward.7
$region0: #{vae_forward.7}
  #allocation0 [shape = 'u32[]', space=smem, size = 0x4, offset = 0x4, fixed_abs, tag = 'smem constant byte address 0x4 - core index']
  #allocation1 [shape = 'u32[144,128]{1,0:T(1,128)}', space=vmem, size = 0x12000, scoped, tag = 'internal scratch']
  %s0 = inlined_call_operand.vmem [shape: bf16[2,90,16], index: 0, kind: input, shape index: {}]
  %s1 = inlined_call_operand.vmem [shape: bf16[4,16,32], index: 1, kind: input, shape index: {}]
  %s2 = inlined_call_operand.vmem [shape: f32[1,32], index: 2, kind: input, shape index: {}]
  %s3 = inlined_call_operand.vmem [shape: bf16[2,72,32], index: 3, kind: output, shape index: {}]
  %s4 = sld [smem:[#allocation0]]
  $region45: #{vae_forward.7} parent=0
    _
  %s6 = ssub.s32 1, %s4
  %s7 = scalar_select 0, %s6, %s4
  loop: start=0, step=1, limit=4
  $region2: #{vae_forward.7} parent=0 // loop_pre_header
    _
  $region3: #{vae_forward.7} parent=0 // loop_header
    %s9 = sphi 0, %s13
    %p10 = scmp.ge.s32.totalorder %s9, 4
    %s19 = sphi 0, %s21
    %s22 = sphi 0, %s19
    %s23 = sphi 0, %s22
    %s39 = sphi 0, %s23
    %s43 = sphi 0, %s43
    %s45 = sphi 0, %s43
    %s46 = sphi 0, %s45
    %s60 = sphi 0, %s46
    %s64 = sphi 0, %s64
    %s66 = sphi 0, %s64
    %s67 = sphi 0, %s66
    %s81 = sphi 0, %s67
    %s87 = sphi 0, %s89
    %s90 = sphi 0, %s87
    %s91 = sphi 0, %s90
    %s107 = sphi 0, %s91
  $region4: #{vae_forward.7} parent=0 // loop_header_branch
    %12 = sbr.rel (%p10) target = $region8
  $region5: #{vae_forward.7} parent=0 // loop_body
    %s14 = ssub.s32 %s9, 1
    %s15 = ssub.s32 %s9, 2
    %s16 = sadd.s32 %s9, 1
    %s17 = ssub.s32 %s9, %s16
    %p18 = scmp.eq.s32.totalorder %s17, 0
    %s20 = sadd.s32 %s19, 1
    %s21 = scalar_select %p18, %s19, %s20
    %p24 = pneg %p18
    %p25 = scmp.eq.s32.totalorder %s9, 1
    %p26 = por %p24, %p25
    %p27 = scmp.ne.s32.totalorder %s19, %s22
    %p28 = scmp.eq.s32.totalorder %s9, 0
    %p29 = por %p27, %p28
    %p30 = scmp.ne.s32.totalorder %s19, %s22
    %p31 = scmp.eq.s32.totalorder %s14, 1
    %p32 = por %p30, %p31
    %p33 = scmp.ne.s32.totalorder %s22, %s23
    %p34 = scmp.eq.s32.totalorder %s14, 0
    %p35 = por %p33, %p34
    %p36 = scmp.ne.s32.totalorder %s22, %s23
    %p37 = scmp.eq.s32.totalorder %s15, 1
    %p38 = por %p36, %p37
    %p40 = scmp.ne.s32.totalorder %s23, %s39
    %p41 = scmp.eq.s32.totalorder %s15, 0
    %p42 = por %p40, %p41
    %s44 = sadd.s32 %s43, 1
    %p47 = scmp.eq.s32.totalorder %s9, 1
    %p48 = scmp.ne.s32.totalorder %s43, %s45
    %p49 = scmp.eq.s32.totalorder %s9, 0
    %p50 = por %p48, %p49
    %p51 = scmp.ne.s32.totalorder %s43, %s45
    %p52 = scmp.eq.s32.totalorder %s14, 1
    %p53 = por %p51, %p52
    %p54 = scmp.ne.s32.totalorder %s45, %s46
    %p55 = scmp.eq.s32.totalorder %s14, 0
    %p56 = por %p54, %p55
    %p57 = scmp.ne.s32.totalorder %s45, %s46
    %p58 = scmp.eq.s32.totalorder %s15, 1
    %p59 = por %p57, %p58
    %p61 = scmp.ne.s32.totalorder %s46, %s60
    %p62 = scmp.eq.s32.totalorder %s15, 0
    %p63 = por %p61, %p62
    %s65 = sadd.s32 %s64, 1
    %p68 = scmp.eq.s32.totalorder %s9, 1
    %p69 = scmp.ne.s32.totalorder %s64, %s66
    %p70 = scmp.eq.s32.totalorder %s9, 0
    %p71 = por %p69, %p70
    %p72 = scmp.ne.s32.totalorder %s64, %s66
    %p73 = scmp.eq.s32.totalorder %s14, 1
    %p74 = por %p72, %p73
    %p75 = scmp.ne.s32.totalorder %s66, %s67
    %p76 = scmp.eq.s32.totalorder %s14, 0
    %p77 = por %p75, %p76
    %p78 = scmp.ne.s32.totalorder %s66, %s67
    %p79 = scmp.eq.s32.totalorder %s15, 1
    %p80 = por %p78, %p79
    %p82 = scmp.ne.s32.totalorder %s67, %s81
    %p83 = scmp.eq.s32.totalorder %s15, 0
    %p84 = por %p82, %p83
    %s85 = ssub.s32 %s9, %s16
    %p86 = scmp.eq.s32.totalorder %s85, 0
    %s88 = sadd.s32 %s87, 1
    %s89 = scalar_select %p86, %s87, %s88
    %p92 = pneg %p86
    %p93 = scmp.eq.s32.totalorder %s9, 1
    %p94 = por %p92, %p93
    %p95 = scmp.ne.s32.totalorder %s87, %s90
    %p96 = scmp.eq.s32.totalorder %s9, 0
    %p97 = por %p95, %p96
    %p98 = scmp.ne.s32.totalorder %s87, %s90
    %p99 = scmp.eq.s32.totalorder %s14, 1
    %p100 = por %p98, %p99
    %p101 = scmp.ne.s32.totalorder %s90, %s91
    %p102 = scmp.eq.s32.totalorder %s14, 0
    %p103 = por %p101, %p102
    %p104 = scmp.ne.s32.totalorder %s90, %s91
    %p105 = scmp.eq.s32.totalorder %s15, 1
    %p106 = por %p104, %p105
    %p108 = scmp.ne.s32.totalorder %s91, %s107
    %p109 = scmp.eq.s32.totalorder %s15, 0
    %p110 = por %p108, %p109
    %p111 = scmp.le.s32.totalorder 1, %s9
    %p112 = scmp.lt.s32.totalorder %s9, 3
    %p113 = pnand %p111, %p112
    %p114 = pneg %p113
    // Predicated region
    $region9: #{vae_forward.7} parent=5 // pred_check
      _
    $region10: #{vae_forward.7} parent=5 // pred_check_branch
      %116 = sbr.rel (%p113) target = $region12
    $region11: #{vae_forward.7} parent=5 // pred_region
      %s117 = ssub.s32 %s9, 1
      // Predicated region
      $region13: #{vae_forward.7} parent=11 // pred_check
        %p118 = pneg %p56
      $region14: #{vae_forward.7} parent=11 // pred_check_branch
        %120 = sbr.rel (%p118) target = $region16
      $region15: #{vae_forward.7} parent=11 // pred_region
        _
      $region16: #{vae_forward.7} parent=11 // pred_fallthru
        _
      // Predicated region
      $region17: #{vae_forward.7} parent=11 // pred_check
        %p121 = pneg %p77
      $region18: #{vae_forward.7} parent=11 // pred_check_branch
        %123 = sbr.rel (%p121) target = $region20
      $region19: #{vae_forward.7} parent=11 // pred_region
        _
      $region20: #{vae_forward.7} parent=11 // pred_fallthru
        _
    $region12: #{vae_forward.7} parent=5 // pred_fallthru
      _
    %p124 = scmp.lt.s32.totalorder %s9, 2
    // Predicated region
    $region21: #{vae_forward.7} parent=5 // pred_check
      %p125 = pneg %p124
    $region22: #{vae_forward.7} parent=5 // pred_check_branch
      %127 = sbr.rel (%p125) target = $region24
    $region23: #{vae_forward.7} parent=5 // pred_region
      // Predicated region
      $region25: #{vae_forward.7} parent=23 // pred_check
        %p128 = pneg %p29
      $region26: #{vae_forward.7} parent=23 // pred_check_branch
        %130 = sbr.rel (%p128) target = $region28
      $region27: #{vae_forward.7} parent=23 // pred_region
        %p131 = scmp.lt.s32.totalorder %s9, 1
        %s132 = scalar_select %p131, %s9, 1
        %s133 = smul.addr %s132, 12
        %s134 = smul.addr %s133, 4
        %s135 = scalar_lea.vmem %s0, %s134
      $region28: #{vae_forward.7} parent=23 // pred_fallthru
        _
    $region24: #{vae_forward.7} parent=5 // pred_fallthru
      _
    %p136 = scmp.le.s32.totalorder 1, %s9
    %p137 = scmp.lt.s32.totalorder %s9, 3
    %p138 = pnand %p136, %p137
    %p139 = pneg %p138
    // Predicated region
    $region29: #{vae_forward.7} parent=5 // pred_check
      _
    $region30: #{vae_forward.7} parent=5 // pred_check_branch
      %141 = sbr.rel (%p138) target = $region32
    $region31: #{vae_forward.7} parent=5 // pred_region
      %s142 = ssub.s32 %s9, 1
      %p143 = scmp.lt.s32.totalorder %s14, 1
      %s144 = scalar_select %p143, %s14, 1
      %s145 = smul.addr %s144, 12
      %s146 = smul.addr %s145, 4
      %s147 = scalar_lea.vmem %s0, %s146
      %p148 = pneg %p35
      %p149 = pneg %p32
      %p150 = pneg %p56
      %p151 = pneg %p53
      %p152 = pneg %p77
      %p153 = pneg %p74
      %p154 = pneg %p103
      %p155 = pneg %p100
      %p156 = scmp.lt.s32.totalorder %s14, 1
      %s157 = scalar_select %p156, %s14, 1
      %s158 = smul.addr %s157, 9
      %s159 = smul.addr %s158, 4
      %s160 = scalar_lea.vmem %s3, %s159
      %p161 = scmp.lt.s32.totalorder %s14, 1
      %s162 = scalar_select %p161, %s14, 1
      %s163 = smul.addr %s162, 12
      %s164 = smul.addr %s163, 4
      %s165 = scalar_lea.vmem %s0, %s164
      %p166 = scmp.lt.s32.totalorder %s14, 1
      %s167 = scalar_select %p166, %s14, 1
      %s168 = smul.addr %s167, 9
      %s169 = smul.addr %s168, 4
      %s170 = scalar_lea.vmem %s3, %s169
      %v172 = vld [vmem:[%s165] sm:$0xf]
      %v173 = vld [vmem:[%s165 + $0x4] sm:$0xf]
      %v174 = vld [vmem:[%s165 + $0x8] sm:$0xf]
      %v175 = vld [vmem:[%s165 + $0xc] sm:$0xf]
      %v176 = vld [vmem:[%s165 + $0x10] sm:$0xf]
      %v177 = vld [vmem:[%s165 + $0x14] sm:$0xf]
      %v178 = vld [vmem:[%s165 + $0x18] sm:$0xf]
      %v179 = vld [vmem:[%s165 + $0x1c] sm:$0xf]
      %v180 = vld [vmem:[%s165 + $0x20] sm:$0xf]
      %v181 = vld [vmem:[%s1] sm:$0xf]
      %v182 = vld [vmem:[%s1 + $0x4] sm:$0xf]
      %v183 = vld [vmem:[%s165 + $0x24] sm:$0x1]
      %s184 = scalar_lea.vmem %s1, 8
      %v185 = vld [vmem:[%s184] sm:$0xf]
      %v186 = vld [vmem:[%s184 + $0x4] sm:$0xf]
      %v197 = vunpack.c.l.b16 %v172
      %v198 = vunpack.c.l.b16 %v173
      %v199 = vunpack.c.l.b16 %v174
      %v200 = vunpack.c.l.b16 %v175
      %v201 = vunpack.c.l.b16 %v176
      %v202 = vunpack.c.l.b16 %v177
      %v203 = vunpack.c.l.b16 %v178
      %v204 = vunpack.c.l.b16 %v179
      %v205 = vunpack.c.l.b16 %v180
      %v206 = vunpack.c.l.b16 %v183
      %v207 = vpack.c.b16 %v198, %v197
      %v208 = vpack.c.b16 %v200, %v199
      %v209 = vpack.c.b16 %v202, %v201
      %v210 = vpack.c.b16 %v204, %v203
      %v211 = vpack.c.b16 %v206, %v205
      %vm212 = vsmask.f32 7424
      %v214 = vshrl.u32 %v207, 16
      %v216 = vshll.u32 %v207, 16
      %v218 = vrot.slane %v216, 1
      %v219 = vor.u32 %v214, %v218
      %v221 = vshll.u32 %v208, 16
      %v223 = vrot.slane %v221, 1
      %v224 = vsel %vm212, %v219, %v223
      %v225 = vshrl.u32 %v208, 16
      %v227 = vor.u32 %v225, %v223
      %v229 = vshll.u32 %v209, 16
      %v231 = vrot.slane %v229, 1
      %v232 = vsel %vm212, %v227, %v231
      %v233 = vshrl.u32 %v209, 16
      %v235 = vor.u32 %v233, %v231
      %v237 = vshll.u32 %v210, 16
      %v239 = vrot.slane %v237, 1
      %v240 = vsel %vm212, %v235, %v239
      %v241 = vshrl.u32 %v210, 16
      %v243 = vor.u32 %v241, %v239
      %v245 = vshll.u32 %v211, 16
      %v247 = vrot.slane %v245, 1
      %v248 = vsel %vm212, %v243, %v247
      %v249 = vshrl.u32 %v211, 16
      %v251 = vor.u32 %v249, %v247
      %v254 = vunpack.c.l.b16 %v185
      %v255 = vunpack.c.l.b16 %v186
      %v256 = vpack.c.b16 %v255, %v254
      %vm258 = vcmask 130048
      %v260 = vsel %vm258, %v224, 0
      %v263 = vsel %vm258, %v232, 0
      %v266 = vsel %vm258, %v240, 0
      %v269 = vsel %vm258, %v248, 0
      %v272 = vsel %vm258, %v251, 0
      %274 = vmatprep.subr.bf16.mxu0 0
      %275 = vmatpush1.bf16.msra.mxu0 %v256
      %276 = vmatprep.subr.bf16.mxu0 0
      %277 = vmatpush1.bf16.msra.mxu0 0
      %278 = vmatprep.subr.bf16.mxu0 0
      %279 = vmatpush1.bf16.msra.mxu0 0
      %280 = vmatprep.subr.bf16.mxu0 0
      %281 = vmatpush1.bf16.msra.mxu0 0
      %282 = vmatprep.subr.bf16.mxu0 0
      %283 = vmatpush1.bf16.msra.mxu0 0
      %284 = vmatprep.subr.bf16.mxu0 0
      %285 = vmatpush1.bf16.msra.mxu0 0
      %286 = vmatprep.subr.bf16.mxu0 0
      %287 = vmatpush1.bf16.msra.mxu0 0
      %288 = vmatprep.subr.bf16.mxu0 0
      %289 = vmatpush1.bf16.msra.mxu0 0
      %290 = vmatprep.subr.bf16.mxu0 0
      %291 = vmatpush1.bf16.msra.mxu0 0
      %292 = vmatprep.subr.bf16.mxu0 0
      %293 = vmatpush1.bf16.msra.mxu0 0
      %294 = vmatprep.subr.bf16.mxu0 0
      %295 = vmatpush1.bf16.msra.mxu0 0
      %296 = vmatprep.subr.bf16.mxu0 0
      %297 = vmatpush1.bf16.msra.mxu0 0
      %298 = vmatprep.subr.bf16.mxu0 0
      %299 = vmatpush1.bf16.msra.mxu0 0
      %300 = vmatprep.subr.bf16.mxu0 0
      %301 = vmatpush1.bf16.msra.mxu0 0
      %302 = vmatprep.subr.bf16.mxu0 0
      %303 = vmatpush1.bf16.msra.mxu0 0
      %304 = vmatprep.subr.bf16.mxu0 0
      %305 = vmatpush1.bf16.msra.mxu0 0
      %306 = vmatprep.mubr.bf16.mxu0 0
      %307 = vmatmul.mubr.bf16.gmra.mrb[0].mxu0 %v260
      %v308 = vpop.f32.mrb[0].mxu0
      %v309 = vadd.f32 0.0, %v308
      %v310 = vpop.f32.mrb[0].mxu0
      %v311 = vpop.f32.mrb[0].mxu0
      %v312 = vadd.f32 0.0, %v311
      %v313 = vpop.f32.mrb[0].mxu0
      %314 = vmatprep.mubr.bf16.mxu0 0
      %315 = vmatmul.mubr.bf16.gmra.mrb[0].mxu0 %v263
      %v316 = vpop.f32.mrb[0].mxu0
      %v317 = vadd.f32 0.0, %v316
      %v318 = vpop.f32.mrb[0].mxu0
      %v319 = vpop.f32.mrb[0].mxu0
      %v320 = vadd.f32 0.0, %v319
      %v321 = vpop.f32.mrb[0].mxu0
      %322 = vmatprep.mubr.bf16.mxu0 0
      %323 = vmatmul.mubr.bf16.gmra.mrb[0].mxu0 %v266
      %v324 = vpop.f32.mrb[0].mxu0
      %v325 = vadd.f32 0.0, %v324
      %v326 = vpop.f32.mrb[0].mxu0
      %v327 = vpop.f32.mrb[0].mxu0
      %v328 = vadd.f32 0.0, %v327
      %v329 = vpop.f32.mrb[0].mxu0
      %330 = vmatprep.mubr.bf16.mxu0 0
      %331 = vmatmul.mubr.bf16.gmra.mrb[0].mxu0 %v269
      %v332 = vpop.f32.mrb[0].mxu0
      %v333 = vadd.f32 0.0, %v332
      %v334 = vpop.f32.mrb[0].mxu0
      %v335 = vpop.f32.mrb[0].mxu0
      %v336 = vadd.f32 0.0, %v335
      %v337 = vpop.f32.mrb[0].mxu0
      %338 = vmatprep.mubr.bf16.mxu0 0
      %339 = vmatmul.mubr.bf16.gmra.mrb[0].mxu0 %v272
      %v340 = vpop.f32.mrb[0].mxu0
      %v341 = vadd.f32 0.0, %v340
      %v342 = vpop.f32.mrb[0].mxu0
      %v343 = vpop.f32.mrb[0].mxu0
      %v344 = vpop.f32.mrb[0].mxu0
      %345 = vdwg.mxu0
      %v346 = vpack.c.b16 %v205, %v205
      %v349 = vunpack.c.l.b16 %v181
      %v350 = vunpack.c.l.b16 %v182
      %v351 = vpack.c.b16 %v350, %v349
      %v353 = vsel %vm258, %v207, 0
      %v355 = vsel %vm258, %v208, 0
      %v357 = vsel %vm258, %v209, 0
      %v359 = vsel %vm258, %v210, 0
      %v362 = vsel %vm258, %v346, 0
      %364 = vmatprep.subr.bf16.mxu0 0
      %365 = vmatpush1.bf16.msra.mxu0 %v351
      %366 = vmatprep.subr.bf16.mxu0 0
      %367 = vmatpush1.bf16.msra.mxu0 0
      %368 = vmatprep.subr.bf16.mxu0 0
      %369 = vmatpush1.bf16.msra.mxu0 0
      %370 = vmatprep.subr.bf16.mxu0 0
      %371 = vmatpush1.bf16.msra.mxu0 0
      %372 = vmatprep.subr.bf16.mxu0 0
      %373 = vmatpush1.bf16.msra.mxu0 0
      %374 = vmatprep.subr.bf16.mxu0 0
      %375 = vmatpush1.bf16.msra.mxu0 0
      %376 = vmatprep.subr.bf16.mxu0 0
      %377 = vmatpush1.bf16.msra.mxu0 0
      %378 = vmatprep.subr.bf16.mxu0 0
      %379 = vmatpush1.bf16.msra.mxu0 0
      %380 = vmatprep.subr.bf16.mxu0 0
      %381 = vmatpush1.bf16.msra.mxu0 0
      %382 = vmatprep.subr.bf16.mxu0 0
      %383 = vmatpush1.bf16.msra.mxu0 0
      %384 = vmatprep.subr.bf16.mxu0 0
      %385 = vmatpush1.bf16.msra.mxu0 0
      %386 = vmatprep.subr.bf16.mxu0 0
      %387 = vmatpush1.bf16.msra.mxu0 0
      %388 = vmatprep.subr.bf16.mxu0 0
      %389 = vmatpush1.bf16.msra.mxu0 0
      %390 = vmatprep.subr.bf16.mxu0 0
      %391 = vmatpush1.bf16.msra.mxu0 0
      %392 = vmatprep.subr.bf16.mxu0 0
      %393 = vmatpush1.bf16.msra.mxu0 0
      %394 = vmatprep.subr.bf16.mxu0 0
      %395 = vmatpush1.bf16.msra.mxu0 0
      %396 = vmatprep.mubr.bf16.mxu0 0
      %397 = vmatmul.mubr.bf16.gmra.mrb[0].mxu0 %v353
      %v398 = vpop.f32.mrb[0].mxu0
      %v399 = vadd.f32 %v309, %v398
      %v400 = vpop.f32.mrb[0].mxu0
      %v401 = vpop.f32.mrb[0].mxu0
      %v402 = vadd.f32 %v312, %v401
      %v403 = vpop.f32.mrb[0].mxu0
      %404 = vmatprep.mubr.bf16.mxu0 0
      %405 = vmatmul.mubr.bf16.gmra.mrb[0].mxu0 %v355
      %v406 = vpop.f32.mrb[0].mxu0
      %v407 = vadd.f32 %v317, %v406
      %v408 = vpop.f32.mrb[0].mxu0
      %v409 = vpop.f32.mrb[0].mxu0
      %v410 = vadd.f32 %v320, %v409
      %v411 = vpop.f32.mrb[0].mxu0
      %412 = vmatprep.mubr.bf16.mxu0 0
      %413 = vmatmul.mubr.bf16.gmra.mrb[0].mxu0 %v357
      %v414 = vpop.f32.mrb[0].mxu0
      %v415 = vadd.f32 %v325, %v414
      %v416 = vpop.f32.mrb[0].mxu0
      %v417 = vpop.f32.mrb[0].mxu0
      %v418 = vadd.f32 %v328, %v417
      %v419 = vpop.f32.mrb[0].mxu0
      %420 = vmatprep.mubr.bf16.mxu0 0
      %421 = vmatmul.mubr.bf16.gmra.mrb[0].mxu0 %v359
      %v422 = vpop.f32.mrb[0].mxu0
      %v423 = vadd.f32 %v333, %v422
      %v424 = vpop.f32.mrb[0].mxu0
      %v425 = vpop.f32.mrb[0].mxu0
      %v426 = vadd.f32 %v336, %v425
      %v427 = vpop.f32.mrb[0].mxu0
      %428 = vmatprep.mubr.bf16.mxu0 0
      %429 = vmatmul.mubr.bf16.gmra.mrb[0].mxu0 %v362
      %v430 = vpop.f32.mrb[0].mxu0
      %v431 = vadd.f32 %v341, %v430
      %v432 = vpop.f32.mrb[0].mxu0
      %v433 = vpop.f32.mrb[0].mxu0
      %v434 = vpop.f32.mrb[0].mxu0
      %435 = vdwg.mxu0
      %v436 = vld [vmem:[%s165 + $0x4] sm:$0xf]
      %v437 = vld [vmem:[%s165 + $0x8] sm:$0xf]
      %v438 = vld [vmem:[%s165 + $0xc] sm:$0xf]
      %v439 = vld [vmem:[%s165 + $0x10] sm:$0xf]
      %v440 = vld [vmem:[%s165 + $0x14] sm:$0xf]
      %v441 = vld [vmem:[%s165 + $0x18] sm:$0xf]
      %v442 = vld [vmem:[%s165 + $0x1c] sm:$0xf]
      %v443 = vld [vmem:[%s165 + $0x20] sm:$0xf]
      %v444 = vld [vmem:[%s165 + $0x24] sm:$0xf]
      %v445 = vld [vmem:[%s165 + $0x28] sm:$0x1]
      %s446 = scalar_lea.vmem %s1, 16
      %v447 = vld [vmem:[%s446] sm:$0xf]
      %v448 = vld [vmem:[%s446 + $0x4] sm:$0xf]
      %v459 = vunpack.c.l.b16 %v436
      %v460 = vunpack.c.l.b16 %v437
      %v461 = vunpack.c.l.b16 %v438
      %v462 = vunpack.c.l.b16 %v439
      %v463 = vunpack.c.l.b16 %v440
      %v464 = vunpack.c.l.b16 %v441
      %v465 = vunpack.c.l.b16 %v442
      %v466 = vunpack.c.l.b16 %v443
      %v467 = vunpack.c.l.b16 %v444
      %v468 = vunpack.c.l.b16 %v445
      %v469 = vpack.c.b16 %v460, %v459
      %v470 = vpack.c.b16 %v462, %v461
      %v471 = vpack.c.b16 %v464, %v463
      %v472 = vpack.c.b16 %v466, %v465
      %v473 = vpack.c.b16 %v468, %v467
      %v475 = vshrl.u32 %v469, 16
      %v477 = vshll.u32 %v469, 16
      %v479 = vrot.slane %v477, 1
      %v480 = vor.u32 %v475, %v479
      %v482 = vshll.u32 %v470, 16
      %v484 = vrot.slane %v482, 1
      %v485 = vsel %vm212, %v480, %v484
      %v486 = vshrl.u32 %v470, 16
      %v488 = vor.u32 %v486, %v484
      %v490 = vshll.u32 %v471, 16
      %v492 = vrot.slane %v490, 1
      %v493 = vsel %vm212, %v488, %v492
      %v494 = vshrl.u32 %v471, 16
      %v496 = vor.u32 %v494, %v492
      %v498 = vshll.u32 %v472, 16
      %v500 = vrot.slane %v498, 1
      %v501 = vsel %vm212, %v496, %v500
      %v502 = vshrl.u32 %v472, 16
      %v504 = vor.u32 %v502, %v500
      %v506 = vshll.u32 %v473, 16
      %v508 = vrot.slane %v506, 1
      %v509 = vsel %vm212, %v504, %v508
      %v510 = vshrl.u32 %v473, 16
      %v512 = vor.u32 %v510, %v508
      %v515 = vunpack.c.l.b16 %v447
      %v516 = vunpack.c.l.b16 %v448
      %v517 = vpack.c.b16 %v516, %v515
      %v520 = vsel %vm258, %v485, 0
      %v523 = vsel %vm258, %v493, 0
      %v526 = vsel %vm258, %v501, 0
      %v529 = vsel %vm258, %v509, 0
      %v532 = vsel %vm258, %v512, 0
      %534 = vmatprep.subr.bf16.mxu0 0
      %535 = vmatpush1.bf16.msra.mxu0 %v517
      %536 = vmatprep.subr.bf16.mxu0 0
      %537 = vmatpush1.bf16.msra.mxu0 0
      %538 = vmatprep.subr.bf16.mxu0 0
      %539 = vmatpush1.bf16.msra.mxu0 0
      %540 = vmatprep.subr.bf16.mxu0 0
      %541 = vmatpush1.bf16.msra.mxu0 0
      %542 = vmatprep.subr.bf16.mxu0 0
      %543 = vmatpush1.bf16.msra.mxu0 0
      %544 = vmatprep.subr.bf16.mxu0 0
      %545 = vmatpush1.bf16.msra.mxu0 0
      %546 = vmatprep.subr.bf16.mxu0 0
      %547 = vmatpush1.bf16.msra.mxu0 0
      %548 = vmatprep.subr.bf16.mxu0 0
      %549 = vmatpush1.bf16.msra.mxu0 0
      %550 = vmatprep.subr.bf16.mxu0 0
      %551 = vmatpush1.bf16.msra.mxu0 0
      %552 = vmatprep.subr.bf16.mxu0 0
      %553 = vmatpush1.bf16.msra.mxu0 0
      %554 = vmatprep.subr.bf16.mxu0 0
      %555 = vmatpush1.bf16.msra.mxu0 0
      %556 = vmatprep.subr.bf16.mxu0 0
      %557 = vmatpush1.bf16.msra.mxu0 0
      %558 = vmatprep.subr.bf16.mxu0 0
      %559 = vmatpush1.bf16.msra.mxu0 0
      %560 = vmatprep.subr.bf16.mxu0 0
      %561 = vmatpush1.bf16.msra.mxu0 0
      %562 = vmatprep.subr.bf16.mxu0 0
      %563 = vmatpush1.bf16.msra.mxu0 0
      %564 = vmatprep.subr.bf16.mxu0 0
      %565 = vmatpush1.bf16.msra.mxu0 0
      %566 = vmatprep.mubr.bf16.mxu0 0
      %567 = vmatmul.mubr.bf16.gmra.mrb[0].mxu0 %v520
      %v568 = vpop.f32.mrb[0].mxu0
      %v569 = vadd.f32 0.0, %v568
      %v570 = vpop.f32.mrb[0].mxu0
      %v571 = vpop.f32.mrb[0].mxu0
      %v572 = vadd.f32 0.0, %v571
      %v573 = vpop.f32.mrb[0].mxu0
      %574 = vmatprep.mubr.bf16.mxu0 0
      %575 = vmatmul.mubr.bf16.gmra.mrb[0].mxu0 %v523
      %v576 = vpop.f32.mrb[0].mxu0
      %v577 = vadd.f32 0.0, %v576
      %v578 = vpop.f32.mrb[0].mxu0
      %v579 = vpop.f32.mrb[0].mxu0
      %v580 = vadd.f32 0.0, %v579
      %v581 = vpop.f32.mrb[0].mxu0
      %582 = vmatprep.mubr.bf16.mxu0 0
      %583 = vmatmul.mubr.bf16.gmra.mrb[0].mxu0 %v526
      %v584 = vpop.f32.mrb[0].mxu0
      %v585 = vadd.f32 0.0, %v584
      %v586 = vpop.f32.mrb[0].mxu0
      %v587 = vpop.f32.mrb[0].mxu0
      %v588 = vadd.f32 0.0, %v587
      %v589 = vpop.f32.mrb[0].mxu0
      %590 = vmatprep.mubr.bf16.mxu0 0
      %591 = vmatmul.mubr.bf16.gmra.mrb[0].mxu0 %v529
      %v592 = vpop.f32.mrb[0].mxu0
      %v593 = vadd.f32 0.0, %v592
      %v594 = vpop.f32.mrb[0].mxu0
      %v595 = vpop.f32.mrb[0].mxu0
      %v596 = vadd.f32 0.0, %v595
      %v597 = vpop.f32.mrb[0].mxu0
      %598 = vmatprep.mubr.bf16.mxu0 0
      %599 = vmatmul.mubr.bf16.gmra.mrb[0].mxu0 %v532
      %v600 = vpop.f32.mrb[0].mxu0
      %v601 = vadd.f32 0.0, %v600
      %v602 = vpop.f32.mrb[0].mxu0
      %v603 = vpop.f32.mrb[0].mxu0
      %v604 = vpop.f32.mrb[0].mxu0
      %605 = vdwg.mxu0
      %v606 = vadd.f32 %v399, %v569
      %v607 = vadd.f32 %v402, %v572
      %v608 = vadd.f32 %v407, %v577
      %v609 = vadd.f32 %v410, %v580
      %v610 = vadd.f32 %v415, %v585
      %v611 = vadd.f32 %v418, %v588
      %v612 = vadd.f32 %v423, %v593
      %v613 = vadd.f32 %v426, %v596
      %v614 = vadd.f32 %v431, %v601
      %v615 = vld [vmem:[%s165 + $0x4] sm:$0xe]
      %s616 = scalar_lea.vmem %s1, 24
      %v617 = vld [vmem:[%s616] sm:$0xf]
      %v618 = vld [vmem:[%s616 + $0x4] sm:$0xf]
      %v620 = vunpack.c.l.b16 %v615
      %v621 = vpack.c.b16 %v460, %v620
      %vm622 = vcmask 1046528
      %v623 = vrot.slane %v621, 1
      %v624 = vrot.slane %v470, 1
      %v625 = vsel %vm622, %v623, %v624
      %v626 = vrot.slane %v471, 1
      %v627 = vsel %vm622, %v624, %v626
      %v628 = vrot.slane %v472, 1
      %v629 = vsel %vm622, %v626, %v628
      %v630 = vrot.slane %v473, 1
      %v631 = vsel %vm622, %v628, %v630
      %v634 = vunpack.c.l.b16 %v617
      %v635 = vunpack.c.l.b16 %v618
      %v636 = vpack.c.b16 %v635, %v634
      %v639 = vsel %vm258, %v625, 0
      %v642 = vsel %vm258, %v627, 0
      %v645 = vsel %vm258, %v629, 0
      %v648 = vsel %vm258, %v631, 0
      %v651 = vsel %vm258, %v630, 0
      %653 = vmatprep.subr.bf16.mxu0 0
      %654 = vmatpush1.bf16.msra.mxu0 %v636
      %655 = vmatprep.subr.bf16.mxu0 0
      %656 = vmatpush1.bf16.msra.mxu0 0
      %657 = vmatprep.subr.bf16.mxu0 0
      %658 = vmatpush1.bf16.msra.mxu0 0
      %659 = vmatprep.subr.bf16.mxu0 0
      %660 = vmatpush1.bf16.msra.mxu0 0
      %661 = vmatprep.subr.bf16.mxu0 0
      %662 = vmatpush1.bf16.msra.mxu0 0
      %663 = vmatprep.subr.bf16.mxu0 0
      %664 = vmatpush1.bf16.msra.mxu0 0
      %665 = vmatprep.subr.bf16.mxu0 0
      %666 = vmatpush1.bf16.msra.mxu0 0
      %667 = vmatprep.subr.bf16.mxu0 0
      %668 = vmatpush1.bf16.msra.mxu0 0
      %669 = vmatprep.subr.bf16.mxu0 0
      %670 = vmatpush1.bf16.msra.mxu0 0
      %671 = vmatprep.subr.bf16.mxu0 0
      %672 = vmatpush1.bf16.msra.mxu0 0
      %673 = vmatprep.subr.bf16.mxu0 0
      %674 = vmatpush1.bf16.msra.mxu0 0
      %675 = vmatprep.subr.bf16.mxu0 0
      %676 = vmatpush1.bf16.msra.mxu0 0
      %677 = vmatprep.subr.bf16.mxu0 0
      %678 = vmatpush1.bf16.msra.mxu0 0
      %679 = vmatprep.subr.bf16.mxu0 0
      %680 = vmatpush1.bf16.msra.mxu0 0
      %681 = vmatprep.subr.bf16.mxu0 0
      %682 = vmatpush1.bf16.msra.mxu0 0
      %683 = vmatprep.subr.bf16.mxu0 0
      %684 = vmatpush1.bf16.msra.mxu0 0
      %685 = vmatprep.mubr.bf16.mxu0 0
      %686 = vmatmul.mubr.bf16.gmra.mrb[0].mxu0 %v639
      %v687 = vpop.f32.mrb[0].mxu0
      %v688 = vadd.f32 0.0, %v687
      %v689 = vpop.f32.mrb[0].mxu0
      %v690 = vpop.f32.mrb[0].mxu0
      %v691 = vadd.f32 0.0, %v690
      %v692 = vpop.f32.mrb[0].mxu0
      %693 = vmatprep.mubr.bf16.mxu0 0
      %694 = vmatmul.mubr.bf16.gmra.mrb[0].mxu0 %v642
      %v695 = vpop.f32.mrb[0].mxu0
      %v696 = vadd.f32 0.0, %v695
      %v697 = vpop.f32.mrb[0].mxu0
      %v698 = vpop.f32.mrb[0].mxu0
      %v699 = vadd.f32 0.0, %v698
      %v700 = vpop.f32.mrb[0].mxu0
      %701 = vmatprep.mubr.bf16.mxu0 0
      %702 = vmatmul.mubr.bf16.gmra.mrb[0].mxu0 %v645
      %v703 = vpop.f32.mrb[0].mxu0
      %v704 = vadd.f32 0.0, %v703
      %v705 = vpop.f32.mrb[0].mxu0
      %v706 = vpop.f32.mrb[0].mxu0
      %v707 = vadd.f32 0.0, %v706
      %v708 = vpop.f32.mrb[0].mxu0
      %709 = vmatprep.mubr.bf16.mxu0 0
      %710 = vmatmul.mubr.bf16.gmra.mrb[0].mxu0 %v648
      %v711 = vpop.f32.mrb[0].mxu0
      %v712 = vadd.f32 0.0, %v711
      %v713 = vpop.f32.mrb[0].mxu0
      %v714 = vpop.f32.mrb[0].mxu0
      %v715 = vadd.f32 0.0, %v714
      %v716 = vpop.f32.mrb[0].mxu0
      %717 = vmatprep.mubr.bf16.mxu0 0
      %718 = vmatmul.mubr.bf16.gmra.mrb[0].mxu0 %v651
      %v719 = vpop.f32.mrb[0].mxu0
      %v720 = vadd.f32 0.0, %v719
      %v721 = vpop.f32.mrb[0].mxu0
      %v722 = vpop.f32.mrb[0].mxu0
      %v723 = vpop.f32.mrb[0].mxu0
      %724 = vdwg.mxu0
      %v725 = vadd.f32 %v606, %v688
      %v726 = vadd.f32 %v607, %v691
      %v727 = vadd.f32 %v608, %v696
      %v728 = vadd.f32 %v609, %v699
      %v729 = vadd.f32 %v610, %v704
      %v730 = vadd.f32 %v611, %v707
      %v731 = vadd.f32 %v612, %v712
      %v732 = vadd.f32 %v613, %v715
      %v733 = vadd.f32 %v614, %v720
      %v734 = vld [vmem:[%s2] sm:$0x1]
      %v736 = vlaneseq
      %v737 = vshrl.u32 %v736, 7
      %v738 = vsub.s32 0, %v737
      %v739 = vrot.slane %v734, %v738
      %v741 = vadd.f32 %v725, %v739
      %v742 = vadd.f32 %v726, %v739
      %v743 = vadd.f32 %v727, %v739
      %v744 = vadd.f32 %v728, %v739
      %v745 = vadd.f32 %v729, %v739
      %v746 = vadd.f32 %v730, %v739
      %v747 = vadd.f32 %v731, %v739
      %v748 = vadd.f32 %v732, %v739
      %v749 = vadd.f32 %v733, %v739
      %v750 = vmax.f32 %v741, 0.0
      %v751 = vmax.f32 %v742, 0.0
      %v752 = vmax.f32 %v743, 0.0
      %v753 = vmax.f32 %v744, 0.0
      %v754 = vmax.f32 %v745, 0.0
      %v755 = vmax.f32 %v746, 0.0
      %v756 = vmax.f32 %v747, 0.0
      %v757 = vmax.f32 %v748, 0.0
      %v758 = vmax.f32 %v749, 0.0
      %v759 = vpack.c.bf16 %v751, %v750
      %v760 = vpack.c.bf16 %v753, %v752
      %v761 = vpack.c.bf16 %v755, %v754
      %v762 = vpack.c.bf16 %v757, %v756
      %v763 = vpack.c.bf16 %v758, %v758
      %v769 = vunpack.c.l.b16 %v759
      %v770 = vunpack.c.h.b16 %v759
      %v771 = vunpack.c.l.b16 %v760
      %v772 = vunpack.c.h.b16 %v760
      %v773 = vunpack.c.l.b16 %v761
      %v774 = vunpack.c.h.b16 %v761
      %v775 = vunpack.c.l.b16 %v762
      %v776 = vunpack.c.h.b16 %v762
      %v777 = vunpack.c.l.b16 %v763
      %v778 = vpack.c.b16 %v769, %v769
      %v779 = vpack.c.b16 %v770, %v770
      %v780 = vpack.c.b16 %v771, %v771
      %v781 = vpack.c.b16 %v772, %v772
      %v782 = vpack.c.b16 %v773, %v773
      %v783 = vpack.c.b16 %v774, %v774
      %v784 = vpack.c.b16 %v775, %v775
      %v785 = vpack.c.b16 %v776, %v776
      %v786 = vpack.c.b16 %v777, %v777
      %vm796 = vcmask 257024
      %797 = vst.msk [vmem:[%s170] sm:$0xf] %vm796, %v778
      %798 = vst.msk [vmem:[%s170 + $0x4] sm:$0xf] %vm796, %v779
      %799 = vst.msk [vmem:[%s170 + $0x8] sm:$0xf] %vm796, %v780
      %800 = vst.msk [vmem:[%s170 + $0xc] sm:$0xf] %vm796, %v781
      %801 = vst.msk [vmem:[%s170 + $0x10] sm:$0xf] %vm796, %v782
      %802 = vst.msk [vmem:[%s170 + $0x14] sm:$0xf] %vm796, %v783
      %803 = vst.msk [vmem:[%s170 + $0x18] sm:$0xf] %vm796, %v784
      %804 = vst.msk [vmem:[%s170 + $0x1c] sm:$0xf] %vm796, %v785
      %805 = vst.msk [vmem:[%s170 + $0x20] sm:$0xf] %vm796, %v786
      %p806 = scmp.lt.s32.totalorder %s14, 1
      %s807 = scalar_select %p806, %s14, 1
      %s808 = smul.addr %s807, 9
      %s809 = smul.addr %s808, 4
      %s810 = scalar_lea.vmem %s3, %s809
      // Predicated region
      $region33: #{vae_forward.7} parent=31 // pred_check
        %p811 = pneg %p100
      $region34: #{vae_forward.7} parent=31 // pred_check_branch
        %813 = sbr.rel (%p811) target = $region36
      $region35: #{vae_forward.7} parent=31 // pred_region
        _
      $region36: #{vae_forward.7} parent=31 // pred_fallthru
        _
    $region32: #{vae_forward.7} parent=5 // pred_fallthru
      _
    %p814 = scmp.le.s32.totalorder 2, %s9
    // Predicated region
    $region37: #{vae_forward.7} parent=5 // pred_check
      %p815 = pneg %p814
    $region38: #{vae_forward.7} parent=5 // pred_check_branch
      %817 = sbr.rel (%p815) target = $region40
    $region39: #{vae_forward.7} parent=5 // pred_region
      %s818 = ssub.s32 %s9, 2
      // Predicated region
      $region41: #{vae_forward.7} parent=39 // pred_check
        %p819 = pneg %p106
      $region42: #{vae_forward.7} parent=39 // pred_check_branch
        %821 = sbr.rel (%p819) target = $region44
      $region43: #{vae_forward.7} parent=39 // pred_region
        %p822 = scmp.lt.s32.totalorder %s15, 1
        %s823 = scalar_select %p822, %s15, 1
        %s824 = smul.addr %s823, 9
        %s825 = smul.addr %s824, 4
        %s826 = scalar_lea.vmem %s3, %s825
      $region44: #{vae_forward.7} parent=39 // pred_fallthru
        _
    $region40: #{vae_forward.7} parent=5 // pred_fallthru
      _
  $region6: #{vae_forward.7} parent=0 // loop_footer
    %s13 = sadd.s32 1, %s9
  $region7: #{vae_forward.7} parent=0 // loop_footer_branch
    %8 = sbr.rel target = $region3
  $region8: #{vae_forward.7} parent=0 // loop_exit
    _

// kernel: vae_forward.8
$region0: #{vae_forward.8}
  #allocation0 [shape = 'u32[]', space=smem, size = 0x4, offset = 0x4, fixed_abs, tag = 'smem constant byte address 0x4 - core index']
  #allocation1 [shape = 'u32[144,128]{1,0:T(1,128)}', space=vmem, size = 0x12000, scoped, tag = 'internal scratch']
  %s0 = inlined_call_operand.vmem [shape: bf16[2,30,128], index: 0, kind: input, shape index: {}]
  %s1 = inlined_call_operand.vmem [shape: bf16[4,128,64], index: 1, kind: input, shape index: {}]
  %s2 = inlined_call_operand.vmem [shape: f32[1,64], index: 2, kind: input, shape index: {}]
  %s3 = inlined_call_operand.vmem [shape: bf16[2,20,64], index: 3, kind: output, shape index: {}]
  %s4 = sld [smem:[#allocation0]]
  $region45: #{vae_forward.8} parent=0
    _
  %s6 = ssub.s32 1, %s4
  %s7 = scalar_select 0, %s6, %s4
  loop: start=0, step=1, limit=4
  $region2: #{vae_forward.8} parent=0 // loop_pre_header
    _
  $region3: #{vae_forward.8} parent=0 // loop_header
    %s9 = sphi 0, %s13
    %p10 = scmp.ge.s32.totalorder %s9, 4
    %s19 = sphi 0, %s21
    %s22 = sphi 0, %s19
    %s23 = sphi 0, %s22
    %s39 = sphi 0, %s23
    %s43 = sphi 0, %s43
    %s45 = sphi 0, %s43
    %s46 = sphi 0, %s45
    %s60 = sphi 0, %s46
    %s64 = sphi 0, %s64
    %s66 = sphi 0, %s64
    %s67 = sphi 0, %s66
    %s81 = sphi 0, %s67
    %s87 = sphi 0, %s89
    %s90 = sphi 0, %s87
    %s91 = sphi 0, %s90
    %s107 = sphi 0, %s91
  $region4: #{vae_forward.8} parent=0 // loop_header_branch
    %12 = sbr.rel (%p10) target = $region8
  $region5: #{vae_forward.8} parent=0 // loop_body
    %s14 = ssub.s32 %s9, 1
    %s15 = ssub.s32 %s9, 2
    %s16 = sadd.s32 %s9, 1
    %s17 = ssub.s32 %s9, %s16
    %p18 = scmp.eq.s32.totalorder %s17, 0
    %s20 = sadd.s32 %s19, 1
    %s21 = scalar_select %p18, %s19, %s20
    %p24 = pneg %p18
    %p25 = scmp.eq.s32.totalorder %s9, 1
    %p26 = por %p24, %p25
    %p27 = scmp.ne.s32.totalorder %s19, %s22
    %p28 = scmp.eq.s32.totalorder %s9, 0
    %p29 = por %p27, %p28
    %p30 = scmp.ne.s32.totalorder %s19, %s22
    %p31 = scmp.eq.s32.totalorder %s14, 1
    %p32 = por %p30, %p31
    %p33 = scmp.ne.s32.totalorder %s22, %s23
    %p34 = scmp.eq.s32.totalorder %s14, 0
    %p35 = por %p33, %p34
    %p36 = scmp.ne.s32.totalorder %s22, %s23
    %p37 = scmp.eq.s32.totalorder %s15, 1
    %p38 = por %p36, %p37
    %p40 = scmp.ne.s32.totalorder %s23, %s39
    %p41 = scmp.eq.s32.totalorder %s15, 0
    %p42 = por %p40, %p41
    %s44 = sadd.s32 %s43, 1
    %p47 = scmp.eq.s32.totalorder %s9, 1
    %p48 = scmp.ne.s32.totalorder %s43, %s45
    %p49 = scmp.eq.s32.totalorder %s9, 0
    %p50 = por %p48, %p49
    %p51 = scmp.ne.s32.totalorder %s43, %s45
    %p52 = scmp.eq.s32.totalorder %s14, 1
    %p53 = por %p51, %p52
    %p54 = scmp.ne.s32.totalorder %s45, %s46
    %p55 = scmp.eq.s32.totalorder %s14, 0
    %p56 = por %p54, %p55
    %p57 = scmp.ne.s32.totalorder %s45, %s46
    %p58 = scmp.eq.s32.totalorder %s15, 1
    %p59 = por %p57, %p58
    %p61 = scmp.ne.s32.totalorder %s46, %s60
    %p62 = scmp.eq.s32.totalorder %s15, 0
    %p63 = por %p61, %p62
    %s65 = sadd.s32 %s64, 1
    %p68 = scmp.eq.s32.totalorder %s9, 1
    %p69 = scmp.ne.s32.totalorder %s64, %s66
    %p70 = scmp.eq.s32.totalorder %s9, 0
    %p71 = por %p69, %p70
    %p72 = scmp.ne.s32.totalorder %s64, %s66
    %p73 = scmp.eq.s32.totalorder %s14, 1
    %p74 = por %p72, %p73
    %p75 = scmp.ne.s32.totalorder %s66, %s67
    %p76 = scmp.eq.s32.totalorder %s14, 0
    %p77 = por %p75, %p76
    %p78 = scmp.ne.s32.totalorder %s66, %s67
    %p79 = scmp.eq.s32.totalorder %s15, 1
    %p80 = por %p78, %p79
    %p82 = scmp.ne.s32.totalorder %s67, %s81
    %p83 = scmp.eq.s32.totalorder %s15, 0
    %p84 = por %p82, %p83
    %s85 = ssub.s32 %s9, %s16
    %p86 = scmp.eq.s32.totalorder %s85, 0
    %s88 = sadd.s32 %s87, 1
    %s89 = scalar_select %p86, %s87, %s88
    %p92 = pneg %p86
    %p93 = scmp.eq.s32.totalorder %s9, 1
    %p94 = por %p92, %p93
    %p95 = scmp.ne.s32.totalorder %s87, %s90
    %p96 = scmp.eq.s32.totalorder %s9, 0
    %p97 = por %p95, %p96
    %p98 = scmp.ne.s32.totalorder %s87, %s90
    %p99 = scmp.eq.s32.totalorder %s14, 1
    %p100 = por %p98, %p99
    %p101 = scmp.ne.s32.totalorder %s90, %s91
    %p102 = scmp.eq.s32.totalorder %s14, 0
    %p103 = por %p101, %p102
    %p104 = scmp.ne.s32.totalorder %s90, %s91
    %p105 = scmp.eq.s32.totalorder %s15, 1
    %p106 = por %p104, %p105
    %p108 = scmp.ne.s32.totalorder %s91, %s107
    %p109 = scmp.eq.s32.totalorder %s15, 0
    %p110 = por %p108, %p109
    %p111 = scmp.le.s32.totalorder 1, %s9
    %p112 = scmp.lt.s32.totalorder %s9, 3
    %p113 = pnand %p111, %p112
    %p114 = pneg %p113
    // Predicated region
    $region9: #{vae_forward.8} parent=5 // pred_check
      _
    $region10: #{vae_forward.8} parent=5 // pred_check_branch
      %116 = sbr.rel (%p113) target = $region12
    $region11: #{vae_forward.8} parent=5 // pred_region
      %s117 = ssub.s32 %s9, 1
      // Predicated region
      $region13: #{vae_forward.8} parent=11 // pred_check
        %p118 = pneg %p56
      $region14: #{vae_forward.8} parent=11 // pred_check_branch
        %120 = sbr.rel (%p118) target = $region16
      $region15: #{vae_forward.8} parent=11 // pred_region
        _
      $region16: #{vae_forward.8} parent=11 // pred_fallthru
        _
      // Predicated region
      $region17: #{vae_forward.8} parent=11 // pred_check
        %p121 = pneg %p77
      $region18: #{vae_forward.8} parent=11 // pred_check_branch
        %123 = sbr.rel (%p121) target = $region20
      $region19: #{vae_forward.8} parent=11 // pred_region
        _
      $region20: #{vae_forward.8} parent=11 // pred_fallthru
        _
    $region12: #{vae_forward.8} parent=5 // pred_fallthru
      _
    %p124 = scmp.lt.s32.totalorder %s9, 2
    // Predicated region
    $region21: #{vae_forward.8} parent=5 // pred_check
      %p125 = pneg %p124
    $region22: #{vae_forward.8} parent=5 // pred_check_branch
      %127 = sbr.rel (%p125) target = $region24
    $region23: #{vae_forward.8} parent=5 // pred_region
      // Predicated region
      $region25: #{vae_forward.8} parent=23 // pred_check
        %p128 = pneg %p29
      $region26: #{vae_forward.8} parent=23 // pred_check_branch
        %130 = sbr.rel (%p128) target = $region28
      $region27: #{vae_forward.8} parent=23 // pred_region
        %p131 = scmp.lt.s32.totalorder %s9, 1
        %s132 = scalar_select %p131, %s9, 1
        %s133 = smul.addr %s132, 4
        %s134 = smul.addr %s133, 4
        %s135 = scalar_lea.vmem %s0, %s134
      $region28: #{vae_forward.8} parent=23 // pred_fallthru
        _
    $region24: #{vae_forward.8} parent=5 // pred_fallthru
      _
    %p136 = scmp.le.s32.totalorder 1, %s9
    %p137 = scmp.lt.s32.totalorder %s9, 3
    %p138 = pnand %p136, %p137
    %p139 = pneg %p138
    // Predicated region
    $region29: #{vae_forward.8} parent=5 // pred_check
      _
    $region30: #{vae_forward.8} parent=5 // pred_check_branch
      %141 = sbr.rel (%p138) target = $region32
    $region31: #{vae_forward.8} parent=5 // pred_region
      %s142 = ssub.s32 %s9, 1
      %p143 = scmp.lt.s32.totalorder %s14, 1
      %s144 = scalar_select %p143, %s14, 1
      %s145 = smul.addr %s144, 4
      %s146 = smul.addr %s145, 4
      %s147 = scalar_lea.vmem %s0, %s146
      %p148 = pneg %p35
      %p149 = pneg %p32
      %p150 = pneg %p56
      %p151 = pneg %p53
      %p152 = pneg %p77
      %p153 = pneg %p74
      %p154 = pneg %p103
      %p155 = pneg %p100
      %p156 = scmp.lt.s32.totalorder %s14, 1
      %s157 = scalar_select %p156, %s14, 1
      %s158 = smul.addr %s157, 3
      %s159 = smul.addr %s158, 4
      %s160 = scalar_lea.vmem %s3, %s159
      %p161 = scmp.lt.s32.totalorder %s14, 1
      %s162 = scalar_select %p161, %s14, 1
      %s163 = smul.addr %s162, 4
      %s164 = smul.addr %s163, 4
      %s165 = scalar_lea.vmem %s0, %s164
      %p166 = scmp.lt.s32.totalorder %s14, 1
      %s167 = scalar_select %p166, %s14, 1
      %s168 = smul.addr %s167, 3
      %s169 = smul.addr %s168, 4
      %s170 = scalar_lea.vmem %s3, %s169
      %v172 = vld [vmem:[%s165] sm:$0xf]
      %v173 = vld [vmem:[%s165 + $0x4] sm:$0xf]
      %v174 = vld [vmem:[%s165 + $0x8] sm:$0x3]
      %v175 = vld [vmem:[%s1] sm:$0xf]
      %v176 = vld [vmem:[%s1 + $0x4] sm:$0xf]
      %v177 = vld [vmem:[%s1 + $0x8] sm:$0xf]
      %v178 = vld [vmem:[%s1 + $0xc] sm:$0xf]
      %v179 = vld [vmem:[%s1 + $0x10] sm:$0xf]
      %v180 = vld [vmem:[%s1 + $0x14] sm:$0xf]
      %v181 = vld [vmem:[%s1 + $0x18] sm:$0xf]
      %v182 = vld [vmem:[%s1 + $0x1c] sm:$0xf]
      %v183 = vld [vmem:[%s1 + $0x20] sm:$0xf]
      %v184 = vld [vmem:[%s1 + $0x24] sm:$0xf]
      %v185 = vld [vmem:[%s1 + $0x28] sm:$0xf]
      %v186 = vld [vmem:[%s1 + $0x2c] sm:$0xf]
      %v187 = vld [vmem:[%s1 + $0x30] sm:$0xf]
      %v188 = vld [vmem:[%s1 + $0x34] sm:$0xf]
      %v189 = vld [vmem:[%s1 + $0x38] sm:$0xf]
      %v190 = vld [vmem:[%s1 + $0x3c] sm:$0xf]
      %v191 = vld [vmem:[%s165 + $0x8] sm:$0x7]
      %s192 = scalar_lea.vmem %s1, 64
      %v193 = vld [vmem:[%s192] sm:$0xf]
      %v194 = vld [vmem:[%s192 + $0x4] sm:$0xf]
      %v195 = vld [vmem:[%s192 + $0x8] sm:$0xf]
      %v196 = vld [vmem:[%s192 + $0xc] sm:$0xf]
      %v197 = vld [vmem:[%s192 + $0x10] sm:$0xf]
      %v198 = vld [vmem:[%s192 + $0x14] sm:$0xf]
      %v199 = vld [vmem:[%s192 + $0x18] sm:$0xf]
      %v200 = vld [vmem:[%s192 + $0x1c] sm:$0xf]
      %v201 = vld [vmem:[%s192 + $0x20] sm:$0xf]
      %v202 = vld [vmem:[%s192 + $0x24] sm:$0xf]
      %v203 = vld [vmem:[%s192 + $0x28] sm:$0xf]
      %v204 = vld [vmem:[%s192 + $0x2c] sm:$0xf]
      %v205 = vld [vmem:[%s192 + $0x30] sm:$0xf]
      %v206 = vld [vmem:[%s192 + $0x34] sm:$0xf]
      %v207 = vld [vmem:[%s192 + $0x38] sm:$0xf]
      %v208 = vld [vmem:[%s192 + $0x3c] sm:$0xf]
      %v212 = vunpack.c.l.b16 %v172
      %v213 = vunpack.c.l.b16 %v173
      %v214 = vunpack.c.l.b16 %v191
      %v215 = vpack.c.b16 %v213, %v212
      %v216 = vpack.c.b16 %v214, %v214
      %vm217 = vsmask.f32 7424
      %v219 = vshrl.u32 %v215, 16
      %v221 = vshll.u32 %v215, 16
      %v223 = vrot.slane %v221, 1
      %v224 = vor.u32 %v219, %v223
      %v226 = vshll.u32 %v216, 16
      %v228 = vrot.slane %v226, 1
      %v229 = vsel %vm217, %v224, %v228
      %v230 = vshrl.u32 %v216, 16
      %v232 = vor.u32 %v230, %v228
      %v251 = vunpack.c.l.b16 %v193
      %v252 = vunpack.c.l.b16 %v194
      %v253 = vunpack.c.l.b16 %v195
      %v254 = vunpack.c.l.b16 %v196
      %v255 = vunpack.c.l.b16 %v197
      %v256 = vunpack.c.l.b16 %v198
      %v257 = vunpack.c.l.b16 %v199
      %v258 = vunpack.c.l.b16 %v200
      %v259 = vunpack.c.l.b16 %v201
      %v260 = vunpack.c.l.b16 %v202
      %v261 = vunpack.c.l.b16 %v203
      %v262 = vunpack.c.l.b16 %v204
      %v263 = vunpack.c.l.b16 %v205
      %v264 = vunpack.c.l.b16 %v206
      %v265 = vunpack.c.l.b16 %v207
      %v266 = vunpack.c.l.b16 %v208
      %v267 = vpack.c.b16 %v252, %v251
      %v268 = vpack.c.b16 %v254, %v253
      %v269 = vpack.c.b16 %v256, %v255
      %v270 = vpack.c.b16 %v258, %v257
      %v271 = vpack.c.b16 %v260, %v259
      %v272 = vpack.c.b16 %v262, %v261
      %v273 = vpack.c.b16 %v264, %v263
      %v274 = vpack.c.b16 %v266, %v265
      %283 = vmatprep.subr.bf16.mxu0 0
      %284 = vmatpush1.bf16.msra.mxu0 %v267
      %285 = vmatprep.subr.bf16.mxu0 0
      %286 = vmatpush1.bf16.msra.mxu0 %v268
      %287 = vmatprep.subr.bf16.mxu0 0
      %288 = vmatpush1.bf16.msra.mxu0 %v269
      %289 = vmatprep.subr.bf16.mxu0 0
      %290 = vmatpush1.bf16.msra.mxu0 %v270
      %291 = vmatprep.subr.bf16.mxu0 0
      %292 = vmatpush1.bf16.msra.mxu0 %v271
      %293 = vmatprep.subr.bf16.mxu0 0
      %294 = vmatpush1.bf16.msra.mxu0 %v272
      %295 = vmatprep.subr.bf16.mxu0 0
      %296 = vmatpush1.bf16.msra.mxu0 %v273
      %297 = vmatprep.subr.bf16.mxu0 0
      %298 = vmatpush1.bf16.msra.mxu0 %v274
      %299 = vmatprep.subr.bf16.mxu0 0
      %300 = vmatpush1.bf16.msra.mxu0 0
      %301 = vmatprep.subr.bf16.mxu0 0
      %302 = vmatpush1.bf16.msra.mxu0 0
      %303 = vmatprep.subr.bf16.mxu0 0
      %304 = vmatpush1.bf16.msra.mxu0 0
      %305 = vmatprep.subr.bf16.mxu0 0
      %306 = vmatpush1.bf16.msra.mxu0 0
      %307 = vmatprep.subr.bf16.mxu0 0
      %308 = vmatpush1.bf16.msra.mxu0 0
      %309 = vmatprep.subr.bf16.mxu0 0
      %310 = vmatpush1.bf16.msra.mxu0 0
      %311 = vmatprep.subr.bf16.mxu0 0
      %312 = vmatpush1.bf16.msra.mxu0 0
      %313 = vmatprep.subr.bf16.mxu0 0
      %314 = vmatpush1.bf16.msra.mxu0 0
      %315 = vmatprep.mubr.bf16.mxu0 0
      %316 = vmatmul.mubr.bf16.gmra.mrb[0].mxu0 %v229
      %v317 = vpop.f32.mrb[0].mxu0
      %v318 = vadd.f32 0.0, %v317
      %v319 = vpop.f32.mrb[0].mxu0
      %v320 = vpop.f32.mrb[0].mxu0
      %v321 = vadd.f32 0.0, %v320
      %v322 = vpop.f32.mrb[0].mxu0
      %323 = vmatprep.mubr.bf16.mxu0 0
      %324 = vmatmul.mubr.bf16.gmra.mrb[0].mxu0 %v232
      %v325 = vpop.f32.mrb[0].mxu0
      %v326 = vadd.f32 0.0, %v325
      %v327 = vpop.f32.mrb[0].mxu0
      %v328 = vpop.f32.mrb[0].mxu0
      %v329 = vpop.f32.mrb[0].mxu0
      %330 = vdwg.mxu0
      %v332 = vunpack.c.l.b16 %v174
      %v333 = vpack.c.b16 %v332, %v332
      %v352 = vunpack.c.l.b16 %v175
      %v353 = vunpack.c.l.b16 %v176
      %v354 = vunpack.c.l.b16 %v177
      %v355 = vunpack.c.l.b16 %v178
      %v356 = vunpack.c.l.b16 %v179
      %v357 = vunpack.c.l.b16 %v180
      %v358 = vunpack.c.l.b16 %v181
      %v359 = vunpack.c.l.b16 %v182
      %v360 = vunpack.c.l.b16 %v183
      %v361 = vunpack.c.l.b16 %v184
      %v362 = vunpack.c.l.b16 %v185
      %v363 = vunpack.c.l.b16 %v186
      %v364 = vunpack.c.l.b16 %v187
      %v365 = vunpack.c.l.b16 %v188
      %v366 = vunpack.c.l.b16 %v189
      %v367 = vunpack.c.l.b16 %v190
      %v368 = vpack.c.b16 %v353, %v352
      %v369 = vpack.c.b16 %v355, %v354
      %v370 = vpack.c.b16 %v357, %v356
      %v371 = vpack.c.b16 %v359, %v358
      %v372 = vpack.c.b16 %v361, %v360
      %v373 = vpack.c.b16 %v363, %v362
      %v374 = vpack.c.b16 %v365, %v364
      %v375 = vpack.c.b16 %v367, %v366
      %384 = vmatprep.subr.bf16.mxu0 0
      %385 = vmatpush1.bf16.msra.mxu0 %v368
      %386 = vmatprep.subr.bf16.mxu0 0
      %387 = vmatpush1.bf16.msra.mxu0 %v369
      %388 = vmatprep.subr.bf16.mxu0 0
      %389 = vmatpush1.bf16.msra.mxu0 %v370
      %390 = vmatprep.subr.bf16.mxu0 0
      %391 = vmatpush1.bf16.msra.mxu0 %v371
      %392 = vmatprep.subr.bf16.mxu0 0
      %393 = vmatpush1.bf16.msra.mxu0 %v372
      %394 = vmatprep.subr.bf16.mxu0 0
      %395 = vmatpush1.bf16.msra.mxu0 %v373
      %396 = vmatprep.subr.bf16.mxu0 0
      %397 = vmatpush1.bf16.msra.mxu0 %v374
      %398 = vmatprep.subr.bf16.mxu0 0
      %399 = vmatpush1.bf16.msra.mxu0 %v375
      %400 = vmatprep.subr.bf16.mxu0 0
      %401 = vmatpush1.bf16.msra.mxu0 0
      %402 = vmatprep.subr.bf16.mxu0 0
      %403 = vmatpush1.bf16.msra.mxu0 0
      %404 = vmatprep.subr.bf16.mxu0 0
      %405 = vmatpush1.bf16.msra.mxu0 0
      %406 = vmatprep.subr.bf16.mxu0 0
      %407 = vmatpush1.bf16.msra.mxu0 0
      %408 = vmatprep.subr.bf16.mxu0 0
      %409 = vmatpush1.bf16.msra.mxu0 0
      %410 = vmatprep.subr.bf16.mxu0 0
      %411 = vmatpush1.bf16.msra.mxu0 0
      %412 = vmatprep.subr.bf16.mxu0 0
      %413 = vmatpush1.bf16.msra.mxu0 0
      %414 = vmatprep.subr.bf16.mxu0 0
      %415 = vmatpush1.bf16.msra.mxu0 0
      %416 = vmatprep.mubr.bf16.mxu0 0
      %417 = vmatmul.mubr.bf16.gmra.mrb[0].mxu0 %v215
      %v418 = vpop.f32.mrb[0].mxu0
      %v419 = vadd.f32 %v318, %v418
      %v420 = vpop.f32.mrb[0].mxu0
      %v421 = vpop.f32.mrb[0].mxu0
      %v422 = vadd.f32 %v321, %v421
      %v423 = vpop.f32.mrb[0].mxu0
      %424 = vmatprep.mubr.bf16.mxu0 0
      %425 = vmatmul.mubr.bf16.gmra.mrb[0].mxu0 %v333
      %v426 = vpop.f32.mrb[0].mxu0
      %v427 = vadd.f32 %v326, %v426
      %v428 = vpop.f32.mrb[0].mxu0
      %v429 = vpop.f32.mrb[0].mxu0
      %v430 = vpop.f32.mrb[0].mxu0
      %431 = vdwg.mxu0
      %v432 = vld [vmem:[%s165] sm:$0xc]
      %v433 = vld [vmem:[%s165 + $0x4] sm:$0xf]
      %v434 = vld [vmem:[%s165 + $0x8] sm:$0xf]
      %v435 = vld [vmem:[%s165 + $0xc] sm:$0x1]
      %s436 = scalar_lea.vmem %s1, 128
      %v437 = vld [vmem:[%s436] sm:$0xf]
      %v438 = vld [vmem:[%s436 + $0x4] sm:$0xf]
      %v439 = vld [vmem:[%s436 + $0x8] sm:$0xf]
      %v440 = vld [vmem:[%s436 + $0xc] sm:$0xf]
      %v441 = vld [vmem:[%s436 + $0x10] sm:$0xf]
      %v442 = vld [vmem:[%s436 + $0x14] sm:$0xf]
      %v443 = vld [vmem:[%s436 + $0x18] sm:$0xf]
      %v444 = vld [vmem:[%s436 + $0x1c] sm:$0xf]
      %v445 = vld [vmem:[%s436 + $0x20] sm:$0xf]
      %v446 = vld [vmem:[%s436 + $0x24] sm:$0xf]
      %v447 = vld [vmem:[%s436 + $0x28] sm:$0xf]
      %v448 = vld [vmem:[%s436 + $0x2c] sm:$0xf]
      %v449 = vld [vmem:[%s436 + $0x30] sm:$0xf]
      %v450 = vld [vmem:[%s436 + $0x34] sm:$0xf]
      %v451 = vld [vmem:[%s436 + $0x38] sm:$0xf]
      %v452 = vld [vmem:[%s436 + $0x3c] sm:$0xf]
      %v457 = vunpack.c.l.b16 %v432
      %v458 = vunpack.c.l.b16 %v433
      %v459 = vunpack.c.l.b16 %v434
      %v460 = vunpack.c.l.b16 %v435
      %v461 = vpack.c.b16 %v458, %v457
      %v462 = vpack.c.b16 %v460, %v459
      %vm463 = vsmask.f32 5376
      %v465 = vshrl.u32 %v461, 16
      %v467 = vrot.slane %v465, 2
      %v468 = vshll.u32 %v461, 16
      %v470 = vrot.slane %v468, 3
      %v471 = vor.u32 %v467, %v470
      %v473 = vshrl.u32 %v462, 16
      %v475 = vrot.slane %v473, 2
      %v476 = vshll.u32 %v462, 16
      %v478 = vrot.slane %v476, 3
      %v479 = vor.u32 %v475, %v478
      %v480 = vsel %vm463, %v471, %v479
      %v499 = vunpack.c.l.b16 %v437
      %v500 = vunpack.c.l.b16 %v438
      %v501 = vunpack.c.l.b16 %v439
      %v502 = vunpack.c.l.b16 %v440
      %v503 = vunpack.c.l.b16 %v441
      %v504 = vunpack.c.l.b16 %v442
      %v505 = vunpack.c.l.b16 %v443
      %v506 = vunpack.c.l.b16 %v444
      %v507 = vunpack.c.l.b16 %v445
      %v508 = vunpack.c.l.b16 %v446
      %v509 = vunpack.c.l.b16 %v447
      %v510 = vunpack.c.l.b16 %v448
      %v511 = vunpack.c.l.b16 %v449
      %v512 = vunpack.c.l.b16 %v450
      %v513 = vunpack.c.l.b16 %v451
      %v514 = vunpack.c.l.b16 %v452
      %v515 = vpack.c.b16 %v500, %v499
      %v516 = vpack.c.b16 %v502, %v501
      %v517 = vpack.c.b16 %v504, %v503
      %v518 = vpack.c.b16 %v506, %v505
      %v519 = vpack.c.b16 %v508, %v507
      %v520 = vpack.c.b16 %v510, %v509
      %v521 = vpack.c.b16 %v512, %v511
      %v522 = vpack.c.b16 %v514, %v513
      %531 = vmatprep.subr.bf16.mxu0 0
      %532 = vmatpush1.bf16.msra.mxu0 %v515
      %533 = vmatprep.subr.bf16.mxu0 0
      %534 = vmatpush1.bf16.msra.mxu0 %v516
      %535 = vmatprep.subr.bf16.mxu0 0
      %536 = vmatpush1.bf16.msra.mxu0 %v517
      %537 = vmatprep.subr.bf16.mxu0 0
      %538 = vmatpush1.bf16.msra.mxu0 %v518
      %539 = vmatprep.subr.bf16.mxu0 0
      %540 = vmatpush1.bf16.msra.mxu0 %v519
      %541 = vmatprep.subr.bf16.mxu0 0
      %542 = vmatpush1.bf16.msra.mxu0 %v520
      %543 = vmatprep.subr.bf16.mxu0 0
      %544 = vmatpush1.bf16.msra.mxu0 %v521
      %545 = vmatprep.subr.bf16.mxu0 0
      %546 = vmatpush1.bf16.msra.mxu0 %v522
      %547 = vmatprep.subr.bf16.mxu0 0
      %548 = vmatpush1.bf16.msra.mxu0 0
      %549 = vmatprep.subr.bf16.mxu0 0
      %550 = vmatpush1.bf16.msra.mxu0 0
      %551 = vmatprep.subr.bf16.mxu0 0
      %552 = vmatpush1.bf16.msra.mxu0 0
      %553 = vmatprep.subr.bf16.mxu0 0
      %554 = vmatpush1.bf16.msra.mxu0 0
      %555 = vmatprep.subr.bf16.mxu0 0
      %556 = vmatpush1.bf16.msra.mxu0 0
      %557 = vmatprep.subr.bf16.mxu0 0
      %558 = vmatpush1.bf16.msra.mxu0 0
      %559 = vmatprep.subr.bf16.mxu0 0
      %560 = vmatpush1.bf16.msra.mxu0 0
      %561 = vmatprep.subr.bf16.mxu0 0
      %562 = vmatpush1.bf16.msra.mxu0 0
      %563 = vmatprep.mubr.bf16.mxu0 0
      %564 = vmatmul.mubr.bf16.gmra.mrb[0].mxu0 %v480
      %v565 = vpop.f32.mrb[0].mxu0
      %v566 = vadd.f32 0.0, %v565
      %v567 = vpop.f32.mrb[0].mxu0
      %v568 = vpop.f32.mrb[0].mxu0
      %v569 = vadd.f32 0.0, %v568
      %v570 = vpop.f32.mrb[0].mxu0
      %571 = vmatprep.mubr.bf16.mxu0 0
      %572 = vmatmul.mubr.bf16.gmra.mrb[0].mxu0 %v479
      %v573 = vpop.f32.mrb[0].mxu0
      %v574 = vadd.f32 0.0, %v573
      %v575 = vpop.f32.mrb[0].mxu0
      %v576 = vpop.f32.mrb[0].mxu0
      %v577 = vpop.f32.mrb[0].mxu0
      %578 = vdwg.mxu0
      %v579 = vadd.f32 %v419, %v566
      %v580 = vadd.f32 %v422, %v569
      %v581 = vadd.f32 %v427, %v574
      %v582 = vld [vmem:[%s165] sm:$0x8]
      %s583 = scalar_lea.vmem %s1, 192
      %v584 = vld [vmem:[%s583] sm:$0xf]
      %v585 = vld [vmem:[%s583 + $0x4] sm:$0xf]
      %v586 = vld [vmem:[%s583 + $0x8] sm:$0xf]
      %v587 = vld [vmem:[%s583 + $0xc] sm:$0xf]
      %v588 = vld [vmem:[%s583 + $0x10] sm:$0xf]
      %v589 = vld [vmem:[%s583 + $0x14] sm:$0xf]
      %v590 = vld [vmem:[%s583 + $0x18] sm:$0xf]
      %v591 = vld [vmem:[%s583 + $0x1c] sm:$0xf]
      %v592 = vld [vmem:[%s583 + $0x20] sm:$0xf]
      %v593 = vld [vmem:[%s583 + $0x24] sm:$0xf]
      %v594 = vld [vmem:[%s583 + $0x28] sm:$0xf]
      %v595 = vld [vmem:[%s583 + $0x2c] sm:$0xf]
      %v596 = vld [vmem:[%s583 + $0x30] sm:$0xf]
      %v597 = vld [vmem:[%s583 + $0x34] sm:$0xf]
      %v598 = vld [vmem:[%s583 + $0x38] sm:$0xf]
      %v599 = vld [vmem:[%s583 + $0x3c] sm:$0xf]
      %v601 = vunpack.c.l.b16 %v582
      %v602 = vpack.c.b16 %v458, %v601
      %vm603 = vcmask 1044480
      %v604 = vrot.slane %v602, 3
      %v605 = vrot.slane %v462, 3
      %v606 = vsel %vm603, %v604, %v605
      %v625 = vunpack.c.l.b16 %v584
      %v626 = vunpack.c.l.b16 %v585
      %v627 = vunpack.c.l.b16 %v586
      %v628 = vunpack.c.l.b16 %v587
      %v629 = vunpack.c.l.b16 %v588
      %v630 = vunpack.c.l.b16 %v589
      %v631 = vunpack.c.l.b16 %v590
      %v632 = vunpack.c.l.b16 %v591
      %v633 = vunpack.c.l.b16 %v592
      %v634 = vunpack.c.l.b16 %v593
      %v635 = vunpack.c.l.b16 %v594
      %v636 = vunpack.c.l.b16 %v595
      %v637 = vunpack.c.l.b16 %v596
      %v638 = vunpack.c.l.b16 %v597
      %v639 = vunpack.c.l.b16 %v598
      %v640 = vunpack.c.l.b16 %v599
      %v641 = vpack.c.b16 %v626, %v625
      %v642 = vpack.c.b16 %v628, %v627
      %v643 = vpack.c.b16 %v630, %v629
      %v644 = vpack.c.b16 %v632, %v631
      %v645 = vpack.c.b16 %v634, %v633
      %v646 = vpack.c.b16 %v636, %v635
      %v647 = vpack.c.b16 %v638, %v637
      %v648 = vpack.c.b16 %v640, %v639
      %657 = vmatprep.subr.bf16.mxu0 0
      %658 = vmatpush1.bf16.msra.mxu0 %v641
      %659 = vmatprep.subr.bf16.mxu0 0
      %660 = vmatpush1.bf16.msra.mxu0 %v642
      %661 = vmatprep.subr.bf16.mxu0 0
      %662 = vmatpush1.bf16.msra.mxu0 %v643
      %663 = vmatprep.subr.bf16.mxu0 0
      %664 = vmatpush1.bf16.msra.mxu0 %v644
      %665 = vmatprep.subr.bf16.mxu0 0
      %666 = vmatpush1.bf16.msra.mxu0 %v645
      %667 = vmatprep.subr.bf16.mxu0 0
      %668 = vmatpush1.bf16.msra.mxu0 %v646
      %669 = vmatprep.subr.bf16.mxu0 0
      %670 = vmatpush1.bf16.msra.mxu0 %v647
      %671 = vmatprep.subr.bf16.mxu0 0
      %672 = vmatpush1.bf16.msra.mxu0 %v648
      %673 = vmatprep.subr.bf16.mxu0 0
      %674 = vmatpush1.bf16.msra.mxu0 0
      %675 = vmatprep.subr.bf16.mxu0 0
      %676 = vmatpush1.bf16.msra.mxu0 0
      %677 = vmatprep.subr.bf16.mxu0 0
      %678 = vmatpush1.bf16.msra.mxu0 0
      %679 = vmatprep.subr.bf16.mxu0 0
      %680 = vmatpush1.bf16.msra.mxu0 0
      %681 = vmatprep.subr.bf16.mxu0 0
      %682 = vmatpush1.bf16.msra.mxu0 0
      %683 = vmatprep.subr.bf16.mxu0 0
      %684 = vmatpush1.bf16.msra.mxu0 0
      %685 = vmatprep.subr.bf16.mxu0 0
      %686 = vmatpush1.bf16.msra.mxu0 0
      %687 = vmatprep.subr.bf16.mxu0 0
      %688 = vmatpush1.bf16.msra.mxu0 0
      %689 = vmatprep.mubr.bf16.mxu0 0
      %690 = vmatmul.mubr.bf16.gmra.mrb[0].mxu0 %v606
      %v691 = vpop.f32.mrb[0].mxu0
      %v692 = vadd.f32 0.0, %v691
      %v693 = vpop.f32.mrb[0].mxu0
      %v694 = vpop.f32.mrb[0].mxu0
      %v695 = vadd.f32 0.0, %v694
      %v696 = vpop.f32.mrb[0].mxu0
      %697 = vmatprep.mubr.bf16.mxu0 0
      %698 = vmatmul.mubr.bf16.gmra.mrb[0].mxu0 %v605
      %v699 = vpop.f32.mrb[0].mxu0
      %v700 = vadd.f32 0.0, %v699
      %v701 = vpop.f32.mrb[0].mxu0
      %v702 = vpop.f32.mrb[0].mxu0
      %v703 = vpop.f32.mrb[0].mxu0
      %704 = vdwg.mxu0
      %v705 = vadd.f32 %v579, %v692
      %v706 = vadd.f32 %v580, %v695
      %v707 = vadd.f32 %v581, %v700
      %v708 = vld [vmem:[%s2] sm:$0x1]
      %v710 = vlaneseq
      %v711 = vshrl.u32 %v710, 7
      %v712 = vsub.s32 0, %v711
      %v713 = vrot.slane %v708, %v712
      %v715 = vadd.f32 %v705, %v713
      %v716 = vadd.f32 %v706, %v713
      %v717 = vadd.f32 %v707, %v713
      %v718 = vmax.f32 %v715, 0.0
      %v719 = vmax.f32 %v716, 0.0
      %v720 = vmax.f32 %v717, 0.0
      %v721 = vpack.c.bf16 %v719, %v718
      %v722 = vpack.c.bf16 %v720, %v720
      %v725 = vunpack.c.l.b16 %v721
      %v726 = vunpack.c.h.b16 %v721
      %v727 = vunpack.c.l.b16 %v722
      %v728 = vpack.c.b16 %v725, %v725
      %v729 = vpack.c.b16 %v726, %v726
      %v730 = vpack.c.b16 %v727, %v727
      %vm734 = vcmask 519168
      %735 = vst.msk [vmem:[%s170] sm:$0xf] %vm734, %v728
      %736 = vst.msk [vmem:[%s170 + $0x4] sm:$0xf] %vm734, %v729
      %vm737 = vcmask 517120
      %738 = vst.msk [vmem:[%s170 + $0x8] sm:$0x3] %vm737, %v730
      %p739 = scmp.lt.s32.totalorder %s14, 1
      %s740 = scalar_select %p739, %s14, 1
      %s741 = smul.addr %s740, 3
      %s742 = smul.addr %s741, 4
      %s743 = scalar_lea.vmem %s3, %s742
      // Predicated region
      $region33: #{vae_forward.8} parent=31 // pred_check
        %p744 = pneg %p100
      $region34: #{vae_forward.8} parent=31 // pred_check_branch
        %746 = sbr.rel (%p744) target = $region36
      $region35: #{vae_forward.8} parent=31 // pred_region
        _
      $region36: #{vae_forward.8} parent=31 // pred_fallthru
        _
    $region32: #{vae_forward.8} parent=5 // pred_fallthru
      _
    %p747 = scmp.le.s32.totalorder 2, %s9
    // Predicated region
    $region37: #{vae_forward.8} parent=5 // pred_check
      %p748 = pneg %p747
    $region38: #{vae_forward.8} parent=5 // pred_check_branch
      %750 = sbr.rel (%p748) target = $region40
    $region39: #{vae_forward.8} parent=5 // pred_region
      %s751 = ssub.s32 %s9, 2
      // Predicated region
      $region41: #{vae_forward.8} parent=39 // pred_check
        %p752 = pneg %p106
      $region42: #{vae_forward.8} parent=39 // pred_check_branch
        %754 = sbr.rel (%p752) target = $region44
      $region43: #{vae_forward.8} parent=39 // pred_region
        %p755 = scmp.lt.s32.totalorder %s15, 1
        %s756 = scalar_select %p755, %s15, 1
        %s757 = smul.addr %s756, 3
        %s758 = smul.addr %s757, 4
        %s759 = scalar_lea.vmem %s3, %s758
      $region44: #{vae_forward.8} parent=39 // pred_fallthru
        _
    $region40: #{vae_forward.8} parent=5 // pred_fallthru
      _
  $region6: #{vae_forward.8} parent=0 // loop_footer
    %s13 = sadd.s32 1, %s9
  $region7: #{vae_forward.8} parent=0 // loop_footer_branch
    %8 = sbr.rel target = $region3
  $region8: #{vae_forward.8} parent=0 // loop_exit
    _

// kernel: vae_forward.10
$region0: #{vae_forward.10}
  #allocation0 [shape = 'u32[]', space=smem, size = 0x4, offset = 0x4, fixed_abs, tag = 'smem constant byte address 0x4 - core index']
  #allocation1 [shape = 'u32[144,128]{1,0:T(1,128)}', space=vmem, size = 0x12000, scoped, tag = 'internal scratch']
  %s0 = inlined_call_operand.vmem [shape: bf16[2,20,128], index: 0, kind: input, shape index: {}]
  %s1 = inlined_call_operand.vmem [shape: bf16[9,128,256], index: 1, kind: input, shape index: {}]
  %s2 = inlined_call_operand.vmem [shape: f32[1,256], index: 2, kind: input, shape index: {}]
  %s3 = inlined_call_operand.vmem [shape: bf16[2,8,256], index: 3, kind: output, shape index: {}]
  %s4 = sld [smem:[#allocation0]]
  $region45: #{vae_forward.10} parent=0
    _
  %s6 = ssub.s32 1, %s4
  %s7 = scalar_select 0, %s6, %s4
  loop: start=0, step=1, limit=4
  $region2: #{vae_forward.10} parent=0 // loop_pre_header
    _
  $region3: #{vae_forward.10} parent=0 // loop_header
    %s9 = sphi 0, %s13
    %p10 = scmp.ge.s32.totalorder %s9, 4
    %s19 = sphi 0, %s21
    %s22 = sphi 0, %s19
    %s23 = sphi 0, %s22
    %s39 = sphi 0, %s23
    %s43 = sphi 0, %s43
    %s45 = sphi 0, %s43
    %s46 = sphi 0, %s45
    %s60 = sphi 0, %s46
    %s64 = sphi 0, %s64
    %s66 = sphi 0, %s64
    %s67 = sphi 0, %s66
    %s81 = sphi 0, %s67
    %s87 = sphi 0, %s89
    %s90 = sphi 0, %s87
    %s91 = sphi 0, %s90
    %s107 = sphi 0, %s91
  $region4: #{vae_forward.10} parent=0 // loop_header_branch
    %12 = sbr.rel (%p10) target = $region8
  $region5: #{vae_forward.10} parent=0 // loop_body
    %s14 = ssub.s32 %s9, 1
    %s15 = ssub.s32 %s9, 2
    %s16 = sadd.s32 %s9, 1
    %s17 = ssub.s32 %s9, %s16
    %p18 = scmp.eq.s32.totalorder %s17, 0
    %s20 = sadd.s32 %s19, 1
    %s21 = scalar_select %p18, %s19, %s20
    %p24 = pneg %p18
    %p25 = scmp.eq.s32.totalorder %s9, 1
    %p26 = por %p24, %p25
    %p27 = scmp.ne.s32.totalorder %s19, %s22
    %p28 = scmp.eq.s32.totalorder %s9, 0
    %p29 = por %p27, %p28
    %p30 = scmp.ne.s32.totalorder %s19, %s22
    %p31 = scmp.eq.s32.totalorder %s14, 1
    %p32 = por %p30, %p31
    %p33 = scmp.ne.s32.totalorder %s22, %s23
    %p34 = scmp.eq.s32.totalorder %s14, 0
    %p35 = por %p33, %p34
    %p36 = scmp.ne.s32.totalorder %s22, %s23
    %p37 = scmp.eq.s32.totalorder %s15, 1
    %p38 = por %p36, %p37
    %p40 = scmp.ne.s32.totalorder %s23, %s39
    %p41 = scmp.eq.s32.totalorder %s15, 0
    %p42 = por %p40, %p41
    %s44 = sadd.s32 %s43, 1
    %p47 = scmp.eq.s32.totalorder %s9, 1
    %p48 = scmp.ne.s32.totalorder %s43, %s45
    %p49 = scmp.eq.s32.totalorder %s9, 0
    %p50 = por %p48, %p49
    %p51 = scmp.ne.s32.totalorder %s43, %s45
    %p52 = scmp.eq.s32.totalorder %s14, 1
    %p53 = por %p51, %p52
    %p54 = scmp.ne.s32.totalorder %s45, %s46
    %p55 = scmp.eq.s32.totalorder %s14, 0
    %p56 = por %p54, %p55
    %p57 = scmp.ne.s32.totalorder %s45, %s46
    %p58 = scmp.eq.s32.totalorder %s15, 1
    %p59 = por %p57, %p58
    %p61 = scmp.ne.s32.totalorder %s46, %s60
    %p62 = scmp.eq.s32.totalorder %s15, 0
    %p63 = por %p61, %p62
    %s65 = sadd.s32 %s64, 1
    %p68 = scmp.eq.s32.totalorder %s9, 1
    %p69 = scmp.ne.s32.totalorder %s64, %s66
    %p70 = scmp.eq.s32.totalorder %s9, 0
    %p71 = por %p69, %p70
    %p72 = scmp.ne.s32.totalorder %s64, %s66
    %p73 = scmp.eq.s32.totalorder %s14, 1
    %p74 = por %p72, %p73
    %p75 = scmp.ne.s32.totalorder %s66, %s67
    %p76 = scmp.eq.s32.totalorder %s14, 0
    %p77 = por %p75, %p76
    %p78 = scmp.ne.s32.totalorder %s66, %s67
    %p79 = scmp.eq.s32.totalorder %s15, 1
    %p80 = por %p78, %p79
    %p82 = scmp.ne.s32.totalorder %s67, %s81
    %p83 = scmp.eq.s32.totalorder %s15, 0
    %p84 = por %p82, %p83
    %s85 = ssub.s32 %s9, %s16
    %p86 = scmp.eq.s32.totalorder %s85, 0
    %s88 = sadd.s32 %s87, 1
    %s89 = scalar_select %p86, %s87, %s88
    %p92 = pneg %p86
    %p93 = scmp.eq.s32.totalorder %s9, 1
    %p94 = por %p92, %p93
    %p95 = scmp.ne.s32.totalorder %s87, %s90
    %p96 = scmp.eq.s32.totalorder %s9, 0
    %p97 = por %p95, %p96
    %p98 = scmp.ne.s32.totalorder %s87, %s90
    %p99 = scmp.eq.s32.totalorder %s14, 1
    %p100 = por %p98, %p99
    %p101 = scmp.ne.s32.totalorder %s90, %s91
    %p102 = scmp.eq.s32.totalorder %s14, 0
    %p103 = por %p101, %p102
    %p104 = scmp.ne.s32.totalorder %s90, %s91
    %p105 = scmp.eq.s32.totalorder %s15, 1
    %p106 = por %p104, %p105
    %p108 = scmp.ne.s32.totalorder %s91, %s107
    %p109 = scmp.eq.s32.totalorder %s15, 0
    %p110 = por %p108, %p109
    %p111 = scmp.le.s32.totalorder 1, %s9
    %p112 = scmp.lt.s32.totalorder %s9, 3
    %p113 = pnand %p111, %p112
    %p114 = pneg %p113
    // Predicated region
    $region9: #{vae_forward.10} parent=5 // pred_check
      _
    $region10: #{vae_forward.10} parent=5 // pred_check_branch
      %116 = sbr.rel (%p113) target = $region12
    $region11: #{vae_forward.10} parent=5 // pred_region
      %s117 = ssub.s32 %s9, 1
      // Predicated region
      $region13: #{vae_forward.10} parent=11 // pred_check
        %p118 = pneg %p56
      $region14: #{vae_forward.10} parent=11 // pred_check_branch
        %120 = sbr.rel (%p118) target = $region16
      $region15: #{vae_forward.10} parent=11 // pred_region
        _
      $region16: #{vae_forward.10} parent=11 // pred_fallthru
        _
      // Predicated region
      $region17: #{vae_forward.10} parent=11 // pred_check
        %p121 = pneg %p77
      $region18: #{vae_forward.10} parent=11 // pred_check_branch
        %123 = sbr.rel (%p121) target = $region20
      $region19: #{vae_forward.10} parent=11 // pred_region
        _
      $region20: #{vae_forward.10} parent=11 // pred_fallthru
        _
    $region12: #{vae_forward.10} parent=5 // pred_fallthru
      _
    %p124 = scmp.lt.s32.totalorder %s9, 2
    // Predicated region
    $region21: #{vae_forward.10} parent=5 // pred_check
      %p125 = pneg %p124
    $region22: #{vae_forward.10} parent=5 // pred_check_branch
      %127 = sbr.rel (%p125) target = $region24
    $region23: #{vae_forward.10} parent=5 // pred_region
      // Predicated region
      $region25: #{vae_forward.10} parent=23 // pred_check
        %p128 = pneg %p29
      $region26: #{vae_forward.10} parent=23 // pred_check_branch
        %130 = sbr.rel (%p128) target = $region28
      $region27: #{vae_forward.10} parent=23 // pred_region
        %p131 = scmp.lt.s32.totalorder %s9, 1
        %s132 = scalar_select %p131, %s9, 1
        %s133 = smul.addr %s132, 3
        %s134 = smul.addr %s133, 4
        %s135 = scalar_lea.vmem %s0, %s134
      $region28: #{vae_forward.10} parent=23 // pred_fallthru
        _
    $region24: #{vae_forward.10} parent=5 // pred_fallthru
      _
    %p136 = scmp.le.s32.totalorder 1, %s9
    %p137 = scmp.lt.s32.totalorder %s9, 3
    %p138 = pnand %p136, %p137
    %p139 = pneg %p138
    // Predicated region
    $region29: #{vae_forward.10} parent=5 // pred_check
      _
    $region30: #{vae_forward.10} parent=5 // pred_check_branch
      %141 = sbr.rel (%p138) target = $region32
    $region31: #{vae_forward.10} parent=5 // pred_region
      %s142 = ssub.s32 %s9, 1
      %p143 = scmp.lt.s32.totalorder %s14, 1
      %s144 = scalar_select %p143, %s14, 1
      %s145 = smul.addr %s144, 3
      %s146 = smul.addr %s145, 4
      %s147 = scalar_lea.vmem %s0, %s146
      %p148 = pneg %p35
      %p149 = pneg %p32
      %p150 = pneg %p56
      %p151 = pneg %p53
      %p152 = pneg %p77
      %p153 = pneg %p74
      %p154 = pneg %p103
      %p155 = pneg %p100
      %p156 = scmp.lt.s32.totalorder %s14, 1
      %s157 = scalar_select %p156, %s14, 1
      %s158 = smul.addr %s157, 2
      %s159 = smul.addr %s158, 4
      %s160 = scalar_lea.vmem %s3, %s159
      %p161 = scmp.lt.s32.totalorder %s14, 1
      %s162 = scalar_select %p161, %s14, 1
      %s163 = smul.addr %s162, 3
      %s164 = smul.addr %s163, 4
      %s165 = scalar_lea.vmem %s0, %s164
      %p166 = scmp.lt.s32.totalorder %s14, 1
      %s167 = scalar_select %p166, %s14, 1
      %s168 = smul.addr %s167, 2
      %s169 = smul.addr %s168, 4
      %s170 = scalar_lea.vmem %s3, %s169
      %v172 = vld [vmem:[%s165] sm:$0xf]
      %v173 = vld [vmem:[%s1] sm:$0xff]
      %v174 = vld [vmem:[%s1 + $0x8] sm:$0xff]
      %v175 = vld [vmem:[%s1 + $0x10] sm:$0xff]
      %v176 = vld [vmem:[%s1 + $0x18] sm:$0xff]
      %v177 = vld [vmem:[%s1 + $0x20] sm:$0xff]
      %v178 = vld [vmem:[%s1 + $0x28] sm:$0xff]
      %v179 = vld [vmem:[%s1 + $0x30] sm:$0xff]
      %v180 = vld [vmem:[%s1 + $0x38] sm:$0xff]
      %v181 = vld [vmem:[%s1 + $0x40] sm:$0xff]
      %v182 = vld [vmem:[%s1 + $0x48] sm:$0xff]
      %v183 = vld [vmem:[%s1 + $0x50] sm:$0xff]
      %v184 = vld [vmem:[%s1 + $0x58] sm:$0xff]
      %v185 = vld [vmem:[%s1 + $0x60] sm:$0xff]
      %v186 = vld [vmem:[%s1 + $0x68] sm:$0xff]
      %v187 = vld [vmem:[%s1 + $0x70] sm:$0xff]
      %v188 = vld [vmem:[%s1 + $0x78] sm:$0xff]
      %v189 = vld [vmem:[%s165 + $0x4] sm:$0x1]
      %s190 = scalar_lea.vmem %s1, 128
      %v191 = vld [vmem:[%s190] sm:$0xff]
      %v192 = vld [vmem:[%s190 + $0x8] sm:$0xff]
      %v193 = vld [vmem:[%s190 + $0x10] sm:$0xff]
      %v194 = vld [vmem:[%s190 + $0x18] sm:$0xff]
      %v195 = vld [vmem:[%s190 + $0x20] sm:$0xff]
      %v196 = vld [vmem:[%s190 + $0x28] sm:$0xff]
      %v197 = vld [vmem:[%s190 + $0x30] sm:$0xff]
      %v198 = vld [vmem:[%s190 + $0x38] sm:$0xff]
      %v199 = vld [vmem:[%s190 + $0x40] sm:$0xff]
      %v200 = vld [vmem:[%s190 + $0x48] sm:$0xff]
      %v201 = vld [vmem:[%s190 + $0x50] sm:$0xff]
      %v202 = vld [vmem:[%s190 + $0x58] sm:$0xff]
      %v203 = vld [vmem:[%s190 + $0x60] sm:$0xff]
      %v204 = vld [vmem:[%s190 + $0x68] sm:$0xff]
      %v205 = vld [vmem:[%s190 + $0x70] sm:$0xff]
      %v206 = vld [vmem:[%s190 + $0x78] sm:$0xff]
      %v209 = vunpack.c.l.b16 %v172
      %v210 = vunpack.c.l.b16 %v189
      %v211 = vpack.c.b16 %v210, %v209
      %v213 = vshrl.u32 %v211, 16
      %v215 = vshll.u32 %v211, 16
      %v217 = vrot.slane %v215, 1
      %v218 = vor.u32 %v213, %v217
      %v236 = vunpack.c.l.b16 %v191
      %v237 = vunpack.c.h.b16 %v191
      %v238 = vunpack.c.l.b16 %v192
      %v239 = vunpack.c.h.b16 %v192
      %v240 = vunpack.c.l.b16 %v193
      %v241 = vunpack.c.h.b16 %v193
      %v242 = vunpack.c.l.b16 %v194
      %v243 = vunpack.c.h.b16 %v194
      %v244 = vunpack.c.l.b16 %v195
      %v245 = vunpack.c.h.b16 %v195
      %v246 = vunpack.c.l.b16 %v196
      %v247 = vunpack.c.h.b16 %v196
      %v248 = vunpack.c.l.b16 %v197
      %v249 = vunpack.c.h.b16 %v197
      %v250 = vunpack.c.l.b16 %v198
      %v251 = vunpack.c.h.b16 %v198
      %v252 = vunpack.c.l.b16 %v199
      %v253 = vunpack.c.h.b16 %v199
      %v254 = vunpack.c.l.b16 %v200
      %v255 = vunpack.c.h.b16 %v200
      %v256 = vunpack.c.l.b16 %v201
      %v257 = vunpack.c.h.b16 %v201
      %v258 = vunpack.c.l.b16 %v202
      %v259 = vunpack.c.h.b16 %v202
      %v260 = vunpack.c.l.b16 %v203
      %v261 = vunpack.c.h.b16 %v203
      %v262 = vunpack.c.l.b16 %v204
      %v263 = vunpack.c.h.b16 %v204
      %v264 = vunpack.c.l.b16 %v205
      %v265 = vunpack.c.h.b16 %v205
      %v266 = vunpack.c.l.b16 %v206
      %v267 = vunpack.c.h.b16 %v206
      %v268 = vpack.c.b16 %v238, %v236
      %v269 = vpack.c.b16 %v239, %v237
      %v270 = vpack.c.b16 %v242, %v240
      %v271 = vpack.c.b16 %v243, %v241
      %v272 = vpack.c.b16 %v246, %v244
      %v273 = vpack.c.b16 %v247, %v245
      %v274 = vpack.c.b16 %v250, %v248
      %v275 = vpack.c.b16 %v251, %v249
      %v276 = vpack.c.b16 %v254, %v252
      %v277 = vpack.c.b16 %v255, %v253
      %v278 = vpack.c.b16 %v258, %v256
      %v279 = vpack.c.b16 %v259, %v257
      %v280 = vpack.c.b16 %v262, %v260
      %v281 = vpack.c.b16 %v263, %v261
      %v282 = vpack.c.b16 %v266, %v264
      %v283 = vpack.c.b16 %v267, %v265
      %300 = vmatprep.subr.bf16.mxu0 %v269
      %301 = vmatpush1.bf16.msra.mxu0 %v268
      %302 = vmatprep.subr.bf16.mxu0 %v271
      %303 = vmatpush1.bf16.msra.mxu0 %v270
      %304 = vmatprep.subr.bf16.mxu0 %v273
      %305 = vmatpush1.bf16.msra.mxu0 %v272
      %306 = vmatprep.subr.bf16.mxu0 %v275
      %307 = vmatpush1.bf16.msra.mxu0 %v274
      %308 = vmatprep.subr.bf16.mxu0 %v277
      %309 = vmatpush1.bf16.msra.mxu0 %v276
      %310 = vmatprep.subr.bf16.mxu0 %v279
      %311 = vmatpush1.bf16.msra.mxu0 %v278
      %312 = vmatprep.subr.bf16.mxu0 %v281
      %313 = vmatpush1.bf16.msra.mxu0 %v280
      %314 = vmatprep.subr.bf16.mxu0 %v283
      %315 = vmatpush1.bf16.msra.mxu0 %v282
      %316 = vmatprep.subr.bf16.mxu0 0
      %317 = vmatpush1.bf16.msra.mxu0 0
      %318 = vmatprep.subr.bf16.mxu0 0
      %319 = vmatpush1.bf16.msra.mxu0 0
      %320 = vmatprep.subr.bf16.mxu0 0
      %321 = vmatpush1.bf16.msra.mxu0 0
      %322 = vmatprep.subr.bf16.mxu0 0
      %323 = vmatpush1.bf16.msra.mxu0 0
      %324 = vmatprep.subr.bf16.mxu0 0
      %325 = vmatpush1.bf16.msra.mxu0 0
      %326 = vmatprep.subr.bf16.mxu0 0
      %327 = vmatpush1.bf16.msra.mxu0 0
      %328 = vmatprep.subr.bf16.mxu0 0
      %329 = vmatpush1.bf16.msra.mxu0 0
      %330 = vmatprep.subr.bf16.mxu0 0
      %331 = vmatpush1.bf16.msra.mxu0 0
      %332 = vmatprep.mubr.bf16.mxu0 0
      %333 = vmatmul.mubr.bf16.gmra.mrb[0].mxu0 %v218
      %v334 = vpop.f32.mrb[0].mxu0
      %v335 = vadd.f32 0.0, %v334
      %v336 = vpop.f32.mrb[0].mxu0
      %v337 = vadd.f32 0.0, %v336
      %v338 = vpop.f32.mrb[0].mxu0
      %v339 = vpop.f32.mrb[0].mxu0
      %340 = vdwg.mxu0
      %v357 = vunpack.c.l.b16 %v173
      %v358 = vunpack.c.h.b16 %v173
      %v359 = vunpack.c.l.b16 %v174
      %v360 = vunpack.c.h.b16 %v174
      %v361 = vunpack.c.l.b16 %v175
      %v362 = vunpack.c.h.b16 %v175
      %v363 = vunpack.c.l.b16 %v176
      %v364 = vunpack.c.h.b16 %v176
      %v365 = vunpack.c.l.b16 %v177
      %v366 = vunpack.c.h.b16 %v177
      %v367 = vunpack.c.l.b16 %v178
      %v368 = vunpack.c.h.b16 %v178
      %v369 = vunpack.c.l.b16 %v179
      %v370 = vunpack.c.h.b16 %v179
      %v371 = vunpack.c.l.b16 %v180
      %v372 = vunpack.c.h.b16 %v180
      %v373 = vunpack.c.l.b16 %v181
      %v374 = vunpack.c.h.b16 %v181
      %v375 = vunpack.c.l.b16 %v182
      %v376 = vunpack.c.h.b16 %v182
      %v377 = vunpack.c.l.b16 %v183
      %v378 = vunpack.c.h.b16 %v183
      %v379 = vunpack.c.l.b16 %v184
      %v380 = vunpack.c.h.b16 %v184
      %v381 = vunpack.c.l.b16 %v185
      %v382 = vunpack.c.h.b16 %v185
      %v383 = vunpack.c.l.b16 %v186
      %v384 = vunpack.c.h.b16 %v186
      %v385 = vunpack.c.l.b16 %v187
      %v386 = vunpack.c.h.b16 %v187
      %v387 = vunpack.c.l.b16 %v188
      %v388 = vunpack.c.h.b16 %v188
      %v389 = vpack.c.b16 %v359, %v357
      %v390 = vpack.c.b16 %v360, %v358
      %v391 = vpack.c.b16 %v363, %v361
      %v392 = vpack.c.b16 %v364, %v362
      %v393 = vpack.c.b16 %v367, %v365
      %v394 = vpack.c.b16 %v368, %v366
      %v395 = vpack.c.b16 %v371, %v369
      %v396 = vpack.c.b16 %v372, %v370
      %v397 = vpack.c.b16 %v375, %v373
      %v398 = vpack.c.b16 %v376, %v374
      %v399 = vpack.c.b16 %v379, %v377
      %v400 = vpack.c.b16 %v380, %v378
      %v401 = vpack.c.b16 %v383, %v381
      %v402 = vpack.c.b16 %v384, %v382
      %v403 = vpack.c.b16 %v387, %v385
      %v404 = vpack.c.b16 %v388, %v386
      %421 = vmatprep.subr.bf16.mxu0 %v390
      %422 = vmatpush1.bf16.msra.mxu0 %v389
      %423 = vmatprep.subr.bf16.mxu0 %v392
      %424 = vmatpush1.bf16.msra.mxu0 %v391
      %425 = vmatprep.subr.bf16.mxu0 %v394
      %426 = vmatpush1.bf16.msra.mxu0 %v393
      %427 = vmatprep.subr.bf16.mxu0 %v396
      %428 = vmatpush1.bf16.msra.mxu0 %v395
      %429 = vmatprep.subr.bf16.mxu0 %v398
      %430 = vmatpush1.bf16.msra.mxu0 %v397
      %431 = vmatprep.subr.bf16.mxu0 %v400
      %432 = vmatpush1.bf16.msra.mxu0 %v399
      %433 = vmatprep.subr.bf16.mxu0 %v402
      %434 = vmatpush1.bf16.msra.mxu0 %v401
      %435 = vmatprep.subr.bf16.mxu0 %v404
      %436 = vmatpush1.bf16.msra.mxu0 %v403
      %437 = vmatprep.subr.bf16.mxu0 0
      %438 = vmatpush1.bf16.msra.mxu0 0
      %439 = vmatprep.subr.bf16.mxu0 0
      %440 = vmatpush1.bf16.msra.mxu0 0
      %441 = vmatprep.subr.bf16.mxu0 0
      %442 = vmatpush1.bf16.msra.mxu0 0
      %443 = vmatprep.subr.bf16.mxu0 0
      %444 = vmatpush1.bf16.msra.mxu0 0
      %445 = vmatprep.subr.bf16.mxu0 0
      %446 = vmatpush1.bf16.msra.mxu0 0
      %447 = vmatprep.subr.bf16.mxu0 0
      %448 = vmatpush1.bf16.msra.mxu0 0
      %449 = vmatprep.subr.bf16.mxu0 0
      %450 = vmatpush1.bf16.msra.mxu0 0
      %451 = vmatprep.subr.bf16.mxu0 0
      %452 = vmatpush1.bf16.msra.mxu0 0
      %453 = vmatprep.mubr.bf16.mxu0 0
      %454 = vmatmul.mubr.bf16.gmra.mrb[0].mxu0 %v172
      %v455 = vpop.f32.mrb[0].mxu0
      %v456 = vadd.f32 %v335, %v455
      %v457 = vpop.f32.mrb[0].mxu0
      %v458 = vadd.f32 %v337, %v457
      %v459 = vpop.f32.mrb[0].mxu0
      %v460 = vpop.f32.mrb[0].mxu0
      %461 = vdwg.mxu0
      %v462 = vld [vmem:[%s165] sm:$0xe]
      %s463 = scalar_lea.vmem %s1, 256
      %v464 = vld [vmem:[%s463] sm:$0xff]
      %v465 = vld [vmem:[%s463 + $0x8] sm:$0xff]
      %v466 = vld [vmem:[%s463 + $0x10] sm:$0xff]
      %v467 = vld [vmem:[%s463 + $0x18] sm:$0xff]
      %v468 = vld [vmem:[%s463 + $0x20] sm:$0xff]
      %v469 = vld [vmem:[%s463 + $0x28] sm:$0xff]
      %v470 = vld [vmem:[%s463 + $0x30] sm:$0xff]
      %v471 = vld [vmem:[%s463 + $0x38] sm:$0xff]
      %v472 = vld [vmem:[%s463 + $0x40] sm:$0xff]
      %v473 = vld [vmem:[%s463 + $0x48] sm:$0xff]
      %v474 = vld [vmem:[%s463 + $0x50] sm:$0xff]
      %v475 = vld [vmem:[%s463 + $0x58] sm:$0xff]
      %v476 = vld [vmem:[%s463 + $0x60] sm:$0xff]
      %v477 = vld [vmem:[%s463 + $0x68] sm:$0xff]
      %v478 = vld [vmem:[%s463 + $0x70] sm:$0xff]
      %v479 = vld [vmem:[%s463 + $0x78] sm:$0xff]
      %v481 = vunpack.c.l.b16 %v462
      %v482 = vpack.c.b16 %v210, %v481
      %v483 = vrot.slane %v482, 1
      %v501 = vunpack.c.l.b16 %v464
      %v502 = vunpack.c.h.b16 %v464
      %v503 = vunpack.c.l.b16 %v465
      %v504 = vunpack.c.h.b16 %v465
      %v505 = vunpack.c.l.b16 %v466
      %v506 = vunpack.c.h.b16 %v466
      %v507 = vunpack.c.l.b16 %v467
      %v508 = vunpack.c.h.b16 %v467
      %v509 = vunpack.c.l.b16 %v468
      %v510 = vunpack.c.h.b16 %v468
      %v511 = vunpack.c.l.b16 %v469
      %v512 = vunpack.c.h.b16 %v469
      %v513 = vunpack.c.l.b16 %v470
      %v514 = vunpack.c.h.b16 %v470
      %v515 = vunpack.c.l.b16 %v471
      %v516 = vunpack.c.h.b16 %v471
      %v517 = vunpack.c.l.b16 %v472
      %v518 = vunpack.c.h.b16 %v472
      %v519 = vunpack.c.l.b16 %v473
      %v520 = vunpack.c.h.b16 %v473
      %v521 = vunpack.c.l.b16 %v474
      %v522 = vunpack.c.h.b16 %v474
      %v523 = vunpack.c.l.b16 %v475
      %v524 = vunpack.c.h.b16 %v475
      %v525 = vunpack.c.l.b16 %v476
      %v526 = vunpack.c.h.b16 %v476
      %v527 = vunpack.c.l.b16 %v477
      %v528 = vunpack.c.h.b16 %v477
      %v529 = vunpack.c.l.b16 %v478
      %v530 = vunpack.c.h.b16 %v478
      %v531 = vunpack.c.l.b16 %v479
      %v532 = vunpack.c.h.b16 %v479
      %v533 = vpack.c.b16 %v503, %v501
      %v534 = vpack.c.b16 %v504, %v502
      %v535 = vpack.c.b16 %v507, %v505
      %v536 = vpack.c.b16 %v508, %v506
      %v537 = vpack.c.b16 %v511, %v509
      %v538 = vpack.c.b16 %v512, %v510
      %v539 = vpack.c.b16 %v515, %v513
      %v540 = vpack.c.b16 %v516, %v514
      %v541 = vpack.c.b16 %v519, %v517
      %v542 = vpack.c.b16 %v520, %v518
      %v543 = vpack.c.b16 %v523, %v521
      %v544 = vpack.c.b16 %v524, %v522
      %v545 = vpack.c.b16 %v527, %v525
      %v546 = vpack.c.b16 %v528, %v526
      %v547 = vpack.c.b16 %v531, %v529
      %v548 = vpack.c.b16 %v532, %v530
      %565 = vmatprep.subr.bf16.mxu0 %v534
      %566 = vmatpush1.bf16.msra.mxu0 %v533
      %567 = vmatprep.subr.bf16.mxu0 %v536
      %568 = vmatpush1.bf16.msra.mxu0 %v535
      %569 = vmatprep.subr.bf16.mxu0 %v538
      %570 = vmatpush1.bf16.msra.mxu0 %v537
      %571 = vmatprep.subr.bf16.mxu0 %v540
      %572 = vmatpush1.bf16.msra.mxu0 %v539
      %573 = vmatprep.subr.bf16.mxu0 %v542
      %574 = vmatpush1.bf16.msra.mxu0 %v541
      %575 = vmatprep.subr.bf16.mxu0 %v544
      %576 = vmatpush1.bf16.msra.mxu0 %v543
      %577 = vmatprep.subr.bf16.mxu0 %v546
      %578 = vmatpush1.bf16.msra.mxu0 %v545
      %579 = vmatprep.subr.bf16.mxu0 %v548
      %580 = vmatpush1.bf16.msra.mxu0 %v547
      %581 = vmatprep.subr.bf16.mxu0 0
      %582 = vmatpush1.bf16.msra.mxu0 0
      %583 = vmatprep.subr.bf16.mxu0 0
      %584 = vmatpush1.bf16.msra.mxu0 0
      %585 = vmatprep.subr.bf16.mxu0 0
      %586 = vmatpush1.bf16.msra.mxu0 0
      %587 = vmatprep.subr.bf16.mxu0 0
      %588 = vmatpush1.bf16.msra.mxu0 0
      %589 = vmatprep.subr.bf16.mxu0 0
      %590 = vmatpush1.bf16.msra.mxu0 0
      %591 = vmatprep.subr.bf16.mxu0 0
      %592 = vmatpush1.bf16.msra.mxu0 0
      %593 = vmatprep.subr.bf16.mxu0 0
      %594 = vmatpush1.bf16.msra.mxu0 0
      %595 = vmatprep.subr.bf16.mxu0 0
      %596 = vmatpush1.bf16.msra.mxu0 0
      %597 = vmatprep.mubr.bf16.mxu0 0
      %598 = vmatmul.mubr.bf16.gmra.mrb[0].mxu0 %v483
      %v599 = vpop.f32.mrb[0].mxu0
      %v600 = vadd.f32 0.0, %v599
      %v601 = vpop.f32.mrb[0].mxu0
      %v602 = vadd.f32 0.0, %v601
      %v603 = vpop.f32.mrb[0].mxu0
      %v604 = vpop.f32.mrb[0].mxu0
      %605 = vdwg.mxu0
      %v606 = vadd.f32 %v456, %v600
      %v607 = vadd.f32 %v458, %v602
      %v608 = vld [vmem:[%s165] sm:$0xc]
      %v609 = vld [vmem:[%s165 + $0x4] sm:$0x3]
      %s610 = scalar_lea.vmem %s1, 384
      %v611 = vld [vmem:[%s610] sm:$0xff]
      %v612 = vld [vmem:[%s610 + $0x8] sm:$0xff]
      %v613 = vld [vmem:[%s610 + $0x10] sm:$0xff]
      %v614 = vld [vmem:[%s610 + $0x18] sm:$0xff]
      %v615 = vld [vmem:[%s610 + $0x20] sm:$0xff]
      %v616 = vld [vmem:[%s610 + $0x28] sm:$0xff]
      %v617 = vld [vmem:[%s610 + $0x30] sm:$0xff]
      %v618 = vld [vmem:[%s610 + $0x38] sm:$0xff]
      %v619 = vld [vmem:[%s610 + $0x40] sm:$0xff]
      %v620 = vld [vmem:[%s610 + $0x48] sm:$0xff]
      %v621 = vld [vmem:[%s610 + $0x50] sm:$0xff]
      %v622 = vld [vmem:[%s610 + $0x58] sm:$0xff]
      %v623 = vld [vmem:[%s610 + $0x60] sm:$0xff]
      %v624 = vld [vmem:[%s610 + $0x68] sm:$0xff]
      %v625 = vld [vmem:[%s610 + $0x70] sm:$0xff]
      %v626 = vld [vmem:[%s610 + $0x78] sm:$0xff]
      %v629 = vunpack.c.l.b16 %v608
      %v630 = vunpack.c.l.b16 %v609
      %v631 = vpack.c.b16 %v630, %v629
      %v632 = vrot.slane %v631, 2
      %v650 = vunpack.c.l.b16 %v611
      %v651 = vunpack.c.h.b16 %v611
      %v652 = vunpack.c.l.b16 %v612
      %v653 = vunpack.c.h.b16 %v612
      %v654 = vunpack.c.l.b16 %v613
      %v655 = vunpack.c.h.b16 %v613
      %v656 = vunpack.c.l.b16 %v614
      %v657 = vunpack.c.h.b16 %v614
      %v658 = vunpack.c.l.b16 %v615
      %v659 = vunpack.c.h.b16 %v615
      %v660 = vunpack.c.l.b16 %v616
      %v661 = vunpack.c.h.b16 %v616
      %v662 = vunpack.c.l.b16 %v617
      %v663 = vunpack.c.h.b16 %v617
      %v664 = vunpack.c.l.b16 %v618
      %v665 = vunpack.c.h.b16 %v618
      %v666 = vunpack.c.l.b16 %v619
      %v667 = vunpack.c.h.b16 %v619
      %v668 = vunpack.c.l.b16 %v620
      %v669 = vunpack.c.h.b16 %v620
      %v670 = vunpack.c.l.b16 %v621
      %v671 = vunpack.c.h.b16 %v621
      %v672 = vunpack.c.l.b16 %v622
      %v673 = vunpack.c.h.b16 %v622
      %v674 = vunpack.c.l.b16 %v623
      %v675 = vunpack.c.h.b16 %v623
      %v676 = vunpack.c.l.b16 %v624
      %v677 = vunpack.c.h.b16 %v624
      %v678 = vunpack.c.l.b16 %v625
      %v679 = vunpack.c.h.b16 %v625
      %v680 = vunpack.c.l.b16 %v626
      %v681 = vunpack.c.h.b16 %v626
      %v682 = vpack.c.b16 %v652, %v650
      %v683 = vpack.c.b16 %v653, %v651
      %v684 = vpack.c.b16 %v656, %v654
      %v685 = vpack.c.b16 %v657, %v655
      %v686 = vpack.c.b16 %v660, %v658
      %v687 = vpack.c.b16 %v661, %v659
      %v688 = vpack.c.b16 %v664, %v662
      %v689 = vpack.c.b16 %v665, %v663
      %v690 = vpack.c.b16 %v668, %v666
      %v691 = vpack.c.b16 %v669, %v667
      %v692 = vpack.c.b16 %v672, %v670
      %v693 = vpack.c.b16 %v673, %v671
      %v694 = vpack.c.b16 %v676, %v674
      %v695 = vpack.c.b16 %v677, %v675
      %v696 = vpack.c.b16 %v680, %v678
      %v697 = vpack.c.b16 %v681, %v679
      %714 = vmatprep.subr.bf16.mxu0 %v683
      %715 = vmatpush1.bf16.msra.mxu0 %v682
      %716 = vmatprep.subr.bf16.mxu0 %v685
      %717 = vmatpush1.bf16.msra.mxu0 %v684
      %718 = vmatprep.subr.bf16.mxu0 %v687
      %719 = vmatpush1.bf16.msra.mxu0 %v686
      %720 = vmatprep.subr.bf16.mxu0 %v689
      %721 = vmatpush1.bf16.msra.mxu0 %v688
      %722 = vmatprep.subr.bf16.mxu0 %v691
      %723 = vmatpush1.bf16.msra.mxu0 %v690
      %724 = vmatprep.subr.bf16.mxu0 %v693
      %725 = vmatpush1.bf16.msra.mxu0 %v692
      %726 = vmatprep.subr.bf16.mxu0 %v695
      %727 = vmatpush1.bf16.msra.mxu0 %v694
      %728 = vmatprep.subr.bf16.mxu0 %v697
      %729 = vmatpush1.bf16.msra.mxu0 %v696
      %730 = vmatprep.subr.bf16.mxu0 0
      %731 = vmatpush1.bf16.msra.mxu0 0
      %732 = vmatprep.subr.bf16.mxu0 0
      %733 = vmatpush1.bf16.msra.mxu0 0
      %734 = vmatprep.subr.bf16.mxu0 0
      %735 = vmatpush1.bf16.msra.mxu0 0
      %736 = vmatprep.subr.bf16.mxu0 0
      %737 = vmatpush1.bf16.msra.mxu0 0
      %738 = vmatprep.subr.bf16.mxu0 0
      %739 = vmatpush1.bf16.msra.mxu0 0
      %740 = vmatprep.subr.bf16.mxu0 0
      %741 = vmatpush1.bf16.msra.mxu0 0
      %742 = vmatprep.subr.bf16.mxu0 0
      %743 = vmatpush1.bf16.msra.mxu0 0
      %744 = vmatprep.subr.bf16.mxu0 0
      %745 = vmatpush1.bf16.msra.mxu0 0
      %746 = vmatprep.mubr.bf16.mxu0 0
      %747 = vmatmul.mubr.bf16.gmra.mrb[0].mxu0 %v632
      %v748 = vpop.f32.mrb[0].mxu0
      %v749 = vadd.f32 0.0, %v748
      %v750 = vpop.f32.mrb[0].mxu0
      %v751 = vadd.f32 0.0, %v750
      %v752 = vpop.f32.mrb[0].mxu0
      %v753 = vpop.f32.mrb[0].mxu0
      %754 = vdwg.mxu0
      %v755 = vadd.f32 %v606, %v749
      %v756 = vadd.f32 %v607, %v751
      %v757 = vld [vmem:[%s165 + $0x4] sm:$0x7]
      %s758 = scalar_lea.vmem %s1, 512
      %v759 = vld [vmem:[%s758] sm:$0xff]
      %v760 = vld [vmem:[%s758 + $0x8] sm:$0xff]
      %v761 = vld [vmem:[%s758 + $0x10] sm:$0xff]
      %v762 = vld [vmem:[%s758 + $0x18] sm:$0xff]
      %v763 = vld [vmem:[%s758 + $0x20] sm:$0xff]
      %v764 = vld [vmem:[%s758 + $0x28] sm:$0xff]
      %v765 = vld [vmem:[%s758 + $0x30] sm:$0xff]
      %v766 = vld [vmem:[%s758 + $0x38] sm:$0xff]
      %v767 = vld [vmem:[%s758 + $0x40] sm:$0xff]
      %v768 = vld [vmem:[%s758 + $0x48] sm:$0xff]
      %v769 = vld [vmem:[%s758 + $0x50] sm:$0xff]
      %v770 = vld [vmem:[%s758 + $0x58] sm:$0xff]
      %v771 = vld [vmem:[%s758 + $0x60] sm:$0xff]
      %v772 = vld [vmem:[%s758 + $0x68] sm:$0xff]
      %v773 = vld [vmem:[%s758 + $0x70] sm:$0xff]
      %v774 = vld [vmem:[%s758 + $0x78] sm:$0xff]
      %v776 = vunpack.c.l.b16 %v757
      %v777 = vpack.c.b16 %v776, %v629
      %v779 = vshrl.u32 %v777, 16
      %v781 = vrot.slane %v779, 2
      %v782 = vshll.u32 %v777, 16
      %v784 = vrot.slane %v782, 3
      %v785 = vor.u32 %v781, %v784
      %v803 = vunpack.c.l.b16 %v759
      %v804 = vunpack.c.h.b16 %v759
      %v805 = vunpack.c.l.b16 %v760
      %v806 = vunpack.c.h.b16 %v760
      %v807 = vunpack.c.l.b16 %v761
      %v808 = vunpack.c.h.b16 %v761
      %v809 = vunpack.c.l.b16 %v762
      %v810 = vunpack.c.h.b16 %v762
      %v811 = vunpack.c.l.b16 %v763
      %v812 = vunpack.c.h.b16 %v763
      %v813 = vunpack.c.l.b16 %v764
      %v814 = vunpack.c.h.b16 %v764
      %v815 = vunpack.c.l.b16 %v765
      %v816 = vunpack.c.h.b16 %v765
      %v817 = vunpack.c.l.b16 %v766
      %v818 = vunpack.c.h.b16 %v766
      %v819 = vunpack.c.l.b16 %v767
      %v820 = vunpack.c.h.b16 %v767
      %v821 = vunpack.c.l.b16 %v768
      %v822 = vunpack.c.h.b16 %v768
      %v823 = vunpack.c.l.b16 %v769
      %v824 = vunpack.c.h.b16 %v769
      %v825 = vunpack.c.l.b16 %v770
      %v826 = vunpack.c.h.b16 %v770
      %v827 = vunpack.c.l.b16 %v771
      %v828 = vunpack.c.h.b16 %v771
      %v829 = vunpack.c.l.b16 %v772
      %v830 = vunpack.c.h.b16 %v772
      %v831 = vunpack.c.l.b16 %v773
      %v832 = vunpack.c.h.b16 %v773
      %v833 = vunpack.c.l.b16 %v774
      %v834 = vunpack.c.h.b16 %v774
      %v835 = vpack.c.b16 %v805, %v803
      %v836 = vpack.c.b16 %v806, %v804
      %v837 = vpack.c.b16 %v809, %v807
      %v838 = vpack.c.b16 %v810, %v808
      %v839 = vpack.c.b16 %v813, %v811
      %v840 = vpack.c.b16 %v814, %v812
      %v841 = vpack.c.b16 %v817, %v815
      %v842 = vpack.c.b16 %v818, %v816
      %v843 = vpack.c.b16 %v821, %v819
      %v844 = vpack.c.b16 %v822, %v820
      %v845 = vpack.c.b16 %v825, %v823
      %v846 = vpack.c.b16 %v826, %v824
      %v847 = vpack.c.b16 %v829, %v827
      %v848 = vpack.c.b16 %v830, %v828
      %v849 = vpack.c.b16 %v833, %v831
      %v850 = vpack.c.b16 %v834, %v832
      %867 = vmatprep.subr.bf16.mxu0 %v836
      %868 = vmatpush1.bf16.msra.mxu0 %v835
      %869 = vmatprep.subr.bf16.mxu0 %v838
      %870 = vmatpush1.bf16.msra.mxu0 %v837
      %871 = vmatprep.subr.bf16.mxu0 %v840
      %872 = vmatpush1.bf16.msra.mxu0 %v839
      %873 = vmatprep.subr.bf16.mxu0 %v842
      %874 = vmatpush1.bf16.msra.mxu0 %v841
      %875 = vmatprep.subr.bf16.mxu0 %v844
      %876 = vmatpush1.bf16.msra.mxu0 %v843
      %877 = vmatprep.subr.bf16.mxu0 %v846
      %878 = vmatpush1.bf16.msra.mxu0 %v845
      %879 = vmatprep.subr.bf16.mxu0 %v848
      %880 = vmatpush1.bf16.msra.mxu0 %v847
      %881 = vmatprep.subr.bf16.mxu0 %v850
      %882 = vmatpush1.bf16.msra.mxu0 %v849
      %883 = vmatprep.subr.bf16.mxu0 0
      %884 = vmatpush1.bf16.msra.mxu0 0
      %885 = vmatprep.subr.bf16.mxu0 0
      %886 = vmatpush1.bf16.msra.mxu0 0
      %887 = vmatprep.subr.bf16.mxu0 0
      %888 = vmatpush1.bf16.msra.mxu0 0
      %889 = vmatprep.subr.bf16.mxu0 0
      %890 = vmatpush1.bf16.msra.mxu0 0
      %891 = vmatprep.subr.bf16.mxu0 0
      %892 = vmatpush1.bf16.msra.mxu0 0
      %893 = vmatprep.subr.bf16.mxu0 0
      %894 = vmatpush1.bf16.msra.mxu0 0
      %895 = vmatprep.subr.bf16.mxu0 0
      %896 = vmatpush1.bf16.msra.mxu0 0
      %897 = vmatprep.subr.bf16.mxu0 0
      %898 = vmatpush1.bf16.msra.mxu0 0
      %899 = vmatprep.mubr.bf16.mxu0 0
      %900 = vmatmul.mubr.bf16.gmra.mrb[0].mxu0 %v785
      %v901 = vpop.f32.mrb[0].mxu0
      %v902 = vadd.f32 0.0, %v901
      %v903 = vpop.f32.mrb[0].mxu0
      %v904 = vadd.f32 0.0, %v903
      %v905 = vpop.f32.mrb[0].mxu0
      %v906 = vpop.f32.mrb[0].mxu0
      %907 = vdwg.mxu0
      %v908 = vadd.f32 %v755, %v902
      %v909 = vadd.f32 %v756, %v904
      %v910 = vld [vmem:[%s165] sm:$0x8]
      %s911 = scalar_lea.vmem %s1, 640
      %v912 = vld [vmem:[%s911] sm:$0xff]
      %v913 = vld [vmem:[%s911 + $0x8] sm:$0xff]
      %v914 = vld [vmem:[%s911 + $0x10] sm:$0xff]
      %v915 = vld [vmem:[%s911 + $0x18] sm:$0xff]
      %v916 = vld [vmem:[%s911 + $0x20] sm:$0xff]
      %v917 = vld [vmem:[%s911 + $0x28] sm:$0xff]
      %v918 = vld [vmem:[%s911 + $0x30] sm:$0xff]
      %v919 = vld [vmem:[%s911 + $0x38] sm:$0xff]
      %v920 = vld [vmem:[%s911 + $0x40] sm:$0xff]
      %v921 = vld [vmem:[%s911 + $0x48] sm:$0xff]
      %v922 = vld [vmem:[%s911 + $0x50] sm:$0xff]
      %v923 = vld [vmem:[%s911 + $0x58] sm:$0xff]
      %v924 = vld [vmem:[%s911 + $0x60] sm:$0xff]
      %v925 = vld [vmem:[%s911 + $0x68] sm:$0xff]
      %v926 = vld [vmem:[%s911 + $0x70] sm:$0xff]
      %v927 = vld [vmem:[%s911 + $0x78] sm:$0xff]
      %v929 = vunpack.c.l.b16 %v910
      %v930 = vpack.c.b16 %v776, %v929
      %v931 = vrot.slane %v930, 3
      %v949 = vunpack.c.l.b16 %v912
      %v950 = vunpack.c.h.b16 %v912
      %v951 = vunpack.c.l.b16 %v913
      %v952 = vunpack.c.h.b16 %v913
      %v953 = vunpack.c.l.b16 %v914
      %v954 = vunpack.c.h.b16 %v914
      %v955 = vunpack.c.l.b16 %v915
      %v956 = vunpack.c.h.b16 %v915
      %v957 = vunpack.c.l.b16 %v916
      %v958 = vunpack.c.h.b16 %v916
      %v959 = vunpack.c.l.b16 %v917
      %v960 = vunpack.c.h.b16 %v917
      %v961 = vunpack.c.l.b16 %v918
      %v962 = vunpack.c.h.b16 %v918
      %v963 = vunpack.c.l.b16 %v919
      %v964 = vunpack.c.h.b16 %v919
      %v965 = vunpack.c.l.b16 %v920
      %v966 = vunpack.c.h.b16 %v920
      %v967 = vunpack.c.l.b16 %v921
      %v968 = vunpack.c.h.b16 %v921
      %v969 = vunpack.c.l.b16 %v922
      %v970 = vunpack.c.h.b16 %v922
      %v971 = vunpack.c.l.b16 %v923
      %v972 = vunpack.c.h.b16 %v923
      %v973 = vunpack.c.l.b16 %v924
      %v974 = vunpack.c.h.b16 %v924
      %v975 = vunpack.c.l.b16 %v925
      %v976 = vunpack.c.h.b16 %v925
      %v977 = vunpack.c.l.b16 %v926
      %v978 = vunpack.c.h.b16 %v926
      %v979 = vunpack.c.l.b16 %v927
      %v980 = vunpack.c.h.b16 %v927
      %v981 = vpack.c.b16 %v951, %v949
      %v982 = vpack.c.b16 %v952, %v950
      %v983 = vpack.c.b16 %v955, %v953
      %v984 = vpack.c.b16 %v956, %v954
      %v985 = vpack.c.b16 %v959, %v957
      %v986 = vpack.c.b16 %v960, %v958
      %v987 = vpack.c.b16 %v963, %v961
      %v988 = vpack.c.b16 %v964, %v962
      %v989 = vpack.c.b16 %v967, %v965
      %v990 = vpack.c.b16 %v968, %v966
      %v991 = vpack.c.b16 %v971, %v969
      %v992 = vpack.c.b16 %v972, %v970
      %v993 = vpack.c.b16 %v975, %v973
      %v994 = vpack.c.b16 %v976, %v974
      %v995 = vpack.c.b16 %v979, %v977
      %v996 = vpack.c.b16 %v980, %v978
      %1013 = vmatprep.subr.bf16.mxu0 %v982
      %1014 = vmatpush1.bf16.msra.mxu0 %v981
      %1015 = vmatprep.subr.bf16.mxu0 %v984
      %1016 = vmatpush1.bf16.msra.mxu0 %v983
      %1017 = vmatprep.subr.bf16.mxu0 %v986
      %1018 = vmatpush1.bf16.msra.mxu0 %v985
      %1019 = vmatprep.subr.bf16.mxu0 %v988
      %1020 = vmatpush1.bf16.msra.mxu0 %v987
      %1021 = vmatprep.subr.bf16.mxu0 %v990
      %1022 = vmatpush1.bf16.msra.mxu0 %v989
      %1023 = vmatprep.subr.bf16.mxu0 %v992
      %1024 = vmatpush1.bf16.msra.mxu0 %v991
      %1025 = vmatprep.subr.bf16.mxu0 %v994
      %1026 = vmatpush1.bf16.msra.mxu0 %v993
      %1027 = vmatprep.subr.bf16.mxu0 %v996
      %1028 = vmatpush1.bf16.msra.mxu0 %v995
      %1029 = vmatprep.subr.bf16.mxu0 0
      %1030 = vmatpush1.bf16.msra.mxu0 0
      %1031 = vmatprep.subr.bf16.mxu0 0
      %1032 = vmatpush1.bf16.msra.mxu0 0
      %1033 = vmatprep.subr.bf16.mxu0 0
      %1034 = vmatpush1.bf16.msra.mxu0 0
      %1035 = vmatprep.subr.bf16.mxu0 0
      %1036 = vmatpush1.bf16.msra.mxu0 0
      %1037 = vmatprep.subr.bf16.mxu0 0
      %1038 = vmatpush1.bf16.msra.mxu0 0
      %1039 = vmatprep.subr.bf16.mxu0 0
      %1040 = vmatpush1.bf16.msra.mxu0 0
      %1041 = vmatprep.subr.bf16.mxu0 0
      %1042 = vmatpush1.bf16.msra.mxu0 0
      %1043 = vmatprep.subr.bf16.mxu0 0
      %1044 = vmatpush1.bf16.msra.mxu0 0
      %1045 = vmatprep.mubr.bf16.mxu0 0
      %1046 = vmatmul.mubr.bf16.gmra.mrb[0].mxu0 %v931
      %v1047 = vpop.f32.mrb[0].mxu0
      %v1048 = vadd.f32 0.0, %v1047
      %v1049 = vpop.f32.mrb[0].mxu0
      %v1050 = vadd.f32 0.0, %v1049
      %v1051 = vpop.f32.mrb[0].mxu0
      %v1052 = vpop.f32.mrb[0].mxu0
      %1053 = vdwg.mxu0
      %v1054 = vadd.f32 %v908, %v1048
      %v1055 = vadd.f32 %v909, %v1050
      %v1056 = vld [vmem:[%s165 + $0x4] sm:$0xf]
      %s1057 = scalar_lea.vmem %s1, 768
      %v1058 = vld [vmem:[%s1057] sm:$0xff]
      %v1059 = vld [vmem:[%s1057 + $0x8] sm:$0xff]
      %v1060 = vld [vmem:[%s1057 + $0x10] sm:$0xff]
      %v1061 = vld [vmem:[%s1057 + $0x18] sm:$0xff]
      %v1062 = vld [vmem:[%s1057 + $0x20] sm:$0xff]
      %v1063 = vld [vmem:[%s1057 + $0x28] sm:$0xff]
      %v1064 = vld [vmem:[%s1057 + $0x30] sm:$0xff]
      %v1065 = vld [vmem:[%s1057 + $0x38] sm:$0xff]
      %v1066 = vld [vmem:[%s1057 + $0x40] sm:$0xff]
      %v1067 = vld [vmem:[%s1057 + $0x48] sm:$0xff]
      %v1068 = vld [vmem:[%s1057 + $0x50] sm:$0xff]
      %v1069 = vld [vmem:[%s1057 + $0x58] sm:$0xff]
      %v1070 = vld [vmem:[%s1057 + $0x60] sm:$0xff]
      %v1071 = vld [vmem:[%s1057 + $0x68] sm:$0xff]
      %v1072 = vld [vmem:[%s1057 + $0x70] sm:$0xff]
      %v1073 = vld [vmem:[%s1057 + $0x78] sm:$0xff]
      %v1090 = vunpack.c.l.b16 %v1058
      %v1091 = vunpack.c.h.b16 %v1058
      %v1092 = vunpack.c.l.b16 %v1059
      %v1093 = vunpack.c.h.b16 %v1059
      %v1094 = vunpack.c.l.b16 %v1060
      %v1095 = vunpack.c.h.b16 %v1060
      %v1096 = vunpack.c.l.b16 %v1061
      %v1097 = vunpack.c.h.b16 %v1061
      %v1098 = vunpack.c.l.b16 %v1062
      %v1099 = vunpack.c.h.b16 %v1062
      %v1100 = vunpack.c.l.b16 %v1063
      %v1101 = vunpack.c.h.b16 %v1063
      %v1102 = vunpack.c.l.b16 %v1064
      %v1103 = vunpack.c.h.b16 %v1064
      %v1104 = vunpack.c.l.b16 %v1065
      %v1105 = vunpack.c.h.b16 %v1065
      %v1106 = vunpack.c.l.b16 %v1066
      %v1107 = vunpack.c.h.b16 %v1066
      %v1108 = vunpack.c.l.b16 %v1067
      %v1109 = vunpack.c.h.b16 %v1067
      %v1110 = vunpack.c.l.b16 %v1068
      %v1111 = vunpack.c.h.b16 %v1068
      %v1112 = vunpack.c.l.b16 %v1069
      %v1113 = vunpack.c.h.b16 %v1069
      %v1114 = vunpack.c.l.b16 %v1070
      %v1115 = vunpack.c.h.b16 %v1070
      %v1116 = vunpack.c.l.b16 %v1071
      %v1117 = vunpack.c.h.b16 %v1071
      %v1118 = vunpack.c.l.b16 %v1072
      %v1119 = vunpack.c.h.b16 %v1072
      %v1120 = vunpack.c.l.b16 %v1073
      %v1121 = vunpack.c.h.b16 %v1073
      %v1122 = vpack.c.b16 %v1092, %v1090
      %v1123 = vpack.c.b16 %v1093, %v1091
      %v1124 = vpack.c.b16 %v1096, %v1094
      %v1125 = vpack.c.b16 %v1097, %v1095
      %v1126 = vpack.c.b16 %v1100, %v1098
      %v1127 = vpack.c.b16 %v1101, %v1099
      %v1128 = vpack.c.b16 %v1104, %v1102
      %v1129 = vpack.c.b16 %v1105, %v1103
      %v1130 = vpack.c.b16 %v1108, %v1106
      %v1131 = vpack.c.b16 %v1109, %v1107
      %v1132 = vpack.c.b16 %v1112, %v1110
      %v1133 = vpack.c.b16 %v1113, %v1111
      %v1134 = vpack.c.b16 %v1116, %v1114
      %v1135 = vpack.c.b16 %v1117, %v1115
      %v1136 = vpack.c.b16 %v1120, %v1118
      %v1137 = vpack.c.b16 %v1121, %v1119
      %1154 = vmatprep.subr.bf16.mxu0 %v1123
      %1155 = vmatpush1.bf16.msra.mxu0 %v1122
      %1156 = vmatprep.subr.bf16.mxu0 %v1125
      %1157 = vmatpush1.bf16.msra.mxu0 %v1124
      %1158 = vmatprep.subr.bf16.mxu0 %v1127
      %1159 = vmatpush1.bf16.msra.mxu0 %v1126
      %1160 = vmatprep.subr.bf16.mxu0 %v1129
      %1161 = vmatpush1.bf16.msra.mxu0 %v1128
      %1162 = vmatprep.subr.bf16.mxu0 %v1131
      %1163 = vmatpush1.bf16.msra.mxu0 %v1130
      %1164 = vmatprep.subr.bf16.mxu0 %v1133
      %1165 = vmatpush1.bf16.msra.mxu0 %v1132
      %1166 = vmatprep.subr.bf16.mxu0 %v1135
      %1167 = vmatpush1.bf16.msra.mxu0 %v1134
      %1168 = vmatprep.subr.bf16.mxu0 %v1137
      %1169 = vmatpush1.bf16.msra.mxu0 %v1136
      %1170 = vmatprep.subr.bf16.mxu0 0
      %1171 = vmatpush1.bf16.msra.mxu0 0
      %1172 = vmatprep.subr.bf16.mxu0 0
      %1173 = vmatpush1.bf16.msra.mxu0 0
      %1174 = vmatprep.subr.bf16.mxu0 0
      %1175 = vmatpush1.bf16.msra.mxu0 0
      %1176 = vmatprep.subr.bf16.mxu0 0
      %1177 = vmatpush1.bf16.msra.mxu0 0
      %1178 = vmatprep.subr.bf16.mxu0 0
      %1179 = vmatpush1.bf16.msra.mxu0 0
      %1180 = vmatprep.subr.bf16.mxu0 0
      %1181 = vmatpush1.bf16.msra.mxu0 0
      %1182 = vmatprep.subr.bf16.mxu0 0
      %1183 = vmatpush1.bf16.msra.mxu0 0
      %1184 = vmatprep.subr.bf16.mxu0 0
      %1185 = vmatpush1.bf16.msra.mxu0 0
      %1186 = vmatprep.mubr.bf16.mxu0 0
      %1187 = vmatmul.mubr.bf16.gmra.mrb[0].mxu0 %v1056
      %v1188 = vpop.f32.mrb[0].mxu0
      %v1189 = vadd.f32 0.0, %v1188
      %v1190 = vpop.f32.mrb[0].mxu0
      %v1191 = vadd.f32 0.0, %v1190
      %v1192 = vpop.f32.mrb[0].mxu0
      %v1193 = vpop.f32.mrb[0].mxu0
      %1194 = vdwg.mxu0
      %v1195 = vadd.f32 %v1054, %v1189
      %v1196 = vadd.f32 %v1055, %v1191
      %v1197 = vld [vmem:[%s165 + $0x4] sm:$0xf]
      %v1198 = vld [vmem:[%s165 + $0x8] sm:$0x1]
      %s1199 = scalar_lea.vmem %s1, 896
      %v1200 = vld [vmem:[%s1199] sm:$0xff]
      %v1201 = vld [vmem:[%s1199 + $0x8] sm:$0xff]
      %v1202 = vld [vmem:[%s1199 + $0x10] sm:$0xff]
      %v1203 = vld [vmem:[%s1199 + $0x18] sm:$0xff]
      %v1204 = vld [vmem:[%s1199 + $0x20] sm:$0xff]
      %v1205 = vld [vmem:[%s1199 + $0x28] sm:$0xff]
      %v1206 = vld [vmem:[%s1199 + $0x30] sm:$0xff]
      %v1207 = vld [vmem:[%s1199 + $0x38] sm:$0xff]
      %v1208 = vld [vmem:[%s1199 + $0x40] sm:$0xff]
      %v1209 = vld [vmem:[%s1199 + $0x48] sm:$0xff]
      %v1210 = vld [vmem:[%s1199 + $0x50] sm:$0xff]
      %v1211 = vld [vmem:[%s1199 + $0x58] sm:$0xff]
      %v1212 = vld [vmem:[%s1199 + $0x60] sm:$0xff]
      %v1213 = vld [vmem:[%s1199 + $0x68] sm:$0xff]
      %v1214 = vld [vmem:[%s1199 + $0x70] sm:$0xff]
      %v1215 = vld [vmem:[%s1199 + $0x78] sm:$0xff]
      %v1218 = vunpack.c.l.b16 %v1197
      %v1219 = vunpack.c.l.b16 %v1198
      %v1220 = vpack.c.b16 %v1219, %v1218
      %v1222 = vshrl.u32 %v1220, 16
      %v1224 = vshll.u32 %v1220, 16
      %v1226 = vrot.slane %v1224, 1
      %v1227 = vor.u32 %v1222, %v1226
      %v1245 = vunpack.c.l.b16 %v1200
      %v1246 = vunpack.c.h.b16 %v1200
      %v1247 = vunpack.c.l.b16 %v1201
      %v1248 = vunpack.c.h.b16 %v1201
      %v1249 = vunpack.c.l.b16 %v1202
      %v1250 = vunpack.c.h.b16 %v1202
      %v1251 = vunpack.c.l.b16 %v1203
      %v1252 = vunpack.c.h.b16 %v1203
      %v1253 = vunpack.c.l.b16 %v1204
      %v1254 = vunpack.c.h.b16 %v1204
      %v1255 = vunpack.c.l.b16 %v1205
      %v1256 = vunpack.c.h.b16 %v1205
      %v1257 = vunpack.c.l.b16 %v1206
      %v1258 = vunpack.c.h.b16 %v1206
      %v1259 = vunpack.c.l.b16 %v1207
      %v1260 = vunpack.c.h.b16 %v1207
      %v1261 = vunpack.c.l.b16 %v1208
      %v1262 = vunpack.c.h.b16 %v1208
      %v1263 = vunpack.c.l.b16 %v1209
      %v1264 = vunpack.c.h.b16 %v1209
      %v1265 = vunpack.c.l.b16 %v1210
      %v1266 = vunpack.c.h.b16 %v1210
      %v1267 = vunpack.c.l.b16 %v1211
      %v1268 = vunpack.c.h.b16 %v1211
      %v1269 = vunpack.c.l.b16 %v1212
      %v1270 = vunpack.c.h.b16 %v1212
      %v1271 = vunpack.c.l.b16 %v1213
      %v1272 = vunpack.c.h.b16 %v1213
      %v1273 = vunpack.c.l.b16 %v1214
      %v1274 = vunpack.c.h.b16 %v1214
      %v1275 = vunpack.c.l.b16 %v1215
      %v1276 = vunpack.c.h.b16 %v1215
      %v1277 = vpack.c.b16 %v1247, %v1245
      %v1278 = vpack.c.b16 %v1248, %v1246
      %v1279 = vpack.c.b16 %v1251, %v1249
      %v1280 = vpack.c.b16 %v1252, %v1250
      %v1281 = vpack.c.b16 %v1255, %v1253
      %v1282 = vpack.c.b16 %v1256, %v1254
      %v1283 = vpack.c.b16 %v1259, %v1257
      %v1284 = vpack.c.b16 %v1260, %v1258
      %v1285 = vpack.c.b16 %v1263, %v1261
      %v1286 = vpack.c.b16 %v1264, %v1262
      %v1287 = vpack.c.b16 %v1267, %v1265
      %v1288 = vpack.c.b16 %v1268, %v1266
      %v1289 = vpack.c.b16 %v1271, %v1269
      %v1290 = vpack.c.b16 %v1272, %v1270
      %v1291 = vpack.c.b16 %v1275, %v1273
      %v1292 = vpack.c.b16 %v1276, %v1274
      %1309 = vmatprep.subr.bf16.mxu0 %v1278
      %1310 = vmatpush1.bf16.msra.mxu0 %v1277
      %1311 = vmatprep.subr.bf16.mxu0 %v1280
      %1312 = vmatpush1.bf16.msra.mxu0 %v1279
      %1313 = vmatprep.subr.bf16.mxu0 %v1282
      %1314 = vmatpush1.bf16.msra.mxu0 %v1281
      %1315 = vmatprep.subr.bf16.mxu0 %v1284
      %1316 = vmatpush1.bf16.msra.mxu0 %v1283
      %1317 = vmatprep.subr.bf16.mxu0 %v1286
      %1318 = vmatpush1.bf16.msra.mxu0 %v1285
      %1319 = vmatprep.subr.bf16.mxu0 %v1288
      %1320 = vmatpush1.bf16.msra.mxu0 %v1287
      %1321 = vmatprep.subr.bf16.mxu0 %v1290
      %1322 = vmatpush1.bf16.msra.mxu0 %v1289
      %1323 = vmatprep.subr.bf16.mxu0 %v1292
      %1324 = vmatpush1.bf16.msra.mxu0 %v1291
      %1325 = vmatprep.subr.bf16.mxu0 0
      %1326 = vmatpush1.bf16.msra.mxu0 0
      %1327 = vmatprep.subr.bf16.mxu0 0
      %1328 = vmatpush1.bf16.msra.mxu0 0
      %1329 = vmatprep.subr.bf16.mxu0 0
      %1330 = vmatpush1.bf16.msra.mxu0 0
      %1331 = vmatprep.subr.bf16.mxu0 0
      %1332 = vmatpush1.bf16.msra.mxu0 0
      %1333 = vmatprep.subr.bf16.mxu0 0
      %1334 = vmatpush1.bf16.msra.mxu0 0
      %1335 = vmatprep.subr.bf16.mxu0 0
      %1336 = vmatpush1.bf16.msra.mxu0 0
      %1337 = vmatprep.subr.bf16.mxu0 0
      %1338 = vmatpush1.bf16.msra.mxu0 0
      %1339 = vmatprep.subr.bf16.mxu0 0
      %1340 = vmatpush1.bf16.msra.mxu0 0
      %1341 = vmatprep.mubr.bf16.mxu0 0
      %1342 = vmatmul.mubr.bf16.gmra.mrb[0].mxu0 %v1227
      %v1343 = vpop.f32.mrb[0].mxu0
      %v1344 = vadd.f32 0.0, %v1343
      %v1345 = vpop.f32.mrb[0].mxu0
      %v1346 = vadd.f32 0.0, %v1345
      %v1347 = vpop.f32.mrb[0].mxu0
      %v1348 = vpop.f32.mrb[0].mxu0
      %1349 = vdwg.mxu0
      %v1350 = vadd.f32 %v1195, %v1344
      %v1351 = vadd.f32 %v1196, %v1346
      %v1352 = vld [vmem:[%s165 + $0x4] sm:$0xe]
      %s1353 = scalar_lea.vmem %s1, 1024
      %v1354 = vld [vmem:[%s1353] sm:$0xff]
      %v1355 = vld [vmem:[%s1353 + $0x8] sm:$0xff]
      %v1356 = vld [vmem:[%s1353 + $0x10] sm:$0xff]
      %v1357 = vld [vmem:[%s1353 + $0x18] sm:$0xff]
      %v1358 = vld [vmem:[%s1353 + $0x20] sm:$0xff]
      %v1359 = vld [vmem:[%s1353 + $0x28] sm:$0xff]
      %v1360 = vld [vmem:[%s1353 + $0x30] sm:$0xff]
      %v1361 = vld [vmem:[%s1353 + $0x38] sm:$0xff]
      %v1362 = vld [vmem:[%s1353 + $0x40] sm:$0xff]
      %v1363 = vld [vmem:[%s1353 + $0x48] sm:$0xff]
      %v1364 = vld [vmem:[%s1353 + $0x50] sm:$0xff]
      %v1365 = vld [vmem:[%s1353 + $0x58] sm:$0xff]
      %v1366 = vld [vmem:[%s1353 + $0x60] sm:$0xff]
      %v1367 = vld [vmem:[%s1353 + $0x68] sm:$0xff]
      %v1368 = vld [vmem:[%s1353 + $0x70] sm:$0xff]
      %v1369 = vld [vmem:[%s1353 + $0x78] sm:$0xff]
      %v1371 = vunpack.c.l.b16 %v1352
      %v1372 = vpack.c.b16 %v1219, %v1371
      %v1373 = vrot.slane %v1372, 1
      %v1391 = vunpack.c.l.b16 %v1354
      %v1392 = vunpack.c.h.b16 %v1354
      %v1393 = vunpack.c.l.b16 %v1355
      %v1394 = vunpack.c.h.b16 %v1355
      %v1395 = vunpack.c.l.b16 %v1356
      %v1396 = vunpack.c.h.b16 %v1356
      %v1397 = vunpack.c.l.b16 %v1357
      %v1398 = vunpack.c.h.b16 %v1357
      %v1399 = vunpack.c.l.b16 %v1358
      %v1400 = vunpack.c.h.b16 %v1358
      %v1401 = vunpack.c.l.b16 %v1359
      %v1402 = vunpack.c.h.b16 %v1359
      %v1403 = vunpack.c.l.b16 %v1360
      %v1404 = vunpack.c.h.b16 %v1360
      %v1405 = vunpack.c.l.b16 %v1361
      %v1406 = vunpack.c.h.b16 %v1361
      %v1407 = vunpack.c.l.b16 %v1362
      %v1408 = vunpack.c.h.b16 %v1362
      %v1409 = vunpack.c.l.b16 %v1363
      %v1410 = vunpack.c.h.b16 %v1363
      %v1411 = vunpack.c.l.b16 %v1364
      %v1412 = vunpack.c.h.b16 %v1364
      %v1413 = vunpack.c.l.b16 %v1365
      %v1414 = vunpack.c.h.b16 %v1365
      %v1415 = vunpack.c.l.b16 %v1366
      %v1416 = vunpack.c.h.b16 %v1366
      %v1417 = vunpack.c.l.b16 %v1367
      %v1418 = vunpack.c.h.b16 %v1367
      %v1419 = vunpack.c.l.b16 %v1368
      %v1420 = vunpack.c.h.b16 %v1368
      %v1421 = vunpack.c.l.b16 %v1369
      %v1422 = vunpack.c.h.b16 %v1369
      %v1423 = vpack.c.b16 %v1393, %v1391
      %v1424 = vpack.c.b16 %v1394, %v1392
      %v1425 = vpack.c.b16 %v1397, %v1395
      %v1426 = vpack.c.b16 %v1398, %v1396
      %v1427 = vpack.c.b16 %v1401, %v1399
      %v1428 = vpack.c.b16 %v1402, %v1400
      %v1429 = vpack.c.b16 %v1405, %v1403
      %v1430 = vpack.c.b16 %v1406, %v1404
      %v1431 = vpack.c.b16 %v1409, %v1407
      %v1432 = vpack.c.b16 %v1410, %v1408
      %v1433 = vpack.c.b16 %v1413, %v1411
      %v1434 = vpack.c.b16 %v1414, %v1412
      %v1435 = vpack.c.b16 %v1417, %v1415
      %v1436 = vpack.c.b16 %v1418, %v1416
      %v1437 = vpack.c.b16 %v1421, %v1419
      %v1438 = vpack.c.b16 %v1422, %v1420
      %1455 = vmatprep.subr.bf16.mxu0 %v1424
      %1456 = vmatpush1.bf16.msra.mxu0 %v1423
      %1457 = vmatprep.subr.bf16.mxu0 %v1426
      %1458 = vmatpush1.bf16.msra.mxu0 %v1425
      %1459 = vmatprep.subr.bf16.mxu0 %v1428
      %1460 = vmatpush1.bf16.msra.mxu0 %v1427
      %1461 = vmatprep.subr.bf16.mxu0 %v1430
      %1462 = vmatpush1.bf16.msra.mxu0 %v1429
      %1463 = vmatprep.subr.bf16.mxu0 %v1432
      %1464 = vmatpush1.bf16.msra.mxu0 %v1431
      %1465 = vmatprep.subr.bf16.mxu0 %v1434
      %1466 = vmatpush1.bf16.msra.mxu0 %v1433
      %1467 = vmatprep.subr.bf16.mxu0 %v1436
      %1468 = vmatpush1.bf16.msra.mxu0 %v1435
      %1469 = vmatprep.subr.bf16.mxu0 %v1438
      %1470 = vmatpush1.bf16.msra.mxu0 %v1437
      %1471 = vmatprep.subr.bf16.mxu0 0
      %1472 = vmatpush1.bf16.msra.mxu0 0
      %1473 = vmatprep.subr.bf16.mxu0 0
      %1474 = vmatpush1.bf16.msra.mxu0 0
      %1475 = vmatprep.subr.bf16.mxu0 0
      %1476 = vmatpush1.bf16.msra.mxu0 0
      %1477 = vmatprep.subr.bf16.mxu0 0
      %1478 = vmatpush1.bf16.msra.mxu0 0
      %1479 = vmatprep.subr.bf16.mxu0 0
      %1480 = vmatpush1.bf16.msra.mxu0 0
      %1481 = vmatprep.subr.bf16.mxu0 0
      %1482 = vmatpush1.bf16.msra.mxu0 0
      %1483 = vmatprep.subr.bf16.mxu0 0
      %1484 = vmatpush1.bf16.msra.mxu0 0
      %1485 = vmatprep.subr.bf16.mxu0 0
      %1486 = vmatpush1.bf16.msra.mxu0 0
      %1487 = vmatprep.mubr.bf16.mxu0 0
      %1488 = vmatmul.mubr.bf16.gmra.mrb[0].mxu0 %v1373
      %v1489 = vpop.f32.mrb[0].mxu0
      %v1490 = vadd.f32 0.0, %v1489
      %v1491 = vpop.f32.mrb[0].mxu0
      %v1492 = vadd.f32 0.0, %v1491
      %v1493 = vpop.f32.mrb[0].mxu0
      %v1494 = vpop.f32.mrb[0].mxu0
      %1495 = vdwg.mxu0
      %v1496 = vadd.f32 %v1350, %v1490
      %v1497 = vadd.f32 %v1351, %v1492
      %v1498 = vld [vmem:[%s2] sm:$0x3]
      %v1500 = vlaneseq
      %v1501 = vshrl.u32 %v1500, 7
      %v1502 = vsub.s32 0, %v1501
      %v1503 = vrot.slane %v1498, %v1502
      %v1504 = vlaneseq
      %v1505 = vshrl.u32 %v1504, 7
      %v1506 = vsub.s32 1, %v1505
      %v1507 = vrot.slane %v1498, %v1506
      %v1510 = vadd.f32 %v1496, %v1503
      %v1511 = vadd.f32 %v1497, %v1507
      %v1512 = vmax.f32 %v1510, 0.0
      %v1513 = vmax.f32 %v1511, 0.0
      %v1514 = vpack.c.bf16 %v1512, %v1512
      %v1515 = vpack.c.bf16 %v1513, %v1513
      %v1518 = vunpack.c.l.b16 %v1514
      %v1519 = vunpack.c.l.b16 %v1515
      %v1520 = vpack.c.b16 %v1519, %v1518
      %1522 = vst [vmem:[%s170] sm:$0xff] %v1520
      %p1523 = scmp.lt.s32.totalorder %s14, 1
      %s1524 = scalar_select %p1523, %s14, 1
      %s1525 = smul.addr %s1524, 2
      %s1526 = smul.addr %s1525, 4
      %s1527 = scalar_lea.vmem %s3, %s1526
      // Predicated region
      $region33: #{vae_forward.10} parent=31 // pred_check
        %p1528 = pneg %p100
      $region34: #{vae_forward.10} parent=31 // pred_check_branch
        %1530 = sbr.rel (%p1528) target = $region36
      $region35: #{vae_forward.10} parent=31 // pred_region
        _
      $region36: #{vae_forward.10} parent=31 // pred_fallthru
        _
    $region32: #{vae_forward.10} parent=5 // pred_fallthru
      _
    %p1531 = scmp.le.s32.totalorder 2, %s9
    // Predicated region
    $region37: #{vae_forward.10} parent=5 // pred_check
      %p1532 = pneg %p1531
    $region38: #{vae_forward.10} parent=5 // pred_check_branch
      %1534 = sbr.rel (%p1532) target = $region40
    $region39: #{vae_forward.10} parent=5 // pred_region
      %s1535 = ssub.s32 %s9, 2
      // Predicated region
      $region41: #{vae_forward.10} parent=39 // pred_check
        %p1536 = pneg %p106
      $region42: #{vae_forward.10} parent=39 // pred_check_branch
        %1538 = sbr.rel (%p1536) target = $region44
      $region43: #{vae_forward.10} parent=39 // pred_region
        %p1539 = scmp.lt.s32.totalorder %s15, 1
        %s1540 = scalar_select %p1539, %s15, 1
        %s1541 = smul.addr %s1540, 2
        %s1542 = smul.addr %s1541, 4
        %s1543 = scalar_lea.vmem %s3, %s1542
      $region44: #{vae_forward.10} parent=39 // pred_fallthru
        _
    $region40: #{vae_forward.10} parent=5 // pred_fallthru
      _
  $region6: #{vae_forward.10} parent=0 // loop_footer
    %s13 = sadd.s32 1, %s9
  $region7: #{vae_forward.10} parent=0 // loop_footer_branch
    %8 = sbr.rel target = $region3
  $region8: #{vae_forward.10} parent=0 // loop_exit
    _

// kernel: vae_forward.9
$region0: #{vae_forward.9}
  #allocation0 [shape = 'u32[]', space=smem, size = 0x4, offset = 0x4, fixed_abs, tag = 'smem constant byte address 0x4 - core index']
  #allocation1 [shape = 'u32[144,128]{1,0:T(1,128)}', space=vmem, size = 0x12000, scoped, tag = 'internal scratch']
  %s0 = inlined_call_operand.vmem [shape: bf16[2,12,256], index: 0, kind: input, shape index: {}]
  %s1 = inlined_call_operand.vmem [shape: bf16[4,256,128], index: 1, kind: input, shape index: {}]
  %s2 = inlined_call_operand.vmem [shape: f32[1,128], index: 2, kind: input, shape index: {}]
  %s3 = inlined_call_operand.vmem [shape: bf16[512,64], index: 3, kind: input, shape index: {}]
  %s4 = inlined_call_operand.vmem [shape: f32[1,64], index: 4, kind: input, shape index: {}]
  %s5 = inlined_call_operand.vmem [shape: f32[2,32], index: 5, kind: input, shape index: {}]
  %s6 = inlined_call_operand.vmem [shape: bf16[32,512], index: 6, kind: input, shape index: {}]
  %s7 = inlined_call_operand.vmem [shape: f32[1,512], index: 7, kind: input, shape index: {}]
  %s8 = inlined_call_operand.vmem [shape: f32[2,64], index: 8, kind: output, shape index: {0}]
  %s9 = inlined_call_operand.vmem [shape: bf16[2,512], index: 9, kind: output, shape index: {1}]
  %10 = xla_tuple %s8, %s9
  %s11 = sld [smem:[#allocation0]]
  $region50: #{vae_forward.9} parent=0
    _
  %s13 = ssub.s32 1, %s11
  %s14 = scalar_select 0, %s13, %s11
  // Predicated region
  $region2: #{vae_forward.9} parent=0 // pred_check
    _
  $region3: #{vae_forward.9} parent=0 // pred_check_branch
    %16 = sbr.rel (0) target = $region5
  $region4: #{vae_forward.9} parent=0 // pred_region
    _
  $region5: #{vae_forward.9} parent=0 // pred_fallthru
    _
  // Predicated region
  $region6: #{vae_forward.9} parent=0 // pred_check
    _
  $region7: #{vae_forward.9} parent=0 // pred_check_branch
    %18 = sbr.rel (0) target = $region9
  $region8: #{vae_forward.9} parent=0 // pred_region
    _
  $region9: #{vae_forward.9} parent=0 // pred_fallthru
    _
  // Predicated region
  $region10: #{vae_forward.9} parent=0 // pred_check
    _
  $region11: #{vae_forward.9} parent=0 // pred_check_branch
    %20 = sbr.rel (0) target = $region13
  $region12: #{vae_forward.9} parent=0 // pred_region
    _
  $region13: #{vae_forward.9} parent=0 // pred_fallthru
    _
  // Predicated region
  $region14: #{vae_forward.9} parent=0 // pred_check
    _
  $region15: #{vae_forward.9} parent=0 // pred_check_branch
    %22 = sbr.rel (0) target = $region17
  $region16: #{vae_forward.9} parent=0 // pred_region
    _
  $region17: #{vae_forward.9} parent=0 // pred_fallthru
    _
  // Predicated region
  $region18: #{vae_forward.9} parent=0 // pred_check
    _
  $region19: #{vae_forward.9} parent=0 // pred_check_branch
    %24 = sbr.rel (0) target = $region21
  $region20: #{vae_forward.9} parent=0 // pred_region
    _
  $region21: #{vae_forward.9} parent=0 // pred_fallthru
    _
  // Predicated region
  $region22: #{vae_forward.9} parent=0 // pred_check
    _
  $region23: #{vae_forward.9} parent=0 // pred_check_branch
    %26 = sbr.rel (0) target = $region25
  $region24: #{vae_forward.9} parent=0 // pred_region
    _
  $region25: #{vae_forward.9} parent=0 // pred_fallthru
    _
  // Predicated region
  $region26: #{vae_forward.9} parent=0 // pred_check
    _
  $region27: #{vae_forward.9} parent=0 // pred_check_branch
    %28 = sbr.rel (0) target = $region29
  $region28: #{vae_forward.9} parent=0 // pred_region
    _
  $region29: #{vae_forward.9} parent=0 // pred_fallthru
    _
  // Predicated region
  $region30: #{vae_forward.9} parent=0 // pred_check
    _
  $region31: #{vae_forward.9} parent=0 // pred_check_branch
    %30 = sbr.rel (0) target = $region33
  $region32: #{vae_forward.9} parent=0 // pred_region
    _
  $region33: #{vae_forward.9} parent=0 // pred_fallthru
    _
  %v32 = vld [vmem:[%s0] sm:$0x77]
  %v33 = vld [vmem:[%s1] sm:$0xf]
  %v34 = vld [vmem:[%s1 + $0x4] sm:$0xf]
  %v35 = vld [vmem:[%s1 + $0x8] sm:$0xf]
  %v36 = vld [vmem:[%s1 + $0xc] sm:$0xf]
  %v37 = vld [vmem:[%s1 + $0x10] sm:$0xf]
  %v38 = vld [vmem:[%s1 + $0x14] sm:$0xf]
  %v39 = vld [vmem:[%s1 + $0x18] sm:$0xf]
  %v40 = vld [vmem:[%s1 + $0x1c] sm:$0xf]
  %v41 = vld [vmem:[%s1 + $0x20] sm:$0xf]
  %v42 = vld [vmem:[%s1 + $0x24] sm:$0xf]
  %v43 = vld [vmem:[%s1 + $0x28] sm:$0xf]
  %v44 = vld [vmem:[%s1 + $0x2c] sm:$0xf]
  %v45 = vld [vmem:[%s1 + $0x30] sm:$0xf]
  %v46 = vld [vmem:[%s1 + $0x34] sm:$0xf]
  %v47 = vld [vmem:[%s1 + $0x38] sm:$0xf]
  %v48 = vld [vmem:[%s1 + $0x3c] sm:$0xf]
  %v49 = vld [vmem:[%s1 + $0x40] sm:$0xf]
  %v50 = vld [vmem:[%s1 + $0x44] sm:$0xf]
  %v51 = vld [vmem:[%s1 + $0x48] sm:$0xf]
  %v52 = vld [vmem:[%s1 + $0x4c] sm:$0xf]
  %v53 = vld [vmem:[%s1 + $0x50] sm:$0xf]
  %v54 = vld [vmem:[%s1 + $0x54] sm:$0xf]
  %v55 = vld [vmem:[%s1 + $0x58] sm:$0xf]
  %v56 = vld [vmem:[%s1 + $0x5c] sm:$0xf]
  %v57 = vld [vmem:[%s1 + $0x60] sm:$0xf]
  %v58 = vld [vmem:[%s1 + $0x64] sm:$0xf]
  %v59 = vld [vmem:[%s1 + $0x68] sm:$0xf]
  %v60 = vld [vmem:[%s1 + $0x6c] sm:$0xf]
  %v61 = vld [vmem:[%s1 + $0x70] sm:$0xf]
  %v62 = vld [vmem:[%s1 + $0x74] sm:$0xf]
  %v63 = vld [vmem:[%s1 + $0x78] sm:$0xf]
  %v64 = vld [vmem:[%s1 + $0x7c] sm:$0xf]
  %v65 = vld [vmem:[%s0] sm:$0xff]
  %s66 = scalar_lea.vmem %s1, 128
  %v67 = vld [vmem:[%s66] sm:$0xf]
  %v68 = vld [vmem:[%s66 + $0x4] sm:$0xf]
  %v69 = vld [vmem:[%s66 + $0x8] sm:$0xf]
  %v70 = vld [vmem:[%s66 + $0xc] sm:$0xf]
  %v71 = vld [vmem:[%s66 + $0x10] sm:$0xf]
  %v72 = vld [vmem:[%s66 + $0x14] sm:$0xf]
  %v73 = vld [vmem:[%s66 + $0x18] sm:$0xf]
  %v74 = vld [vmem:[%s66 + $0x1c] sm:$0xf]
  %v75 = vld [vmem:[%s66 + $0x20] sm:$0xf]
  %v76 = vld [vmem:[%s66 + $0x24] sm:$0xf]
  %v77 = vld [vmem:[%s66 + $0x28] sm:$0xf]
  %v78 = vld [vmem:[%s66 + $0x2c] sm:$0xf]
  %v79 = vld [vmem:[%s66 + $0x30] sm:$0xf]
  %v80 = vld [vmem:[%s66 + $0x34] sm:$0xf]
  %v81 = vld [vmem:[%s66 + $0x38] sm:$0xf]
  %v82 = vld [vmem:[%s66 + $0x3c] sm:$0xf]
  %v83 = vld [vmem:[%s66 + $0x40] sm:$0xf]
  %v84 = vld [vmem:[%s66 + $0x44] sm:$0xf]
  %v85 = vld [vmem:[%s66 + $0x48] sm:$0xf]
  %v86 = vld [vmem:[%s66 + $0x4c] sm:$0xf]
  %v87 = vld [vmem:[%s66 + $0x50] sm:$0xf]
  %v88 = vld [vmem:[%s66 + $0x54] sm:$0xf]
  %v89 = vld [vmem:[%s66 + $0x58] sm:$0xf]
  %v90 = vld [vmem:[%s66 + $0x5c] sm:$0xf]
  %v91 = vld [vmem:[%s66 + $0x60] sm:$0xf]
  %v92 = vld [vmem:[%s66 + $0x64] sm:$0xf]
  %v93 = vld [vmem:[%s66 + $0x68] sm:$0xf]
  %v94 = vld [vmem:[%s66 + $0x6c] sm:$0xf]
  %v95 = vld [vmem:[%s66 + $0x70] sm:$0xf]
  %v96 = vld [vmem:[%s66 + $0x74] sm:$0xf]
  %v97 = vld [vmem:[%s66 + $0x78] sm:$0xf]
  %v98 = vld [vmem:[%s66 + $0x7c] sm:$0xf]
  %v100 = vunpack.c.l.b16 %v65
  %v101 = vunpack.c.h.b16 %v65
  %v102 = vpack.c.b16 %v100, %v100
  %v103 = vpack.c.b16 %v101, %v101
  %v105 = vshrl.u32 %v102, 16
  %v107 = vshll.u32 %v102, 16
  %v109 = vrot.slane %v107, 1
  %v110 = vor.u32 %v105, %v109
  %v112 = vshrl.u32 %v103, 16
  %v114 = vshll.u32 %v103, 16
  %v116 = vrot.slane %v114, 1
  %v117 = vor.u32 %v112, %v116
  %v152 = vunpack.c.l.b16 %v67
  %v153 = vunpack.c.l.b16 %v68
  %v154 = vunpack.c.l.b16 %v69
  %v155 = vunpack.c.l.b16 %v70
  %v156 = vunpack.c.l.b16 %v71
  %v157 = vunpack.c.l.b16 %v72
  %v158 = vunpack.c.l.b16 %v73
  %v159 = vunpack.c.l.b16 %v74
  %v160 = vunpack.c.l.b16 %v75
  %v161 = vunpack.c.l.b16 %v76
  %v162 = vunpack.c.l.b16 %v77
  %v163 = vunpack.c.l.b16 %v78
  %v164 = vunpack.c.l.b16 %v79
  %v165 = vunpack.c.l.b16 %v80
  %v166 = vunpack.c.l.b16 %v81
  %v167 = vunpack.c.l.b16 %v82
  %v168 = vunpack.c.l.b16 %v83
  %v169 = vunpack.c.l.b16 %v84
  %v170 = vunpack.c.l.b16 %v85
  %v171 = vunpack.c.l.b16 %v86
  %v172 = vunpack.c.l.b16 %v87
  %v173 = vunpack.c.l.b16 %v88
  %v174 = vunpack.c.l.b16 %v89
  %v175 = vunpack.c.l.b16 %v90
  %v176 = vunpack.c.l.b16 %v91
  %v177 = vunpack.c.l.b16 %v92
  %v178 = vunpack.c.l.b16 %v93
  %v179 = vunpack.c.l.b16 %v94
  %v180 = vunpack.c.l.b16 %v95
  %v181 = vunpack.c.l.b16 %v96
  %v182 = vunpack.c.l.b16 %v97
  %v183 = vunpack.c.l.b16 %v98
  %v184 = vpack.c.b16 %v153, %v152
  %v185 = vpack.c.b16 %v155, %v154
  %v186 = vpack.c.b16 %v157, %v156
  %v187 = vpack.c.b16 %v159, %v158
  %v188 = vpack.c.b16 %v161, %v160
  %v189 = vpack.c.b16 %v163, %v162
  %v190 = vpack.c.b16 %v165, %v164
  %v191 = vpack.c.b16 %v167, %v166
  %v192 = vpack.c.b16 %v169, %v168
  %v193 = vpack.c.b16 %v171, %v170
  %v194 = vpack.c.b16 %v173, %v172
  %v195 = vpack.c.b16 %v175, %v174
  %v196 = vpack.c.b16 %v177, %v176
  %v197 = vpack.c.b16 %v179, %v178
  %v198 = vpack.c.b16 %v181, %v180
  %v199 = vpack.c.b16 %v183, %v182
  %216 = vmatprep.subr.bf16.mxu0 0
  %217 = vmatpush1.bf16.msra.mxu0 %v184
  %218 = vmatprep.subr.bf16.mxu0 0
  %219 = vmatpush1.bf16.msra.mxu0 %v185
  %220 = vmatprep.subr.bf16.mxu0 0
  %221 = vmatpush1.bf16.msra.mxu0 %v186
  %222 = vmatprep.subr.bf16.mxu0 0
  %223 = vmatpush1.bf16.msra.mxu0 %v187
  %224 = vmatprep.subr.bf16.mxu0 0
  %225 = vmatpush1.bf16.msra.mxu0 %v188
  %226 = vmatprep.subr.bf16.mxu0 0
  %227 = vmatpush1.bf16.msra.mxu0 %v189
  %228 = vmatprep.subr.bf16.mxu0 0
  %229 = vmatpush1.bf16.msra.mxu0 %v190
  %230 = vmatprep.subr.bf16.mxu0 0
  %231 = vmatpush1.bf16.msra.mxu0 %v191
  %232 = vmatprep.subr.bf16.mxu0 0
  %233 = vmatpush1.bf16.msra.mxu0 %v192
  %234 = vmatprep.subr.bf16.mxu0 0
  %235 = vmatpush1.bf16.msra.mxu0 %v193
  %236 = vmatprep.subr.bf16.mxu0 0
  %237 = vmatpush1.bf16.msra.mxu0 %v194
  %238 = vmatprep.subr.bf16.mxu0 0
  %239 = vmatpush1.bf16.msra.mxu0 %v195
  %240 = vmatprep.subr.bf16.mxu0 0
  %241 = vmatpush1.bf16.msra.mxu0 %v196
  %242 = vmatprep.subr.bf16.mxu0 0
  %243 = vmatpush1.bf16.msra.mxu0 %v197
  %244 = vmatprep.subr.bf16.mxu0 0
  %245 = vmatpush1.bf16.msra.mxu0 %v198
  %246 = vmatprep.subr.bf16.mxu0 0
  %247 = vmatpush1.bf16.msra.mxu0 %v199
  %248 = vmatprep.mubr.bf16.mxu0 %v117
  %249 = vmatmul.mubr.bf16.gmra.mrb[0].mxu0 %v110
  %v250 = vpop.f32.mrb[0].mxu0
  %v251 = vadd.f32 0.0, %v250
  %v252 = vpop.f32.mrb[0].mxu0
  %v253 = vpop.f32.mrb[0].mxu0
  %v254 = vpop.f32.mrb[0].mxu0
  %255 = vdwg.mxu0
  %v257 = vunpack.c.l.b16 %v32
  %v258 = vunpack.c.h.b16 %v32
  %v259 = vpack.c.b16 %v257, %v257
  %v260 = vpack.c.b16 %v258, %v258
  %v295 = vunpack.c.l.b16 %v33
  %v296 = vunpack.c.l.b16 %v34
  %v297 = vunpack.c.l.b16 %v35
  %v298 = vunpack.c.l.b16 %v36
  %v299 = vunpack.c.l.b16 %v37
  %v300 = vunpack.c.l.b16 %v38
  %v301 = vunpack.c.l.b16 %v39
  %v302 = vunpack.c.l.b16 %v40
  %v303 = vunpack.c.l.b16 %v41
  %v304 = vunpack.c.l.b16 %v42
  %v305 = vunpack.c.l.b16 %v43
  %v306 = vunpack.c.l.b16 %v44
  %v307 = vunpack.c.l.b16 %v45
  %v308 = vunpack.c.l.b16 %v46
  %v309 = vunpack.c.l.b16 %v47
  %v310 = vunpack.c.l.b16 %v48
  %v311 = vunpack.c.l.b16 %v49
  %v312 = vunpack.c.l.b16 %v50
  %v313 = vunpack.c.l.b16 %v51
  %v314 = vunpack.c.l.b16 %v52
  %v315 = vunpack.c.l.b16 %v53
  %v316 = vunpack.c.l.b16 %v54
  %v317 = vunpack.c.l.b16 %v55
  %v318 = vunpack.c.l.b16 %v56
  %v319 = vunpack.c.l.b16 %v57
  %v320 = vunpack.c.l.b16 %v58
  %v321 = vunpack.c.l.b16 %v59
  %v322 = vunpack.c.l.b16 %v60
  %v323 = vunpack.c.l.b16 %v61
  %v324 = vunpack.c.l.b16 %v62
  %v325 = vunpack.c.l.b16 %v63
  %v326 = vunpack.c.l.b16 %v64
  %v327 = vpack.c.b16 %v296, %v295
  %v328 = vpack.c.b16 %v298, %v297
  %v329 = vpack.c.b16 %v300, %v299
  %v330 = vpack.c.b16 %v302, %v301
  %v331 = vpack.c.b16 %v304, %v303
  %v332 = vpack.c.b16 %v306, %v305
  %v333 = vpack.c.b16 %v308, %v307
  %v334 = vpack.c.b16 %v310, %v309
  %v335 = vpack.c.b16 %v312, %v311
  %v336 = vpack.c.b16 %v314, %v313
  %v337 = vpack.c.b16 %v316, %v315
  %v338 = vpack.c.b16 %v318, %v317
  %v339 = vpack.c.b16 %v320, %v319
  %v340 = vpack.c.b16 %v322, %v321
  %v341 = vpack.c.b16 %v324, %v323
  %v342 = vpack.c.b16 %v326, %v325
  %359 = vmatprep.subr.bf16.mxu0 0
  %360 = vmatpush1.bf16.msra.mxu0 %v327
  %361 = vmatprep.subr.bf16.mxu0 0
  %362 = vmatpush1.bf16.msra.mxu0 %v328
  %363 = vmatprep.subr.bf16.mxu0 0
  %364 = vmatpush1.bf16.msra.mxu0 %v329
  %365 = vmatprep.subr.bf16.mxu0 0
  %366 = vmatpush1.bf16.msra.mxu0 %v330
  %367 = vmatprep.subr.bf16.mxu0 0
  %368 = vmatpush1.bf16.msra.mxu0 %v331
  %369 = vmatprep.subr.bf16.mxu0 0
  %370 = vmatpush1.bf16.msra.mxu0 %v332
  %371 = vmatprep.subr.bf16.mxu0 0
  %372 = vmatpush1.bf16.msra.mxu0 %v333
  %373 = vmatprep.subr.bf16.mxu0 0
  %374 = vmatpush1.bf16.msra.mxu0 %v334
  %375 = vmatprep.subr.bf16.mxu0 0
  %376 = vmatpush1.bf16.msra.mxu0 %v335
  %377 = vmatprep.subr.bf16.mxu0 0
  %378 = vmatpush1.bf16.msra.mxu0 %v336
  %379 = vmatprep.subr.bf16.mxu0 0
  %380 = vmatpush1.bf16.msra.mxu0 %v337
  %381 = vmatprep.subr.bf16.mxu0 0
  %382 = vmatpush1.bf16.msra.mxu0 %v338
  %383 = vmatprep.subr.bf16.mxu0 0
  %384 = vmatpush1.bf16.msra.mxu0 %v339
  %385 = vmatprep.subr.bf16.mxu0 0
  %386 = vmatpush1.bf16.msra.mxu0 %v340
  %387 = vmatprep.subr.bf16.mxu0 0
  %388 = vmatpush1.bf16.msra.mxu0 %v341
  %389 = vmatprep.subr.bf16.mxu0 0
  %390 = vmatpush1.bf16.msra.mxu0 %v342
  %391 = vmatprep.mubr.bf16.mxu0 %v260
  %392 = vmatmul.mubr.bf16.gmra.mrb[0].mxu0 %v259
  %v393 = vpop.f32.mrb[0].mxu0
  %v394 = vadd.f32 %v251, %v393
  %v395 = vpop.f32.mrb[0].mxu0
  %v396 = vpop.f32.mrb[0].mxu0
  %v397 = vpop.f32.mrb[0].mxu0
  %398 = vdwg.mxu0
  %v399 = vld [vmem:[%s0] sm:$0xee]
  %v400 = vld [vmem:[%s0 + $0x8] sm:$0x11]
  %s401 = scalar_lea.vmem %s1, 256
  %v402 = vld [vmem:[%s401] sm:$0xf]
  %v403 = vld [vmem:[%s401 + $0x4] sm:$0xf]
  %v404 = vld [vmem:[%s401 + $0x8] sm:$0xf]
  %v405 = vld [vmem:[%s401 + $0xc] sm:$0xf]
  %v406 = vld [vmem:[%s401 + $0x10] sm:$0xf]
  %v407 = vld [vmem:[%s401 + $0x14] sm:$0xf]
  %v408 = vld [vmem:[%s401 + $0x18] sm:$0xf]
  %v409 = vld [vmem:[%s401 + $0x1c] sm:$0xf]
  %v410 = vld [vmem:[%s401 + $0x20] sm:$0xf]
  %v411 = vld [vmem:[%s401 + $0x24] sm:$0xf]
  %v412 = vld [vmem:[%s401 + $0x28] sm:$0xf]
  %v413 = vld [vmem:[%s401 + $0x2c] sm:$0xf]
  %v414 = vld [vmem:[%s401 + $0x30] sm:$0xf]
  %v415 = vld [vmem:[%s401 + $0x34] sm:$0xf]
  %v416 = vld [vmem:[%s401 + $0x38] sm:$0xf]
  %v417 = vld [vmem:[%s401 + $0x3c] sm:$0xf]
  %v418 = vld [vmem:[%s401 + $0x40] sm:$0xf]
  %v419 = vld [vmem:[%s401 + $0x44] sm:$0xf]
  %v420 = vld [vmem:[%s401 + $0x48] sm:$0xf]
  %v421 = vld [vmem:[%s401 + $0x4c] sm:$0xf]
  %v422 = vld [vmem:[%s401 + $0x50] sm:$0xf]
  %v423 = vld [vmem:[%s401 + $0x54] sm:$0xf]
  %v424 = vld [vmem:[%s401 + $0x58] sm:$0xf]
  %v425 = vld [vmem:[%s401 + $0x5c] sm:$0xf]
  %v426 = vld [vmem:[%s401 + $0x60] sm:$0xf]
  %v427 = vld [vmem:[%s401 + $0x64] sm:$0xf]
  %v428 = vld [vmem:[%s401 + $0x68] sm:$0xf]
  %v429 = vld [vmem:[%s401 + $0x6c] sm:$0xf]
  %v430 = vld [vmem:[%s401 + $0x70] sm:$0xf]
  %v431 = vld [vmem:[%s401 + $0x74] sm:$0xf]
  %v432 = vld [vmem:[%s401 + $0x78] sm:$0xf]
  %v433 = vld [vmem:[%s401 + $0x7c] sm:$0xf]
  %v436 = vunpack.c.l.b16 %v399
  %v437 = vunpack.c.h.b16 %v399
  %v438 = vunpack.c.l.b16 %v400
  %v439 = vunpack.c.h.b16 %v400
  %v440 = vpack.c.b16 %v438, %v436
  %v441 = vpack.c.b16 %v439, %v437
  %v443 = vshrl.u32 %v440, 16
  %v445 = vrot.slane %v443, 1
  %v446 = vshll.u32 %v440, 16
  %v448 = vrot.slane %v446, 2
  %v449 = vor.u32 %v445, %v448
  %v451 = vshrl.u32 %v441, 16
  %v453 = vrot.slane %v451, 1
  %v454 = vshll.u32 %v441, 16
  %v456 = vrot.slane %v454, 2
  %v457 = vor.u32 %v453, %v456
  %v492 = vunpack.c.l.b16 %v402
  %v493 = vunpack.c.l.b16 %v403
  %v494 = vunpack.c.l.b16 %v404
  %v495 = vunpack.c.l.b16 %v405
  %v496 = vunpack.c.l.b16 %v406
  %v497 = vunpack.c.l.b16 %v407
  %v498 = vunpack.c.l.b16 %v408
  %v499 = vunpack.c.l.b16 %v409
  %v500 = vunpack.c.l.b16 %v410
  %v501 = vunpack.c.l.b16 %v411
  %v502 = vunpack.c.l.b16 %v412
  %v503 = vunpack.c.l.b16 %v413
  %v504 = vunpack.c.l.b16 %v414
  %v505 = vunpack.c.l.b16 %v415
  %v506 = vunpack.c.l.b16 %v416
  %v507 = vunpack.c.l.b16 %v417
  %v508 = vunpack.c.l.b16 %v418
  %v509 = vunpack.c.l.b16 %v419
  %v510 = vunpack.c.l.b16 %v420
  %v511 = vunpack.c.l.b16 %v421
  %v512 = vunpack.c.l.b16 %v422
  %v513 = vunpack.c.l.b16 %v423
  %v514 = vunpack.c.l.b16 %v424
  %v515 = vunpack.c.l.b16 %v425
  %v516 = vunpack.c.l.b16 %v426
  %v517 = vunpack.c.l.b16 %v427
  %v518 = vunpack.c.l.b16 %v428
  %v519 = vunpack.c.l.b16 %v429
  %v520 = vunpack.c.l.b16 %v430
  %v521 = vunpack.c.l.b16 %v431
  %v522 = vunpack.c.l.b16 %v432
  %v523 = vunpack.c.l.b16 %v433
  %v524 = vpack.c.b16 %v493, %v492
  %v525 = vpack.c.b16 %v495, %v494
  %v526 = vpack.c.b16 %v497, %v496
  %v527 = vpack.c.b16 %v499, %v498
  %v528 = vpack.c.b16 %v501, %v500
  %v529 = vpack.c.b16 %v503, %v502
  %v530 = vpack.c.b16 %v505, %v504
  %v531 = vpack.c.b16 %v507, %v506
  %v532 = vpack.c.b16 %v509, %v508
  %v533 = vpack.c.b16 %v511, %v510
  %v534 = vpack.c.b16 %v513, %v512
  %v535 = vpack.c.b16 %v515, %v514
  %v536 = vpack.c.b16 %v517, %v516
  %v537 = vpack.c.b16 %v519, %v518
  %v538 = vpack.c.b16 %v521, %v520
  %v539 = vpack.c.b16 %v523, %v522
  %556 = vmatprep.subr.bf16.mxu0 0
  %557 = vmatpush1.bf16.msra.mxu0 %v524
  %558 = vmatprep.subr.bf16.mxu0 0
  %559 = vmatpush1.bf16.msra.mxu0 %v525
  %560 = vmatprep.subr.bf16.mxu0 0
  %561 = vmatpush1.bf16.msra.mxu0 %v526
  %562 = vmatprep.subr.bf16.mxu0 0
  %563 = vmatpush1.bf16.msra.mxu0 %v527
  %564 = vmatprep.subr.bf16.mxu0 0
  %565 = vmatpush1.bf16.msra.mxu0 %v528
  %566 = vmatprep.subr.bf16.mxu0 0
  %567 = vmatpush1.bf16.msra.mxu0 %v529
  %568 = vmatprep.subr.bf16.mxu0 0
  %569 = vmatpush1.bf16.msra.mxu0 %v530
  %570 = vmatprep.subr.bf16.mxu0 0
  %571 = vmatpush1.bf16.msra.mxu0 %v531
  %572 = vmatprep.subr.bf16.mxu0 0
  %573 = vmatpush1.bf16.msra.mxu0 %v532
  %574 = vmatprep.subr.bf16.mxu0 0
  %575 = vmatpush1.bf16.msra.mxu0 %v533
  %576 = vmatprep.subr.bf16.mxu0 0
  %577 = vmatpush1.bf16.msra.mxu0 %v534
  %578 = vmatprep.subr.bf16.mxu0 0
  %579 = vmatpush1.bf16.msra.mxu0 %v535
  %580 = vmatprep.subr.bf16.mxu0 0
  %581 = vmatpush1.bf16.msra.mxu0 %v536
  %582 = vmatprep.subr.bf16.mxu0 0
  %583 = vmatpush1.bf16.msra.mxu0 %v537
  %584 = vmatprep.subr.bf16.mxu0 0
  %585 = vmatpush1.bf16.msra.mxu0 %v538
  %586 = vmatprep.subr.bf16.mxu0 0
  %587 = vmatpush1.bf16.msra.mxu0 %v539
  %588 = vmatprep.mubr.bf16.mxu0 %v457
  %589 = vmatmul.mubr.bf16.gmra.mrb[0].mxu0 %v449
  %v590 = vpop.f32.mrb[0].mxu0
  %v591 = vadd.f32 0.0, %v590
  %v592 = vpop.f32.mrb[0].mxu0
  %v593 = vpop.f32.mrb[0].mxu0
  %v594 = vpop.f32.mrb[0].mxu0
  %595 = vdwg.mxu0
  %v596 = vadd.f32 %v394, %v591
  %v597 = vld [vmem:[%s0] sm:$0xcc]
  %s598 = scalar_lea.vmem %s1, 384
  %v599 = vld [vmem:[%s598] sm:$0xf]
  %v600 = vld [vmem:[%s598 + $0x4] sm:$0xf]
  %v601 = vld [vmem:[%s598 + $0x8] sm:$0xf]
  %v602 = vld [vmem:[%s598 + $0xc] sm:$0xf]
  %v603 = vld [vmem:[%s598 + $0x10] sm:$0xf]
  %v604 = vld [vmem:[%s598 + $0x14] sm:$0xf]
  %v605 = vld [vmem:[%s598 + $0x18] sm:$0xf]
  %v606 = vld [vmem:[%s598 + $0x1c] sm:$0xf]
  %v607 = vld [vmem:[%s598 + $0x20] sm:$0xf]
  %v608 = vld [vmem:[%s598 + $0x24] sm:$0xf]
  %v609 = vld [vmem:[%s598 + $0x28] sm:$0xf]
  %v610 = vld [vmem:[%s598 + $0x2c] sm:$0xf]
  %v611 = vld [vmem:[%s598 + $0x30] sm:$0xf]
  %v612 = vld [vmem:[%s598 + $0x34] sm:$0xf]
  %v613 = vld [vmem:[%s598 + $0x38] sm:$0xf]
  %v614 = vld [vmem:[%s598 + $0x3c] sm:$0xf]
  %v615 = vld [vmem:[%s598 + $0x40] sm:$0xf]
  %v616 = vld [vmem:[%s598 + $0x44] sm:$0xf]
  %v617 = vld [vmem:[%s598 + $0x48] sm:$0xf]
  %v618 = vld [vmem:[%s598 + $0x4c] sm:$0xf]
  %v619 = vld [vmem:[%s598 + $0x50] sm:$0xf]
  %v620 = vld [vmem:[%s598 + $0x54] sm:$0xf]
  %v621 = vld [vmem:[%s598 + $0x58] sm:$0xf]
  %v622 = vld [vmem:[%s598 + $0x5c] sm:$0xf]
  %v623 = vld [vmem:[%s598 + $0x60] sm:$0xf]
  %v624 = vld [vmem:[%s598 + $0x64] sm:$0xf]
  %v625 = vld [vmem:[%s598 + $0x68] sm:$0xf]
  %v626 = vld [vmem:[%s598 + $0x6c] sm:$0xf]
  %v627 = vld [vmem:[%s598 + $0x70] sm:$0xf]
  %v628 = vld [vmem:[%s598 + $0x74] sm:$0xf]
  %v629 = vld [vmem:[%s598 + $0x78] sm:$0xf]
  %v630 = vld [vmem:[%s598 + $0x7c] sm:$0xf]
  %v632 = vunpack.c.l.b16 %v597
  %v633 = vunpack.c.h.b16 %v597
  %v634 = vpack.c.b16 %v438, %v632
  %v635 = vpack.c.b16 %v439, %v633
  %v636 = vrot.slane %v634, 2
  %v637 = vrot.slane %v635, 2
  %v672 = vunpack.c.l.b16 %v599
  %v673 = vunpack.c.l.b16 %v600
  %v674 = vunpack.c.l.b16 %v601
  %v675 = vunpack.c.l.b16 %v602
  %v676 = vunpack.c.l.b16 %v603
  %v677 = vunpack.c.l.b16 %v604
  %v678 = vunpack.c.l.b16 %v605
  %v679 = vunpack.c.l.b16 %v606
  %v680 = vunpack.c.l.b16 %v607
  %v681 = vunpack.c.l.b16 %v608
  %v682 = vunpack.c.l.b16 %v609
  %v683 = vunpack.c.l.b16 %v610
  %v684 = vunpack.c.l.b16 %v611
  %v685 = vunpack.c.l.b16 %v612
  %v686 = vunpack.c.l.b16 %v613
  %v687 = vunpack.c.l.b16 %v614
  %v688 = vunpack.c.l.b16 %v615
  %v689 = vunpack.c.l.b16 %v616
  %v690 = vunpack.c.l.b16 %v617
  %v691 = vunpack.c.l.b16 %v618
  %v692 = vunpack.c.l.b16 %v619
  %v693 = vunpack.c.l.b16 %v620
  %v694 = vunpack.c.l.b16 %v621
  %v695 = vunpack.c.l.b16 %v622
  %v696 = vunpack.c.l.b16 %v623
  %v697 = vunpack.c.l.b16 %v624
  %v698 = vunpack.c.l.b16 %v625
  %v699 = vunpack.c.l.b16 %v626
  %v700 = vunpack.c.l.b16 %v627
  %v701 = vunpack.c.l.b16 %v628
  %v702 = vunpack.c.l.b16 %v629
  %v703 = vunpack.c.l.b16 %v630
  %v704 = vpack.c.b16 %v673, %v672
  %v705 = vpack.c.b16 %v675, %v674
  %v706 = vpack.c.b16 %v677, %v676
  %v707 = vpack.c.b16 %v679, %v678
  %v708 = vpack.c.b16 %v681, %v680
  %v709 = vpack.c.b16 %v683, %v682
  %v710 = vpack.c.b16 %v685, %v684
  %v711 = vpack.c.b16 %v687, %v686
  %v712 = vpack.c.b16 %v689, %v688
  %v713 = vpack.c.b16 %v691, %v690
  %v714 = vpack.c.b16 %v693, %v692
  %v715 = vpack.c.b16 %v695, %v694
  %v716 = vpack.c.b16 %v697, %v696
  %v717 = vpack.c.b16 %v699, %v698
  %v718 = vpack.c.b16 %v701, %v700
  %v719 = vpack.c.b16 %v703, %v702
  %736 = vmatprep.subr.bf16.mxu0 0
  %737 = vmatpush1.bf16.msra.mxu0 %v704
  %738 = vmatprep.subr.bf16.mxu0 0
  %739 = vmatpush1.bf16.msra.mxu0 %v705
  %740 = vmatprep.subr.bf16.mxu0 0
  %741 = vmatpush1.bf16.msra.mxu0 %v706
  %742 = vmatprep.subr.bf16.mxu0 0
  %743 = vmatpush1.bf16.msra.mxu0 %v707
  %744 = vmatprep.subr.bf16.mxu0 0
  %745 = vmatpush1.bf16.msra.mxu0 %v708
  %746 = vmatprep.subr.bf16.mxu0 0
  %747 = vmatpush1.bf16.msra.mxu0 %v709
  %748 = vmatprep.subr.bf16.mxu0 0
  %749 = vmatpush1.bf16.msra.mxu0 %v710
  %750 = vmatprep.subr.bf16.mxu0 0
  %751 = vmatpush1.bf16.msra.mxu0 %v711
  %752 = vmatprep.subr.bf16.mxu0 0
  %753 = vmatpush1.bf16.msra.mxu0 %v712
  %754 = vmatprep.subr.bf16.mxu0 0
  %755 = vmatpush1.bf16.msra.mxu0 %v713
  %756 = vmatprep.subr.bf16.mxu0 0
  %757 = vmatpush1.bf16.msra.mxu0 %v714
  %758 = vmatprep.subr.bf16.mxu0 0
  %759 = vmatpush1.bf16.msra.mxu0 %v715
  %760 = vmatprep.subr.bf16.mxu0 0
  %761 = vmatpush1.bf16.msra.mxu0 %v716
  %762 = vmatprep.subr.bf16.mxu0 0
  %763 = vmatpush1.bf16.msra.mxu0 %v717
  %764 = vmatprep.subr.bf16.mxu0 0
  %765 = vmatpush1.bf16.msra.mxu0 %v718
  %766 = vmatprep.subr.bf16.mxu0 0
  %767 = vmatpush1.bf16.msra.mxu0 %v719
  %768 = vmatprep.mubr.bf16.mxu0 %v637
  %769 = vmatmul.mubr.bf16.gmra.mrb[0].mxu0 %v636
  %v770 = vpop.f32.mrb[0].mxu0
  %v771 = vadd.f32 0.0, %v770
  %v772 = vpop.f32.mrb[0].mxu0
  %v773 = vpop.f32.mrb[0].mxu0
  %v774 = vpop.f32.mrb[0].mxu0
  %775 = vdwg.mxu0
  %v776 = vadd.f32 %v596, %v771
  %v777 = vld [vmem:[%s2] sm:$0x1]
  %v779 = vlaneseq
  %v780 = vshrl.u32 %v779, 7
  %v781 = vsub.s32 0, %v780
  %v782 = vrot.slane %v777, %v781
  %v784 = vadd.f32 %v776, %v782
  %v785 = vmax.f32 %v784, 0.0
  %v787 = vrot.slane %v785, 1
  %v789 = vrot.slane %v785, 3
  %v791 = vrot.slane %v785, 4
  %s793 = scalar_lea.vmem %s0, 16
  %v794 = vld [vmem:[%s793] sm:$0x77]
  %v795 = vld [vmem:[%s793] sm:$0xff]
  %v797 = vunpack.c.l.b16 %v795
  %v798 = vunpack.c.h.b16 %v795
  %v799 = vpack.c.b16 %v797, %v797
  %v800 = vpack.c.b16 %v798, %v798
  %v802 = vshrl.u32 %v799, 16
  %v804 = vshll.u32 %v799, 16
  %v806 = vrot.slane %v804, 1
  %v807 = vor.u32 %v802, %v806
  %v809 = vshrl.u32 %v800, 16
  %v811 = vshll.u32 %v800, 16
  %v813 = vrot.slane %v811, 1
  %v814 = vor.u32 %v809, %v813
  %817 = vmatprep.subr.bf16.mxu0 0
  %818 = vmatpush1.bf16.msra.mxu0 %v184
  %819 = vmatprep.subr.bf16.mxu0 0
  %820 = vmatpush1.bf16.msra.mxu0 %v185
  %821 = vmatprep.subr.bf16.mxu0 0
  %822 = vmatpush1.bf16.msra.mxu0 %v186
  %823 = vmatprep.subr.bf16.mxu0 0
  %824 = vmatpush1.bf16.msra.mxu0 %v187
  %825 = vmatprep.subr.bf16.mxu0 0
  %826 = vmatpush1.bf16.msra.mxu0 %v188
  %827 = vmatprep.subr.bf16.mxu0 0
  %828 = vmatpush1.bf16.msra.mxu0 %v189
  %829 = vmatprep.subr.bf16.mxu0 0
  %830 = vmatpush1.bf16.msra.mxu0 %v190
  %831 = vmatprep.subr.bf16.mxu0 0
  %832 = vmatpush1.bf16.msra.mxu0 %v191
  %833 = vmatprep.subr.bf16.mxu0 0
  %834 = vmatpush1.bf16.msra.mxu0 %v192
  %835 = vmatprep.subr.bf16.mxu0 0
  %836 = vmatpush1.bf16.msra.mxu0 %v193
  %837 = vmatprep.subr.bf16.mxu0 0
  %838 = vmatpush1.bf16.msra.mxu0 %v194
  %839 = vmatprep.subr.bf16.mxu0 0
  %840 = vmatpush1.bf16.msra.mxu0 %v195
  %841 = vmatprep.subr.bf16.mxu0 0
  %842 = vmatpush1.bf16.msra.mxu0 %v196
  %843 = vmatprep.subr.bf16.mxu0 0
  %844 = vmatpush1.bf16.msra.mxu0 %v197
  %845 = vmatprep.subr.bf16.mxu0 0
  %846 = vmatpush1.bf16.msra.mxu0 %v198
  %847 = vmatprep.subr.bf16.mxu0 0
  %848 = vmatpush1.bf16.msra.mxu0 %v199
  %849 = vmatprep.mubr.bf16.mxu0 %v814
  %850 = vmatmul.mubr.bf16.gmra.mrb[0].mxu0 %v807
  %v851 = vpop.f32.mrb[0].mxu0
  %v852 = vadd.f32 0.0, %v851
  %v853 = vpop.f32.mrb[0].mxu0
  %v854 = vpop.f32.mrb[0].mxu0
  %v855 = vpop.f32.mrb[0].mxu0
  %856 = vdwg.mxu0
  %v858 = vunpack.c.l.b16 %v794
  %v859 = vunpack.c.h.b16 %v794
  %v860 = vpack.c.b16 %v858, %v858
  %v861 = vpack.c.b16 %v859, %v859
  %864 = vmatprep.subr.bf16.mxu0 0
  %865 = vmatpush1.bf16.msra.mxu0 %v327
  %866 = vmatprep.subr.bf16.mxu0 0
  %867 = vmatpush1.bf16.msra.mxu0 %v328
  %868 = vmatprep.subr.bf16.mxu0 0
  %869 = vmatpush1.bf16.msra.mxu0 %v329
  %870 = vmatprep.subr.bf16.mxu0 0
  %871 = vmatpush1.bf16.msra.mxu0 %v330
  %872 = vmatprep.subr.bf16.mxu0 0
  %873 = vmatpush1.bf16.msra.mxu0 %v331
  %874 = vmatprep.subr.bf16.mxu0 0
  %875 = vmatpush1.bf16.msra.mxu0 %v332
  %876 = vmatprep.subr.bf16.mxu0 0
  %877 = vmatpush1.bf16.msra.mxu0 %v333
  %878 = vmatprep.subr.bf16.mxu0 0
  %879 = vmatpush1.bf16.msra.mxu0 %v334
  %880 = vmatprep.subr.bf16.mxu0 0
  %881 = vmatpush1.bf16.msra.mxu0 %v335
  %882 = vmatprep.subr.bf16.mxu0 0
  %883 = vmatpush1.bf16.msra.mxu0 %v336
  %884 = vmatprep.subr.bf16.mxu0 0
  %885 = vmatpush1.bf16.msra.mxu0 %v337
  %886 = vmatprep.subr.bf16.mxu0 0
  %887 = vmatpush1.bf16.msra.mxu0 %v338
  %888 = vmatprep.subr.bf16.mxu0 0
  %889 = vmatpush1.bf16.msra.mxu0 %v339
  %890 = vmatprep.subr.bf16.mxu0 0
  %891 = vmatpush1.bf16.msra.mxu0 %v340
  %892 = vmatprep.subr.bf16.mxu0 0
  %893 = vmatpush1.bf16.msra.mxu0 %v341
  %894 = vmatprep.subr.bf16.mxu0 0
  %895 = vmatpush1.bf16.msra.mxu0 %v342
  %896 = vmatprep.mubr.bf16.mxu0 %v861
  %897 = vmatmul.mubr.bf16.gmra.mrb[0].mxu0 %v860
  %v898 = vpop.f32.mrb[0].mxu0
  %v899 = vadd.f32 %v852, %v898
  %v900 = vpop.f32.mrb[0].mxu0
  %v901 = vpop.f32.mrb[0].mxu0
  %v902 = vpop.f32.mrb[0].mxu0
  %903 = vdwg.mxu0
  %v904 = vld [vmem:[%s793] sm:$0xee]
  %v905 = vld [vmem:[%s793 + $0x8] sm:$0x11]
  %v908 = vunpack.c.l.b16 %v904
  %v909 = vunpack.c.h.b16 %v904
  %v910 = vunpack.c.l.b16 %v905
  %v911 = vunpack.c.h.b16 %v905
  %v912 = vpack.c.b16 %v910, %v908
  %v913 = vpack.c.b16 %v911, %v909
  %v915 = vshrl.u32 %v912, 16
  %v917 = vrot.slane %v915, 1
  %v918 = vshll.u32 %v912, 16
  %v920 = vrot.slane %v918, 2
  %v921 = vor.u32 %v917, %v920
  %v923 = vshrl.u32 %v913, 16
  %v925 = vrot.slane %v923, 1
  %v926 = vshll.u32 %v913, 16
  %v928 = vrot.slane %v926, 2
  %v929 = vor.u32 %v925, %v928
  %932 = vmatprep.subr.bf16.mxu0 0
  %933 = vmatpush1.bf16.msra.mxu0 %v524
  %934 = vmatprep.subr.bf16.mxu0 0
  %935 = vmatpush1.bf16.msra.mxu0 %v525
  %936 = vmatprep.subr.bf16.mxu0 0
  %937 = vmatpush1.bf16.msra.mxu0 %v526
  %938 = vmatprep.subr.bf16.mxu0 0
  %939 = vmatpush1.bf16.msra.mxu0 %v527
  %940 = vmatprep.subr.bf16.mxu0 0
  %941 = vmatpush1.bf16.msra.mxu0 %v528
  %942 = vmatprep.subr.bf16.mxu0 0
  %943 = vmatpush1.bf16.msra.mxu0 %v529
  %944 = vmatprep.subr.bf16.mxu0 0
  %945 = vmatpush1.bf16.msra.mxu0 %v530
  %946 = vmatprep.subr.bf16.mxu0 0
  %947 = vmatpush1.bf16.msra.mxu0 %v531
  %948 = vmatprep.subr.bf16.mxu0 0
  %949 = vmatpush1.bf16.msra.mxu0 %v532
  %950 = vmatprep.subr.bf16.mxu0 0
  %951 = vmatpush1.bf16.msra.mxu0 %v533
  %952 = vmatprep.subr.bf16.mxu0 0
  %953 = vmatpush1.bf16.msra.mxu0 %v534
  %954 = vmatprep.subr.bf16.mxu0 0
  %955 = vmatpush1.bf16.msra.mxu0 %v535
  %956 = vmatprep.subr.bf16.mxu0 0
  %957 = vmatpush1.bf16.msra.mxu0 %v536
  %958 = vmatprep.subr.bf16.mxu0 0
  %959 = vmatpush1.bf16.msra.mxu0 %v537
  %960 = vmatprep.subr.bf16.mxu0 0
  %961 = vmatpush1.bf16.msra.mxu0 %v538
  %962 = vmatprep.subr.bf16.mxu0 0
  %963 = vmatpush1.bf16.msra.mxu0 %v539
  %964 = vmatprep.mubr.bf16.mxu0 %v929
  %965 = vmatmul.mubr.bf16.gmra.mrb[0].mxu0 %v921
  %v966 = vpop.f32.mrb[0].mxu0
  %v967 = vadd.f32 0.0, %v966
  %v968 = vpop.f32.mrb[0].mxu0
  %v969 = vpop.f32.mrb[0].mxu0
  %v970 = vpop.f32.mrb[0].mxu0
  %971 = vdwg.mxu0
  %v972 = vadd.f32 %v899, %v967
  %v973 = vld [vmem:[%s793] sm:$0xcc]
  %v975 = vunpack.c.l.b16 %v973
  %v976 = vunpack.c.h.b16 %v973
  %v977 = vpack.c.b16 %v910, %v975
  %v978 = vpack.c.b16 %v911, %v976
  %v979 = vrot.slane %v977, 2
  %v980 = vrot.slane %v978, 2
  %983 = vmatprep.subr.bf16.mxu0 0
  %984 = vmatpush1.bf16.msra.mxu0 %v704
  %985 = vmatprep.subr.bf16.mxu0 0
  %986 = vmatpush1.bf16.msra.mxu0 %v705
  %987 = vmatprep.subr.bf16.mxu0 0
  %988 = vmatpush1.bf16.msra.mxu0 %v706
  %989 = vmatprep.subr.bf16.mxu0 0
  %990 = vmatpush1.bf16.msra.mxu0 %v707
  %991 = vmatprep.subr.bf16.mxu0 0
  %992 = vmatpush1.bf16.msra.mxu0 %v708
  %993 = vmatprep.subr.bf16.mxu0 0
  %994 = vmatpush1.bf16.msra.mxu0 %v709
  %995 = vmatprep.subr.bf16.mxu0 0
  %996 = vmatpush1.bf16.msra.mxu0 %v710
  %997 = vmatprep.subr.bf16.mxu0 0
  %998 = vmatpush1.bf16.msra.mxu0 %v711
  %999 = vmatprep.subr.bf16.mxu0 0
  %1000 = vmatpush1.bf16.msra.mxu0 %v712
  %1001 = vmatprep.subr.bf16.mxu0 0
  %1002 = vmatpush1.bf16.msra.mxu0 %v713
  %1003 = vmatprep.subr.bf16.mxu0 0
  %1004 = vmatpush1.bf16.msra.mxu0 %v714
  %1005 = vmatprep.subr.bf16.mxu0 0
  %1006 = vmatpush1.bf16.msra.mxu0 %v715
  %1007 = vmatprep.subr.bf16.mxu0 0
  %1008 = vmatpush1.bf16.msra.mxu0 %v716
  %1009 = vmatprep.subr.bf16.mxu0 0
  %1010 = vmatpush1.bf16.msra.mxu0 %v717
  %1011 = vmatprep.subr.bf16.mxu0 0
  %1012 = vmatpush1.bf16.msra.mxu0 %v718
  %1013 = vmatprep.subr.bf16.mxu0 0
  %1014 = vmatpush1.bf16.msra.mxu0 %v719
  %1015 = vmatprep.mubr.bf16.mxu0 %v980
  %1016 = vmatmul.mubr.bf16.gmra.mrb[0].mxu0 %v979
  %v1017 = vpop.f32.mrb[0].mxu0
  %v1018 = vadd.f32 0.0, %v1017
  %v1019 = vpop.f32.mrb[0].mxu0
  %v1020 = vpop.f32.mrb[0].mxu0
  %v1021 = vpop.f32.mrb[0].mxu0
  %1022 = vdwg.mxu0
  %v1023 = vadd.f32 %v972, %v1018
  %v1024 = vadd.f32 %v1023, %v782
  %v1025 = vmax.f32 %v1024, 0.0
  %v1027 = vrot.slane %v1025, 1
  %v1028 = vrot.slane %v1025, 3
  %v1029 = vrot.slane %v1025, 4
  %v1030 = vrot.slane %v1025, 7
  %v1031 = vrot.slane %v1027, 7
  %v1032 = vrot.slane %v1028, 7
  %v1033 = vrot.slane %v1029, 7
  %vm1038 = vcmask 1040384
  %v1039 = vsel %vm1038, %v785, %v1030
  %v1040 = vsel %vm1038, %v787, %v1031
  %v1041 = vsel %vm1038, %v789, %v1032
  %v1042 = vsel %vm1038, %v791, %v1033
  %v1043 = vpack.c.bf16 %v1039, %v1039
  %v1044 = vpack.c.bf16 %v1040, %v1040
  %v1045 = vpack.c.bf16 %v1041, %v1041
  %v1046 = vpack.c.bf16 %v1042, %v1042
  %v1047 = vld [vmem:[%s3] sm:$0xf]
  %v1048 = vld [vmem:[%s3 + $0x4] sm:$0xf]
  %v1049 = vld [vmem:[%s3 + $0x8] sm:$0xf]
  %v1050 = vld [vmem:[%s3 + $0xc] sm:$0xf]
  %v1051 = vld [vmem:[%s3 + $0x10] sm:$0xf]
  %v1052 = vld [vmem:[%s3 + $0x14] sm:$0xf]
  %v1053 = vld [vmem:[%s3 + $0x18] sm:$0xf]
  %v1054 = vld [vmem:[%s3 + $0x1c] sm:$0xf]
  %v1055 = vld [vmem:[%s3 + $0x20] sm:$0xf]
  %v1056 = vld [vmem:[%s3 + $0x24] sm:$0xf]
  %v1057 = vld [vmem:[%s3 + $0x28] sm:$0xf]
  %v1058 = vld [vmem:[%s3 + $0x2c] sm:$0xf]
  %v1059 = vld [vmem:[%s3 + $0x30] sm:$0xf]
  %v1060 = vld [vmem:[%s3 + $0x34] sm:$0xf]
  %v1061 = vld [vmem:[%s3 + $0x38] sm:$0xf]
  %v1062 = vld [vmem:[%s3 + $0x3c] sm:$0xf]
  %v1063 = vld [vmem:[%s3 + $0x40] sm:$0xf]
  %v1064 = vld [vmem:[%s3 + $0x44] sm:$0xf]
  %v1065 = vld [vmem:[%s3 + $0x48] sm:$0xf]
  %v1066 = vld [vmem:[%s3 + $0x4c] sm:$0xf]
  %v1067 = vld [vmem:[%s3 + $0x50] sm:$0xf]
  %v1068 = vld [vmem:[%s3 + $0x54] sm:$0xf]
  %v1069 = vld [vmem:[%s3 + $0x58] sm:$0xf]
  %v1070 = vld [vmem:[%s3 + $0x5c] sm:$0xf]
  %v1071 = vld [vmem:[%s3 + $0x60] sm:$0xf]
  %v1072 = vld [vmem:[%s3 + $0x64] sm:$0xf]
  %v1073 = vld [vmem:[%s3 + $0x68] sm:$0xf]
  %v1074 = vld [vmem:[%s3 + $0x6c] sm:$0xf]
  %v1075 = vld [vmem:[%s3 + $0x70] sm:$0xf]
  %v1076 = vld [vmem:[%s3 + $0x74] sm:$0xf]
  %v1077 = vld [vmem:[%s3 + $0x78] sm:$0xf]
  %v1078 = vld [vmem:[%s3 + $0x7c] sm:$0xf]
  %v1079 = vld [vmem:[%s3 + $0x80] sm:$0xf]
  %v1080 = vld [vmem:[%s3 + $0x84] sm:$0xf]
  %v1081 = vld [vmem:[%s3 + $0x88] sm:$0xf]
  %v1082 = vld [vmem:[%s3 + $0x8c] sm:$0xf]
  %v1083 = vld [vmem:[%s3 + $0x90] sm:$0xf]
  %v1084 = vld [vmem:[%s3 + $0x94] sm:$0xf]
  %v1085 = vld [vmem:[%s3 + $0x98] sm:$0xf]
  %v1086 = vld [vmem:[%s3 + $0x9c] sm:$0xf]
  %v1087 = vld [vmem:[%s3 + $0xa0] sm:$0xf]
  %v1088 = vld [vmem:[%s3 + $0xa4] sm:$0xf]
  %v1089 = vld [vmem:[%s3 + $0xa8] sm:$0xf]
  %v1090 = vld [vmem:[%s3 + $0xac] sm:$0xf]
  %v1091 = vld [vmem:[%s3 + $0xb0] sm:$0xf]
  %v1092 = vld [vmem:[%s3 + $0xb4] sm:$0xf]
  %v1093 = vld [vmem:[%s3 + $0xb8] sm:$0xf]
  %v1094 = vld [vmem:[%s3 + $0xbc] sm:$0xf]
  %v1095 = vld [vmem:[%s3 + $0xc0] sm:$0xf]
  %v1096 = vld [vmem:[%s3 + $0xc4] sm:$0xf]
  %v1097 = vld [vmem:[%s3 + $0xc8] sm:$0xf]
  %v1098 = vld [vmem:[%s3 + $0xcc] sm:$0xf]
  %v1099 = vld [vmem:[%s3 + $0xd0] sm:$0xf]
  %v1100 = vld [vmem:[%s3 + $0xd4] sm:$0xf]
  %v1101 = vld [vmem:[%s3 + $0xd8] sm:$0xf]
  %v1102 = vld [vmem:[%s3 + $0xdc] sm:$0xf]
  %v1103 = vld [vmem:[%s3 + $0xe0] sm:$0xf]
  %v1104 = vld [vmem:[%s3 + $0xe4] sm:$0xf]
  %v1105 = vld [vmem:[%s3 + $0xe8] sm:$0xf]
  %v1106 = vld [vmem:[%s3 + $0xec] sm:$0xf]
  %v1107 = vld [vmem:[%s3 + $0xf0] sm:$0xf]
  %v1108 = vld [vmem:[%s3 + $0xf4] sm:$0xf]
  %v1109 = vld [vmem:[%s3 + $0xf8] sm:$0xf]
  %v1110 = vld [vmem:[%s3 + $0xfc] sm:$0xf]
  %v1111 = vld [vmem:[%s4] sm:$0x1]
  %v1113 = vlaneseq
  %v1114 = vshrl.u32 %v1113, 7
  %v1115 = vsub.s32 0, %v1114
  %v1116 = vrot.slane %v1111, %v1115
  %v1182 = vunpack.c.l.b16 %v1047
  %v1183 = vunpack.c.l.b16 %v1048
  %v1184 = vunpack.c.l.b16 %v1049
  %v1185 = vunpack.c.l.b16 %v1050
  %v1186 = vunpack.c.l.b16 %v1051
  %v1187 = vunpack.c.l.b16 %v1052
  %v1188 = vunpack.c.l.b16 %v1053
  %v1189 = vunpack.c.l.b16 %v1054
  %v1190 = vunpack.c.l.b16 %v1055
  %v1191 = vunpack.c.l.b16 %v1056
  %v1192 = vunpack.c.l.b16 %v1057
  %v1193 = vunpack.c.l.b16 %v1058
  %v1194 = vunpack.c.l.b16 %v1059
  %v1195 = vunpack.c.l.b16 %v1060
  %v1196 = vunpack.c.l.b16 %v1061
  %v1197 = vunpack.c.l.b16 %v1062
  %v1198 = vunpack.c.l.b16 %v1063
  %v1199 = vunpack.c.l.b16 %v1064
  %v1200 = vunpack.c.l.b16 %v1065
  %v1201 = vunpack.c.l.b16 %v1066
  %v1202 = vunpack.c.l.b16 %v1067
  %v1203 = vunpack.c.l.b16 %v1068
  %v1204 = vunpack.c.l.b16 %v1069
  %v1205 = vunpack.c.l.b16 %v1070
  %v1206 = vunpack.c.l.b16 %v1071
  %v1207 = vunpack.c.l.b16 %v1072
  %v1208 = vunpack.c.l.b16 %v1073
  %v1209 = vunpack.c.l.b16 %v1074
  %v1210 = vunpack.c.l.b16 %v1075
  %v1211 = vunpack.c.l.b16 %v1076
  %v1212 = vunpack.c.l.b16 %v1077
  %v1213 = vunpack.c.l.b16 %v1078
  %v1214 = vunpack.c.l.b16 %v1079
  %v1215 = vunpack.c.l.b16 %v1080
  %v1216 = vunpack.c.l.b16 %v1081
  %v1217 = vunpack.c.l.b16 %v1082
  %v1218 = vunpack.c.l.b16 %v1083
  %v1219 = vunpack.c.l.b16 %v1084
  %v1220 = vunpack.c.l.b16 %v1085
  %v1221 = vunpack.c.l.b16 %v1086
  %v1222 = vunpack.c.l.b16 %v1087
  %v1223 = vunpack.c.l.b16 %v1088
  %v1224 = vunpack.c.l.b16 %v1089
  %v1225 = vunpack.c.l.b16 %v1090
  %v1226 = vunpack.c.l.b16 %v1091
  %v1227 = vunpack.c.l.b16 %v1092
  %v1228 = vunpack.c.l.b16 %v1093
  %v1229 = vunpack.c.l.b16 %v1094
  %v1230 = vunpack.c.l.b16 %v1095
  %v1231 = vunpack.c.l.b16 %v1096
  %v1232 = vunpack.c.l.b16 %v1097
  %v1233 = vunpack.c.l.b16 %v1098
  %v1234 = vunpack.c.l.b16 %v1099
  %v1235 = vunpack.c.l.b16 %v1100
  %v1236 = vunpack.c.l.b16 %v1101
  %v1237 = vunpack.c.l.b16 %v1102
  %v1238 = vunpack.c.l.b16 %v1103
  %v1239 = vunpack.c.l.b16 %v1104
  %v1240 = vunpack.c.l.b16 %v1105
  %v1241 = vunpack.c.l.b16 %v1106
  %v1242 = vunpack.c.l.b16 %v1107
  %v1243 = vunpack.c.l.b16 %v1108
  %v1244 = vunpack.c.l.b16 %v1109
  %v1245 = vunpack.c.l.b16 %v1110
  %v1246 = vpack.c.b16 %v1183, %v1182
  %v1247 = vpack.c.b16 %v1185, %v1184
  %v1248 = vpack.c.b16 %v1187, %v1186
  %v1249 = vpack.c.b16 %v1189, %v1188
  %v1250 = vpack.c.b16 %v1191, %v1190
  %v1251 = vpack.c.b16 %v1193, %v1192
  %v1252 = vpack.c.b16 %v1195, %v1194
  %v1253 = vpack.c.b16 %v1197, %v1196
  %v1254 = vpack.c.b16 %v1199, %v1198
  %v1255 = vpack.c.b16 %v1201, %v1200
  %v1256 = vpack.c.b16 %v1203, %v1202
  %v1257 = vpack.c.b16 %v1205, %v1204
  %v1258 = vpack.c.b16 %v1207, %v1206
  %v1259 = vpack.c.b16 %v1209, %v1208
  %v1260 = vpack.c.b16 %v1211, %v1210
  %v1261 = vpack.c.b16 %v1213, %v1212
  %v1262 = vpack.c.b16 %v1215, %v1214
  %v1263 = vpack.c.b16 %v1217, %v1216
  %v1264 = vpack.c.b16 %v1219, %v1218
  %v1265 = vpack.c.b16 %v1221, %v1220
  %v1266 = vpack.c.b16 %v1223, %v1222
  %v1267 = vpack.c.b16 %v1225, %v1224
  %v1268 = vpack.c.b16 %v1227, %v1226
  %v1269 = vpack.c.b16 %v1229, %v1228
  %v1270 = vpack.c.b16 %v1231, %v1230
  %v1271 = vpack.c.b16 %v1233, %v1232
  %v1272 = vpack.c.b16 %v1235, %v1234
  %v1273 = vpack.c.b16 %v1237, %v1236
  %v1274 = vpack.c.b16 %v1239, %v1238
  %v1275 = vpack.c.b16 %v1241, %v1240
  %v1276 = vpack.c.b16 %v1243, %v1242
  %v1277 = vpack.c.b16 %v1245, %v1244
  %1310 = vmatprep.subr.bf16.mxu0 0
  %1311 = vmatpush1.bf16.msra.mxu0 %v1246
  %1312 = vmatprep.subr.bf16.mxu0 0
  %1313 = vmatpush1.bf16.msra.mxu0 %v1247
  %1314 = vmatprep.subr.bf16.mxu0 0
  %1315 = vmatpush1.bf16.msra.mxu0 %v1248
  %1316 = vmatprep.subr.bf16.mxu0 0
  %1317 = vmatpush1.bf16.msra.mxu0 %v1249
  %1318 = vmatprep.subr.bf16.mxu0 0
  %1319 = vmatpush1.bf16.msra.mxu0 %v1250
  %1320 = vmatprep.subr.bf16.mxu0 0
  %1321 = vmatpush1.bf16.msra.mxu0 %v1251
  %1322 = vmatprep.subr.bf16.mxu0 0
  %1323 = vmatpush1.bf16.msra.mxu0 %v1252
  %1324 = vmatprep.subr.bf16.mxu0 0
  %1325 = vmatpush1.bf16.msra.mxu0 %v1253
  %1326 = vmatprep.subr.bf16.mxu0 0
  %1327 = vmatpush1.bf16.msra.mxu0 %v1254
  %1328 = vmatprep.subr.bf16.mxu0 0
  %1329 = vmatpush1.bf16.msra.mxu0 %v1255
  %1330 = vmatprep.subr.bf16.mxu0 0
  %1331 = vmatpush1.bf16.msra.mxu0 %v1256
  %1332 = vmatprep.subr.bf16.mxu0 0
  %1333 = vmatpush1.bf16.msra.mxu0 %v1257
  %1334 = vmatprep.subr.bf16.mxu0 0
  %1335 = vmatpush1.bf16.msra.mxu0 %v1258
  %1336 = vmatprep.subr.bf16.mxu0 0
  %1337 = vmatpush1.bf16.msra.mxu0 %v1259
  %1338 = vmatprep.subr.bf16.mxu0 0
  %1339 = vmatpush1.bf16.msra.mxu0 %v1260
  %1340 = vmatprep.subr.bf16.mxu0 0
  %1341 = vmatpush1.bf16.msra.mxu0 %v1261
  %1342 = vmatprep.mubr.bf16.mxu0 %v1044
  %1343 = vmatmul.mubr.bf16.gmra.mrb[0].mxu0 %v1043
  %v1344 = vpop.f32.mrb[0].mxu0
  %v1345 = vadd.f32 %v1116, %v1344
  %v1346 = vpop.f32.mrb[0].mxu0
  %v1347 = vpop.f32.mrb[0].mxu0
  %v1348 = vpop.f32.mrb[0].mxu0
  %1349 = vdwg.mxu0
  %1350 = vmatprep.subr.bf16.mxu0 0
  %1351 = vmatpush1.bf16.msra.mxu0 %v1262
  %1352 = vmatprep.subr.bf16.mxu0 0
  %1353 = vmatpush1.bf16.msra.mxu0 %v1263
  %1354 = vmatprep.subr.bf16.mxu0 0
  %1355 = vmatpush1.bf16.msra.mxu0 %v1264
  %1356 = vmatprep.subr.bf16.mxu0 0
  %1357 = vmatpush1.bf16.msra.mxu0 %v1265
  %1358 = vmatprep.subr.bf16.mxu0 0
  %1359 = vmatpush1.bf16.msra.mxu0 %v1266
  %1360 = vmatprep.subr.bf16.mxu0 0
  %1361 = vmatpush1.bf16.msra.mxu0 %v1267
  %1362 = vmatprep.subr.bf16.mxu0 0
  %1363 = vmatpush1.bf16.msra.mxu0 %v1268
  %1364 = vmatprep.subr.bf16.mxu0 0
  %1365 = vmatpush1.bf16.msra.mxu0 %v1269
  %1366 = vmatprep.subr.bf16.mxu0 0
  %1367 = vmatpush1.bf16.msra.mxu0 %v1270
  %1368 = vmatprep.subr.bf16.mxu0 0
  %1369 = vmatpush1.bf16.msra.mxu0 %v1271
  %1370 = vmatprep.subr.bf16.mxu0 0
  %1371 = vmatpush1.bf16.msra.mxu0 %v1272
  %1372 = vmatprep.subr.bf16.mxu0 0
  %1373 = vmatpush1.bf16.msra.mxu0 %v1273
  %1374 = vmatprep.subr.bf16.mxu0 0
  %1375 = vmatpush1.bf16.msra.mxu0 %v1274
  %1376 = vmatprep.subr.bf16.mxu0 0
  %1377 = vmatpush1.bf16.msra.mxu0 %v1275
  %1378 = vmatprep.subr.bf16.mxu0 0
  %1379 = vmatpush1.bf16.msra.mxu0 %v1276
  %1380 = vmatprep.subr.bf16.mxu0 0
  %1381 = vmatpush1.bf16.msra.mxu0 %v1277
  %1382 = vmatprep.mubr.bf16.mxu0 %v1046
  %1383 = vmatmul.mubr.bf16.gmra.mrb[0].mxu0 %v1045
  %v1384 = vpop.f32.mrb[0].mxu0
  %v1385 = vadd.f32 %v1345, %v1384
  %v1386 = vpop.f32.mrb[0].mxu0
  %v1387 = vpop.f32.mrb[0].mxu0
  %v1388 = vpop.f32.mrb[0].mxu0
  %1389 = vdwg.mxu0
  %vm1390 = vcmask 517120
  %1391 = vst.msk [vmem:[%s8] sm:$0x3] %vm1390, %v1385
  %v1392 = vld [vmem:[%s5] sm:$0x3]
  %v1393 = vmul.f32 %v1385, 0.5
  %v1394 = vmul.f32 %v1393, 1.442695
  %v1395 = vpow.pop %v1394
  %1397 = vrot.lane.b32.xlu0 %v1395, 96
  %v1398 = vpop.permute.xlu0 %1397
  %v1400 = vmul.f32 %v1392, %v1398
  %v1401 = vadd.f32 %v1385, %v1400
  %v1402 = vpack.c.bf16 %v1401, %v1401
  %v1403 = vld [vmem:[%s6] sm:$0xff]
  %v1404 = vld [vmem:[%s6 + $0x8] sm:$0xff]
  %v1405 = vld [vmem:[%s6 + $0x10] sm:$0xff]
  %v1406 = vld [vmem:[%s6 + $0x18] sm:$0xff]
  %v1407 = vld [vmem:[%s6 + $0x20] sm:$0xff]
  %v1408 = vld [vmem:[%s6 + $0x28] sm:$0xff]
  %v1409 = vld [vmem:[%s6 + $0x30] sm:$0xff]
  %v1410 = vld [vmem:[%s6 + $0x38] sm:$0xff]
  %v1411 = vld [vmem:[%s7] sm:$0xf]
  %v1413 = vlaneseq
  %v1414 = vshrl.u32 %v1413, 7
  %v1415 = vsub.s32 0, %v1414
  %v1416 = vrot.slane %v1411, %v1415
  %v1417 = vlaneseq
  %v1418 = vshrl.u32 %v1417, 7
  %v1419 = vsub.s32 1, %v1418
  %v1420 = vrot.slane %v1411, %v1419
  %v1421 = vlaneseq
  %v1422 = vshrl.u32 %v1421, 7
  %v1423 = vsub.s32 2, %v1422
  %v1424 = vrot.slane %v1411, %v1423
  %v1425 = vlaneseq
  %v1426 = vshrl.u32 %v1425, 7
  %v1427 = vsub.s32 3, %v1426
  %v1428 = vrot.slane %v1411, %v1427
  %v1441 = vunpack.c.l.b16 %v1403
  %v1442 = vunpack.c.h.b16 %v1403
  %v1443 = vunpack.c.l.b16 %v1404
  %v1444 = vunpack.c.h.b16 %v1404
  %v1445 = vunpack.c.l.b16 %v1405
  %v1446 = vunpack.c.h.b16 %v1405
  %v1447 = vunpack.c.l.b16 %v1406
  %v1448 = vunpack.c.h.b16 %v1406
  %v1449 = vunpack.c.l.b16 %v1407
  %v1450 = vunpack.c.h.b16 %v1407
  %v1451 = vunpack.c.l.b16 %v1408
  %v1452 = vunpack.c.h.b16 %v1408
  %v1453 = vunpack.c.l.b16 %v1409
  %v1454 = vunpack.c.h.b16 %v1409
  %v1455 = vunpack.c.l.b16 %v1410
  %v1456 = vunpack.c.h.b16 %v1410
  %v1457 = vpack.c.b16 %v1445, %v1441
  %v1458 = vpack.c.b16 %v1446, %v1442
  %v1459 = vpack.c.b16 %v1447, %v1443
  %v1460 = vpack.c.b16 %v1448, %v1444
  %v1461 = vpack.c.b16 %v1453, %v1449
  %v1462 = vpack.c.b16 %v1454, %v1450
  %v1463 = vpack.c.b16 %v1455, %v1451
  %v1464 = vpack.c.b16 %v1456, %v1452
  %vm1473 = vcmask 261120
  %v1475 = vsel %vm1473, %v1402, 0
  %1477 = vmatprep.subr.bf16.mxu0 %v1458
  %1478 = vmatpush1.bf16.msra.mxu0 %v1457
  %1479 = vmatprep.subr.bf16.mxu0 %v1462
  %1480 = vmatpush1.bf16.msra.mxu0 %v1461
  %1481 = vmatprep.subr.bf16.mxu0 0
  %1482 = vmatpush1.bf16.msra.mxu0 0
  %1483 = vmatprep.subr.bf16.mxu0 0
  %1484 = vmatpush1.bf16.msra.mxu0 0
  %1485 = vmatprep.subr.bf16.mxu0 0
  %1486 = vmatpush1.bf16.msra.mxu0 0
  %1487 = vmatprep.subr.bf16.mxu0 0
  %1488 = vmatpush1.bf16.msra.mxu0 0
  %1489 = vmatprep.subr.bf16.mxu0 0
  %1490 = vmatpush1.bf16.msra.mxu0 0
  %1491 = vmatprep.subr.bf16.mxu0 0
  %1492 = vmatpush1.bf16.msra.mxu0 0
  %1493 = vmatprep.subr.bf16.mxu0 0
  %1494 = vmatpush1.bf16.msra.mxu0 0
  %1495 = vmatprep.subr.bf16.mxu0 0
  %1496 = vmatpush1.bf16.msra.mxu0 0
  %1497 = vmatprep.subr.bf16.mxu0 0
  %1498 = vmatpush1.bf16.msra.mxu0 0
  %1499 = vmatprep.subr.bf16.mxu0 0
  %1500 = vmatpush1.bf16.msra.mxu0 0
  %1501 = vmatprep.subr.bf16.mxu0 0
  %1502 = vmatpush1.bf16.msra.mxu0 0
  %1503 = vmatprep.subr.bf16.mxu0 0
  %1504 = vmatpush1.bf16.msra.mxu0 0
  %1505 = vmatprep.subr.bf16.mxu0 0
  %1506 = vmatpush1.bf16.msra.mxu0 0
  %1507 = vmatprep.subr.bf16.mxu0 0
  %1508 = vmatpush1.bf16.msra.mxu0 0
  %1509 = vmatprep.mubr.bf16.mxu0 0
  %1510 = vmatmul.mubr.bf16.gmra.mrb[0].mxu0 %v1475
  %v1511 = vpop.f32.mrb[0].mxu0
  %v1512 = vadd.f32 %v1416, %v1511
  %v1513 = vpop.f32.mrb[0].mxu0
  %v1514 = vadd.f32 %v1420, %v1513
  %v1515 = vpop.f32.mrb[0].mxu0
  %v1516 = vpop.f32.mrb[0].mxu0
  %1517 = vdwg.mxu0
  %1518 = vmatprep.subr.bf16.mxu0 %v1460
  %1519 = vmatpush1.bf16.msra.mxu0 %v1459
  %1520 = vmatprep.subr.bf16.mxu0 %v1464
  %1521 = vmatpush1.bf16.msra.mxu0 %v1463
  %1522 = vmatprep.subr.bf16.mxu0 0
  %1523 = vmatpush1.bf16.msra.mxu0 0
  %1524 = vmatprep.subr.bf16.mxu0 0
  %1525 = vmatpush1.bf16.msra.mxu0 0
  %1526 = vmatprep.subr.bf16.mxu0 0
  %1527 = vmatpush1.bf16.msra.mxu0 0
  %1528 = vmatprep.subr.bf16.mxu0 0
  %1529 = vmatpush1.bf16.msra.mxu0 0
  %1530 = vmatprep.subr.bf16.mxu0 0
  %1531 = vmatpush1.bf16.msra.mxu0 0
  %1532 = vmatprep.subr.bf16.mxu0 0
  %1533 = vmatpush1.bf16.msra.mxu0 0
  %1534 = vmatprep.subr.bf16.mxu0 0
  %1535 = vmatpush1.bf16.msra.mxu0 0
  %1536 = vmatprep.subr.bf16.mxu0 0
  %1537 = vmatpush1.bf16.msra.mxu0 0
  %1538 = vmatprep.subr.bf16.mxu0 0
  %1539 = vmatpush1.bf16.msra.mxu0 0
  %1540 = vmatprep.subr.bf16.mxu0 0
  %1541 = vmatpush1.bf16.msra.mxu0 0
  %1542 = vmatprep.subr.bf16.mxu0 0
  %1543 = vmatpush1.bf16.msra.mxu0 0
  %1544 = vmatprep.subr.bf16.mxu0 0
  %1545 = vmatpush1.bf16.msra.mxu0 0
  %1546 = vmatprep.subr.bf16.mxu0 0
  %1547 = vmatpush1.bf16.msra.mxu0 0
  %1548 = vmatprep.subr.bf16.mxu0 0
  %1549 = vmatpush1.bf16.msra.mxu0 0
  %1550 = vmatprep.mubr.bf16.mxu0 0
  %1551 = vmatmul.mubr.bf16.gmra.mrb[0].mxu0 %v1475
  %v1552 = vpop.f32.mrb[0].mxu0
  %v1553 = vadd.f32 %v1424, %v1552
  %v1554 = vpop.f32.mrb[0].mxu0
  %v1555 = vadd.f32 %v1428, %v1554
  %v1556 = vpop.f32.mrb[0].mxu0
  %v1557 = vpop.f32.mrb[0].mxu0
  %1558 = vdwg.mxu0
  %v1559 = vmax.f32 %v1512, 0.0
  %v1560 = vmax.f32 %v1514, 0.0
  %v1561 = vmax.f32 %v1553, 0.0
  %v1562 = vmax.f32 %v1555, 0.0
  %v1563 = vpack.c.bf16 %v1559, %v1559
  %v1564 = vpack.c.bf16 %v1560, %v1560
  %v1565 = vpack.c.bf16 %v1561, %v1561
  %v1566 = vpack.c.bf16 %v1562, %v1562
  %v1571 = vcombine.low %v1563, %v1564
  %v1572 = vcombine.low %v1565, %v1566
  %v1574 = vunpack.c.l.s4 1966171168
  %v1575 = vunpack.c.0.s8 %v1574
  %v1576 = vlaneseq
  %v1577 = vshrl.u32 %v1576, 7
  %v1578 = vsub.s32 %v1575, %v1577
  %v1579 = vrot.slane %v1571, %v1578
  %v1581 = vunpack.c.l.s4 1966171168
  %v1582 = vunpack.c.0.s8 %v1581
  %v1583 = vlaneseq
  %v1584 = vshrl.u32 %v1583, 7
  %v1585 = vsub.s32 %v1582, %v1584
  %v1586 = vrot.slane %v1572, %v1585
  %v1587 = vcombine.low %v1579, %v1586
  %v1589 = vunpack.c.l.s4 1966171168
  %v1590 = vunpack.c.0.s8 %v1589
  %v1591 = vlaneseq
  %v1592 = vshrl.u32 %v1591, 7
  %v1593 = vsub.s32 %v1590, %v1592
  %v1594 = vrot.slane %v1587, %v1593
  %1596 = vst [vmem:[%s9] sm:$0xf] %v1594
  // Predicated region
  $region34: #{vae_forward.9} parent=0 // pred_check
    _
  $region35: #{vae_forward.9} parent=0 // pred_check_branch
    %1598 = sbr.rel (0) target = $region37
  $region36: #{vae_forward.9} parent=0 // pred_region
    _
  $region37: #{vae_forward.9} parent=0 // pred_fallthru
    _
  // Predicated region
  $region38: #{vae_forward.9} parent=0 // pred_check
    _
  $region39: #{vae_forward.9} parent=0 // pred_check_branch
    %1600 = sbr.rel (0) target = $region41
  $region40: #{vae_forward.9} parent=0 // pred_region
    _
  $region41: #{vae_forward.9} parent=0 // pred_fallthru
    _
  // Predicated region
  $region42: #{vae_forward.9} parent=0 // pred_check
    _
  $region43: #{vae_forward.9} parent=0 // pred_check_branch
    %1602 = sbr.rel (0) target = $region45
  $region44: #{vae_forward.9} parent=0 // pred_region
    _
  $region45: #{vae_forward.9} parent=0 // pred_fallthru
    _
  // Predicated region
  $region46: #{vae_forward.9} parent=0 // pred_check
    _
  $region47: #{vae_forward.9} parent=0 // pred_check_branch
    %1604 = sbr.rel (0) target = $region49
  $region48: #{vae_forward.9} parent=0 // pred_region
    _
  $region49: #{vae_forward.9} parent=0 // pred_fallthru
    _

// kernel: vae_forward.11
$region0: #{vae_forward.11}
  #allocation0 [shape = 'u32[]', space=smem, size = 0x4, offset = 0x4, fixed_abs, tag = 'smem constant byte address 0x4 - core index']
  #allocation1 [shape = 'u32[144,128]{1,0:T(1,128)}', space=vmem, size = 0x12000, scoped, tag = 'internal scratch']
  %s0 = inlined_call_operand.vmem [shape: bf16[2,42,64], index: 0, kind: input, shape index: {}]
  %s1 = inlined_call_operand.vmem [shape: bf16[9,64,128], index: 1, kind: input, shape index: {}]
  %s2 = inlined_call_operand.vmem [shape: f32[1,128], index: 2, kind: input, shape index: {}]
  %s3 = inlined_call_operand.vmem [shape: bf16[2,24,128], index: 3, kind: output, shape index: {}]
  %s4 = sld [smem:[#allocation0]]
  $region45: #{vae_forward.11} parent=0
    _
  %s6 = ssub.s32 1, %s4
  %s7 = scalar_select 0, %s6, %s4
  loop: start=0, step=1, limit=4
  $region2: #{vae_forward.11} parent=0 // loop_pre_header
    _
  $region3: #{vae_forward.11} parent=0 // loop_header
    %s9 = sphi 0, %s13
    %p10 = scmp.ge.s32.totalorder %s9, 4
    %s19 = sphi 0, %s21
    %s22 = sphi 0, %s19
    %s23 = sphi 0, %s22
    %s39 = sphi 0, %s23
    %s43 = sphi 0, %s43
    %s45 = sphi 0, %s43
    %s46 = sphi 0, %s45
    %s60 = sphi 0, %s46
    %s64 = sphi 0, %s64
    %s66 = sphi 0, %s64
    %s67 = sphi 0, %s66
    %s81 = sphi 0, %s67
    %s87 = sphi 0, %s89
    %s90 = sphi 0, %s87
    %s91 = sphi 0, %s90
    %s107 = sphi 0, %s91
  $region4: #{vae_forward.11} parent=0 // loop_header_branch
    %12 = sbr.rel (%p10) target = $region8
  $region5: #{vae_forward.11} parent=0 // loop_body
    %s14 = ssub.s32 %s9, 1
    %s15 = ssub.s32 %s9, 2
    %s16 = sadd.s32 %s9, 1
    %s17 = ssub.s32 %s9, %s16
    %p18 = scmp.eq.s32.totalorder %s17, 0
    %s20 = sadd.s32 %s19, 1
    %s21 = scalar_select %p18, %s19, %s20
    %p24 = pneg %p18
    %p25 = scmp.eq.s32.totalorder %s9, 1
    %p26 = por %p24, %p25
    %p27 = scmp.ne.s32.totalorder %s19, %s22
    %p28 = scmp.eq.s32.totalorder %s9, 0
    %p29 = por %p27, %p28
    %p30 = scmp.ne.s32.totalorder %s19, %s22
    %p31 = scmp.eq.s32.totalorder %s14, 1
    %p32 = por %p30, %p31
    %p33 = scmp.ne.s32.totalorder %s22, %s23
    %p34 = scmp.eq.s32.totalorder %s14, 0
    %p35 = por %p33, %p34
    %p36 = scmp.ne.s32.totalorder %s22, %s23
    %p37 = scmp.eq.s32.totalorder %s15, 1
    %p38 = por %p36, %p37
    %p40 = scmp.ne.s32.totalorder %s23, %s39
    %p41 = scmp.eq.s32.totalorder %s15, 0
    %p42 = por %p40, %p41
    %s44 = sadd.s32 %s43, 1
    %p47 = scmp.eq.s32.totalorder %s9, 1
    %p48 = scmp.ne.s32.totalorder %s43, %s45
    %p49 = scmp.eq.s32.totalorder %s9, 0
    %p50 = por %p48, %p49
    %p51 = scmp.ne.s32.totalorder %s43, %s45
    %p52 = scmp.eq.s32.totalorder %s14, 1
    %p53 = por %p51, %p52
    %p54 = scmp.ne.s32.totalorder %s45, %s46
    %p55 = scmp.eq.s32.totalorder %s14, 0
    %p56 = por %p54, %p55
    %p57 = scmp.ne.s32.totalorder %s45, %s46
    %p58 = scmp.eq.s32.totalorder %s15, 1
    %p59 = por %p57, %p58
    %p61 = scmp.ne.s32.totalorder %s46, %s60
    %p62 = scmp.eq.s32.totalorder %s15, 0
    %p63 = por %p61, %p62
    %s65 = sadd.s32 %s64, 1
    %p68 = scmp.eq.s32.totalorder %s9, 1
    %p69 = scmp.ne.s32.totalorder %s64, %s66
    %p70 = scmp.eq.s32.totalorder %s9, 0
    %p71 = por %p69, %p70
    %p72 = scmp.ne.s32.totalorder %s64, %s66
    %p73 = scmp.eq.s32.totalorder %s14, 1
    %p74 = por %p72, %p73
    %p75 = scmp.ne.s32.totalorder %s66, %s67
    %p76 = scmp.eq.s32.totalorder %s14, 0
    %p77 = por %p75, %p76
    %p78 = scmp.ne.s32.totalorder %s66, %s67
    %p79 = scmp.eq.s32.totalorder %s15, 1
    %p80 = por %p78, %p79
    %p82 = scmp.ne.s32.totalorder %s67, %s81
    %p83 = scmp.eq.s32.totalorder %s15, 0
    %p84 = por %p82, %p83
    %s85 = ssub.s32 %s9, %s16
    %p86 = scmp.eq.s32.totalorder %s85, 0
    %s88 = sadd.s32 %s87, 1
    %s89 = scalar_select %p86, %s87, %s88
    %p92 = pneg %p86
    %p93 = scmp.eq.s32.totalorder %s9, 1
    %p94 = por %p92, %p93
    %p95 = scmp.ne.s32.totalorder %s87, %s90
    %p96 = scmp.eq.s32.totalorder %s9, 0
    %p97 = por %p95, %p96
    %p98 = scmp.ne.s32.totalorder %s87, %s90
    %p99 = scmp.eq.s32.totalorder %s14, 1
    %p100 = por %p98, %p99
    %p101 = scmp.ne.s32.totalorder %s90, %s91
    %p102 = scmp.eq.s32.totalorder %s14, 0
    %p103 = por %p101, %p102
    %p104 = scmp.ne.s32.totalorder %s90, %s91
    %p105 = scmp.eq.s32.totalorder %s15, 1
    %p106 = por %p104, %p105
    %p108 = scmp.ne.s32.totalorder %s91, %s107
    %p109 = scmp.eq.s32.totalorder %s15, 0
    %p110 = por %p108, %p109
    %p111 = scmp.le.s32.totalorder 1, %s9
    %p112 = scmp.lt.s32.totalorder %s9, 3
    %p113 = pnand %p111, %p112
    %p114 = pneg %p113
    // Predicated region
    $region9: #{vae_forward.11} parent=5 // pred_check
      _
    $region10: #{vae_forward.11} parent=5 // pred_check_branch
      %116 = sbr.rel (%p113) target = $region12
    $region11: #{vae_forward.11} parent=5 // pred_region
      %s117 = ssub.s32 %s9, 1
      // Predicated region
      $region13: #{vae_forward.11} parent=11 // pred_check
        %p118 = pneg %p56
      $region14: #{vae_forward.11} parent=11 // pred_check_branch
        %120 = sbr.rel (%p118) target = $region16
      $region15: #{vae_forward.11} parent=11 // pred_region
        _
      $region16: #{vae_forward.11} parent=11 // pred_fallthru
        _
      // Predicated region
      $region17: #{vae_forward.11} parent=11 // pred_check
        %p121 = pneg %p77
      $region18: #{vae_forward.11} parent=11 // pred_check_branch
        %123 = sbr.rel (%p121) target = $region20
      $region19: #{vae_forward.11} parent=11 // pred_region
        _
      $region20: #{vae_forward.11} parent=11 // pred_fallthru
        _
    $region12: #{vae_forward.11} parent=5 // pred_fallthru
      _
    %p124 = scmp.lt.s32.totalorder %s9, 2
    // Predicated region
    $region21: #{vae_forward.11} parent=5 // pred_check
      %p125 = pneg %p124
    $region22: #{vae_forward.11} parent=5 // pred_check_branch
      %127 = sbr.rel (%p125) target = $region24
    $region23: #{vae_forward.11} parent=5 // pred_region
      // Predicated region
      $region25: #{vae_forward.11} parent=23 // pred_check
        %p128 = pneg %p29
      $region26: #{vae_forward.11} parent=23 // pred_check_branch
        %130 = sbr.rel (%p128) target = $region28
      $region27: #{vae_forward.11} parent=23 // pred_region
        %p131 = scmp.lt.s32.totalorder %s9, 1
        %s132 = scalar_select %p131, %s9, 1
        %s133 = smul.addr %s132, 6
        %s134 = smul.addr %s133, 4
        %s135 = scalar_lea.vmem %s0, %s134
      $region28: #{vae_forward.11} parent=23 // pred_fallthru
        _
    $region24: #{vae_forward.11} parent=5 // pred_fallthru
      _
    %p136 = scmp.le.s32.totalorder 1, %s9
    %p137 = scmp.lt.s32.totalorder %s9, 3
    %p138 = pnand %p136, %p137
    %p139 = pneg %p138
    // Predicated region
    $region29: #{vae_forward.11} parent=5 // pred_check
      _
    $region30: #{vae_forward.11} parent=5 // pred_check_branch
      %141 = sbr.rel (%p138) target = $region32
    $region31: #{vae_forward.11} parent=5 // pred_region
      %s142 = ssub.s32 %s9, 1
      %p143 = scmp.lt.s32.totalorder %s14, 1
      %s144 = scalar_select %p143, %s14, 1
      %s145 = smul.addr %s144, 6
      %s146 = smul.addr %s145, 4
      %s147 = scalar_lea.vmem %s0, %s146
      %p148 = pneg %p35
      %p149 = pneg %p32
      %p150 = pneg %p56
      %p151 = pneg %p53
      %p152 = pneg %p77
      %p153 = pneg %p74
      %p154 = pneg %p103
      %p155 = pneg %p100
      %p156 = scmp.lt.s32.totalorder %s14, 1
      %s157 = scalar_select %p156, %s14, 1
      %s158 = smul.addr %s157, 3
      %s159 = smul.addr %s158, 4
      %s160 = scalar_lea.vmem %s3, %s159
      %p161 = scmp.lt.s32.totalorder %s14, 1
      %s162 = scalar_select %p161, %s14, 1
      %s163 = smul.addr %s162, 6
      %s164 = smul.addr %s163, 4
      %s165 = scalar_lea.vmem %s0, %s164
      %p166 = scmp.lt.s32.totalorder %s14, 1
      %s167 = scalar_select %p166, %s14, 1
      %s168 = smul.addr %s167, 3
      %s169 = smul.addr %s168, 4
      %s170 = scalar_lea.vmem %s3, %s169
      %v172 = vld [vmem:[%s165] sm:$0xf]
      %v173 = vld [vmem:[%s165 + $0x4] sm:$0xf]
      %v174 = vld [vmem:[%s165 + $0x8] sm:$0xf]
      %v175 = vld [vmem:[%s1] sm:$0xf]
      %v176 = vld [vmem:[%s1 + $0x4] sm:$0xf]
      %v177 = vld [vmem:[%s1 + $0x8] sm:$0xf]
      %v178 = vld [vmem:[%s1 + $0xc] sm:$0xf]
      %v179 = vld [vmem:[%s1 + $0x10] sm:$0xf]
      %v180 = vld [vmem:[%s1 + $0x14] sm:$0xf]
      %v181 = vld [vmem:[%s1 + $0x18] sm:$0xf]
      %v182 = vld [vmem:[%s1 + $0x1c] sm:$0xf]
      %v183 = vld [vmem:[%s165 + $0xc] sm:$0x1]
      %s184 = scalar_lea.vmem %s1, 32
      %v185 = vld [vmem:[%s184] sm:$0xf]
      %v186 = vld [vmem:[%s184 + $0x4] sm:$0xf]
      %v187 = vld [vmem:[%s184 + $0x8] sm:$0xf]
      %v188 = vld [vmem:[%s184 + $0xc] sm:$0xf]
      %v189 = vld [vmem:[%s184 + $0x10] sm:$0xf]
      %v190 = vld [vmem:[%s184 + $0x14] sm:$0xf]
      %v191 = vld [vmem:[%s184 + $0x18] sm:$0xf]
      %v192 = vld [vmem:[%s184 + $0x1c] sm:$0xf]
      %v197 = vunpack.c.l.b16 %v172
      %v198 = vunpack.c.l.b16 %v173
      %v199 = vunpack.c.l.b16 %v174
      %v200 = vunpack.c.l.b16 %v183
      %v201 = vpack.c.b16 %v198, %v197
      %v202 = vpack.c.b16 %v200, %v199
      %vm203 = vsmask.f32 7424
      %v205 = vshrl.u32 %v201, 16
      %v207 = vshll.u32 %v201, 16
      %v209 = vrot.slane %v207, 1
      %v210 = vor.u32 %v205, %v209
      %v212 = vshll.u32 %v202, 16
      %v214 = vrot.slane %v212, 1
      %v215 = vsel %vm203, %v210, %v214
      %v216 = vshrl.u32 %v202, 16
      %v218 = vor.u32 %v216, %v214
      %v227 = vunpack.c.l.b16 %v185
      %v228 = vunpack.c.l.b16 %v186
      %v229 = vunpack.c.l.b16 %v187
      %v230 = vunpack.c.l.b16 %v188
      %v231 = vunpack.c.l.b16 %v189
      %v232 = vunpack.c.l.b16 %v190
      %v233 = vunpack.c.l.b16 %v191
      %v234 = vunpack.c.l.b16 %v192
      %v235 = vpack.c.b16 %v228, %v227
      %v236 = vpack.c.b16 %v230, %v229
      %v237 = vpack.c.b16 %v232, %v231
      %v238 = vpack.c.b16 %v234, %v233
      %vm243 = vcmask 523264
      %v245 = vsel %vm243, %v215, 0
      %v248 = vsel %vm243, %v218, 0
      %250 = vmatprep.subr.bf16.mxu0 0
      %251 = vmatpush1.bf16.msra.mxu0 %v235
      %252 = vmatprep.subr.bf16.mxu0 0
      %253 = vmatpush1.bf16.msra.mxu0 %v236
      %254 = vmatprep.subr.bf16.mxu0 0
      %255 = vmatpush1.bf16.msra.mxu0 %v237
      %256 = vmatprep.subr.bf16.mxu0 0
      %257 = vmatpush1.bf16.msra.mxu0 %v238
      %258 = vmatprep.subr.bf16.mxu0 0
      %259 = vmatpush1.bf16.msra.mxu0 0
      %260 = vmatprep.subr.bf16.mxu0 0
      %261 = vmatpush1.bf16.msra.mxu0 0
      %262 = vmatprep.subr.bf16.mxu0 0
      %263 = vmatpush1.bf16.msra.mxu0 0
      %264 = vmatprep.subr.bf16.mxu0 0
      %265 = vmatpush1.bf16.msra.mxu0 0
      %266 = vmatprep.subr.bf16.mxu0 0
      %267 = vmatpush1.bf16.msra.mxu0 0
      %268 = vmatprep.subr.bf16.mxu0 0
      %269 = vmatpush1.bf16.msra.mxu0 0
      %270 = vmatprep.subr.bf16.mxu0 0
      %271 = vmatpush1.bf16.msra.mxu0 0
      %272 = vmatprep.subr.bf16.mxu0 0
      %273 = vmatpush1.bf16.msra.mxu0 0
      %274 = vmatprep.subr.bf16.mxu0 0
      %275 = vmatpush1.bf16.msra.mxu0 0
      %276 = vmatprep.subr.bf16.mxu0 0
      %277 = vmatpush1.bf16.msra.mxu0 0
      %278 = vmatprep.subr.bf16.mxu0 0
      %279 = vmatpush1.bf16.msra.mxu0 0
      %280 = vmatprep.subr.bf16.mxu0 0
      %281 = vmatpush1.bf16.msra.mxu0 0
      %282 = vmatprep.mubr.bf16.mxu0 0
      %283 = vmatmul.mubr.bf16.gmra.mrb[0].mxu0 %v245
      %v284 = vpop.f32.mrb[0].mxu0
      %v285 = vadd.f32 0.0, %v284
      %v286 = vpop.f32.mrb[0].mxu0
      %v287 = vpop.f32.mrb[0].mxu0
      %v288 = vadd.f32 0.0, %v287
      %v289 = vpop.f32.mrb[0].mxu0
      %290 = vmatprep.mubr.bf16.mxu0 0
      %291 = vmatmul.mubr.bf16.gmra.mrb[0].mxu0 %v248
      %v292 = vpop.f32.mrb[0].mxu0
      %v293 = vadd.f32 0.0, %v292
      %v294 = vpop.f32.mrb[0].mxu0
      %v295 = vpop.f32.mrb[0].mxu0
      %v296 = vpop.f32.mrb[0].mxu0
      %297 = vdwg.mxu0
      %v298 = vpack.c.b16 %v199, %v199
      %v307 = vunpack.c.l.b16 %v175
      %v308 = vunpack.c.l.b16 %v176
      %v309 = vunpack.c.l.b16 %v177
      %v310 = vunpack.c.l.b16 %v178
      %v311 = vunpack.c.l.b16 %v179
      %v312 = vunpack.c.l.b16 %v180
      %v313 = vunpack.c.l.b16 %v181
      %v314 = vunpack.c.l.b16 %v182
      %v315 = vpack.c.b16 %v308, %v307
      %v316 = vpack.c.b16 %v310, %v309
      %v317 = vpack.c.b16 %v312, %v311
      %v318 = vpack.c.b16 %v314, %v313
      %v323 = vsel %vm243, %v201, 0
      %v326 = vsel %vm243, %v298, 0
      %328 = vmatprep.subr.bf16.mxu0 0
      %329 = vmatpush1.bf16.msra.mxu0 %v315
      %330 = vmatprep.subr.bf16.mxu0 0
      %331 = vmatpush1.bf16.msra.mxu0 %v316
      %332 = vmatprep.subr.bf16.mxu0 0
      %333 = vmatpush1.bf16.msra.mxu0 %v317
      %334 = vmatprep.subr.bf16.mxu0 0
      %335 = vmatpush1.bf16.msra.mxu0 %v318
      %336 = vmatprep.subr.bf16.mxu0 0
      %337 = vmatpush1.bf16.msra.mxu0 0
      %338 = vmatprep.subr.bf16.mxu0 0
      %339 = vmatpush1.bf16.msra.mxu0 0
      %340 = vmatprep.subr.bf16.mxu0 0
      %341 = vmatpush1.bf16.msra.mxu0 0
      %342 = vmatprep.subr.bf16.mxu0 0
      %343 = vmatpush1.bf16.msra.mxu0 0
      %344 = vmatprep.subr.bf16.mxu0 0
      %345 = vmatpush1.bf16.msra.mxu0 0
      %346 = vmatprep.subr.bf16.mxu0 0
      %347 = vmatpush1.bf16.msra.mxu0 0
      %348 = vmatprep.subr.bf16.mxu0 0
      %349 = vmatpush1.bf16.msra.mxu0 0
      %350 = vmatprep.subr.bf16.mxu0 0
      %351 = vmatpush1.bf16.msra.mxu0 0
      %352 = vmatprep.subr.bf16.mxu0 0
      %353 = vmatpush1.bf16.msra.mxu0 0
      %354 = vmatprep.subr.bf16.mxu0 0
      %355 = vmatpush1.bf16.msra.mxu0 0
      %356 = vmatprep.subr.bf16.mxu0 0
      %357 = vmatpush1.bf16.msra.mxu0 0
      %358 = vmatprep.subr.bf16.mxu0 0
      %359 = vmatpush1.bf16.msra.mxu0 0
      %360 = vmatprep.mubr.bf16.mxu0 0
      %361 = vmatmul.mubr.bf16.gmra.mrb[0].mxu0 %v323
      %v362 = vpop.f32.mrb[0].mxu0
      %v363 = vadd.f32 %v285, %v362
      %v364 = vpop.f32.mrb[0].mxu0
      %v365 = vpop.f32.mrb[0].mxu0
      %v366 = vadd.f32 %v288, %v365
      %v367 = vpop.f32.mrb[0].mxu0
      %368 = vmatprep.mubr.bf16.mxu0 0
      %369 = vmatmul.mubr.bf16.gmra.mrb[0].mxu0 %v326
      %v370 = vpop.f32.mrb[0].mxu0
      %v371 = vadd.f32 %v293, %v370
      %v372 = vpop.f32.mrb[0].mxu0
      %v373 = vpop.f32.mrb[0].mxu0
      %v374 = vpop.f32.mrb[0].mxu0
      %375 = vdwg.mxu0
      %v376 = vld [vmem:[%s165] sm:$0xe]
      %s377 = scalar_lea.vmem %s1, 64
      %v378 = vld [vmem:[%s377] sm:$0xf]
      %v379 = vld [vmem:[%s377 + $0x4] sm:$0xf]
      %v380 = vld [vmem:[%s377 + $0x8] sm:$0xf]
      %v381 = vld [vmem:[%s377 + $0xc] sm:$0xf]
      %v382 = vld [vmem:[%s377 + $0x10] sm:$0xf]
      %v383 = vld [vmem:[%s377 + $0x14] sm:$0xf]
      %v384 = vld [vmem:[%s377 + $0x18] sm:$0xf]
      %v385 = vld [vmem:[%s377 + $0x1c] sm:$0xf]
      %v387 = vunpack.c.l.b16 %v376
      %v388 = vpack.c.b16 %v198, %v387
      %vm389 = vcmask 1046528
      %v390 = vrot.slane %v388, 1
      %v391 = vrot.slane %v202, 1
      %v392 = vsel %vm389, %v390, %v391
      %v401 = vunpack.c.l.b16 %v378
      %v402 = vunpack.c.l.b16 %v379
      %v403 = vunpack.c.l.b16 %v380
      %v404 = vunpack.c.l.b16 %v381
      %v405 = vunpack.c.l.b16 %v382
      %v406 = vunpack.c.l.b16 %v383
      %v407 = vunpack.c.l.b16 %v384
      %v408 = vunpack.c.l.b16 %v385
      %v409 = vpack.c.b16 %v402, %v401
      %v410 = vpack.c.b16 %v404, %v403
      %v411 = vpack.c.b16 %v406, %v405
      %v412 = vpack.c.b16 %v408, %v407
      %v418 = vsel %vm243, %v392, 0
      %v421 = vsel %vm243, %v391, 0
      %423 = vmatprep.subr.bf16.mxu0 0
      %424 = vmatpush1.bf16.msra.mxu0 %v409
      %425 = vmatprep.subr.bf16.mxu0 0
      %426 = vmatpush1.bf16.msra.mxu0 %v410
      %427 = vmatprep.subr.bf16.mxu0 0
      %428 = vmatpush1.bf16.msra.mxu0 %v411
      %429 = vmatprep.subr.bf16.mxu0 0
      %430 = vmatpush1.bf16.msra.mxu0 %v412
      %431 = vmatprep.subr.bf16.mxu0 0
      %432 = vmatpush1.bf16.msra.mxu0 0
      %433 = vmatprep.subr.bf16.mxu0 0
      %434 = vmatpush1.bf16.msra.mxu0 0
      %435 = vmatprep.subr.bf16.mxu0 0
      %436 = vmatpush1.bf16.msra.mxu0 0
      %437 = vmatprep.subr.bf16.mxu0 0
      %438 = vmatpush1.bf16.msra.mxu0 0
      %439 = vmatprep.subr.bf16.mxu0 0
      %440 = vmatpush1.bf16.msra.mxu0 0
      %441 = vmatprep.subr.bf16.mxu0 0
      %442 = vmatpush1.bf16.msra.mxu0 0
      %443 = vmatprep.subr.bf16.mxu0 0
      %444 = vmatpush1.bf16.msra.mxu0 0
      %445 = vmatprep.subr.bf16.mxu0 0
      %446 = vmatpush1.bf16.msra.mxu0 0
      %447 = vmatprep.subr.bf16.mxu0 0
      %448 = vmatpush1.bf16.msra.mxu0 0
      %449 = vmatprep.subr.bf16.mxu0 0
      %450 = vmatpush1.bf16.msra.mxu0 0
      %451 = vmatprep.subr.bf16.mxu0 0
      %452 = vmatpush1.bf16.msra.mxu0 0
      %453 = vmatprep.subr.bf16.mxu0 0
      %454 = vmatpush1.bf16.msra.mxu0 0
      %455 = vmatprep.mubr.bf16.mxu0 0
      %456 = vmatmul.mubr.bf16.gmra.mrb[0].mxu0 %v418
      %v457 = vpop.f32.mrb[0].mxu0
      %v458 = vadd.f32 0.0, %v457
      %v459 = vpop.f32.mrb[0].mxu0
      %v460 = vpop.f32.mrb[0].mxu0
      %v461 = vadd.f32 0.0, %v460
      %v462 = vpop.f32.mrb[0].mxu0
      %463 = vmatprep.mubr.bf16.mxu0 0
      %464 = vmatmul.mubr.bf16.gmra.mrb[0].mxu0 %v421
      %v465 = vpop.f32.mrb[0].mxu0
      %v466 = vadd.f32 0.0, %v465
      %v467 = vpop.f32.mrb[0].mxu0
      %v468 = vpop.f32.mrb[0].mxu0
      %v469 = vpop.f32.mrb[0].mxu0
      %470 = vdwg.mxu0
      %v471 = vadd.f32 %v363, %v458
      %v472 = vadd.f32 %v366, %v461
      %v473 = vadd.f32 %v371, %v466
      %v474 = vld [vmem:[%s165] sm:$0x8]
      %v475 = vld [vmem:[%s165 + $0xc] sm:$0x7]
      %s476 = scalar_lea.vmem %s1, 96
      %v477 = vld [vmem:[%s476] sm:$0xf]
      %v478 = vld [vmem:[%s476 + $0x4] sm:$0xf]
      %v479 = vld [vmem:[%s476 + $0x8] sm:$0xf]
      %v480 = vld [vmem:[%s476 + $0xc] sm:$0xf]
      %v481 = vld [vmem:[%s476 + $0x10] sm:$0xf]
      %v482 = vld [vmem:[%s476 + $0x14] sm:$0xf]
      %v483 = vld [vmem:[%s476 + $0x18] sm:$0xf]
      %v484 = vld [vmem:[%s476 + $0x1c] sm:$0xf]
      %v487 = vunpack.c.l.b16 %v474
      %v488 = vunpack.c.l.b16 %v475
      %v489 = vpack.c.b16 %v198, %v487
      %v490 = vpack.c.b16 %v488, %v199
      %vm491 = vcmask 1044480
      %v492 = vrot.slane %v489, 3
      %v493 = vrot.slane %v490, 3
      %v494 = vsel %vm491, %v492, %v493
      %v503 = vunpack.c.l.b16 %v477
      %v504 = vunpack.c.l.b16 %v478
      %v505 = vunpack.c.l.b16 %v479
      %v506 = vunpack.c.l.b16 %v480
      %v507 = vunpack.c.l.b16 %v481
      %v508 = vunpack.c.l.b16 %v482
      %v509 = vunpack.c.l.b16 %v483
      %v510 = vunpack.c.l.b16 %v484
      %v511 = vpack.c.b16 %v504, %v503
      %v512 = vpack.c.b16 %v506, %v505
      %v513 = vpack.c.b16 %v508, %v507
      %v514 = vpack.c.b16 %v510, %v509
      %v520 = vsel %vm243, %v494, 0
      %v523 = vsel %vm243, %v493, 0
      %525 = vmatprep.subr.bf16.mxu0 0
      %526 = vmatpush1.bf16.msra.mxu0 %v511
      %527 = vmatprep.subr.bf16.mxu0 0
      %528 = vmatpush1.bf16.msra.mxu0 %v512
      %529 = vmatprep.subr.bf16.mxu0 0
      %530 = vmatpush1.bf16.msra.mxu0 %v513
      %531 = vmatprep.subr.bf16.mxu0 0
      %532 = vmatpush1.bf16.msra.mxu0 %v514
      %533 = vmatprep.subr.bf16.mxu0 0
      %534 = vmatpush1.bf16.msra.mxu0 0
      %535 = vmatprep.subr.bf16.mxu0 0
      %536 = vmatpush1.bf16.msra.mxu0 0
      %537 = vmatprep.subr.bf16.mxu0 0
      %538 = vmatpush1.bf16.msra.mxu0 0
      %539 = vmatprep.subr.bf16.mxu0 0
      %540 = vmatpush1.bf16.msra.mxu0 0
      %541 = vmatprep.subr.bf16.mxu0 0
      %542 = vmatpush1.bf16.msra.mxu0 0
      %543 = vmatprep.subr.bf16.mxu0 0
      %544 = vmatpush1.bf16.msra.mxu0 0
      %545 = vmatprep.subr.bf16.mxu0 0
      %546 = vmatpush1.bf16.msra.mxu0 0
      %547 = vmatprep.subr.bf16.mxu0 0
      %548 = vmatpush1.bf16.msra.mxu0 0
      %549 = vmatprep.subr.bf16.mxu0 0
      %550 = vmatpush1.bf16.msra.mxu0 0
      %551 = vmatprep.subr.bf16.mxu0 0
      %552 = vmatpush1.bf16.msra.mxu0 0
      %553 = vmatprep.subr.bf16.mxu0 0
      %554 = vmatpush1.bf16.msra.mxu0 0
      %555 = vmatprep.subr.bf16.mxu0 0
      %556 = vmatpush1.bf16.msra.mxu0 0
      %557 = vmatprep.mubr.bf16.mxu0 0
      %558 = vmatmul.mubr.bf16.gmra.mrb[0].mxu0 %v520
      %v559 = vpop.f32.mrb[0].mxu0
      %v560 = vadd.f32 0.0, %v559
      %v561 = vpop.f32.mrb[0].mxu0
      %v562 = vpop.f32.mrb[0].mxu0
      %v563 = vadd.f32 0.0, %v562
      %v564 = vpop.f32.mrb[0].mxu0
      %565 = vmatprep.mubr.bf16.mxu0 0
      %566 = vmatmul.mubr.bf16.gmra.mrb[0].mxu0 %v523
      %v567 = vpop.f32.mrb[0].mxu0
      %v568 = vadd.f32 0.0, %v567
      %v569 = vpop.f32.mrb[0].mxu0
      %v570 = vpop.f32.mrb[0].mxu0
      %v571 = vpop.f32.mrb[0].mxu0
      %572 = vdwg.mxu0
      %v573 = vadd.f32 %v471, %v560
      %v574 = vadd.f32 %v472, %v563
      %v575 = vadd.f32 %v473, %v568
      %v576 = vld [vmem:[%s165 + $0xc] sm:$0xf]
      %s577 = scalar_lea.vmem %s1, 128
      %v578 = vld [vmem:[%s577] sm:$0xf]
      %v579 = vld [vmem:[%s577 + $0x4] sm:$0xf]
      %v580 = vld [vmem:[%s577 + $0x8] sm:$0xf]
      %v581 = vld [vmem:[%s577 + $0xc] sm:$0xf]
      %v582 = vld [vmem:[%s577 + $0x10] sm:$0xf]
      %v583 = vld [vmem:[%s577 + $0x14] sm:$0xf]
      %v584 = vld [vmem:[%s577 + $0x18] sm:$0xf]
      %v585 = vld [vmem:[%s577 + $0x1c] sm:$0xf]
      %v587 = vunpack.c.l.b16 %v576
      %v588 = vpack.c.b16 %v587, %v199
      %vm589 = vsmask.f32 4352
      %v591 = vshrl.u32 %v489, 16
      %v593 = vrot.slane %v591, 3
      %v594 = vshll.u32 %v489, 16
      %v596 = vrot.slane %v594, 4
      %v597 = vor.u32 %v593, %v596
      %v599 = vshrl.u32 %v588, 16
      %v601 = vrot.slane %v599, 3
      %v602 = vshll.u32 %v588, 16
      %v604 = vrot.slane %v602, 4
      %v605 = vor.u32 %v601, %v604
      %v606 = vsel %vm589, %v597, %v605
      %v615 = vunpack.c.l.b16 %v578
      %v616 = vunpack.c.l.b16 %v579
      %v617 = vunpack.c.l.b16 %v580
      %v618 = vunpack.c.l.b16 %v581
      %v619 = vunpack.c.l.b16 %v582
      %v620 = vunpack.c.l.b16 %v583
      %v621 = vunpack.c.l.b16 %v584
      %v622 = vunpack.c.l.b16 %v585
      %v623 = vpack.c.b16 %v616, %v615
      %v624 = vpack.c.b16 %v618, %v617
      %v625 = vpack.c.b16 %v620, %v619
      %v626 = vpack.c.b16 %v622, %v621
      %v632 = vsel %vm243, %v606, 0
      %v635 = vsel %vm243, %v605, 0
      %637 = vmatprep.subr.bf16.mxu0 0
      %638 = vmatpush1.bf16.msra.mxu0 %v623
      %639 = vmatprep.subr.bf16.mxu0 0
      %640 = vmatpush1.bf16.msra.mxu0 %v624
      %641 = vmatprep.subr.bf16.mxu0 0
      %642 = vmatpush1.bf16.msra.mxu0 %v625
      %643 = vmatprep.subr.bf16.mxu0 0
      %644 = vmatpush1.bf16.msra.mxu0 %v626
      %645 = vmatprep.subr.bf16.mxu0 0
      %646 = vmatpush1.bf16.msra.mxu0 0
      %647 = vmatprep.subr.bf16.mxu0 0
      %648 = vmatpush1.bf16.msra.mxu0 0
      %649 = vmatprep.subr.bf16.mxu0 0
      %650 = vmatpush1.bf16.msra.mxu0 0
      %651 = vmatprep.subr.bf16.mxu0 0
      %652 = vmatpush1.bf16.msra.mxu0 0
      %653 = vmatprep.subr.bf16.mxu0 0
      %654 = vmatpush1.bf16.msra.mxu0 0
      %655 = vmatprep.subr.bf16.mxu0 0
      %656 = vmatpush1.bf16.msra.mxu0 0
      %657 = vmatprep.subr.bf16.mxu0 0
      %658 = vmatpush1.bf16.msra.mxu0 0
      %659 = vmatprep.subr.bf16.mxu0 0
      %660 = vmatpush1.bf16.msra.mxu0 0
      %661 = vmatprep.subr.bf16.mxu0 0
      %662 = vmatpush1.bf16.msra.mxu0 0
      %663 = vmatprep.subr.bf16.mxu0 0
      %664 = vmatpush1.bf16.msra.mxu0 0
      %665 = vmatprep.subr.bf16.mxu0 0
      %666 = vmatpush1.bf16.msra.mxu0 0
      %667 = vmatprep.subr.bf16.mxu0 0
      %668 = vmatpush1.bf16.msra.mxu0 0
      %669 = vmatprep.mubr.bf16.mxu0 0
      %670 = vmatmul.mubr.bf16.gmra.mrb[0].mxu0 %v632
      %v671 = vpop.f32.mrb[0].mxu0
      %v672 = vadd.f32 0.0, %v671
      %v673 = vpop.f32.mrb[0].mxu0
      %v674 = vpop.f32.mrb[0].mxu0
      %v675 = vadd.f32 0.0, %v674
      %v676 = vpop.f32.mrb[0].mxu0
      %677 = vmatprep.mubr.bf16.mxu0 0
      %678 = vmatmul.mubr.bf16.gmra.mrb[0].mxu0 %v635
      %v679 = vpop.f32.mrb[0].mxu0
      %v680 = vadd.f32 0.0, %v679
      %v681 = vpop.f32.mrb[0].mxu0
      %v682 = vpop.f32.mrb[0].mxu0
      %v683 = vpop.f32.mrb[0].mxu0
      %684 = vdwg.mxu0
      %v685 = vadd.f32 %v573, %v672
      %v686 = vadd.f32 %v574, %v675
      %v687 = vadd.f32 %v575, %v680
      %s688 = scalar_lea.vmem %s1, 160
      %v689 = vld [vmem:[%s688] sm:$0xf]
      %v690 = vld [vmem:[%s688 + $0x4] sm:$0xf]
      %v691 = vld [vmem:[%s688 + $0x8] sm:$0xf]
      %v692 = vld [vmem:[%s688 + $0xc] sm:$0xf]
      %v693 = vld [vmem:[%s688 + $0x10] sm:$0xf]
      %v694 = vld [vmem:[%s688 + $0x14] sm:$0xf]
      %v695 = vld [vmem:[%s688 + $0x18] sm:$0xf]
      %v696 = vld [vmem:[%s688 + $0x1c] sm:$0xf]
      %v697 = vpack.c.b16 %v199, %v198
      %v698 = vpack.c.b16 %v587, %v587
      %v707 = vunpack.c.l.b16 %v689
      %v708 = vunpack.c.l.b16 %v690
      %v709 = vunpack.c.l.b16 %v691
      %v710 = vunpack.c.l.b16 %v692
      %v711 = vunpack.c.l.b16 %v693
      %v712 = vunpack.c.l.b16 %v694
      %v713 = vunpack.c.l.b16 %v695
      %v714 = vunpack.c.l.b16 %v696
      %v715 = vpack.c.b16 %v708, %v707
      %v716 = vpack.c.b16 %v710, %v709
      %v717 = vpack.c.b16 %v712, %v711
      %v718 = vpack.c.b16 %v714, %v713
      %v724 = vsel %vm243, %v697, 0
      %v727 = vsel %vm243, %v698, 0
      %729 = vmatprep.subr.bf16.mxu0 0
      %730 = vmatpush1.bf16.msra.mxu0 %v715
      %731 = vmatprep.subr.bf16.mxu0 0
      %732 = vmatpush1.bf16.msra.mxu0 %v716
      %733 = vmatprep.subr.bf16.mxu0 0
      %734 = vmatpush1.bf16.msra.mxu0 %v717
      %735 = vmatprep.subr.bf16.mxu0 0
      %736 = vmatpush1.bf16.msra.mxu0 %v718
      %737 = vmatprep.subr.bf16.mxu0 0
      %738 = vmatpush1.bf16.msra.mxu0 0
      %739 = vmatprep.subr.bf16.mxu0 0
      %740 = vmatpush1.bf16.msra.mxu0 0
      %741 = vmatprep.subr.bf16.mxu0 0
      %742 = vmatpush1.bf16.msra.mxu0 0
      %743 = vmatprep.subr.bf16.mxu0 0
      %744 = vmatpush1.bf16.msra.mxu0 0
      %745 = vmatprep.subr.bf16.mxu0 0
      %746 = vmatpush1.bf16.msra.mxu0 0
      %747 = vmatprep.subr.bf16.mxu0 0
      %748 = vmatpush1.bf16.msra.mxu0 0
      %749 = vmatprep.subr.bf16.mxu0 0
      %750 = vmatpush1.bf16.msra.mxu0 0
      %751 = vmatprep.subr.bf16.mxu0 0
      %752 = vmatpush1.bf16.msra.mxu0 0
      %753 = vmatprep.subr.bf16.mxu0 0
      %754 = vmatpush1.bf16.msra.mxu0 0
      %755 = vmatprep.subr.bf16.mxu0 0
      %756 = vmatpush1.bf16.msra.mxu0 0
      %757 = vmatprep.subr.bf16.mxu0 0
      %758 = vmatpush1.bf16.msra.mxu0 0
      %759 = vmatprep.subr.bf16.mxu0 0
      %760 = vmatpush1.bf16.msra.mxu0 0
      %761 = vmatprep.mubr.bf16.mxu0 0
      %762 = vmatmul.mubr.bf16.gmra.mrb[0].mxu0 %v724
      %v763 = vpop.f32.mrb[0].mxu0
      %v764 = vadd.f32 0.0, %v763
      %v765 = vpop.f32.mrb[0].mxu0
      %v766 = vpop.f32.mrb[0].mxu0
      %v767 = vadd.f32 0.0, %v766
      %v768 = vpop.f32.mrb[0].mxu0
      %769 = vmatprep.mubr.bf16.mxu0 0
      %770 = vmatmul.mubr.bf16.gmra.mrb[0].mxu0 %v727
      %v771 = vpop.f32.mrb[0].mxu0
      %v772 = vadd.f32 0.0, %v771
      %v773 = vpop.f32.mrb[0].mxu0
      %v774 = vpop.f32.mrb[0].mxu0
      %v775 = vpop.f32.mrb[0].mxu0
      %776 = vdwg.mxu0
      %v777 = vadd.f32 %v685, %v764
      %v778 = vadd.f32 %v686, %v767
      %v779 = vadd.f32 %v687, %v772
      %v780 = vld [vmem:[%s165 + $0x4] sm:$0xc]
      %v781 = vld [vmem:[%s165 + $0x8] sm:$0xf]
      %v782 = vld [vmem:[%s165 + $0xc] sm:$0xf]
      %v783 = vld [vmem:[%s165 + $0x10] sm:$0x3]
      %s784 = scalar_lea.vmem %s1, 192
      %v785 = vld [vmem:[%s784] sm:$0xf]
      %v786 = vld [vmem:[%s784 + $0x4] sm:$0xf]
      %v787 = vld [vmem:[%s784 + $0x8] sm:$0xf]
      %v788 = vld [vmem:[%s784 + $0xc] sm:$0xf]
      %v789 = vld [vmem:[%s784 + $0x10] sm:$0xf]
      %v790 = vld [vmem:[%s784 + $0x14] sm:$0xf]
      %v791 = vld [vmem:[%s784 + $0x18] sm:$0xf]
      %v792 = vld [vmem:[%s784 + $0x1c] sm:$0xf]
      %v797 = vunpack.c.l.b16 %v780
      %v798 = vunpack.c.l.b16 %v781
      %v799 = vunpack.c.l.b16 %v782
      %v800 = vunpack.c.l.b16 %v783
      %v801 = vpack.c.b16 %v798, %v797
      %v802 = vpack.c.b16 %v800, %v799
      %vm803 = vcmask 1045504
      %v804 = vrot.slane %v801, 2
      %v805 = vrot.slane %v802, 2
      %v806 = vsel %vm803, %v804, %v805
      %v815 = vunpack.c.l.b16 %v785
      %v816 = vunpack.c.l.b16 %v786
      %v817 = vunpack.c.l.b16 %v787
      %v818 = vunpack.c.l.b16 %v788
      %v819 = vunpack.c.l.b16 %v789
      %v820 = vunpack.c.l.b16 %v790
      %v821 = vunpack.c.l.b16 %v791
      %v822 = vunpack.c.l.b16 %v792
      %v823 = vpack.c.b16 %v816, %v815
      %v824 = vpack.c.b16 %v818, %v817
      %v825 = vpack.c.b16 %v820, %v819
      %v826 = vpack.c.b16 %v822, %v821
      %v832 = vsel %vm243, %v806, 0
      %v835 = vsel %vm243, %v805, 0
      %837 = vmatprep.subr.bf16.mxu0 0
      %838 = vmatpush1.bf16.msra.mxu0 %v823
      %839 = vmatprep.subr.bf16.mxu0 0
      %840 = vmatpush1.bf16.msra.mxu0 %v824
      %841 = vmatprep.subr.bf16.mxu0 0
      %842 = vmatpush1.bf16.msra.mxu0 %v825
      %843 = vmatprep.subr.bf16.mxu0 0
      %844 = vmatpush1.bf16.msra.mxu0 %v826
      %845 = vmatprep.subr.bf16.mxu0 0
      %846 = vmatpush1.bf16.msra.mxu0 0
      %847 = vmatprep.subr.bf16.mxu0 0
      %848 = vmatpush1.bf16.msra.mxu0 0
      %849 = vmatprep.subr.bf16.mxu0 0
      %850 = vmatpush1.bf16.msra.mxu0 0
      %851 = vmatprep.subr.bf16.mxu0 0
      %852 = vmatpush1.bf16.msra.mxu0 0
      %853 = vmatprep.subr.bf16.mxu0 0
      %854 = vmatpush1.bf16.msra.mxu0 0
      %855 = vmatprep.subr.bf16.mxu0 0
      %856 = vmatpush1.bf16.msra.mxu0 0
      %857 = vmatprep.subr.bf16.mxu0 0
      %858 = vmatpush1.bf16.msra.mxu0 0
      %859 = vmatprep.subr.bf16.mxu0 0
      %860 = vmatpush1.bf16.msra.mxu0 0
      %861 = vmatprep.subr.bf16.mxu0 0
      %862 = vmatpush1.bf16.msra.mxu0 0
      %863 = vmatprep.subr.bf16.mxu0 0
      %864 = vmatpush1.bf16.msra.mxu0 0
      %865 = vmatprep.subr.bf16.mxu0 0
      %866 = vmatpush1.bf16.msra.mxu0 0
      %867 = vmatprep.subr.bf16.mxu0 0
      %868 = vmatpush1.bf16.msra.mxu0 0
      %869 = vmatprep.mubr.bf16.mxu0 0
      %870 = vmatmul.mubr.bf16.gmra.mrb[0].mxu0 %v832
      %v871 = vpop.f32.mrb[0].mxu0
      %v872 = vadd.f32 0.0, %v871
      %v873 = vpop.f32.mrb[0].mxu0
      %v874 = vpop.f32.mrb[0].mxu0
      %v875 = vadd.f32 0.0, %v874
      %v876 = vpop.f32.mrb[0].mxu0
      %877 = vmatprep.mubr.bf16.mxu0 0
      %878 = vmatmul.mubr.bf16.gmra.mrb[0].mxu0 %v835
      %v879 = vpop.f32.mrb[0].mxu0
      %v880 = vadd.f32 0.0, %v879
      %v881 = vpop.f32.mrb[0].mxu0
      %v882 = vpop.f32.mrb[0].mxu0
      %v883 = vpop.f32.mrb[0].mxu0
      %884 = vdwg.mxu0
      %v885 = vadd.f32 %v777, %v872
      %v886 = vadd.f32 %v778, %v875
      %v887 = vadd.f32 %v779, %v880
      %v888 = vld [vmem:[%s165 + $0x10] sm:$0x7]
      %s889 = scalar_lea.vmem %s1, 224
      %v890 = vld [vmem:[%s889] sm:$0xf]
      %v891 = vld [vmem:[%s889 + $0x4] sm:$0xf]
      %v892 = vld [vmem:[%s889 + $0x8] sm:$0xf]
      %v893 = vld [vmem:[%s889 + $0xc] sm:$0xf]
      %v894 = vld [vmem:[%s889 + $0x10] sm:$0xf]
      %v895 = vld [vmem:[%s889 + $0x14] sm:$0xf]
      %v896 = vld [vmem:[%s889 + $0x18] sm:$0xf]
      %v897 = vld [vmem:[%s889 + $0x1c] sm:$0xf]
      %v899 = vunpack.c.l.b16 %v888
      %v900 = vpack.c.b16 %v899, %v799
      %vm901 = vsmask.f32 5376
      %v903 = vshrl.u32 %v801, 16
      %v905 = vrot.slane %v903, 2
      %v906 = vshll.u32 %v801, 16
      %v908 = vrot.slane %v906, 3
      %v909 = vor.u32 %v905, %v908
      %v911 = vshrl.u32 %v900, 16
      %v913 = vrot.slane %v911, 2
      %v914 = vshll.u32 %v900, 16
      %v916 = vrot.slane %v914, 3
      %v917 = vor.u32 %v913, %v916
      %v918 = vsel %vm901, %v909, %v917
      %v927 = vunpack.c.l.b16 %v890
      %v928 = vunpack.c.l.b16 %v891
      %v929 = vunpack.c.l.b16 %v892
      %v930 = vunpack.c.l.b16 %v893
      %v931 = vunpack.c.l.b16 %v894
      %v932 = vunpack.c.l.b16 %v895
      %v933 = vunpack.c.l.b16 %v896
      %v934 = vunpack.c.l.b16 %v897
      %v935 = vpack.c.b16 %v928, %v927
      %v936 = vpack.c.b16 %v930, %v929
      %v937 = vpack.c.b16 %v932, %v931
      %v938 = vpack.c.b16 %v934, %v933
      %v944 = vsel %vm243, %v918, 0
      %v947 = vsel %vm243, %v917, 0
      %949 = vmatprep.subr.bf16.mxu0 0
      %950 = vmatpush1.bf16.msra.mxu0 %v935
      %951 = vmatprep.subr.bf16.mxu0 0
      %952 = vmatpush1.bf16.msra.mxu0 %v936
      %953 = vmatprep.subr.bf16.mxu0 0
      %954 = vmatpush1.bf16.msra.mxu0 %v937
      %955 = vmatprep.subr.bf16.mxu0 0
      %956 = vmatpush1.bf16.msra.mxu0 %v938
      %957 = vmatprep.subr.bf16.mxu0 0
      %958 = vmatpush1.bf16.msra.mxu0 0
      %959 = vmatprep.subr.bf16.mxu0 0
      %960 = vmatpush1.bf16.msra.mxu0 0
      %961 = vmatprep.subr.bf16.mxu0 0
      %962 = vmatpush1.bf16.msra.mxu0 0
      %963 = vmatprep.subr.bf16.mxu0 0
      %964 = vmatpush1.bf16.msra.mxu0 0
      %965 = vmatprep.subr.bf16.mxu0 0
      %966 = vmatpush1.bf16.msra.mxu0 0
      %967 = vmatprep.subr.bf16.mxu0 0
      %968 = vmatpush1.bf16.msra.mxu0 0
      %969 = vmatprep.subr.bf16.mxu0 0
      %970 = vmatpush1.bf16.msra.mxu0 0
      %971 = vmatprep.subr.bf16.mxu0 0
      %972 = vmatpush1.bf16.msra.mxu0 0
      %973 = vmatprep.subr.bf16.mxu0 0
      %974 = vmatpush1.bf16.msra.mxu0 0
      %975 = vmatprep.subr.bf16.mxu0 0
      %976 = vmatpush1.bf16.msra.mxu0 0
      %977 = vmatprep.subr.bf16.mxu0 0
      %978 = vmatpush1.bf16.msra.mxu0 0
      %979 = vmatprep.subr.bf16.mxu0 0
      %980 = vmatpush1.bf16.msra.mxu0 0
      %981 = vmatprep.mubr.bf16.mxu0 0
      %982 = vmatmul.mubr.bf16.gmra.mrb[0].mxu0 %v944
      %v983 = vpop.f32.mrb[0].mxu0
      %v984 = vadd.f32 0.0, %v983
      %v985 = vpop.f32.mrb[0].mxu0
      %v986 = vpop.f32.mrb[0].mxu0
      %v987 = vadd.f32 0.0, %v986
      %v988 = vpop.f32.mrb[0].mxu0
      %989 = vmatprep.mubr.bf16.mxu0 0
      %990 = vmatmul.mubr.bf16.gmra.mrb[0].mxu0 %v947
      %v991 = vpop.f32.mrb[0].mxu0
      %v992 = vadd.f32 0.0, %v991
      %v993 = vpop.f32.mrb[0].mxu0
      %v994 = vpop.f32.mrb[0].mxu0
      %v995 = vpop.f32.mrb[0].mxu0
      %996 = vdwg.mxu0
      %v997 = vadd.f32 %v885, %v984
      %v998 = vadd.f32 %v886, %v987
      %v999 = vadd.f32 %v887, %v992
      %v1000 = vld [vmem:[%s165 + $0x4] sm:$0x8]
      %s1001 = scalar_lea.vmem %s1, 256
      %v1002 = vld [vmem:[%s1001] sm:$0xf]
      %v1003 = vld [vmem:[%s1001 + $0x4] sm:$0xf]
      %v1004 = vld [vmem:[%s1001 + $0x8] sm:$0xf]
      %v1005 = vld [vmem:[%s1001 + $0xc] sm:$0xf]
      %v1006 = vld [vmem:[%s1001 + $0x10] sm:$0xf]
      %v1007 = vld [vmem:[%s1001 + $0x14] sm:$0xf]
      %v1008 = vld [vmem:[%s1001 + $0x18] sm:$0xf]
      %v1009 = vld [vmem:[%s1001 + $0x1c] sm:$0xf]
      %v1011 = vunpack.c.l.b16 %v1000
      %v1012 = vpack.c.b16 %v798, %v1011
      %v1013 = vrot.slane %v1012, 3
      %v1014 = vrot.slane %v900, 3
      %v1015 = vsel %vm491, %v1013, %v1014
      %v1024 = vunpack.c.l.b16 %v1002
      %v1025 = vunpack.c.l.b16 %v1003
      %v1026 = vunpack.c.l.b16 %v1004
      %v1027 = vunpack.c.l.b16 %v1005
      %v1028 = vunpack.c.l.b16 %v1006
      %v1029 = vunpack.c.l.b16 %v1007
      %v1030 = vunpack.c.l.b16 %v1008
      %v1031 = vunpack.c.l.b16 %v1009
      %v1032 = vpack.c.b16 %v1025, %v1024
      %v1033 = vpack.c.b16 %v1027, %v1026
      %v1034 = vpack.c.b16 %v1029, %v1028
      %v1035 = vpack.c.b16 %v1031, %v1030
      %v1041 = vsel %vm243, %v1015, 0
      %v1044 = vsel %vm243, %v1014, 0
      %1046 = vmatprep.subr.bf16.mxu0 0
      %1047 = vmatpush1.bf16.msra.mxu0 %v1032
      %1048 = vmatprep.subr.bf16.mxu0 0
      %1049 = vmatpush1.bf16.msra.mxu0 %v1033
      %1050 = vmatprep.subr.bf16.mxu0 0
      %1051 = vmatpush1.bf16.msra.mxu0 %v1034
      %1052 = vmatprep.subr.bf16.mxu0 0
      %1053 = vmatpush1.bf16.msra.mxu0 %v1035
      %1054 = vmatprep.subr.bf16.mxu0 0
      %1055 = vmatpush1.bf16.msra.mxu0 0
      %1056 = vmatprep.subr.bf16.mxu0 0
      %1057 = vmatpush1.bf16.msra.mxu0 0
      %1058 = vmatprep.subr.bf16.mxu0 0
      %1059 = vmatpush1.bf16.msra.mxu0 0
      %1060 = vmatprep.subr.bf16.mxu0 0
      %1061 = vmatpush1.bf16.msra.mxu0 0
      %1062 = vmatprep.subr.bf16.mxu0 0
      %1063 = vmatpush1.bf16.msra.mxu0 0
      %1064 = vmatprep.subr.bf16.mxu0 0
      %1065 = vmatpush1.bf16.msra.mxu0 0
      %1066 = vmatprep.subr.bf16.mxu0 0
      %1067 = vmatpush1.bf16.msra.mxu0 0
      %1068 = vmatprep.subr.bf16.mxu0 0
      %1069 = vmatpush1.bf16.msra.mxu0 0
      %1070 = vmatprep.subr.bf16.mxu0 0
      %1071 = vmatpush1.bf16.msra.mxu0 0
      %1072 = vmatprep.subr.bf16.mxu0 0
      %1073 = vmatpush1.bf16.msra.mxu0 0
      %1074 = vmatprep.subr.bf16.mxu0 0
      %1075 = vmatpush1.bf16.msra.mxu0 0
      %1076 = vmatprep.subr.bf16.mxu0 0
      %1077 = vmatpush1.bf16.msra.mxu0 0
      %1078 = vmatprep.mubr.bf16.mxu0 0
      %1079 = vmatmul.mubr.bf16.gmra.mrb[0].mxu0 %v1041
      %v1080 = vpop.f32.mrb[0].mxu0
      %v1081 = vadd.f32 0.0, %v1080
      %v1082 = vpop.f32.mrb[0].mxu0
      %v1083 = vpop.f32.mrb[0].mxu0
      %v1084 = vadd.f32 0.0, %v1083
      %v1085 = vpop.f32.mrb[0].mxu0
      %1086 = vmatprep.mubr.bf16.mxu0 0
      %1087 = vmatmul.mubr.bf16.gmra.mrb[0].mxu0 %v1044
      %v1088 = vpop.f32.mrb[0].mxu0
      %v1089 = vadd.f32 0.0, %v1088
      %v1090 = vpop.f32.mrb[0].mxu0
      %v1091 = vpop.f32.mrb[0].mxu0
      %v1092 = vpop.f32.mrb[0].mxu0
      %1093 = vdwg.mxu0
      %v1094 = vadd.f32 %v997, %v1081
      %v1095 = vadd.f32 %v998, %v1084
      %v1096 = vadd.f32 %v999, %v1089
      %v1097 = vld [vmem:[%s2] sm:$0x1]
      %v1099 = vlaneseq
      %v1100 = vshrl.u32 %v1099, 7
      %v1101 = vsub.s32 0, %v1100
      %v1102 = vrot.slane %v1097, %v1101
      %v1104 = vadd.f32 %v1094, %v1102
      %v1105 = vadd.f32 %v1095, %v1102
      %v1106 = vadd.f32 %v1096, %v1102
      %v1107 = vmax.f32 %v1104, 0.0
      %v1108 = vmax.f32 %v1105, 0.0
      %v1109 = vmax.f32 %v1106, 0.0
      %v1110 = vpack.c.bf16 %v1108, %v1107
      %v1111 = vpack.c.bf16 %v1109, %v1109
      %v1114 = vunpack.c.l.b16 %v1110
      %v1115 = vunpack.c.h.b16 %v1110
      %v1116 = vunpack.c.l.b16 %v1111
      %v1117 = vpack.c.b16 %v1114, %v1114
      %v1118 = vpack.c.b16 %v1115, %v1115
      %v1119 = vpack.c.b16 %v1116, %v1116
      %1123 = vst [vmem:[%s170] sm:$0xf] %v1117
      %1124 = vst [vmem:[%s170 + $0x4] sm:$0xf] %v1118
      %1125 = vst [vmem:[%s170 + $0x8] sm:$0xf] %v1119
      %p1126 = scmp.lt.s32.totalorder %s14, 1
      %s1127 = scalar_select %p1126, %s14, 1
      %s1128 = smul.addr %s1127, 3
      %s1129 = smul.addr %s1128, 4
      %s1130 = scalar_lea.vmem %s3, %s1129
      // Predicated region
      $region33: #{vae_forward.11} parent=31 // pred_check
        %p1131 = pneg %p100
      $region34: #{vae_forward.11} parent=31 // pred_check_branch
        %1133 = sbr.rel (%p1131) target = $region36
      $region35: #{vae_forward.11} parent=31 // pred_region
        _
      $region36: #{vae_forward.11} parent=31 // pred_fallthru
        _
    $region32: #{vae_forward.11} parent=5 // pred_fallthru
      _
    %p1134 = scmp.le.s32.totalorder 2, %s9
    // Predicated region
    $region37: #{vae_forward.11} parent=5 // pred_check
      %p1135 = pneg %p1134
    $region38: #{vae_forward.11} parent=5 // pred_check_branch
      %1137 = sbr.rel (%p1135) target = $region40
    $region39: #{vae_forward.11} parent=5 // pred_region
      %s1138 = ssub.s32 %s9, 2
      // Predicated region
      $region41: #{vae_forward.11} parent=39 // pred_check
        %p1139 = pneg %p106
      $region42: #{vae_forward.11} parent=39 // pred_check_branch
        %1141 = sbr.rel (%p1139) target = $region44
      $region43: #{vae_forward.11} parent=39 // pred_region
        %p1142 = scmp.lt.s32.totalorder %s15, 1
        %s1143 = scalar_select %p1142, %s15, 1
        %s1144 = smul.addr %s1143, 3
        %s1145 = smul.addr %s1144, 4
        %s1146 = scalar_lea.vmem %s3, %s1145
      $region44: #{vae_forward.11} parent=39 // pred_fallthru
        _
    $region40: #{vae_forward.11} parent=5 // pred_fallthru
      _
  $region6: #{vae_forward.11} parent=0 // loop_footer
    %s13 = sadd.s32 1, %s9
  $region7: #{vae_forward.11} parent=0 // loop_footer_branch
    %8 = sbr.rel target = $region3
  $region8: #{vae_forward.11} parent=0 // loop_exit
    _

// kernel: vae_forward.12
$region0: #{vae_forward.12}
  #allocation0 [shape = 'u32[]', space=smem, size = 0x4, offset = 0x4, fixed_abs, tag = 'smem constant byte address 0x4 - core index']
  #allocation1 [shape = 'u32[144,128]{1,0:T(1,128)}', space=vmem, size = 0x12000, scoped, tag = 'internal scratch']
  %s0 = inlined_call_operand.vmem [shape: bf16[2,110,32], index: 0, kind: input, shape index: {}]
  %s1 = inlined_call_operand.vmem [shape: bf16[9,32,16], index: 1, kind: input, shape index: {}]
  %s2 = inlined_call_operand.vmem [shape: f32[1,16], index: 2, kind: input, shape index: {}]
  %s3 = inlined_call_operand.vmem [shape: bf16[2,80,16], index: 3, kind: output, shape index: {}]
  %s4 = sld [smem:[#allocation0]]
  $region45: #{vae_forward.12} parent=0
    _
  %s6 = ssub.s32 1, %s4
  %s7 = scalar_select 0, %s6, %s4
  loop: start=0, step=1, limit=4
  $region2: #{vae_forward.12} parent=0 // loop_pre_header
    _
  $region3: #{vae_forward.12} parent=0 // loop_header
    %s9 = sphi 0, %s13
    %p10 = scmp.ge.s32.totalorder %s9, 4
    %s19 = sphi 0, %s21
    %s22 = sphi 0, %s19
    %s23 = sphi 0, %s22
    %s39 = sphi 0, %s23
    %s43 = sphi 0, %s43
    %s45 = sphi 0, %s43
    %s46 = sphi 0, %s45
    %s60 = sphi 0, %s46
    %s64 = sphi 0, %s64
    %s66 = sphi 0, %s64
    %s67 = sphi 0, %s66
    %s81 = sphi 0, %s67
    %s87 = sphi 0, %s89
    %s90 = sphi 0, %s87
    %s91 = sphi 0, %s90
    %s107 = sphi 0, %s91
  $region4: #{vae_forward.12} parent=0 // loop_header_branch
    %12 = sbr.rel (%p10) target = $region8
  $region5: #{vae_forward.12} parent=0 // loop_body
    %s14 = ssub.s32 %s9, 1
    %s15 = ssub.s32 %s9, 2
    %s16 = sadd.s32 %s9, 1
    %s17 = ssub.s32 %s9, %s16
    %p18 = scmp.eq.s32.totalorder %s17, 0
    %s20 = sadd.s32 %s19, 1
    %s21 = scalar_select %p18, %s19, %s20
    %p24 = pneg %p18
    %p25 = scmp.eq.s32.totalorder %s9, 1
    %p26 = por %p24, %p25
    %p27 = scmp.ne.s32.totalorder %s19, %s22
    %p28 = scmp.eq.s32.totalorder %s9, 0
    %p29 = por %p27, %p28
    %p30 = scmp.ne.s32.totalorder %s19, %s22
    %p31 = scmp.eq.s32.totalorder %s14, 1
    %p32 = por %p30, %p31
    %p33 = scmp.ne.s32.totalorder %s22, %s23
    %p34 = scmp.eq.s32.totalorder %s14, 0
    %p35 = por %p33, %p34
    %p36 = scmp.ne.s32.totalorder %s22, %s23
    %p37 = scmp.eq.s32.totalorder %s15, 1
    %p38 = por %p36, %p37
    %p40 = scmp.ne.s32.totalorder %s23, %s39
    %p41 = scmp.eq.s32.totalorder %s15, 0
    %p42 = por %p40, %p41
    %s44 = sadd.s32 %s43, 1
    %p47 = scmp.eq.s32.totalorder %s9, 1
    %p48 = scmp.ne.s32.totalorder %s43, %s45
    %p49 = scmp.eq.s32.totalorder %s9, 0
    %p50 = por %p48, %p49
    %p51 = scmp.ne.s32.totalorder %s43, %s45
    %p52 = scmp.eq.s32.totalorder %s14, 1
    %p53 = por %p51, %p52
    %p54 = scmp.ne.s32.totalorder %s45, %s46
    %p55 = scmp.eq.s32.totalorder %s14, 0
    %p56 = por %p54, %p55
    %p57 = scmp.ne.s32.totalorder %s45, %s46
    %p58 = scmp.eq.s32.totalorder %s15, 1
    %p59 = por %p57, %p58
    %p61 = scmp.ne.s32.totalorder %s46, %s60
    %p62 = scmp.eq.s32.totalorder %s15, 0
    %p63 = por %p61, %p62
    %s65 = sadd.s32 %s64, 1
    %p68 = scmp.eq.s32.totalorder %s9, 1
    %p69 = scmp.ne.s32.totalorder %s64, %s66
    %p70 = scmp.eq.s32.totalorder %s9, 0
    %p71 = por %p69, %p70
    %p72 = scmp.ne.s32.totalorder %s64, %s66
    %p73 = scmp.eq.s32.totalorder %s14, 1
    %p74 = por %p72, %p73
    %p75 = scmp.ne.s32.totalorder %s66, %s67
    %p76 = scmp.eq.s32.totalorder %s14, 0
    %p77 = por %p75, %p76
    %p78 = scmp.ne.s32.totalorder %s66, %s67
    %p79 = scmp.eq.s32.totalorder %s15, 1
    %p80 = por %p78, %p79
    %p82 = scmp.ne.s32.totalorder %s67, %s81
    %p83 = scmp.eq.s32.totalorder %s15, 0
    %p84 = por %p82, %p83
    %s85 = ssub.s32 %s9, %s16
    %p86 = scmp.eq.s32.totalorder %s85, 0
    %s88 = sadd.s32 %s87, 1
    %s89 = scalar_select %p86, %s87, %s88
    %p92 = pneg %p86
    %p93 = scmp.eq.s32.totalorder %s9, 1
    %p94 = por %p92, %p93
    %p95 = scmp.ne.s32.totalorder %s87, %s90
    %p96 = scmp.eq.s32.totalorder %s9, 0
    %p97 = por %p95, %p96
    %p98 = scmp.ne.s32.totalorder %s87, %s90
    %p99 = scmp.eq.s32.totalorder %s14, 1
    %p100 = por %p98, %p99
    %p101 = scmp.ne.s32.totalorder %s90, %s91
    %p102 = scmp.eq.s32.totalorder %s14, 0
    %p103 = por %p101, %p102
    %p104 = scmp.ne.s32.totalorder %s90, %s91
    %p105 = scmp.eq.s32.totalorder %s15, 1
    %p106 = por %p104, %p105
    %p108 = scmp.ne.s32.totalorder %s91, %s107
    %p109 = scmp.eq.s32.totalorder %s15, 0
    %p110 = por %p108, %p109
    %p111 = scmp.le.s32.totalorder 1, %s9
    %p112 = scmp.lt.s32.totalorder %s9, 3
    %p113 = pnand %p111, %p112
    %p114 = pneg %p113
    // Predicated region
    $region9: #{vae_forward.12} parent=5 // pred_check
      _
    $region10: #{vae_forward.12} parent=5 // pred_check_branch
      %116 = sbr.rel (%p113) target = $region12
    $region11: #{vae_forward.12} parent=5 // pred_region
      %s117 = ssub.s32 %s9, 1
      // Predicated region
      $region13: #{vae_forward.12} parent=11 // pred_check
        %p118 = pneg %p56
      $region14: #{vae_forward.12} parent=11 // pred_check_branch
        %120 = sbr.rel (%p118) target = $region16
      $region15: #{vae_forward.12} parent=11 // pred_region
        _
      $region16: #{vae_forward.12} parent=11 // pred_fallthru
        _
      // Predicated region
      $region17: #{vae_forward.12} parent=11 // pred_check
        %p121 = pneg %p77
      $region18: #{vae_forward.12} parent=11 // pred_check_branch
        %123 = sbr.rel (%p121) target = $region20
      $region19: #{vae_forward.12} parent=11 // pred_region
        _
      $region20: #{vae_forward.12} parent=11 // pred_fallthru
        _
    $region12: #{vae_forward.12} parent=5 // pred_fallthru
      _
    %p124 = scmp.lt.s32.totalorder %s9, 2
    // Predicated region
    $region21: #{vae_forward.12} parent=5 // pred_check
      %p125 = pneg %p124
    $region22: #{vae_forward.12} parent=5 // pred_check_branch
      %127 = sbr.rel (%p125) target = $region24
    $region23: #{vae_forward.12} parent=5 // pred_region
      // Predicated region
      $region25: #{vae_forward.12} parent=23 // pred_check
        %p128 = pneg %p29
      $region26: #{vae_forward.12} parent=23 // pred_check_branch
        %130 = sbr.rel (%p128) target = $region28
      $region27: #{vae_forward.12} parent=23 // pred_region
        %p131 = scmp.lt.s32.totalorder %s9, 1
        %s132 = scalar_select %p131, %s9, 1
        %s133 = smul.addr %s132, 14
        %s134 = smul.addr %s133, 4
        %s135 = scalar_lea.vmem %s0, %s134
      $region28: #{vae_forward.12} parent=23 // pred_fallthru
        _
    $region24: #{vae_forward.12} parent=5 // pred_fallthru
      _
    %p136 = scmp.le.s32.totalorder 1, %s9
    %p137 = scmp.lt.s32.totalorder %s9, 3
    %p138 = pnand %p136, %p137
    %p139 = pneg %p138
    // Predicated region
    $region29: #{vae_forward.12} parent=5 // pred_check
      _
    $region30: #{vae_forward.12} parent=5 // pred_check_branch
      %141 = sbr.rel (%p138) target = $region32
    $region31: #{vae_forward.12} parent=5 // pred_region
      %s142 = ssub.s32 %s9, 1
      %p143 = scmp.lt.s32.totalorder %s14, 1
      %s144 = scalar_select %p143, %s14, 1
      %s145 = smul.addr %s144, 14
      %s146 = smul.addr %s145, 4
      %s147 = scalar_lea.vmem %s0, %s146
      %p148 = pneg %p35
      %p149 = pneg %p32
      %p150 = pneg %p56
      %p151 = pneg %p53
      %p152 = pneg %p77
      %p153 = pneg %p74
      %p154 = pneg %p103
      %p155 = pneg %p100
      %p156 = scmp.lt.s32.totalorder %s14, 1
      %s157 = scalar_select %p156, %s14, 1
      %s158 = smul.addr %s157, 10
      %s159 = smul.addr %s158, 4
      %s160 = scalar_lea.vmem %s3, %s159
      %p161 = scmp.lt.s32.totalorder %s14, 1
      %s162 = scalar_select %p161, %s14, 1
      %s163 = smul.addr %s162, 14
      %s164 = smul.addr %s163, 4
      %s165 = scalar_lea.vmem %s0, %s164
      %p166 = scmp.lt.s32.totalorder %s14, 1
      %s167 = scalar_select %p166, %s14, 1
      %s168 = smul.addr %s167, 10
      %s169 = smul.addr %s168, 4
      %s170 = scalar_lea.vmem %s3, %s169
      %v172 = vld [vmem:[%s165] sm:$0xf]
      %v173 = vld [vmem:[%s165 + $0x4] sm:$0xf]
      %v174 = vld [vmem:[%s165 + $0x8] sm:$0xf]
      %v175 = vld [vmem:[%s165 + $0xc] sm:$0xf]
      %v176 = vld [vmem:[%s165 + $0x10] sm:$0xf]
      %v177 = vld [vmem:[%s165 + $0x14] sm:$0xf]
      %v178 = vld [vmem:[%s165 + $0x18] sm:$0xf]
      %v179 = vld [vmem:[%s165 + $0x1c] sm:$0xf]
      %v180 = vld [vmem:[%s165 + $0x20] sm:$0xf]
      %v181 = vld [vmem:[%s165 + $0x24] sm:$0xf]
      %v182 = vld [vmem:[%s1] sm:$0xf]
      %v183 = vld [vmem:[%s1 + $0x4] sm:$0xf]
      %v184 = vld [vmem:[%s1 + $0x8] sm:$0xf]
      %v185 = vld [vmem:[%s1 + $0xc] sm:$0xf]
      %v186 = vld [vmem:[%s165 + $0x28] sm:$0x1]
      %s187 = scalar_lea.vmem %s1, 16
      %v188 = vld [vmem:[%s187] sm:$0xf]
      %v189 = vld [vmem:[%s187 + $0x4] sm:$0xf]
      %v190 = vld [vmem:[%s187 + $0x8] sm:$0xf]
      %v191 = vld [vmem:[%s187 + $0xc] sm:$0xf]
      %v203 = vunpack.c.l.b16 %v172
      %v204 = vunpack.c.l.b16 %v173
      %v205 = vunpack.c.l.b16 %v174
      %v206 = vunpack.c.l.b16 %v175
      %v207 = vunpack.c.l.b16 %v176
      %v208 = vunpack.c.l.b16 %v177
      %v209 = vunpack.c.l.b16 %v178
      %v210 = vunpack.c.l.b16 %v179
      %v211 = vunpack.c.l.b16 %v180
      %v212 = vunpack.c.l.b16 %v181
      %v213 = vunpack.c.l.b16 %v186
      %v214 = vpack.c.b16 %v204, %v203
      %v215 = vpack.c.b16 %v206, %v205
      %v216 = vpack.c.b16 %v208, %v207
      %v217 = vpack.c.b16 %v210, %v209
      %v218 = vpack.c.b16 %v212, %v211
      %v219 = vpack.c.b16 %v213, %v213
      %vm220 = vsmask.f32 7424
      %v222 = vshrl.u32 %v214, 16
      %v224 = vshll.u32 %v214, 16
      %v226 = vrot.slane %v224, 1
      %v227 = vor.u32 %v222, %v226
      %v229 = vshll.u32 %v215, 16
      %v231 = vrot.slane %v229, 1
      %v232 = vsel %vm220, %v227, %v231
      %v233 = vshrl.u32 %v215, 16
      %v235 = vor.u32 %v233, %v231
      %v237 = vshll.u32 %v216, 16
      %v239 = vrot.slane %v237, 1
      %v240 = vsel %vm220, %v235, %v239
      %v241 = vshrl.u32 %v216, 16
      %v243 = vor.u32 %v241, %v239
      %v245 = vshll.u32 %v217, 16
      %v247 = vrot.slane %v245, 1
      %v248 = vsel %vm220, %v243, %v247
      %v249 = vshrl.u32 %v217, 16
      %v251 = vor.u32 %v249, %v247
      %v253 = vshll.u32 %v218, 16
      %v255 = vrot.slane %v253, 1
      %v256 = vsel %vm220, %v251, %v255
      %v257 = vshrl.u32 %v218, 16
      %v259 = vor.u32 %v257, %v255
      %v261 = vshll.u32 %v219, 16
      %v263 = vrot.slane %v261, 1
      %v264 = vsel %vm220, %v259, %v263
      %v269 = vunpack.c.l.b16 %v188
      %v270 = vunpack.c.l.b16 %v189
      %v271 = vunpack.c.l.b16 %v190
      %v272 = vunpack.c.l.b16 %v191
      %v273 = vpack.c.b16 %v270, %v269
      %v274 = vpack.c.b16 %v272, %v271
      %vm277 = vcmask 261120
      %v279 = vsel %vm277, %v232, 0
      %v282 = vsel %vm277, %v240, 0
      %v285 = vsel %vm277, %v248, 0
      %v288 = vsel %vm277, %v256, 0
      %v291 = vsel %vm277, %v264, 0
      %293 = vmatprep.subr.bf16.mxu0 0
      %294 = vmatpush1.bf16.msra.mxu0 %v273
      %295 = vmatprep.subr.bf16.mxu0 0
      %296 = vmatpush1.bf16.msra.mxu0 %v274
      %297 = vmatprep.subr.bf16.mxu0 0
      %298 = vmatpush1.bf16.msra.mxu0 0
      %299 = vmatprep.subr.bf16.mxu0 0
      %300 = vmatpush1.bf16.msra.mxu0 0
      %301 = vmatprep.subr.bf16.mxu0 0
      %302 = vmatpush1.bf16.msra.mxu0 0
      %303 = vmatprep.subr.bf16.mxu0 0
      %304 = vmatpush1.bf16.msra.mxu0 0
      %305 = vmatprep.subr.bf16.mxu0 0
      %306 = vmatpush1.bf16.msra.mxu0 0
      %307 = vmatprep.subr.bf16.mxu0 0
      %308 = vmatpush1.bf16.msra.mxu0 0
      %309 = vmatprep.subr.bf16.mxu0 0
      %310 = vmatpush1.bf16.msra.mxu0 0
      %311 = vmatprep.subr.bf16.mxu0 0
      %312 = vmatpush1.bf16.msra.mxu0 0
      %313 = vmatprep.subr.bf16.mxu0 0
      %314 = vmatpush1.bf16.msra.mxu0 0
      %315 = vmatprep.subr.bf16.mxu0 0
      %316 = vmatpush1.bf16.msra.mxu0 0
      %317 = vmatprep.subr.bf16.mxu0 0
      %318 = vmatpush1.bf16.msra.mxu0 0
      %319 = vmatprep.subr.bf16.mxu0 0
      %320 = vmatpush1.bf16.msra.mxu0 0
      %321 = vmatprep.subr.bf16.mxu0 0
      %322 = vmatpush1.bf16.msra.mxu0 0
      %323 = vmatprep.subr.bf16.mxu0 0
      %324 = vmatpush1.bf16.msra.mxu0 0
      %325 = vmatprep.mubr.bf16.mxu0 0
      %326 = vmatmul.mubr.bf16.gmra.mrb[0].mxu0 %v279
      %v327 = vpop.f32.mrb[0].mxu0
      %v328 = vadd.f32 0.0, %v327
      %v329 = vpop.f32.mrb[0].mxu0
      %v330 = vpop.f32.mrb[0].mxu0
      %v331 = vadd.f32 0.0, %v330
      %v332 = vpop.f32.mrb[0].mxu0
      %333 = vmatprep.mubr.bf16.mxu0 0
      %334 = vmatmul.mubr.bf16.gmra.mrb[0].mxu0 %v282
      %v335 = vpop.f32.mrb[0].mxu0
      %v336 = vadd.f32 0.0, %v335
      %v337 = vpop.f32.mrb[0].mxu0
      %v338 = vpop.f32.mrb[0].mxu0
      %v339 = vadd.f32 0.0, %v338
      %v340 = vpop.f32.mrb[0].mxu0
      %341 = vmatprep.mubr.bf16.mxu0 0
      %342 = vmatmul.mubr.bf16.gmra.mrb[0].mxu0 %v285
      %v343 = vpop.f32.mrb[0].mxu0
      %v344 = vadd.f32 0.0, %v343
      %v345 = vpop.f32.mrb[0].mxu0
      %v346 = vpop.f32.mrb[0].mxu0
      %v347 = vadd.f32 0.0, %v346
      %v348 = vpop.f32.mrb[0].mxu0
      %349 = vmatprep.mubr.bf16.mxu0 0
      %350 = vmatmul.mubr.bf16.gmra.mrb[0].mxu0 %v288
      %v351 = vpop.f32.mrb[0].mxu0
      %v352 = vadd.f32 0.0, %v351
      %v353 = vpop.f32.mrb[0].mxu0
      %v354 = vpop.f32.mrb[0].mxu0
      %v355 = vadd.f32 0.0, %v354
      %v356 = vpop.f32.mrb[0].mxu0
      %357 = vmatprep.mubr.bf16.mxu0 0
      %358 = vmatmul.mubr.bf16.gmra.mrb[0].mxu0 %v291
      %v359 = vpop.f32.mrb[0].mxu0
      %v360 = vadd.f32 0.0, %v359
      %v361 = vpop.f32.mrb[0].mxu0
      %v362 = vpop.f32.mrb[0].mxu0
      %v363 = vadd.f32 0.0, %v362
      %v364 = vpop.f32.mrb[0].mxu0
      %365 = vdwg.mxu0
      %v370 = vunpack.c.l.b16 %v182
      %v371 = vunpack.c.l.b16 %v183
      %v372 = vunpack.c.l.b16 %v184
      %v373 = vunpack.c.l.b16 %v185
      %v374 = vpack.c.b16 %v371, %v370
      %v375 = vpack.c.b16 %v373, %v372
      %v378 = vsel %vm277, %v214, 0
      %v380 = vsel %vm277, %v215, 0
      %v382 = vsel %vm277, %v216, 0
      %v384 = vsel %vm277, %v217, 0
      %v386 = vsel %vm277, %v218, 0
      %388 = vmatprep.subr.bf16.mxu0 0
      %389 = vmatpush1.bf16.msra.mxu0 %v374
      %390 = vmatprep.subr.bf16.mxu0 0
      %391 = vmatpush1.bf16.msra.mxu0 %v375
      %392 = vmatprep.subr.bf16.mxu0 0
      %393 = vmatpush1.bf16.msra.mxu0 0
      %394 = vmatprep.subr.bf16.mxu0 0
      %395 = vmatpush1.bf16.msra.mxu0 0
      %396 = vmatprep.subr.bf16.mxu0 0
      %397 = vmatpush1.bf16.msra.mxu0 0
      %398 = vmatprep.subr.bf16.mxu0 0
      %399 = vmatpush1.bf16.msra.mxu0 0
      %400 = vmatprep.subr.bf16.mxu0 0
      %401 = vmatpush1.bf16.msra.mxu0 0
      %402 = vmatprep.subr.bf16.mxu0 0
      %403 = vmatpush1.bf16.msra.mxu0 0
      %404 = vmatprep.subr.bf16.mxu0 0
      %405 = vmatpush1.bf16.msra.mxu0 0
      %406 = vmatprep.subr.bf16.mxu0 0
      %407 = vmatpush1.bf16.msra.mxu0 0
      %408 = vmatprep.subr.bf16.mxu0 0
      %409 = vmatpush1.bf16.msra.mxu0 0
      %410 = vmatprep.subr.bf16.mxu0 0
      %411 = vmatpush1.bf16.msra.mxu0 0
      %412 = vmatprep.subr.bf16.mxu0 0
      %413 = vmatpush1.bf16.msra.mxu0 0
      %414 = vmatprep.subr.bf16.mxu0 0
      %415 = vmatpush1.bf16.msra.mxu0 0
      %416 = vmatprep.subr.bf16.mxu0 0
      %417 = vmatpush1.bf16.msra.mxu0 0
      %418 = vmatprep.subr.bf16.mxu0 0
      %419 = vmatpush1.bf16.msra.mxu0 0
      %420 = vmatprep.mubr.bf16.mxu0 0
      %421 = vmatmul.mubr.bf16.gmra.mrb[0].mxu0 %v378
      %v422 = vpop.f32.mrb[0].mxu0
      %v423 = vadd.f32 %v328, %v422
      %v424 = vpop.f32.mrb[0].mxu0
      %v425 = vpop.f32.mrb[0].mxu0
      %v426 = vadd.f32 %v331, %v425
      %v427 = vpop.f32.mrb[0].mxu0
      %428 = vmatprep.mubr.bf16.mxu0 0
      %429 = vmatmul.mubr.bf16.gmra.mrb[0].mxu0 %v380
      %v430 = vpop.f32.mrb[0].mxu0
      %v431 = vadd.f32 %v336, %v430
      %v432 = vpop.f32.mrb[0].mxu0
      %v433 = vpop.f32.mrb[0].mxu0
      %v434 = vadd.f32 %v339, %v433
      %v435 = vpop.f32.mrb[0].mxu0
      %436 = vmatprep.mubr.bf16.mxu0 0
      %437 = vmatmul.mubr.bf16.gmra.mrb[0].mxu0 %v382
      %v438 = vpop.f32.mrb[0].mxu0
      %v439 = vadd.f32 %v344, %v438
      %v440 = vpop.f32.mrb[0].mxu0
      %v441 = vpop.f32.mrb[0].mxu0
      %v442 = vadd.f32 %v347, %v441
      %v443 = vpop.f32.mrb[0].mxu0
      %444 = vmatprep.mubr.bf16.mxu0 0
      %445 = vmatmul.mubr.bf16.gmra.mrb[0].mxu0 %v384
      %v446 = vpop.f32.mrb[0].mxu0
      %v447 = vadd.f32 %v352, %v446
      %v448 = vpop.f32.mrb[0].mxu0
      %v449 = vpop.f32.mrb[0].mxu0
      %v450 = vadd.f32 %v355, %v449
      %v451 = vpop.f32.mrb[0].mxu0
      %452 = vmatprep.mubr.bf16.mxu0 0
      %453 = vmatmul.mubr.bf16.gmra.mrb[0].mxu0 %v386
      %v454 = vpop.f32.mrb[0].mxu0
      %v455 = vadd.f32 %v360, %v454
      %v456 = vpop.f32.mrb[0].mxu0
      %v457 = vpop.f32.mrb[0].mxu0
      %v458 = vadd.f32 %v363, %v457
      %v459 = vpop.f32.mrb[0].mxu0
      %460 = vdwg.mxu0
      %v461 = vld [vmem:[%s165] sm:$0xe]
      %s462 = scalar_lea.vmem %s1, 32
      %v463 = vld [vmem:[%s462] sm:$0xf]
      %v464 = vld [vmem:[%s462 + $0x4] sm:$0xf]
      %v465 = vld [vmem:[%s462 + $0x8] sm:$0xf]
      %v466 = vld [vmem:[%s462 + $0xc] sm:$0xf]
      %v468 = vunpack.c.l.b16 %v461
      %v469 = vpack.c.b16 %v204, %v468
      %vm470 = vcmask 1046528
      %v471 = vrot.slane %v469, 1
      %v472 = vrot.slane %v215, 1
      %v473 = vsel %vm470, %v471, %v472
      %v474 = vrot.slane %v216, 1
      %v475 = vsel %vm470, %v472, %v474
      %v476 = vrot.slane %v217, 1
      %v477 = vsel %vm470, %v474, %v476
      %v478 = vrot.slane %v218, 1
      %v479 = vsel %vm470, %v476, %v478
      %v480 = vrot.slane %v219, 1
      %v481 = vsel %vm470, %v478, %v480
      %v486 = vunpack.c.l.b16 %v463
      %v487 = vunpack.c.l.b16 %v464
      %v488 = vunpack.c.l.b16 %v465
      %v489 = vunpack.c.l.b16 %v466
      %v490 = vpack.c.b16 %v487, %v486
      %v491 = vpack.c.b16 %v489, %v488
      %v495 = vsel %vm277, %v473, 0
      %v498 = vsel %vm277, %v475, 0
      %v501 = vsel %vm277, %v477, 0
      %v504 = vsel %vm277, %v479, 0
      %v507 = vsel %vm277, %v481, 0
      %509 = vmatprep.subr.bf16.mxu0 0
      %510 = vmatpush1.bf16.msra.mxu0 %v490
      %511 = vmatprep.subr.bf16.mxu0 0
      %512 = vmatpush1.bf16.msra.mxu0 %v491
      %513 = vmatprep.subr.bf16.mxu0 0
      %514 = vmatpush1.bf16.msra.mxu0 0
      %515 = vmatprep.subr.bf16.mxu0 0
      %516 = vmatpush1.bf16.msra.mxu0 0
      %517 = vmatprep.subr.bf16.mxu0 0
      %518 = vmatpush1.bf16.msra.mxu0 0
      %519 = vmatprep.subr.bf16.mxu0 0
      %520 = vmatpush1.bf16.msra.mxu0 0
      %521 = vmatprep.subr.bf16.mxu0 0
      %522 = vmatpush1.bf16.msra.mxu0 0
      %523 = vmatprep.subr.bf16.mxu0 0
      %524 = vmatpush1.bf16.msra.mxu0 0
      %525 = vmatprep.subr.bf16.mxu0 0
      %526 = vmatpush1.bf16.msra.mxu0 0
      %527 = vmatprep.subr.bf16.mxu0 0
      %528 = vmatpush1.bf16.msra.mxu0 0
      %529 = vmatprep.subr.bf16.mxu0 0
      %530 = vmatpush1.bf16.msra.mxu0 0
      %531 = vmatprep.subr.bf16.mxu0 0
      %532 = vmatpush1.bf16.msra.mxu0 0
      %533 = vmatprep.subr.bf16.mxu0 0
      %534 = vmatpush1.bf16.msra.mxu0 0
      %535 = vmatprep.subr.bf16.mxu0 0
      %536 = vmatpush1.bf16.msra.mxu0 0
      %537 = vmatprep.subr.bf16.mxu0 0
      %538 = vmatpush1.bf16.msra.mxu0 0
      %539 = vmatprep.subr.bf16.mxu0 0
      %540 = vmatpush1.bf16.msra.mxu0 0
      %541 = vmatprep.mubr.bf16.mxu0 0
      %542 = vmatmul.mubr.bf16.gmra.mrb[0].mxu0 %v495
      %v543 = vpop.f32.mrb[0].mxu0
      %v544 = vadd.f32 0.0, %v543
      %v545 = vpop.f32.mrb[0].mxu0
      %v546 = vpop.f32.mrb[0].mxu0
      %v547 = vadd.f32 0.0, %v546
      %v548 = vpop.f32.mrb[0].mxu0
      %549 = vmatprep.mubr.bf16.mxu0 0
      %550 = vmatmul.mubr.bf16.gmra.mrb[0].mxu0 %v498
      %v551 = vpop.f32.mrb[0].mxu0
      %v552 = vadd.f32 0.0, %v551
      %v553 = vpop.f32.mrb[0].mxu0
      %v554 = vpop.f32.mrb[0].mxu0
      %v555 = vadd.f32 0.0, %v554
      %v556 = vpop.f32.mrb[0].mxu0
      %557 = vmatprep.mubr.bf16.mxu0 0
      %558 = vmatmul.mubr.bf16.gmra.mrb[0].mxu0 %v501
      %v559 = vpop.f32.mrb[0].mxu0
      %v560 = vadd.f32 0.0, %v559
      %v561 = vpop.f32.mrb[0].mxu0
      %v562 = vpop.f32.mrb[0].mxu0
      %v563 = vadd.f32 0.0, %v562
      %v564 = vpop.f32.mrb[0].mxu0
      %565 = vmatprep.mubr.bf16.mxu0 0
      %566 = vmatmul.mubr.bf16.gmra.mrb[0].mxu0 %v504
      %v567 = vpop.f32.mrb[0].mxu0
      %v568 = vadd.f32 0.0, %v567
      %v569 = vpop.f32.mrb[0].mxu0
      %v570 = vpop.f32.mrb[0].mxu0
      %v571 = vadd.f32 0.0, %v570
      %v572 = vpop.f32.mrb[0].mxu0
      %573 = vmatprep.mubr.bf16.mxu0 0
      %574 = vmatmul.mubr.bf16.gmra.mrb[0].mxu0 %v507
      %v575 = vpop.f32.mrb[0].mxu0
      %v576 = vadd.f32 0.0, %v575
      %v577 = vpop.f32.mrb[0].mxu0
      %v578 = vpop.f32.mrb[0].mxu0
      %v579 = vadd.f32 0.0, %v578
      %v580 = vpop.f32.mrb[0].mxu0
      %581 = vdwg.mxu0
      %v582 = vadd.f32 %v423, %v544
      %v583 = vadd.f32 %v426, %v547
      %v584 = vadd.f32 %v431, %v552
      %v585 = vadd.f32 %v434, %v555
      %v586 = vadd.f32 %v439, %v560
      %v587 = vadd.f32 %v442, %v563
      %v588 = vadd.f32 %v447, %v568
      %v589 = vadd.f32 %v450, %v571
      %v590 = vadd.f32 %v455, %v576
      %v591 = vadd.f32 %v458, %v579
      %v592 = vld [vmem:[%s165 + $0x4] sm:$0xe]
      %v593 = vld [vmem:[%s165 + $0x8] sm:$0xf]
      %v594 = vld [vmem:[%s165 + $0xc] sm:$0xf]
      %v595 = vld [vmem:[%s165 + $0x10] sm:$0xf]
      %v596 = vld [vmem:[%s165 + $0x14] sm:$0xf]
      %v597 = vld [vmem:[%s165 + $0x18] sm:$0xf]
      %v598 = vld [vmem:[%s165 + $0x1c] sm:$0xf]
      %v599 = vld [vmem:[%s165 + $0x20] sm:$0xf]
      %v600 = vld [vmem:[%s165 + $0x24] sm:$0xf]
      %v601 = vld [vmem:[%s165 + $0x28] sm:$0xf]
      %v602 = vld [vmem:[%s165 + $0x2c] sm:$0x1]
      %s603 = scalar_lea.vmem %s1, 48
      %v604 = vld [vmem:[%s603] sm:$0xf]
      %v605 = vld [vmem:[%s603 + $0x4] sm:$0xf]
      %v606 = vld [vmem:[%s603 + $0x8] sm:$0xf]
      %v607 = vld [vmem:[%s603 + $0xc] sm:$0xf]
      %v619 = vunpack.c.l.b16 %v592
      %v620 = vunpack.c.l.b16 %v593
      %v621 = vunpack.c.l.b16 %v594
      %v622 = vunpack.c.l.b16 %v595
      %v623 = vunpack.c.l.b16 %v596
      %v624 = vunpack.c.l.b16 %v597
      %v625 = vunpack.c.l.b16 %v598
      %v626 = vunpack.c.l.b16 %v599
      %v627 = vunpack.c.l.b16 %v600
      %v628 = vunpack.c.l.b16 %v601
      %v629 = vunpack.c.l.b16 %v602
      %v630 = vpack.c.b16 %v620, %v619
      %v631 = vpack.c.b16 %v622, %v621
      %v632 = vpack.c.b16 %v624, %v623
      %v633 = vpack.c.b16 %v626, %v625
      %v634 = vpack.c.b16 %v628, %v627
      %v635 = vpack.c.b16 %v629, %v629
      %v636 = vrot.slane %v630, 1
      %v637 = vrot.slane %v631, 1
      %v638 = vsel %vm470, %v636, %v637
      %v639 = vrot.slane %v632, 1
      %v640 = vsel %vm470, %v637, %v639
      %v641 = vrot.slane %v633, 1
      %v642 = vsel %vm470, %v639, %v641
      %v643 = vrot.slane %v634, 1
      %v644 = vsel %vm470, %v641, %v643
      %v645 = vrot.slane %v635, 1
      %v646 = vsel %vm470, %v643, %v645
      %v651 = vunpack.c.l.b16 %v604
      %v652 = vunpack.c.l.b16 %v605
      %v653 = vunpack.c.l.b16 %v606
      %v654 = vunpack.c.l.b16 %v607
      %v655 = vpack.c.b16 %v652, %v651
      %v656 = vpack.c.b16 %v654, %v653
      %v660 = vsel %vm277, %v638, 0
      %v663 = vsel %vm277, %v640, 0
      %v666 = vsel %vm277, %v642, 0
      %v669 = vsel %vm277, %v644, 0
      %v672 = vsel %vm277, %v646, 0
      %674 = vmatprep.subr.bf16.mxu0 0
      %675 = vmatpush1.bf16.msra.mxu0 %v655
      %676 = vmatprep.subr.bf16.mxu0 0
      %677 = vmatpush1.bf16.msra.mxu0 %v656
      %678 = vmatprep.subr.bf16.mxu0 0
      %679 = vmatpush1.bf16.msra.mxu0 0
      %680 = vmatprep.subr.bf16.mxu0 0
      %681 = vmatpush1.bf16.msra.mxu0 0
      %682 = vmatprep.subr.bf16.mxu0 0
      %683 = vmatpush1.bf16.msra.mxu0 0
      %684 = vmatprep.subr.bf16.mxu0 0
      %685 = vmatpush1.bf16.msra.mxu0 0
      %686 = vmatprep.subr.bf16.mxu0 0
      %687 = vmatpush1.bf16.msra.mxu0 0
      %688 = vmatprep.subr.bf16.mxu0 0
      %689 = vmatpush1.bf16.msra.mxu0 0
      %690 = vmatprep.subr.bf16.mxu0 0
      %691 = vmatpush1.bf16.msra.mxu0 0
      %692 = vmatprep.subr.bf16.mxu0 0
      %693 = vmatpush1.bf16.msra.mxu0 0
      %694 = vmatprep.subr.bf16.mxu0 0
      %695 = vmatpush1.bf16.msra.mxu0 0
      %696 = vmatprep.subr.bf16.mxu0 0
      %697 = vmatpush1.bf16.msra.mxu0 0
      %698 = vmatprep.subr.bf16.mxu0 0
      %699 = vmatpush1.bf16.msra.mxu0 0
      %700 = vmatprep.subr.bf16.mxu0 0
      %701 = vmatpush1.bf16.msra.mxu0 0
      %702 = vmatprep.subr.bf16.mxu0 0
      %703 = vmatpush1.bf16.msra.mxu0 0
      %704 = vmatprep.subr.bf16.mxu0 0
      %705 = vmatpush1.bf16.msra.mxu0 0
      %706 = vmatprep.mubr.bf16.mxu0 0
      %707 = vmatmul.mubr.bf16.gmra.mrb[0].mxu0 %v660
      %v708 = vpop.f32.mrb[0].mxu0
      %v709 = vadd.f32 0.0, %v708
      %v710 = vpop.f32.mrb[0].mxu0
      %v711 = vpop.f32.mrb[0].mxu0
      %v712 = vadd.f32 0.0, %v711
      %v713 = vpop.f32.mrb[0].mxu0
      %714 = vmatprep.mubr.bf16.mxu0 0
      %715 = vmatmul.mubr.bf16.gmra.mrb[0].mxu0 %v663
      %v716 = vpop.f32.mrb[0].mxu0
      %v717 = vadd.f32 0.0, %v716
      %v718 = vpop.f32.mrb[0].mxu0
      %v719 = vpop.f32.mrb[0].mxu0
      %v720 = vadd.f32 0.0, %v719
      %v721 = vpop.f32.mrb[0].mxu0
      %722 = vmatprep.mubr.bf16.mxu0 0
      %723 = vmatmul.mubr.bf16.gmra.mrb[0].mxu0 %v666
      %v724 = vpop.f32.mrb[0].mxu0
      %v725 = vadd.f32 0.0, %v724
      %v726 = vpop.f32.mrb[0].mxu0
      %v727 = vpop.f32.mrb[0].mxu0
      %v728 = vadd.f32 0.0, %v727
      %v729 = vpop.f32.mrb[0].mxu0
      %730 = vmatprep.mubr.bf16.mxu0 0
      %731 = vmatmul.mubr.bf16.gmra.mrb[0].mxu0 %v669
      %v732 = vpop.f32.mrb[0].mxu0
      %v733 = vadd.f32 0.0, %v732
      %v734 = vpop.f32.mrb[0].mxu0
      %v735 = vpop.f32.mrb[0].mxu0
      %v736 = vadd.f32 0.0, %v735
      %v737 = vpop.f32.mrb[0].mxu0
      %738 = vmatprep.mubr.bf16.mxu0 0
      %739 = vmatmul.mubr.bf16.gmra.mrb[0].mxu0 %v672
      %v740 = vpop.f32.mrb[0].mxu0
      %v741 = vadd.f32 0.0, %v740
      %v742 = vpop.f32.mrb[0].mxu0
      %v743 = vpop.f32.mrb[0].mxu0
      %v744 = vadd.f32 0.0, %v743
      %v745 = vpop.f32.mrb[0].mxu0
      %746 = vdwg.mxu0
      %v747 = vadd.f32 %v582, %v709
      %v748 = vadd.f32 %v583, %v712
      %v749 = vadd.f32 %v584, %v717
      %v750 = vadd.f32 %v585, %v720
      %v751 = vadd.f32 %v586, %v725
      %v752 = vadd.f32 %v587, %v728
      %v753 = vadd.f32 %v588, %v733
      %v754 = vadd.f32 %v589, %v736
      %v755 = vadd.f32 %v590, %v741
      %v756 = vadd.f32 %v591, %v744
      %v757 = vld [vmem:[%s165 + $0x2c] sm:$0x3]
      %s758 = scalar_lea.vmem %s1, 64
      %v759 = vld [vmem:[%s758] sm:$0xf]
      %v760 = vld [vmem:[%s758 + $0x4] sm:$0xf]
      %v761 = vld [vmem:[%s758 + $0x8] sm:$0xf]
      %v762 = vld [vmem:[%s758 + $0xc] sm:$0xf]
      %v764 = vunpack.c.l.b16 %v757
      %v765 = vpack.c.b16 %v764, %v764
      %vm766 = vsmask.f32 6400
      %v768 = vshrl.u32 %v630, 16
      %v770 = vrot.slane %v768, 1
      %v771 = vshll.u32 %v630, 16
      %v773 = vrot.slane %v771, 2
      %v774 = vor.u32 %v770, %v773
      %v776 = vshrl.u32 %v631, 16
      %v778 = vrot.slane %v776, 1
      %v779 = vshll.u32 %v631, 16
      %v781 = vrot.slane %v779, 2
      %v782 = vor.u32 %v778, %v781
      %v783 = vsel %vm766, %v774, %v782
      %v785 = vshrl.u32 %v632, 16
      %v787 = vrot.slane %v785, 1
      %v788 = vshll.u32 %v632, 16
      %v790 = vrot.slane %v788, 2
      %v791 = vor.u32 %v787, %v790
      %v792 = vsel %vm766, %v782, %v791
      %v794 = vshrl.u32 %v633, 16
      %v796 = vrot.slane %v794, 1
      %v797 = vshll.u32 %v633, 16
      %v799 = vrot.slane %v797, 2
      %v800 = vor.u32 %v796, %v799
      %v801 = vsel %vm766, %v791, %v800
      %v803 = vshrl.u32 %v634, 16
      %v805 = vrot.slane %v803, 1
      %v806 = vshll.u32 %v634, 16
      %v808 = vrot.slane %v806, 2
      %v809 = vor.u32 %v805, %v808
      %v810 = vsel %vm766, %v800, %v809
      %v812 = vshrl.u32 %v765, 16
      %v814 = vrot.slane %v812, 1
      %v815 = vshll.u32 %v765, 16
      %v817 = vrot.slane %v815, 2
      %v818 = vor.u32 %v814, %v817
      %v819 = vsel %vm766, %v809, %v818
      %v824 = vunpack.c.l.b16 %v759
      %v825 = vunpack.c.l.b16 %v760
      %v826 = vunpack.c.l.b16 %v761
      %v827 = vunpack.c.l.b16 %v762
      %v828 = vpack.c.b16 %v825, %v824
      %v829 = vpack.c.b16 %v827, %v826
      %v833 = vsel %vm277, %v783, 0
      %v836 = vsel %vm277, %v792, 0
      %v839 = vsel %vm277, %v801, 0
      %v842 = vsel %vm277, %v810, 0
      %v845 = vsel %vm277, %v819, 0
      %847 = vmatprep.subr.bf16.mxu0 0
      %848 = vmatpush1.bf16.msra.mxu0 %v828
      %849 = vmatprep.subr.bf16.mxu0 0
      %850 = vmatpush1.bf16.msra.mxu0 %v829
      %851 = vmatprep.subr.bf16.mxu0 0
      %852 = vmatpush1.bf16.msra.mxu0 0
      %853 = vmatprep.subr.bf16.mxu0 0
      %854 = vmatpush1.bf16.msra.mxu0 0
      %855 = vmatprep.subr.bf16.mxu0 0
      %856 = vmatpush1.bf16.msra.mxu0 0
      %857 = vmatprep.subr.bf16.mxu0 0
      %858 = vmatpush1.bf16.msra.mxu0 0
      %859 = vmatprep.subr.bf16.mxu0 0
      %860 = vmatpush1.bf16.msra.mxu0 0
      %861 = vmatprep.subr.bf16.mxu0 0
      %862 = vmatpush1.bf16.msra.mxu0 0
      %863 = vmatprep.subr.bf16.mxu0 0
      %864 = vmatpush1.bf16.msra.mxu0 0
      %865 = vmatprep.subr.bf16.mxu0 0
      %866 = vmatpush1.bf16.msra.mxu0 0
      %867 = vmatprep.subr.bf16.mxu0 0
      %868 = vmatpush1.bf16.msra.mxu0 0
      %869 = vmatprep.subr.bf16.mxu0 0
      %870 = vmatpush1.bf16.msra.mxu0 0
      %871 = vmatprep.subr.bf16.mxu0 0
      %872 = vmatpush1.bf16.msra.mxu0 0
      %873 = vmatprep.subr.bf16.mxu0 0
      %874 = vmatpush1.bf16.msra.mxu0 0
      %875 = vmatprep.subr.bf16.mxu0 0
      %876 = vmatpush1.bf16.msra.mxu0 0
      %877 = vmatprep.subr.bf16.mxu0 0
      %878 = vmatpush1.bf16.msra.mxu0 0
      %879 = vmatprep.mubr.bf16.mxu0 0
      %880 = vmatmul.mubr.bf16.gmra.mrb[0].mxu0 %v833
      %v881 = vpop.f32.mrb[0].mxu0
      %v882 = vadd.f32 0.0, %v881
      %v883 = vpop.f32.mrb[0].mxu0
      %v884 = vpop.f32.mrb[0].mxu0
      %v885 = vadd.f32 0.0, %v884
      %v886 = vpop.f32.mrb[0].mxu0
      %887 = vmatprep.mubr.bf16.mxu0 0
      %888 = vmatmul.mubr.bf16.gmra.mrb[0].mxu0 %v836
      %v889 = vpop.f32.mrb[0].mxu0
      %v890 = vadd.f32 0.0, %v889
      %v891 = vpop.f32.mrb[0].mxu0
      %v892 = vpop.f32.mrb[0].mxu0
      %v893 = vadd.f32 0.0, %v892
      %v894 = vpop.f32.mrb[0].mxu0
      %895 = vmatprep.mubr.bf16.mxu0 0
      %896 = vmatmul.mubr.bf16.gmra.mrb[0].mxu0 %v839
      %v897 = vpop.f32.mrb[0].mxu0
      %v898 = vadd.f32 0.0, %v897
      %v899 = vpop.f32.mrb[0].mxu0
      %v900 = vpop.f32.mrb[0].mxu0
      %v901 = vadd.f32 0.0, %v900
      %v902 = vpop.f32.mrb[0].mxu0
      %903 = vmatprep.mubr.bf16.mxu0 0
      %904 = vmatmul.mubr.bf16.gmra.mrb[0].mxu0 %v842
      %v905 = vpop.f32.mrb[0].mxu0
      %v906 = vadd.f32 0.0, %v905
      %v907 = vpop.f32.mrb[0].mxu0
      %v908 = vpop.f32.mrb[0].mxu0
      %v909 = vadd.f32 0.0, %v908
      %v910 = vpop.f32.mrb[0].mxu0
      %911 = vmatprep.mubr.bf16.mxu0 0
      %912 = vmatmul.mubr.bf16.gmra.mrb[0].mxu0 %v845
      %v913 = vpop.f32.mrb[0].mxu0
      %v914 = vadd.f32 0.0, %v913
      %v915 = vpop.f32.mrb[0].mxu0
      %v916 = vpop.f32.mrb[0].mxu0
      %v917 = vadd.f32 0.0, %v916
      %v918 = vpop.f32.mrb[0].mxu0
      %919 = vdwg.mxu0
      %v920 = vadd.f32 %v747, %v882
      %v921 = vadd.f32 %v748, %v885
      %v922 = vadd.f32 %v749, %v890
      %v923 = vadd.f32 %v750, %v893
      %v924 = vadd.f32 %v751, %v898
      %v925 = vadd.f32 %v752, %v901
      %v926 = vadd.f32 %v753, %v906
      %v927 = vadd.f32 %v754, %v909
      %v928 = vadd.f32 %v755, %v914
      %v929 = vadd.f32 %v756, %v917
      %v930 = vld [vmem:[%s165 + $0x4] sm:$0xc]
      %s931 = scalar_lea.vmem %s1, 80
      %v932 = vld [vmem:[%s931] sm:$0xf]
      %v933 = vld [vmem:[%s931 + $0x4] sm:$0xf]
      %v934 = vld [vmem:[%s931 + $0x8] sm:$0xf]
      %v935 = vld [vmem:[%s931 + $0xc] sm:$0xf]
      %v937 = vunpack.c.l.b16 %v930
      %v938 = vpack.c.b16 %v620, %v937
      %vm939 = vcmask 1045504
      %v940 = vrot.slane %v938, 2
      %v941 = vrot.slane %v631, 2
      %v942 = vsel %vm939, %v940, %v941
      %v943 = vrot.slane %v632, 2
      %v944 = vsel %vm939, %v941, %v943
      %v945 = vrot.slane %v633, 2
      %v946 = vsel %vm939, %v943, %v945
      %v947 = vrot.slane %v634, 2
      %v948 = vsel %vm939, %v945, %v947
      %v949 = vrot.slane %v765, 2
      %v950 = vsel %vm939, %v947, %v949
      %v955 = vunpack.c.l.b16 %v932
      %v956 = vunpack.c.l.b16 %v933
      %v957 = vunpack.c.l.b16 %v934
      %v958 = vunpack.c.l.b16 %v935
      %v959 = vpack.c.b16 %v956, %v955
      %v960 = vpack.c.b16 %v958, %v957
      %v964 = vsel %vm277, %v942, 0
      %v967 = vsel %vm277, %v944, 0
      %v970 = vsel %vm277, %v946, 0
      %v973 = vsel %vm277, %v948, 0
      %v976 = vsel %vm277, %v950, 0
      %978 = vmatprep.subr.bf16.mxu0 0
      %979 = vmatpush1.bf16.msra.mxu0 %v959
      %980 = vmatprep.subr.bf16.mxu0 0
      %981 = vmatpush1.bf16.msra.mxu0 %v960
      %982 = vmatprep.subr.bf16.mxu0 0
      %983 = vmatpush1.bf16.msra.mxu0 0
      %984 = vmatprep.subr.bf16.mxu0 0
      %985 = vmatpush1.bf16.msra.mxu0 0
      %986 = vmatprep.subr.bf16.mxu0 0
      %987 = vmatpush1.bf16.msra.mxu0 0
      %988 = vmatprep.subr.bf16.mxu0 0
      %989 = vmatpush1.bf16.msra.mxu0 0
      %990 = vmatprep.subr.bf16.mxu0 0
      %991 = vmatpush1.bf16.msra.mxu0 0
      %992 = vmatprep.subr.bf16.mxu0 0
      %993 = vmatpush1.bf16.msra.mxu0 0
      %994 = vmatprep.subr.bf16.mxu0 0
      %995 = vmatpush1.bf16.msra.mxu0 0
      %996 = vmatprep.subr.bf16.mxu0 0
      %997 = vmatpush1.bf16.msra.mxu0 0
      %998 = vmatprep.subr.bf16.mxu0 0
      %999 = vmatpush1.bf16.msra.mxu0 0
      %1000 = vmatprep.subr.bf16.mxu0 0
      %1001 = vmatpush1.bf16.msra.mxu0 0
      %1002 = vmatprep.subr.bf16.mxu0 0
      %1003 = vmatpush1.bf16.msra.mxu0 0
      %1004 = vmatprep.subr.bf16.mxu0 0
      %1005 = vmatpush1.bf16.msra.mxu0 0
      %1006 = vmatprep.subr.bf16.mxu0 0
      %1007 = vmatpush1.bf16.msra.mxu0 0
      %1008 = vmatprep.subr.bf16.mxu0 0
      %1009 = vmatpush1.bf16.msra.mxu0 0
      %1010 = vmatprep.mubr.bf16.mxu0 0
      %1011 = vmatmul.mubr.bf16.gmra.mrb[0].mxu0 %v964
      %v1012 = vpop.f32.mrb[0].mxu0
      %v1013 = vadd.f32 0.0, %v1012
      %v1014 = vpop.f32.mrb[0].mxu0
      %v1015 = vpop.f32.mrb[0].mxu0
      %v1016 = vadd.f32 0.0, %v1015
      %v1017 = vpop.f32.mrb[0].mxu0
      %1018 = vmatprep.mubr.bf16.mxu0 0
      %1019 = vmatmul.mubr.bf16.gmra.mrb[0].mxu0 %v967
      %v1020 = vpop.f32.mrb[0].mxu0
      %v1021 = vadd.f32 0.0, %v1020
      %v1022 = vpop.f32.mrb[0].mxu0
      %v1023 = vpop.f32.mrb[0].mxu0
      %v1024 = vadd.f32 0.0, %v1023
      %v1025 = vpop.f32.mrb[0].mxu0
      %1026 = vmatprep.mubr.bf16.mxu0 0
      %1027 = vmatmul.mubr.bf16.gmra.mrb[0].mxu0 %v970
      %v1028 = vpop.f32.mrb[0].mxu0
      %v1029 = vadd.f32 0.0, %v1028
      %v1030 = vpop.f32.mrb[0].mxu0
      %v1031 = vpop.f32.mrb[0].mxu0
      %v1032 = vadd.f32 0.0, %v1031
      %v1033 = vpop.f32.mrb[0].mxu0
      %1034 = vmatprep.mubr.bf16.mxu0 0
      %1035 = vmatmul.mubr.bf16.gmra.mrb[0].mxu0 %v973
      %v1036 = vpop.f32.mrb[0].mxu0
      %v1037 = vadd.f32 0.0, %v1036
      %v1038 = vpop.f32.mrb[0].mxu0
      %v1039 = vpop.f32.mrb[0].mxu0
      %v1040 = vadd.f32 0.0, %v1039
      %v1041 = vpop.f32.mrb[0].mxu0
      %1042 = vmatprep.mubr.bf16.mxu0 0
      %1043 = vmatmul.mubr.bf16.gmra.mrb[0].mxu0 %v976
      %v1044 = vpop.f32.mrb[0].mxu0
      %v1045 = vadd.f32 0.0, %v1044
      %v1046 = vpop.f32.mrb[0].mxu0
      %v1047 = vpop.f32.mrb[0].mxu0
      %v1048 = vadd.f32 0.0, %v1047
      %v1049 = vpop.f32.mrb[0].mxu0
      %1050 = vdwg.mxu0
      %v1051 = vadd.f32 %v920, %v1013
      %v1052 = vadd.f32 %v921, %v1016
      %v1053 = vadd.f32 %v922, %v1021
      %v1054 = vadd.f32 %v923, %v1024
      %v1055 = vadd.f32 %v924, %v1029
      %v1056 = vadd.f32 %v925, %v1032
      %v1057 = vadd.f32 %v926, %v1037
      %v1058 = vadd.f32 %v927, %v1040
      %v1059 = vadd.f32 %v928, %v1045
      %v1060 = vadd.f32 %v929, %v1048
      %v1061 = vld [vmem:[%s165 + $0x8] sm:$0xc]
      %v1062 = vld [vmem:[%s165 + $0xc] sm:$0xf]
      %v1063 = vld [vmem:[%s165 + $0x10] sm:$0xf]
      %v1064 = vld [vmem:[%s165 + $0x14] sm:$0xf]
      %v1065 = vld [vmem:[%s165 + $0x18] sm:$0xf]
      %v1066 = vld [vmem:[%s165 + $0x1c] sm:$0xf]
      %v1067 = vld [vmem:[%s165 + $0x20] sm:$0xf]
      %v1068 = vld [vmem:[%s165 + $0x24] sm:$0xf]
      %v1069 = vld [vmem:[%s165 + $0x28] sm:$0xf]
      %v1070 = vld [vmem:[%s165 + $0x2c] sm:$0xf]
      %v1071 = vld [vmem:[%s165 + $0x30] sm:$0x3]
      %s1072 = scalar_lea.vmem %s1, 96
      %v1073 = vld [vmem:[%s1072] sm:$0xf]
      %v1074 = vld [vmem:[%s1072 + $0x4] sm:$0xf]
      %v1075 = vld [vmem:[%s1072 + $0x8] sm:$0xf]
      %v1076 = vld [vmem:[%s1072 + $0xc] sm:$0xf]
      %v1088 = vunpack.c.l.b16 %v1061
      %v1089 = vunpack.c.l.b16 %v1062
      %v1090 = vunpack.c.l.b16 %v1063
      %v1091 = vunpack.c.l.b16 %v1064
      %v1092 = vunpack.c.l.b16 %v1065
      %v1093 = vunpack.c.l.b16 %v1066
      %v1094 = vunpack.c.l.b16 %v1067
      %v1095 = vunpack.c.l.b16 %v1068
      %v1096 = vunpack.c.l.b16 %v1069
      %v1097 = vunpack.c.l.b16 %v1070
      %v1098 = vunpack.c.l.b16 %v1071
      %v1099 = vpack.c.b16 %v1089, %v1088
      %v1100 = vpack.c.b16 %v1091, %v1090
      %v1101 = vpack.c.b16 %v1093, %v1092
      %v1102 = vpack.c.b16 %v1095, %v1094
      %v1103 = vpack.c.b16 %v1097, %v1096
      %v1104 = vpack.c.b16 %v1098, %v1098
      %v1105 = vrot.slane %v1099, 2
      %v1106 = vrot.slane %v1100, 2
      %v1107 = vsel %vm939, %v1105, %v1106
      %v1108 = vrot.slane %v1101, 2
      %v1109 = vsel %vm939, %v1106, %v1108
      %v1110 = vrot.slane %v1102, 2
      %v1111 = vsel %vm939, %v1108, %v1110
      %v1112 = vrot.slane %v1103, 2
      %v1113 = vsel %vm939, %v1110, %v1112
      %v1114 = vrot.slane %v1104, 2
      %v1115 = vsel %vm939, %v1112, %v1114
      %v1120 = vunpack.c.l.b16 %v1073
      %v1121 = vunpack.c.l.b16 %v1074
      %v1122 = vunpack.c.l.b16 %v1075
      %v1123 = vunpack.c.l.b16 %v1076
      %v1124 = vpack.c.b16 %v1121, %v1120
      %v1125 = vpack.c.b16 %v1123, %v1122
      %v1129 = vsel %vm277, %v1107, 0
      %v1132 = vsel %vm277, %v1109, 0
      %v1135 = vsel %vm277, %v1111, 0
      %v1138 = vsel %vm277, %v1113, 0
      %v1141 = vsel %vm277, %v1115, 0
      %1143 = vmatprep.subr.bf16.mxu0 0
      %1144 = vmatpush1.bf16.msra.mxu0 %v1124
      %1145 = vmatprep.subr.bf16.mxu0 0
      %1146 = vmatpush1.bf16.msra.mxu0 %v1125
      %1147 = vmatprep.subr.bf16.mxu0 0
      %1148 = vmatpush1.bf16.msra.mxu0 0
      %1149 = vmatprep.subr.bf16.mxu0 0
      %1150 = vmatpush1.bf16.msra.mxu0 0
      %1151 = vmatprep.subr.bf16.mxu0 0
      %1152 = vmatpush1.bf16.msra.mxu0 0
      %1153 = vmatprep.subr.bf16.mxu0 0
      %1154 = vmatpush1.bf16.msra.mxu0 0
      %1155 = vmatprep.subr.bf16.mxu0 0
      %1156 = vmatpush1.bf16.msra.mxu0 0
      %1157 = vmatprep.subr.bf16.mxu0 0
      %1158 = vmatpush1.bf16.msra.mxu0 0
      %1159 = vmatprep.subr.bf16.mxu0 0
      %1160 = vmatpush1.bf16.msra.mxu0 0
      %1161 = vmatprep.subr.bf16.mxu0 0
      %1162 = vmatpush1.bf16.msra.mxu0 0
      %1163 = vmatprep.subr.bf16.mxu0 0
      %1164 = vmatpush1.bf16.msra.mxu0 0
      %1165 = vmatprep.subr.bf16.mxu0 0
      %1166 = vmatpush1.bf16.msra.mxu0 0
      %1167 = vmatprep.subr.bf16.mxu0 0
      %1168 = vmatpush1.bf16.msra.mxu0 0
      %1169 = vmatprep.subr.bf16.mxu0 0
      %1170 = vmatpush1.bf16.msra.mxu0 0
      %1171 = vmatprep.subr.bf16.mxu0 0
      %1172 = vmatpush1.bf16.msra.mxu0 0
      %1173 = vmatprep.subr.bf16.mxu0 0
      %1174 = vmatpush1.bf16.msra.mxu0 0
      %1175 = vmatprep.mubr.bf16.mxu0 0
      %1176 = vmatmul.mubr.bf16.gmra.mrb[0].mxu0 %v1129
      %v1177 = vpop.f32.mrb[0].mxu0
      %v1178 = vadd.f32 0.0, %v1177
      %v1179 = vpop.f32.mrb[0].mxu0
      %v1180 = vpop.f32.mrb[0].mxu0
      %v1181 = vadd.f32 0.0, %v1180
      %v1182 = vpop.f32.mrb[0].mxu0
      %1183 = vmatprep.mubr.bf16.mxu0 0
      %1184 = vmatmul.mubr.bf16.gmra.mrb[0].mxu0 %v1132
      %v1185 = vpop.f32.mrb[0].mxu0
      %v1186 = vadd.f32 0.0, %v1185
      %v1187 = vpop.f32.mrb[0].mxu0
      %v1188 = vpop.f32.mrb[0].mxu0
      %v1189 = vadd.f32 0.0, %v1188
      %v1190 = vpop.f32.mrb[0].mxu0
      %1191 = vmatprep.mubr.bf16.mxu0 0
      %1192 = vmatmul.mubr.bf16.gmra.mrb[0].mxu0 %v1135
      %v1193 = vpop.f32.mrb[0].mxu0
      %v1194 = vadd.f32 0.0, %v1193
      %v1195 = vpop.f32.mrb[0].mxu0
      %v1196 = vpop.f32.mrb[0].mxu0
      %v1197 = vadd.f32 0.0, %v1196
      %v1198 = vpop.f32.mrb[0].mxu0
      %1199 = vmatprep.mubr.bf16.mxu0 0
      %1200 = vmatmul.mubr.bf16.gmra.mrb[0].mxu0 %v1138
      %v1201 = vpop.f32.mrb[0].mxu0
      %v1202 = vadd.f32 0.0, %v1201
      %v1203 = vpop.f32.mrb[0].mxu0
      %v1204 = vpop.f32.mrb[0].mxu0
      %v1205 = vadd.f32 0.0, %v1204
      %v1206 = vpop.f32.mrb[0].mxu0
      %1207 = vmatprep.mubr.bf16.mxu0 0
      %1208 = vmatmul.mubr.bf16.gmra.mrb[0].mxu0 %v1141
      %v1209 = vpop.f32.mrb[0].mxu0
      %v1210 = vadd.f32 0.0, %v1209
      %v1211 = vpop.f32.mrb[0].mxu0
      %v1212 = vpop.f32.mrb[0].mxu0
      %v1213 = vadd.f32 0.0, %v1212
      %v1214 = vpop.f32.mrb[0].mxu0
      %1215 = vdwg.mxu0
      %v1216 = vadd.f32 %v1051, %v1178
      %v1217 = vadd.f32 %v1052, %v1181
      %v1218 = vadd.f32 %v1053, %v1186
      %v1219 = vadd.f32 %v1054, %v1189
      %v1220 = vadd.f32 %v1055, %v1194
      %v1221 = vadd.f32 %v1056, %v1197
      %v1222 = vadd.f32 %v1057, %v1202
      %v1223 = vadd.f32 %v1058, %v1205
      %v1224 = vadd.f32 %v1059, %v1210
      %v1225 = vadd.f32 %v1060, %v1213
      %v1226 = vld [vmem:[%s165 + $0x30] sm:$0x7]
      %s1227 = scalar_lea.vmem %s1, 112
      %v1228 = vld [vmem:[%s1227] sm:$0xf]
      %v1229 = vld [vmem:[%s1227 + $0x4] sm:$0xf]
      %v1230 = vld [vmem:[%s1227 + $0x8] sm:$0xf]
      %v1231 = vld [vmem:[%s1227 + $0xc] sm:$0xf]
      %v1233 = vunpack.c.l.b16 %v1226
      %v1234 = vpack.c.b16 %v1233, %v1233
      %vm1235 = vsmask.f32 5376
      %v1237 = vshrl.u32 %v1099, 16
      %v1239 = vrot.slane %v1237, 2
      %v1240 = vshll.u32 %v1099, 16
      %v1242 = vrot.slane %v1240, 3
      %v1243 = vor.u32 %v1239, %v1242
      %v1245 = vshrl.u32 %v1100, 16
      %v1247 = vrot.slane %v1245, 2
      %v1248 = vshll.u32 %v1100, 16
      %v1250 = vrot.slane %v1248, 3
      %v1251 = vor.u32 %v1247, %v1250
      %v1252 = vsel %vm1235, %v1243, %v1251
      %v1254 = vshrl.u32 %v1101, 16
      %v1256 = vrot.slane %v1254, 2
      %v1257 = vshll.u32 %v1101, 16
      %v1259 = vrot.slane %v1257, 3
      %v1260 = vor.u32 %v1256, %v1259
      %v1261 = vsel %vm1235, %v1251, %v1260
      %v1263 = vshrl.u32 %v1102, 16
      %v1265 = vrot.slane %v1263, 2
      %v1266 = vshll.u32 %v1102, 16
      %v1268 = vrot.slane %v1266, 3
      %v1269 = vor.u32 %v1265, %v1268
      %v1270 = vsel %vm1235, %v1260, %v1269
      %v1272 = vshrl.u32 %v1103, 16
      %v1274 = vrot.slane %v1272, 2
      %v1275 = vshll.u32 %v1103, 16
      %v1277 = vrot.slane %v1275, 3
      %v1278 = vor.u32 %v1274, %v1277
      %v1279 = vsel %vm1235, %v1269, %v1278
      %v1281 = vshrl.u32 %v1234, 16
      %v1283 = vrot.slane %v1281, 2
      %v1284 = vshll.u32 %v1234, 16
      %v1286 = vrot.slane %v1284, 3
      %v1287 = vor.u32 %v1283, %v1286
      %v1288 = vsel %vm1235, %v1278, %v1287
      %v1293 = vunpack.c.l.b16 %v1228
      %v1294 = vunpack.c.l.b16 %v1229
      %v1295 = vunpack.c.l.b16 %v1230
      %v1296 = vunpack.c.l.b16 %v1231
      %v1297 = vpack.c.b16 %v1294, %v1293
      %v1298 = vpack.c.b16 %v1296, %v1295
      %v1302 = vsel %vm277, %v1252, 0
      %v1305 = vsel %vm277, %v1261, 0
      %v1308 = vsel %vm277, %v1270, 0
      %v1311 = vsel %vm277, %v1279, 0
      %v1314 = vsel %vm277, %v1288, 0
      %1316 = vmatprep.subr.bf16.mxu0 0
      %1317 = vmatpush1.bf16.msra.mxu0 %v1297
      %1318 = vmatprep.subr.bf16.mxu0 0
      %1319 = vmatpush1.bf16.msra.mxu0 %v1298
      %1320 = vmatprep.subr.bf16.mxu0 0
      %1321 = vmatpush1.bf16.msra.mxu0 0
      %1322 = vmatprep.subr.bf16.mxu0 0
      %1323 = vmatpush1.bf16.msra.mxu0 0
      %1324 = vmatprep.subr.bf16.mxu0 0
      %1325 = vmatpush1.bf16.msra.mxu0 0
      %1326 = vmatprep.subr.bf16.mxu0 0
      %1327 = vmatpush1.bf16.msra.mxu0 0
      %1328 = vmatprep.subr.bf16.mxu0 0
      %1329 = vmatpush1.bf16.msra.mxu0 0
      %1330 = vmatprep.subr.bf16.mxu0 0
      %1331 = vmatpush1.bf16.msra.mxu0 0
      %1332 = vmatprep.subr.bf16.mxu0 0
      %1333 = vmatpush1.bf16.msra.mxu0 0
      %1334 = vmatprep.subr.bf16.mxu0 0
      %1335 = vmatpush1.bf16.msra.mxu0 0
      %1336 = vmatprep.subr.bf16.mxu0 0
      %1337 = vmatpush1.bf16.msra.mxu0 0
      %1338 = vmatprep.subr.bf16.mxu0 0
      %1339 = vmatpush1.bf16.msra.mxu0 0
      %1340 = vmatprep.subr.bf16.mxu0 0
      %1341 = vmatpush1.bf16.msra.mxu0 0
      %1342 = vmatprep.subr.bf16.mxu0 0
      %1343 = vmatpush1.bf16.msra.mxu0 0
      %1344 = vmatprep.subr.bf16.mxu0 0
      %1345 = vmatpush1.bf16.msra.mxu0 0
      %1346 = vmatprep.subr.bf16.mxu0 0
      %1347 = vmatpush1.bf16.msra.mxu0 0
      %1348 = vmatprep.mubr.bf16.mxu0 0
      %1349 = vmatmul.mubr.bf16.gmra.mrb[0].mxu0 %v1302
      %v1350 = vpop.f32.mrb[0].mxu0
      %v1351 = vadd.f32 0.0, %v1350
      %v1352 = vpop.f32.mrb[0].mxu0
      %v1353 = vpop.f32.mrb[0].mxu0
      %v1354 = vadd.f32 0.0, %v1353
      %v1355 = vpop.f32.mrb[0].mxu0
      %1356 = vmatprep.mubr.bf16.mxu0 0
      %1357 = vmatmul.mubr.bf16.gmra.mrb[0].mxu0 %v1305
      %v1358 = vpop.f32.mrb[0].mxu0
      %v1359 = vadd.f32 0.0, %v1358
      %v1360 = vpop.f32.mrb[0].mxu0
      %v1361 = vpop.f32.mrb[0].mxu0
      %v1362 = vadd.f32 0.0, %v1361
      %v1363 = vpop.f32.mrb[0].mxu0
      %1364 = vmatprep.mubr.bf16.mxu0 0
      %1365 = vmatmul.mubr.bf16.gmra.mrb[0].mxu0 %v1308
      %v1366 = vpop.f32.mrb[0].mxu0
      %v1367 = vadd.f32 0.0, %v1366
      %v1368 = vpop.f32.mrb[0].mxu0
      %v1369 = vpop.f32.mrb[0].mxu0
      %v1370 = vadd.f32 0.0, %v1369
      %v1371 = vpop.f32.mrb[0].mxu0
      %1372 = vmatprep.mubr.bf16.mxu0 0
      %1373 = vmatmul.mubr.bf16.gmra.mrb[0].mxu0 %v1311
      %v1374 = vpop.f32.mrb[0].mxu0
      %v1375 = vadd.f32 0.0, %v1374
      %v1376 = vpop.f32.mrb[0].mxu0
      %v1377 = vpop.f32.mrb[0].mxu0
      %v1378 = vadd.f32 0.0, %v1377
      %v1379 = vpop.f32.mrb[0].mxu0
      %1380 = vmatprep.mubr.bf16.mxu0 0
      %1381 = vmatmul.mubr.bf16.gmra.mrb[0].mxu0 %v1314
      %v1382 = vpop.f32.mrb[0].mxu0
      %v1383 = vadd.f32 0.0, %v1382
      %v1384 = vpop.f32.mrb[0].mxu0
      %v1385 = vpop.f32.mrb[0].mxu0
      %v1386 = vadd.f32 0.0, %v1385
      %v1387 = vpop.f32.mrb[0].mxu0
      %1388 = vdwg.mxu0
      %v1389 = vadd.f32 %v1216, %v1351
      %v1390 = vadd.f32 %v1217, %v1354
      %v1391 = vadd.f32 %v1218, %v1359
      %v1392 = vadd.f32 %v1219, %v1362
      %v1393 = vadd.f32 %v1220, %v1367
      %v1394 = vadd.f32 %v1221, %v1370
      %v1395 = vadd.f32 %v1222, %v1375
      %v1396 = vadd.f32 %v1223, %v1378
      %v1397 = vadd.f32 %v1224, %v1383
      %v1398 = vadd.f32 %v1225, %v1386
      %v1399 = vld [vmem:[%s165 + $0x8] sm:$0x8]
      %s1400 = scalar_lea.vmem %s1, 128
      %v1401 = vld [vmem:[%s1400] sm:$0xf]
      %v1402 = vld [vmem:[%s1400 + $0x4] sm:$0xf]
      %v1403 = vld [vmem:[%s1400 + $0x8] sm:$0xf]
      %v1404 = vld [vmem:[%s1400 + $0xc] sm:$0xf]
      %v1406 = vunpack.c.l.b16 %v1399
      %v1407 = vpack.c.b16 %v1089, %v1406
      %vm1408 = vcmask 1044480
      %v1409 = vrot.slane %v1407, 3
      %v1410 = vrot.slane %v1100, 3
      %v1411 = vsel %vm1408, %v1409, %v1410
      %v1412 = vrot.slane %v1101, 3
      %v1413 = vsel %vm1408, %v1410, %v1412
      %v1414 = vrot.slane %v1102, 3
      %v1415 = vsel %vm1408, %v1412, %v1414
      %v1416 = vrot.slane %v1103, 3
      %v1417 = vsel %vm1408, %v1414, %v1416
      %v1418 = vrot.slane %v1234, 3
      %v1419 = vsel %vm1408, %v1416, %v1418
      %v1424 = vunpack.c.l.b16 %v1401
      %v1425 = vunpack.c.l.b16 %v1402
      %v1426 = vunpack.c.l.b16 %v1403
      %v1427 = vunpack.c.l.b16 %v1404
      %v1428 = vpack.c.b16 %v1425, %v1424
      %v1429 = vpack.c.b16 %v1427, %v1426
      %v1433 = vsel %vm277, %v1411, 0
      %v1436 = vsel %vm277, %v1413, 0
      %v1439 = vsel %vm277, %v1415, 0
      %v1442 = vsel %vm277, %v1417, 0
      %v1445 = vsel %vm277, %v1419, 0
      %1447 = vmatprep.subr.bf16.mxu0 0
      %1448 = vmatpush1.bf16.msra.mxu0 %v1428
      %1449 = vmatprep.subr.bf16.mxu0 0
      %1450 = vmatpush1.bf16.msra.mxu0 %v1429
      %1451 = vmatprep.subr.bf16.mxu0 0
      %1452 = vmatpush1.bf16.msra.mxu0 0
      %1453 = vmatprep.subr.bf16.mxu0 0
      %1454 = vmatpush1.bf16.msra.mxu0 0
      %1455 = vmatprep.subr.bf16.mxu0 0
      %1456 = vmatpush1.bf16.msra.mxu0 0
      %1457 = vmatprep.subr.bf16.mxu0 0
      %1458 = vmatpush1.bf16.msra.mxu0 0
      %1459 = vmatprep.subr.bf16.mxu0 0
      %1460 = vmatpush1.bf16.msra.mxu0 0
      %1461 = vmatprep.subr.bf16.mxu0 0
      %1462 = vmatpush1.bf16.msra.mxu0 0
      %1463 = vmatprep.subr.bf16.mxu0 0
      %1464 = vmatpush1.bf16.msra.mxu0 0
      %1465 = vmatprep.subr.bf16.mxu0 0
      %1466 = vmatpush1.bf16.msra.mxu0 0
      %1467 = vmatprep.subr.bf16.mxu0 0
      %1468 = vmatpush1.bf16.msra.mxu0 0
      %1469 = vmatprep.subr.bf16.mxu0 0
      %1470 = vmatpush1.bf16.msra.mxu0 0
      %1471 = vmatprep.subr.bf16.mxu0 0
      %1472 = vmatpush1.bf16.msra.mxu0 0
      %1473 = vmatprep.subr.bf16.mxu0 0
      %1474 = vmatpush1.bf16.msra.mxu0 0
      %1475 = vmatprep.subr.bf16.mxu0 0
      %1476 = vmatpush1.bf16.msra.mxu0 0
      %1477 = vmatprep.subr.bf16.mxu0 0
      %1478 = vmatpush1.bf16.msra.mxu0 0
      %1479 = vmatprep.mubr.bf16.mxu0 0
      %1480 = vmatmul.mubr.bf16.gmra.mrb[0].mxu0 %v1433
      %v1481 = vpop.f32.mrb[0].mxu0
      %v1482 = vadd.f32 0.0, %v1481
      %v1483 = vpop.f32.mrb[0].mxu0
      %v1484 = vpop.f32.mrb[0].mxu0
      %v1485 = vadd.f32 0.0, %v1484
      %v1486 = vpop.f32.mrb[0].mxu0
      %1487 = vmatprep.mubr.bf16.mxu0 0
      %1488 = vmatmul.mubr.bf16.gmra.mrb[0].mxu0 %v1436
      %v1489 = vpop.f32.mrb[0].mxu0
      %v1490 = vadd.f32 0.0, %v1489
      %v1491 = vpop.f32.mrb[0].mxu0
      %v1492 = vpop.f32.mrb[0].mxu0
      %v1493 = vadd.f32 0.0, %v1492
      %v1494 = vpop.f32.mrb[0].mxu0
      %1495 = vmatprep.mubr.bf16.mxu0 0
      %1496 = vmatmul.mubr.bf16.gmra.mrb[0].mxu0 %v1439
      %v1497 = vpop.f32.mrb[0].mxu0
      %v1498 = vadd.f32 0.0, %v1497
      %v1499 = vpop.f32.mrb[0].mxu0
      %v1500 = vpop.f32.mrb[0].mxu0
      %v1501 = vadd.f32 0.0, %v1500
      %v1502 = vpop.f32.mrb[0].mxu0
      %1503 = vmatprep.mubr.bf16.mxu0 0
      %1504 = vmatmul.mubr.bf16.gmra.mrb[0].mxu0 %v1442
      %v1505 = vpop.f32.mrb[0].mxu0
      %v1506 = vadd.f32 0.0, %v1505
      %v1507 = vpop.f32.mrb[0].mxu0
      %v1508 = vpop.f32.mrb[0].mxu0
      %v1509 = vadd.f32 0.0, %v1508
      %v1510 = vpop.f32.mrb[0].mxu0
      %1511 = vmatprep.mubr.bf16.mxu0 0
      %1512 = vmatmul.mubr.bf16.gmra.mrb[0].mxu0 %v1445
      %v1513 = vpop.f32.mrb[0].mxu0
      %v1514 = vadd.f32 0.0, %v1513
      %v1515 = vpop.f32.mrb[0].mxu0
      %v1516 = vpop.f32.mrb[0].mxu0
      %v1517 = vadd.f32 0.0, %v1516
      %v1518 = vpop.f32.mrb[0].mxu0
      %1519 = vdwg.mxu0
      %v1520 = vadd.f32 %v1389, %v1482
      %v1521 = vadd.f32 %v1390, %v1485
      %v1522 = vadd.f32 %v1391, %v1490
      %v1523 = vadd.f32 %v1392, %v1493
      %v1524 = vadd.f32 %v1393, %v1498
      %v1525 = vadd.f32 %v1394, %v1501
      %v1526 = vadd.f32 %v1395, %v1506
      %v1527 = vadd.f32 %v1396, %v1509
      %v1528 = vadd.f32 %v1397, %v1514
      %v1529 = vadd.f32 %v1398, %v1517
      %v1530 = vld [vmem:[%s2] sm:$0x1]
      %v1532 = vlaneseq
      %v1533 = vshrl.u32 %v1532, 7
      %v1534 = vsub.s32 0, %v1533
      %v1535 = vrot.slane %v1530, %v1534
      %v1537 = vadd.f32 %v1520, %v1535
      %v1538 = vadd.f32 %v1521, %v1535
      %v1539 = vadd.f32 %v1522, %v1535
      %v1540 = vadd.f32 %v1523, %v1535
      %v1541 = vadd.f32 %v1524, %v1535
      %v1542 = vadd.f32 %v1525, %v1535
      %v1543 = vadd.f32 %v1526, %v1535
      %v1544 = vadd.f32 %v1527, %v1535
      %v1545 = vadd.f32 %v1528, %v1535
      %v1546 = vadd.f32 %v1529, %v1535
      %v1547 = vmax.f32 %v1537, 0.0
      %v1548 = vmax.f32 %v1538, 0.0
      %v1549 = vmax.f32 %v1539, 0.0
      %v1550 = vmax.f32 %v1540, 0.0
      %v1551 = vmax.f32 %v1541, 0.0
      %v1552 = vmax.f32 %v1542, 0.0
      %v1553 = vmax.f32 %v1543, 0.0
      %v1554 = vmax.f32 %v1544, 0.0
      %v1555 = vmax.f32 %v1545, 0.0
      %v1556 = vmax.f32 %v1546, 0.0
      %v1557 = vpack.c.bf16 %v1548, %v1547
      %v1558 = vpack.c.bf16 %v1550, %v1549
      %v1559 = vpack.c.bf16 %v1552, %v1551
      %v1560 = vpack.c.bf16 %v1554, %v1553
      %v1561 = vpack.c.bf16 %v1556, %v1555
      %v1567 = vunpack.c.l.b16 %v1557
      %v1568 = vunpack.c.h.b16 %v1557
      %v1569 = vunpack.c.l.b16 %v1558
      %v1570 = vunpack.c.h.b16 %v1558
      %v1571 = vunpack.c.l.b16 %v1559
      %v1572 = vunpack.c.h.b16 %v1559
      %v1573 = vunpack.c.l.b16 %v1560
      %v1574 = vunpack.c.h.b16 %v1560
      %v1575 = vunpack.c.l.b16 %v1561
      %v1576 = vunpack.c.h.b16 %v1561
      %v1577 = vpack.c.b16 %v1567, %v1567
      %v1578 = vpack.c.b16 %v1568, %v1568
      %v1579 = vpack.c.b16 %v1569, %v1569
      %v1580 = vpack.c.b16 %v1570, %v1570
      %v1581 = vpack.c.b16 %v1571, %v1571
      %v1582 = vpack.c.b16 %v1572, %v1572
      %v1583 = vpack.c.b16 %v1573, %v1573
      %v1584 = vpack.c.b16 %v1574, %v1574
      %v1585 = vpack.c.b16 %v1575, %v1575
      %v1586 = vpack.c.b16 %v1576, %v1576
      %vm1597 = vcmask 125952
      %1598 = vst.msk [vmem:[%s170] sm:$0xf] %vm1597, %v1577
      %1599 = vst.msk [vmem:[%s170 + $0x4] sm:$0xf] %vm1597, %v1578
      %1600 = vst.msk [vmem:[%s170 + $0x8] sm:$0xf] %vm1597, %v1579
      %1601 = vst.msk [vmem:[%s170 + $0xc] sm:$0xf] %vm1597, %v1580
      %1602 = vst.msk [vmem:[%s170 + $0x10] sm:$0xf] %vm1597, %v1581
      %1603 = vst.msk [vmem:[%s170 + $0x14] sm:$0xf] %vm1597, %v1582
      %1604 = vst.msk [vmem:[%s170 + $0x18] sm:$0xf] %vm1597, %v1583
      %1605 = vst.msk [vmem:[%s170 + $0x1c] sm:$0xf] %vm1597, %v1584
      %1606 = vst.msk [vmem:[%s170 + $0x20] sm:$0xf] %vm1597, %v1585
      %1607 = vst.msk [vmem:[%s170 + $0x24] sm:$0xf] %vm1597, %v1586
      %p1608 = scmp.lt.s32.totalorder %s14, 1
      %s1609 = scalar_select %p1608, %s14, 1
      %s1610 = smul.addr %s1609, 10
      %s1611 = smul.addr %s1610, 4
      %s1612 = scalar_lea.vmem %s3, %s1611
      // Predicated region
      $region33: #{vae_forward.12} parent=31 // pred_check
        %p1613 = pneg %p100
      $region34: #{vae_forward.12} parent=31 // pred_check_branch
        %1615 = sbr.rel (%p1613) target = $region36
      $region35: #{vae_forward.12} parent=31 // pred_region
        _
      $region36: #{vae_forward.12} parent=31 // pred_fallthru
        _
    $region32: #{vae_forward.12} parent=5 // pred_fallthru
      _
    %p1616 = scmp.le.s32.totalorder 2, %s9
    // Predicated region
    $region37: #{vae_forward.12} parent=5 // pred_check
      %p1617 = pneg %p1616
    $region38: #{vae_forward.12} parent=5 // pred_check_branch
      %1619 = sbr.rel (%p1617) target = $region40
    $region39: #{vae_forward.12} parent=5 // pred_region
      %s1620 = ssub.s32 %s9, 2
      // Predicated region
      $region41: #{vae_forward.12} parent=39 // pred_check
        %p1621 = pneg %p106
      $region42: #{vae_forward.12} parent=39 // pred_check_branch
        %1623 = sbr.rel (%p1621) target = $region44
      $region43: #{vae_forward.12} parent=39 // pred_region
        %p1624 = scmp.lt.s32.totalorder %s15, 1
        %s1625 = scalar_select %p1624, %s15, 1
        %s1626 = smul.addr %s1625, 10
        %s1627 = smul.addr %s1626, 4
        %s1628 = scalar_lea.vmem %s3, %s1627
      $region44: #{vae_forward.12} parent=39 // pred_fallthru
        _
    $region40: #{vae_forward.12} parent=5 // pred_fallthru
      _
  $region6: #{vae_forward.12} parent=0 // loop_footer
    %s13 = sadd.s32 1, %s9
  $region7: #{vae_forward.12} parent=0 // loop_footer_branch
    %8 = sbr.rel target = $region3
  $region8: #{vae_forward.12} parent=0 // loop_exit
    _

// kernel: vae_forward.13
$region0: #{vae_forward.13}
  #allocation0 [shape = 'u32[]', space=smem, size = 0x4, offset = 0x4, fixed_abs, tag = 'smem constant byte address 0x4 - core index']
  #allocation1 [shape = 'u32[144,128]{1,0:T(1,128)}', space=vmem, size = 0x12000, scoped, tag = 'internal scratch']
  %s0 = inlined_call_operand.vmem [shape: bf16[2,342,4], index: 0, kind: input, shape index: {}]
  %s1 = inlined_call_operand.vmem [shape: bf16[9,4,16], index: 1, kind: input, shape index: {}]
  %s2 = inlined_call_operand.vmem [shape: f32[1,16], index: 2, kind: input, shape index: {}]
  %s3 = inlined_call_operand.vmem [shape: f32[2,288,16], index: 3, kind: output, shape index: {}]
  %s4 = sld [smem:[#allocation0]]
  $region45: #{vae_forward.13} parent=0
    _
  %s6 = ssub.s32 1, %s4
  %s7 = scalar_select 0, %s6, %s4
  loop: start=0, step=1, limit=4
  $region2: #{vae_forward.13} parent=0 // loop_pre_header
    _
  $region3: #{vae_forward.13} parent=0 // loop_header
    %s9 = sphi 0, %s13
    %p10 = scmp.ge.s32.totalorder %s9, 4
    %s19 = sphi 0, %s21
    %s22 = sphi 0, %s19
    %s23 = sphi 0, %s22
    %s39 = sphi 0, %s23
    %s43 = sphi 0, %s43
    %s45 = sphi 0, %s43
    %s46 = sphi 0, %s45
    %s60 = sphi 0, %s46
    %s64 = sphi 0, %s64
    %s66 = sphi 0, %s64
    %s67 = sphi 0, %s66
    %s81 = sphi 0, %s67
    %s87 = sphi 0, %s89
    %s90 = sphi 0, %s87
    %s91 = sphi 0, %s90
    %s107 = sphi 0, %s91
  $region4: #{vae_forward.13} parent=0 // loop_header_branch
    %12 = sbr.rel (%p10) target = $region8
  $region5: #{vae_forward.13} parent=0 // loop_body
    %s14 = ssub.s32 %s9, 1
    %s15 = ssub.s32 %s9, 2
    %s16 = sadd.s32 %s9, 1
    %s17 = ssub.s32 %s9, %s16
    %p18 = scmp.eq.s32.totalorder %s17, 0
    %s20 = sadd.s32 %s19, 1
    %s21 = scalar_select %p18, %s19, %s20
    %p24 = pneg %p18
    %p25 = scmp.eq.s32.totalorder %s9, 1
    %p26 = por %p24, %p25
    %p27 = scmp.ne.s32.totalorder %s19, %s22
    %p28 = scmp.eq.s32.totalorder %s9, 0
    %p29 = por %p27, %p28
    %p30 = scmp.ne.s32.totalorder %s19, %s22
    %p31 = scmp.eq.s32.totalorder %s14, 1
    %p32 = por %p30, %p31
    %p33 = scmp.ne.s32.totalorder %s22, %s23
    %p34 = scmp.eq.s32.totalorder %s14, 0
    %p35 = por %p33, %p34
    %p36 = scmp.ne.s32.totalorder %s22, %s23
    %p37 = scmp.eq.s32.totalorder %s15, 1
    %p38 = por %p36, %p37
    %p40 = scmp.ne.s32.totalorder %s23, %s39
    %p41 = scmp.eq.s32.totalorder %s15, 0
    %p42 = por %p40, %p41
    %s44 = sadd.s32 %s43, 1
    %p47 = scmp.eq.s32.totalorder %s9, 1
    %p48 = scmp.ne.s32.totalorder %s43, %s45
    %p49 = scmp.eq.s32.totalorder %s9, 0
    %p50 = por %p48, %p49
    %p51 = scmp.ne.s32.totalorder %s43, %s45
    %p52 = scmp.eq.s32.totalorder %s14, 1
    %p53 = por %p51, %p52
    %p54 = scmp.ne.s32.totalorder %s45, %s46
    %p55 = scmp.eq.s32.totalorder %s14, 0
    %p56 = por %p54, %p55
    %p57 = scmp.ne.s32.totalorder %s45, %s46
    %p58 = scmp.eq.s32.totalorder %s15, 1
    %p59 = por %p57, %p58
    %p61 = scmp.ne.s32.totalorder %s46, %s60
    %p62 = scmp.eq.s32.totalorder %s15, 0
    %p63 = por %p61, %p62
    %s65 = sadd.s32 %s64, 1
    %p68 = scmp.eq.s32.totalorder %s9, 1
    %p69 = scmp.ne.s32.totalorder %s64, %s66
    %p70 = scmp.eq.s32.totalorder %s9, 0
    %p71 = por %p69, %p70
    %p72 = scmp.ne.s32.totalorder %s64, %s66
    %p73 = scmp.eq.s32.totalorder %s14, 1
    %p74 = por %p72, %p73
    %p75 = scmp.ne.s32.totalorder %s66, %s67
    %p76 = scmp.eq.s32.totalorder %s14, 0
    %p77 = por %p75, %p76
    %p78 = scmp.ne.s32.totalorder %s66, %s67
    %p79 = scmp.eq.s32.totalorder %s15, 1
    %p80 = por %p78, %p79
    %p82 = scmp.ne.s32.totalorder %s67, %s81
    %p83 = scmp.eq.s32.totalorder %s15, 0
    %p84 = por %p82, %p83
    %s85 = ssub.s32 %s9, %s16
    %p86 = scmp.eq.s32.totalorder %s85, 0
    %s88 = sadd.s32 %s87, 1
    %s89 = scalar_select %p86, %s87, %s88
    %p92 = pneg %p86
    %p93 = scmp.eq.s32.totalorder %s9, 1
    %p94 = por %p92, %p93
    %p95 = scmp.ne.s32.totalorder %s87, %s90
    %p96 = scmp.eq.s32.totalorder %s9, 0
    %p97 = por %p95, %p96
    %p98 = scmp.ne.s32.totalorder %s87, %s90
    %p99 = scmp.eq.s32.totalorder %s14, 1
    %p100 = por %p98, %p99
    %p101 = scmp.ne.s32.totalorder %s90, %s91
    %p102 = scmp.eq.s32.totalorder %s14, 0
    %p103 = por %p101, %p102
    %p104 = scmp.ne.s32.totalorder %s90, %s91
    %p105 = scmp.eq.s32.totalorder %s15, 1
    %p106 = por %p104, %p105
    %p108 = scmp.ne.s32.totalorder %s91, %s107
    %p109 = scmp.eq.s32.totalorder %s15, 0
    %p110 = por %p108, %p109
    %p111 = scmp.le.s32.totalorder 1, %s9
    %p112 = scmp.lt.s32.totalorder %s9, 3
    %p113 = pnand %p111, %p112
    %p114 = pneg %p113
    // Predicated region
    $region9: #{vae_forward.13} parent=5 // pred_check
      _
    $region10: #{vae_forward.13} parent=5 // pred_check_branch
      %116 = sbr.rel (%p113) target = $region12
    $region11: #{vae_forward.13} parent=5 // pred_region
      %s117 = ssub.s32 %s9, 1
      // Predicated region
      $region13: #{vae_forward.13} parent=11 // pred_check
        %p118 = pneg %p56
      $region14: #{vae_forward.13} parent=11 // pred_check_branch
        %120 = sbr.rel (%p118) target = $region16
      $region15: #{vae_forward.13} parent=11 // pred_region
        _
      $region16: #{vae_forward.13} parent=11 // pred_fallthru
        _
      // Predicated region
      $region17: #{vae_forward.13} parent=11 // pred_check
        %p121 = pneg %p77
      $region18: #{vae_forward.13} parent=11 // pred_check_branch
        %123 = sbr.rel (%p121) target = $region20
      $region19: #{vae_forward.13} parent=11 // pred_region
        _
      $region20: #{vae_forward.13} parent=11 // pred_fallthru
        _
    $region12: #{vae_forward.13} parent=5 // pred_fallthru
      _
    %p124 = scmp.lt.s32.totalorder %s9, 2
    // Predicated region
    $region21: #{vae_forward.13} parent=5 // pred_check
      %p125 = pneg %p124
    $region22: #{vae_forward.13} parent=5 // pred_check_branch
      %127 = sbr.rel (%p125) target = $region24
    $region23: #{vae_forward.13} parent=5 // pred_region
      // Predicated region
      $region25: #{vae_forward.13} parent=23 // pred_check
        %p128 = pneg %p29
      $region26: #{vae_forward.13} parent=23 // pred_check_branch
        %130 = sbr.rel (%p128) target = $region28
      $region27: #{vae_forward.13} parent=23 // pred_region
        %p131 = scmp.lt.s32.totalorder %s9, 1
        %s132 = scalar_select %p131, %s9, 1
        %s133 = smul.addr %s132, 43
        %s134 = smul.addr %s133, 4
        %s135 = scalar_lea.vmem %s0, %s134
      $region28: #{vae_forward.13} parent=23 // pred_fallthru
        _
    $region24: #{vae_forward.13} parent=5 // pred_fallthru
      _
    %p136 = scmp.le.s32.totalorder 1, %s9
    %p137 = scmp.lt.s32.totalorder %s9, 3
    %p138 = pnand %p136, %p137
    %p139 = pneg %p138
    // Predicated region
    $region29: #{vae_forward.13} parent=5 // pred_check
      _
    $region30: #{vae_forward.13} parent=5 // pred_check_branch
      %141 = sbr.rel (%p138) target = $region32
    $region31: #{vae_forward.13} parent=5 // pred_region
      %s142 = ssub.s32 %s9, 1
      %p143 = scmp.lt.s32.totalorder %s14, 1
      %s144 = scalar_select %p143, %s14, 1
      %s145 = smul.addr %s144, 43
      %s146 = smul.addr %s145, 4
      %s147 = scalar_lea.vmem %s0, %s146
      %p148 = pneg %p35
      %p149 = pneg %p32
      %p150 = pneg %p56
      %p151 = pneg %p53
      %p152 = pneg %p77
      %p153 = pneg %p74
      %p154 = pneg %p103
      %p155 = pneg %p100
      %p156 = scmp.lt.s32.totalorder %s14, 1
      %s157 = scalar_select %p156, %s14, 1
      %s158 = smul.addr %s157, 36
      %s159 = smul.addr %s158, 8
      %s160 = scalar_lea.vmem %s3, %s159
      %p161 = scmp.lt.s32.totalorder %s14, 1
      %s162 = scalar_select %p161, %s14, 1
      %s163 = smul.addr %s162, 43
      %s164 = smul.addr %s163, 4
      %s165 = scalar_lea.vmem %s0, %s164
      %p166 = scmp.lt.s32.totalorder %s14, 1
      %s167 = scalar_select %p166, %s14, 1
      %s168 = smul.addr %s167, 36
      %s169 = smul.addr %s168, 8
      %s170 = scalar_lea.vmem %s3, %s169
      %v172 = vld [vmem:[%s165] sm:$0xf]
      %v173 = vld [vmem:[%s165 + $0x4] sm:$0xf]
      %v174 = vld [vmem:[%s165 + $0x8] sm:$0xf]
      %v175 = vld [vmem:[%s165 + $0xc] sm:$0xf]
      %v176 = vld [vmem:[%s165 + $0x10] sm:$0xf]
      %v177 = vld [vmem:[%s165 + $0x14] sm:$0xf]
      %v178 = vld [vmem:[%s165 + $0x18] sm:$0xf]
      %v179 = vld [vmem:[%s165 + $0x1c] sm:$0xf]
      %v180 = vld [vmem:[%s165 + $0x20] sm:$0xf]
      %v181 = vld [vmem:[%s165 + $0x24] sm:$0xf]
      %v182 = vld [vmem:[%s165 + $0x28] sm:$0xf]
      %v183 = vld [vmem:[%s165 + $0x2c] sm:$0xf]
      %v184 = vld [vmem:[%s165 + $0x30] sm:$0xf]
      %v185 = vld [vmem:[%s165 + $0x34] sm:$0xf]
      %v186 = vld [vmem:[%s165 + $0x38] sm:$0xf]
      %v187 = vld [vmem:[%s165 + $0x3c] sm:$0xf]
      %v188 = vld [vmem:[%s165 + $0x40] sm:$0xf]
      %v189 = vld [vmem:[%s165 + $0x44] sm:$0xf]
      %v190 = vld [vmem:[%s165 + $0x48] sm:$0xf]
      %v191 = vld [vmem:[%s165 + $0x4c] sm:$0xf]
      %v192 = vld [vmem:[%s165 + $0x50] sm:$0xf]
      %v193 = vld [vmem:[%s165 + $0x54] sm:$0xf]
      %v194 = vld [vmem:[%s165 + $0x58] sm:$0xf]
      %v195 = vld [vmem:[%s165 + $0x5c] sm:$0xf]
      %v196 = vld [vmem:[%s165 + $0x60] sm:$0xf]
      %v197 = vld [vmem:[%s165 + $0x64] sm:$0xf]
      %v198 = vld [vmem:[%s165 + $0x68] sm:$0xf]
      %v199 = vld [vmem:[%s165 + $0x6c] sm:$0xf]
      %v200 = vld [vmem:[%s165 + $0x70] sm:$0xf]
      %v201 = vld [vmem:[%s165 + $0x74] sm:$0xf]
      %v202 = vld [vmem:[%s165 + $0x78] sm:$0xf]
      %v203 = vld [vmem:[%s165 + $0x7c] sm:$0xf]
      %v204 = vld [vmem:[%s165 + $0x80] sm:$0xf]
      %v205 = vld [vmem:[%s165 + $0x84] sm:$0xf]
      %v206 = vld [vmem:[%s165 + $0x88] sm:$0xf]
      %v207 = vld [vmem:[%s165 + $0x8c] sm:$0xf]
      %v208 = vld [vmem:[%s1] sm:$0x3]
      %v209 = vld [vmem:[%s165 + $0x90] sm:$0x1]
      %s210 = scalar_lea.vmem %s1, 2
      %v211 = vld [vmem:[%s210] sm:$0x3]
      %v249 = vunpack.c.l.b16 %v172
      %v250 = vunpack.c.l.b16 %v173
      %v251 = vunpack.c.l.b16 %v174
      %v252 = vunpack.c.l.b16 %v175
      %v253 = vunpack.c.l.b16 %v176
      %v254 = vunpack.c.l.b16 %v177
      %v255 = vunpack.c.l.b16 %v178
      %v256 = vunpack.c.l.b16 %v179
      %v257 = vunpack.c.l.b16 %v180
      %v258 = vunpack.c.l.b16 %v181
      %v259 = vunpack.c.l.b16 %v182
      %v260 = vunpack.c.l.b16 %v183
      %v261 = vunpack.c.l.b16 %v184
      %v262 = vunpack.c.l.b16 %v185
      %v263 = vunpack.c.l.b16 %v186
      %v264 = vunpack.c.l.b16 %v187
      %v265 = vunpack.c.l.b16 %v188
      %v266 = vunpack.c.l.b16 %v189
      %v267 = vunpack.c.l.b16 %v190
      %v268 = vunpack.c.l.b16 %v191
      %v269 = vunpack.c.l.b16 %v192
      %v270 = vunpack.c.l.b16 %v193
      %v271 = vunpack.c.l.b16 %v194
      %v272 = vunpack.c.l.b16 %v195
      %v273 = vunpack.c.l.b16 %v196
      %v274 = vunpack.c.l.b16 %v197
      %v275 = vunpack.c.l.b16 %v198
      %v276 = vunpack.c.l.b16 %v199
      %v277 = vunpack.c.l.b16 %v200
      %v278 = vunpack.c.l.b16 %v201
      %v279 = vunpack.c.l.b16 %v202
      %v280 = vunpack.c.l.b16 %v203
      %v281 = vunpack.c.l.b16 %v204
      %v282 = vunpack.c.l.b16 %v205
      %v283 = vunpack.c.l.b16 %v206
      %v284 = vunpack.c.l.b16 %v207
      %v285 = vunpack.c.l.b16 %v209
      %v286 = vpack.c.b16 %v250, %v249
      %v287 = vpack.c.b16 %v252, %v251
      %v288 = vpack.c.b16 %v254, %v253
      %v289 = vpack.c.b16 %v256, %v255
      %v290 = vpack.c.b16 %v258, %v257
      %v291 = vpack.c.b16 %v260, %v259
      %v292 = vpack.c.b16 %v262, %v261
      %v293 = vpack.c.b16 %v264, %v263
      %v294 = vpack.c.b16 %v266, %v265
      %v295 = vpack.c.b16 %v268, %v267
      %v296 = vpack.c.b16 %v270, %v269
      %v297 = vpack.c.b16 %v272, %v271
      %v298 = vpack.c.b16 %v274, %v273
      %v299 = vpack.c.b16 %v276, %v275
      %v300 = vpack.c.b16 %v278, %v277
      %v301 = vpack.c.b16 %v280, %v279
      %v302 = vpack.c.b16 %v282, %v281
      %v303 = vpack.c.b16 %v284, %v283
      %v304 = vpack.c.b16 %v285, %v285
      %vm305 = vsmask.f32 7424
      %v307 = vshrl.u32 %v286, 16
      %v309 = vshll.u32 %v286, 16
      %v311 = vrot.slane %v309, 1
      %v312 = vor.u32 %v307, %v311
      %v314 = vshll.u32 %v287, 16
      %v316 = vrot.slane %v314, 1
      %v317 = vsel %vm305, %v312, %v316
      %v318 = vshrl.u32 %v287, 16
      %v320 = vor.u32 %v318, %v316
      %v322 = vshll.u32 %v288, 16
      %v324 = vrot.slane %v322, 1
      %v325 = vsel %vm305, %v320, %v324
      %v326 = vshrl.u32 %v288, 16
      %v328 = vor.u32 %v326, %v324
      %v330 = vshll.u32 %v289, 16
      %v332 = vrot.slane %v330, 1
      %v333 = vsel %vm305, %v328, %v332
      %v334 = vshrl.u32 %v289, 16
      %v336 = vor.u32 %v334, %v332
      %v338 = vshll.u32 %v290, 16
      %v340 = vrot.slane %v338, 1
      %v341 = vsel %vm305, %v336, %v340
      %v342 = vshrl.u32 %v290, 16
      %v344 = vor.u32 %v342, %v340
      %v346 = vshll.u32 %v291, 16
      %v348 = vrot.slane %v346, 1
      %v349 = vsel %vm305, %v344, %v348
      %v350 = vshrl.u32 %v291, 16
      %v352 = vor.u32 %v350, %v348
      %v354 = vshll.u32 %v292, 16
      %v356 = vrot.slane %v354, 1
      %v357 = vsel %vm305, %v352, %v356
      %v358 = vshrl.u32 %v292, 16
      %v360 = vor.u32 %v358, %v356
      %v362 = vshll.u32 %v293, 16
      %v364 = vrot.slane %v362, 1
      %v365 = vsel %vm305, %v360, %v364
      %v366 = vshrl.u32 %v293, 16
      %v368 = vor.u32 %v366, %v364
      %v370 = vshll.u32 %v294, 16
      %v372 = vrot.slane %v370, 1
      %v373 = vsel %vm305, %v368, %v372
      %v374 = vshrl.u32 %v294, 16
      %v376 = vor.u32 %v374, %v372
      %v378 = vshll.u32 %v295, 16
      %v380 = vrot.slane %v378, 1
      %v381 = vsel %vm305, %v376, %v380
      %v382 = vshrl.u32 %v295, 16
      %v384 = vor.u32 %v382, %v380
      %v386 = vshll.u32 %v296, 16
      %v388 = vrot.slane %v386, 1
      %v389 = vsel %vm305, %v384, %v388
      %v390 = vshrl.u32 %v296, 16
      %v392 = vor.u32 %v390, %v388
      %v394 = vshll.u32 %v297, 16
      %v396 = vrot.slane %v394, 1
      %v397 = vsel %vm305, %v392, %v396
      %v398 = vshrl.u32 %v297, 16
      %v400 = vor.u32 %v398, %v396
      %v402 = vshll.u32 %v298, 16
      %v404 = vrot.slane %v402, 1
      %v405 = vsel %vm305, %v400, %v404
      %v406 = vshrl.u32 %v298, 16
      %v408 = vor.u32 %v406, %v404
      %v410 = vshll.u32 %v299, 16
      %v412 = vrot.slane %v410, 1
      %v413 = vsel %vm305, %v408, %v412
      %v414 = vshrl.u32 %v299, 16
      %v416 = vor.u32 %v414, %v412
      %v418 = vshll.u32 %v300, 16
      %v420 = vrot.slane %v418, 1
      %v421 = vsel %vm305, %v416, %v420
      %v422 = vshrl.u32 %v300, 16
      %v424 = vor.u32 %v422, %v420
      %v426 = vshll.u32 %v301, 16
      %v428 = vrot.slane %v426, 1
      %v429 = vsel %vm305, %v424, %v428
      %v430 = vshrl.u32 %v301, 16
      %v432 = vor.u32 %v430, %v428
      %v434 = vshll.u32 %v302, 16
      %v436 = vrot.slane %v434, 1
      %v437 = vsel %vm305, %v432, %v436
      %v438 = vshrl.u32 %v302, 16
      %v440 = vor.u32 %v438, %v436
      %v442 = vshll.u32 %v303, 16
      %v444 = vrot.slane %v442, 1
      %v445 = vsel %vm305, %v440, %v444
      %v446 = vshrl.u32 %v303, 16
      %v448 = vor.u32 %v446, %v444
      %v450 = vshll.u32 %v304, 16
      %v452 = vrot.slane %v450, 1
      %v453 = vsel %vm305, %v448, %v452
      %vm454 = vcmask 31744
      %v456 = vsel %vm454, %v317, 0
      %v459 = vsel %vm454, %v325, 0
      %v462 = vsel %vm454, %v333, 0
      %v465 = vsel %vm454, %v341, 0
      %v468 = vsel %vm454, %v349, 0
      %v471 = vsel %vm454, %v357, 0
      %v474 = vsel %vm454, %v365, 0
      %v477 = vsel %vm454, %v373, 0
      %v480 = vsel %vm454, %v381, 0
      %v483 = vsel %vm454, %v389, 0
      %v486 = vsel %vm454, %v397, 0
      %v489 = vsel %vm454, %v405, 0
      %v492 = vsel %vm454, %v413, 0
      %v495 = vsel %vm454, %v421, 0
      %v498 = vsel %vm454, %v429, 0
      %v501 = vsel %vm454, %v437, 0
      %v504 = vsel %vm454, %v445, 0
      %v507 = vsel %vm454, %v453, 0
      %vm509 = vcmask 1041408
      %v511 = vsel %vm509, %v211, 0
      %513 = vmatprep.subr.bf16.mxu0 0
      %514 = vmatpush1.bf16.msra.mxu0 %v511
      %515 = vmatprep.subr.bf16.mxu0 0
      %516 = vmatpush1.bf16.msra.mxu0 0
      %517 = vmatprep.subr.bf16.mxu0 0
      %518 = vmatpush1.bf16.msra.mxu0 0
      %519 = vmatprep.subr.bf16.mxu0 0
      %520 = vmatpush1.bf16.msra.mxu0 0
      %521 = vmatprep.subr.bf16.mxu0 0
      %522 = vmatpush1.bf16.msra.mxu0 0
      %523 = vmatprep.subr.bf16.mxu0 0
      %524 = vmatpush1.bf16.msra.mxu0 0
      %525 = vmatprep.subr.bf16.mxu0 0
      %526 = vmatpush1.bf16.msra.mxu0 0
      %527 = vmatprep.subr.bf16.mxu0 0
      %528 = vmatpush1.bf16.msra.mxu0 0
      %529 = vmatprep.subr.bf16.mxu0 0
      %530 = vmatpush1.bf16.msra.mxu0 0
      %531 = vmatprep.subr.bf16.mxu0 0
      %532 = vmatpush1.bf16.msra.mxu0 0
      %533 = vmatprep.subr.bf16.mxu0 0
      %534 = vmatpush1.bf16.msra.mxu0 0
      %535 = vmatprep.subr.bf16.mxu0 0
      %536 = vmatpush1.bf16.msra.mxu0 0
      %537 = vmatprep.subr.bf16.mxu0 0
      %538 = vmatpush1.bf16.msra.mxu0 0
      %539 = vmatprep.subr.bf16.mxu0 0
      %540 = vmatpush1.bf16.msra.mxu0 0
      %541 = vmatprep.subr.bf16.mxu0 0
      %542 = vmatpush1.bf16.msra.mxu0 0
      %543 = vmatprep.subr.bf16.mxu0 0
      %544 = vmatpush1.bf16.msra.mxu0 0
      %545 = vmatprep.mubr.bf16.mxu0 0
      %546 = vmatmul.mubr.bf16.gmra.mrb[0].mxu0 %v456
      %v547 = vpop.f32.mrb[0].mxu0
      %v548 = vadd.f32 0.0, %v547
      %v549 = vpop.f32.mrb[0].mxu0
      %v550 = vpop.f32.mrb[0].mxu0
      %v551 = vadd.f32 0.0, %v550
      %v552 = vpop.f32.mrb[0].mxu0
      %553 = vmatprep.mubr.bf16.mxu0 0
      %554 = vmatmul.mubr.bf16.gmra.mrb[0].mxu0 %v459
      %v555 = vpop.f32.mrb[0].mxu0
      %v556 = vadd.f32 0.0, %v555
      %v557 = vpop.f32.mrb[0].mxu0
      %v558 = vpop.f32.mrb[0].mxu0
      %v559 = vadd.f32 0.0, %v558
      %v560 = vpop.f32.mrb[0].mxu0
      %561 = vmatprep.mubr.bf16.mxu0 0
      %562 = vmatmul.mubr.bf16.gmra.mrb[0].mxu0 %v462
      %v563 = vpop.f32.mrb[0].mxu0
      %v564 = vadd.f32 0.0, %v563
      %v565 = vpop.f32.mrb[0].mxu0
      %v566 = vpop.f32.mrb[0].mxu0
      %v567 = vadd.f32 0.0, %v566
      %v568 = vpop.f32.mrb[0].mxu0
      %569 = vmatprep.mubr.bf16.mxu0 0
      %570 = vmatmul.mubr.bf16.gmra.mrb[0].mxu0 %v465
      %v571 = vpop.f32.mrb[0].mxu0
      %v572 = vadd.f32 0.0, %v571
      %v573 = vpop.f32.mrb[0].mxu0
      %v574 = vpop.f32.mrb[0].mxu0
      %v575 = vadd.f32 0.0, %v574
      %v576 = vpop.f32.mrb[0].mxu0
      %577 = vmatprep.mubr.bf16.mxu0 0
      %578 = vmatmul.mubr.bf16.gmra.mrb[0].mxu0 %v468
      %v579 = vpop.f32.mrb[0].mxu0
      %v580 = vadd.f32 0.0, %v579
      %v581 = vpop.f32.mrb[0].mxu0
      %v582 = vpop.f32.mrb[0].mxu0
      %v583 = vadd.f32 0.0, %v582
      %v584 = vpop.f32.mrb[0].mxu0
      %585 = vmatprep.mubr.bf16.mxu0 0
      %586 = vmatmul.mubr.bf16.gmra.mrb[0].mxu0 %v471
      %v587 = vpop.f32.mrb[0].mxu0
      %v588 = vadd.f32 0.0, %v587
      %v589 = vpop.f32.mrb[0].mxu0
      %v590 = vpop.f32.mrb[0].mxu0
      %v591 = vadd.f32 0.0, %v590
      %v592 = vpop.f32.mrb[0].mxu0
      %593 = vmatprep.mubr.bf16.mxu0 0
      %594 = vmatmul.mubr.bf16.gmra.mrb[0].mxu0 %v474
      %v595 = vpop.f32.mrb[0].mxu0
      %v596 = vadd.f32 0.0, %v595
      %v597 = vpop.f32.mrb[0].mxu0
      %v598 = vpop.f32.mrb[0].mxu0
      %v599 = vadd.f32 0.0, %v598
      %v600 = vpop.f32.mrb[0].mxu0
      %601 = vmatprep.mubr.bf16.mxu0 0
      %602 = vmatmul.mubr.bf16.gmra.mrb[0].mxu0 %v477
      %v603 = vpop.f32.mrb[0].mxu0
      %v604 = vadd.f32 0.0, %v603
      %v605 = vpop.f32.mrb[0].mxu0
      %v606 = vpop.f32.mrb[0].mxu0
      %v607 = vadd.f32 0.0, %v606
      %v608 = vpop.f32.mrb[0].mxu0
      %609 = vmatprep.mubr.bf16.mxu0 0
      %610 = vmatmul.mubr.bf16.gmra.mrb[0].mxu0 %v480
      %v611 = vpop.f32.mrb[0].mxu0
      %v612 = vadd.f32 0.0, %v611
      %v613 = vpop.f32.mrb[0].mxu0
      %v614 = vpop.f32.mrb[0].mxu0
      %v615 = vadd.f32 0.0, %v614
      %v616 = vpop.f32.mrb[0].mxu0
      %617 = vmatprep.mubr.bf16.mxu0 0
      %618 = vmatmul.mubr.bf16.gmra.mrb[0].mxu0 %v483
      %v619 = vpop.f32.mrb[0].mxu0
      %v620 = vadd.f32 0.0, %v619
      %v621 = vpop.f32.mrb[0].mxu0
      %v622 = vpop.f32.mrb[0].mxu0
      %v623 = vadd.f32 0.0, %v622
      %v624 = vpop.f32.mrb[0].mxu0
      %625 = vmatprep.mubr.bf16.mxu0 0
      %626 = vmatmul.mubr.bf16.gmra.mrb[0].mxu0 %v486
      %v627 = vpop.f32.mrb[0].mxu0
      %v628 = vadd.f32 0.0, %v627
      %v629 = vpop.f32.mrb[0].mxu0
      %v630 = vpop.f32.mrb[0].mxu0
      %v631 = vadd.f32 0.0, %v630
      %v632 = vpop.f32.mrb[0].mxu0
      %633 = vmatprep.mubr.bf16.mxu0 0
      %634 = vmatmul.mubr.bf16.gmra.mrb[0].mxu0 %v489
      %v635 = vpop.f32.mrb[0].mxu0
      %v636 = vadd.f32 0.0, %v635
      %v637 = vpop.f32.mrb[0].mxu0
      %v638 = vpop.f32.mrb[0].mxu0
      %v639 = vadd.f32 0.0, %v638
      %v640 = vpop.f32.mrb[0].mxu0
      %641 = vmatprep.mubr.bf16.mxu0 0
      %642 = vmatmul.mubr.bf16.gmra.mrb[0].mxu0 %v492
      %v643 = vpop.f32.mrb[0].mxu0
      %v644 = vadd.f32 0.0, %v643
      %v645 = vpop.f32.mrb[0].mxu0
      %v646 = vpop.f32.mrb[0].mxu0
      %v647 = vadd.f32 0.0, %v646
      %v648 = vpop.f32.mrb[0].mxu0
      %649 = vmatprep.mubr.bf16.mxu0 0
      %650 = vmatmul.mubr.bf16.gmra.mrb[0].mxu0 %v495
      %v651 = vpop.f32.mrb[0].mxu0
      %v652 = vadd.f32 0.0, %v651
      %v653 = vpop.f32.mrb[0].mxu0
      %v654 = vpop.f32.mrb[0].mxu0
      %v655 = vadd.f32 0.0, %v654
      %v656 = vpop.f32.mrb[0].mxu0
      %657 = vmatprep.mubr.bf16.mxu0 0
      %658 = vmatmul.mubr.bf16.gmra.mrb[0].mxu0 %v498
      %v659 = vpop.f32.mrb[0].mxu0
      %v660 = vadd.f32 0.0, %v659
      %v661 = vpop.f32.mrb[0].mxu0
      %v662 = vpop.f32.mrb[0].mxu0
      %v663 = vadd.f32 0.0, %v662
      %v664 = vpop.f32.mrb[0].mxu0
      %665 = vmatprep.mubr.bf16.mxu0 0
      %666 = vmatmul.mubr.bf16.gmra.mrb[0].mxu0 %v501
      %v667 = vpop.f32.mrb[0].mxu0
      %v668 = vadd.f32 0.0, %v667
      %v669 = vpop.f32.mrb[0].mxu0
      %v670 = vpop.f32.mrb[0].mxu0
      %v671 = vadd.f32 0.0, %v670
      %v672 = vpop.f32.mrb[0].mxu0
      %673 = vmatprep.mubr.bf16.mxu0 0
      %674 = vmatmul.mubr.bf16.gmra.mrb[0].mxu0 %v504
      %v675 = vpop.f32.mrb[0].mxu0
      %v676 = vadd.f32 0.0, %v675
      %v677 = vpop.f32.mrb[0].mxu0
      %v678 = vpop.f32.mrb[0].mxu0
      %v679 = vadd.f32 0.0, %v678
      %v680 = vpop.f32.mrb[0].mxu0
      %681 = vmatprep.mubr.bf16.mxu0 0
      %682 = vmatmul.mubr.bf16.gmra.mrb[0].mxu0 %v507
      %v683 = vpop.f32.mrb[0].mxu0
      %v684 = vadd.f32 0.0, %v683
      %v685 = vpop.f32.mrb[0].mxu0
      %v686 = vpop.f32.mrb[0].mxu0
      %v687 = vadd.f32 0.0, %v686
      %v688 = vpop.f32.mrb[0].mxu0
      %689 = vdwg.mxu0
      %v690 = vsel %vm454, %v286, 0
      %v692 = vsel %vm454, %v287, 0
      %v694 = vsel %vm454, %v288, 0
      %v696 = vsel %vm454, %v289, 0
      %v698 = vsel %vm454, %v290, 0
      %v700 = vsel %vm454, %v291, 0
      %v702 = vsel %vm454, %v292, 0
      %v704 = vsel %vm454, %v293, 0
      %v706 = vsel %vm454, %v294, 0
      %v708 = vsel %vm454, %v295, 0
      %v710 = vsel %vm454, %v296, 0
      %v712 = vsel %vm454, %v297, 0
      %v714 = vsel %vm454, %v298, 0
      %v716 = vsel %vm454, %v299, 0
      %v718 = vsel %vm454, %v300, 0
      %v720 = vsel %vm454, %v301, 0
      %v722 = vsel %vm454, %v302, 0
      %v724 = vsel %vm454, %v303, 0
      %v727 = vsel %vm509, %v208, 0
      %729 = vmatprep.subr.bf16.mxu0 0
      %730 = vmatpush1.bf16.msra.mxu0 %v727
      %731 = vmatprep.subr.bf16.mxu0 0
      %732 = vmatpush1.bf16.msra.mxu0 0
      %733 = vmatprep.subr.bf16.mxu0 0
      %734 = vmatpush1.bf16.msra.mxu0 0
      %735 = vmatprep.subr.bf16.mxu0 0
      %736 = vmatpush1.bf16.msra.mxu0 0
      %737 = vmatprep.subr.bf16.mxu0 0
      %738 = vmatpush1.bf16.msra.mxu0 0
      %739 = vmatprep.subr.bf16.mxu0 0
      %740 = vmatpush1.bf16.msra.mxu0 0
      %741 = vmatprep.subr.bf16.mxu0 0
      %742 = vmatpush1.bf16.msra.mxu0 0
      %743 = vmatprep.subr.bf16.mxu0 0
      %744 = vmatpush1.bf16.msra.mxu0 0
      %745 = vmatprep.subr.bf16.mxu0 0
      %746 = vmatpush1.bf16.msra.mxu0 0
      %747 = vmatprep.subr.bf16.mxu0 0
      %748 = vmatpush1.bf16.msra.mxu0 0
      %749 = vmatprep.subr.bf16.mxu0 0
      %750 = vmatpush1.bf16.msra.mxu0 0
      %751 = vmatprep.subr.bf16.mxu0 0
      %752 = vmatpush1.bf16.msra.mxu0 0
      %753 = vmatprep.subr.bf16.mxu0 0
      %754 = vmatpush1.bf16.msra.mxu0 0
      %755 = vmatprep.subr.bf16.mxu0 0
      %756 = vmatpush1.bf16.msra.mxu0 0
      %757 = vmatprep.subr.bf16.mxu0 0
      %758 = vmatpush1.bf16.msra.mxu0 0
      %759 = vmatprep.subr.bf16.mxu0 0
      %760 = vmatpush1.bf16.msra.mxu0 0
      %761 = vmatprep.mubr.bf16.mxu0 0
      %762 = vmatmul.mubr.bf16.gmra.mrb[0].mxu0 %v690
      %v763 = vpop.f32.mrb[0].mxu0
      %v764 = vadd.f32 %v548, %v763
      %v765 = vpop.f32.mrb[0].mxu0
      %v766 = vpop.f32.mrb[0].mxu0
      %v767 = vadd.f32 %v551, %v766
      %v768 = vpop.f32.mrb[0].mxu0
      %769 = vmatprep.mubr.bf16.mxu0 0
      %770 = vmatmul.mubr.bf16.gmra.mrb[0].mxu0 %v692
      %v771 = vpop.f32.mrb[0].mxu0
      %v772 = vadd.f32 %v556, %v771
      %v773 = vpop.f32.mrb[0].mxu0
      %v774 = vpop.f32.mrb[0].mxu0
      %v775 = vadd.f32 %v559, %v774
      %v776 = vpop.f32.mrb[0].mxu0
      %777 = vmatprep.mubr.bf16.mxu0 0
      %778 = vmatmul.mubr.bf16.gmra.mrb[0].mxu0 %v694
      %v779 = vpop.f32.mrb[0].mxu0
      %v780 = vadd.f32 %v564, %v779
      %v781 = vpop.f32.mrb[0].mxu0
      %v782 = vpop.f32.mrb[0].mxu0
      %v783 = vadd.f32 %v567, %v782
      %v784 = vpop.f32.mrb[0].mxu0
      %785 = vmatprep.mubr.bf16.mxu0 0
      %786 = vmatmul.mubr.bf16.gmra.mrb[0].mxu0 %v696
      %v787 = vpop.f32.mrb[0].mxu0
      %v788 = vadd.f32 %v572, %v787
      %v789 = vpop.f32.mrb[0].mxu0
      %v790 = vpop.f32.mrb[0].mxu0
      %v791 = vadd.f32 %v575, %v790
      %v792 = vpop.f32.mrb[0].mxu0
      %793 = vmatprep.mubr.bf16.mxu0 0
      %794 = vmatmul.mubr.bf16.gmra.mrb[0].mxu0 %v698
      %v795 = vpop.f32.mrb[0].mxu0
      %v796 = vadd.f32 %v580, %v795
      %v797 = vpop.f32.mrb[0].mxu0
      %v798 = vpop.f32.mrb[0].mxu0
      %v799 = vadd.f32 %v583, %v798
      %v800 = vpop.f32.mrb[0].mxu0
      %801 = vmatprep.mubr.bf16.mxu0 0
      %802 = vmatmul.mubr.bf16.gmra.mrb[0].mxu0 %v700
      %v803 = vpop.f32.mrb[0].mxu0
      %v804 = vadd.f32 %v588, %v803
      %v805 = vpop.f32.mrb[0].mxu0
      %v806 = vpop.f32.mrb[0].mxu0
      %v807 = vadd.f32 %v591, %v806
      %v808 = vpop.f32.mrb[0].mxu0
      %809 = vmatprep.mubr.bf16.mxu0 0
      %810 = vmatmul.mubr.bf16.gmra.mrb[0].mxu0 %v702
      %v811 = vpop.f32.mrb[0].mxu0
      %v812 = vadd.f32 %v596, %v811
      %v813 = vpop.f32.mrb[0].mxu0
      %v814 = vpop.f32.mrb[0].mxu0
      %v815 = vadd.f32 %v599, %v814
      %v816 = vpop.f32.mrb[0].mxu0
      %817 = vmatprep.mubr.bf16.mxu0 0
      %818 = vmatmul.mubr.bf16.gmra.mrb[0].mxu0 %v704
      %v819 = vpop.f32.mrb[0].mxu0
      %v820 = vadd.f32 %v604, %v819
      %v821 = vpop.f32.mrb[0].mxu0
      %v822 = vpop.f32.mrb[0].mxu0
      %v823 = vadd.f32 %v607, %v822
      %v824 = vpop.f32.mrb[0].mxu0
      %825 = vmatprep.mubr.bf16.mxu0 0
      %826 = vmatmul.mubr.bf16.gmra.mrb[0].mxu0 %v706
      %v827 = vpop.f32.mrb[0].mxu0
      %v828 = vadd.f32 %v612, %v827
      %v829 = vpop.f32.mrb[0].mxu0
      %v830 = vpop.f32.mrb[0].mxu0
      %v831 = vadd.f32 %v615, %v830
      %v832 = vpop.f32.mrb[0].mxu0
      %833 = vmatprep.mubr.bf16.mxu0 0
      %834 = vmatmul.mubr.bf16.gmra.mrb[0].mxu0 %v708
      %v835 = vpop.f32.mrb[0].mxu0
      %v836 = vadd.f32 %v620, %v835
      %v837 = vpop.f32.mrb[0].mxu0
      %v838 = vpop.f32.mrb[0].mxu0
      %v839 = vadd.f32 %v623, %v838
      %v840 = vpop.f32.mrb[0].mxu0
      %841 = vmatprep.mubr.bf16.mxu0 0
      %842 = vmatmul.mubr.bf16.gmra.mrb[0].mxu0 %v710
      %v843 = vpop.f32.mrb[0].mxu0
      %v844 = vadd.f32 %v628, %v843
      %v845 = vpop.f32.mrb[0].mxu0
      %v846 = vpop.f32.mrb[0].mxu0
      %v847 = vadd.f32 %v631, %v846
      %v848 = vpop.f32.mrb[0].mxu0
      %849 = vmatprep.mubr.bf16.mxu0 0
      %850 = vmatmul.mubr.bf16.gmra.mrb[0].mxu0 %v712
      %v851 = vpop.f32.mrb[0].mxu0
      %v852 = vadd.f32 %v636, %v851
      %v853 = vpop.f32.mrb[0].mxu0
      %v854 = vpop.f32.mrb[0].mxu0
      %v855 = vadd.f32 %v639, %v854
      %v856 = vpop.f32.mrb[0].mxu0
      %857 = vmatprep.mubr.bf16.mxu0 0
      %858 = vmatmul.mubr.bf16.gmra.mrb[0].mxu0 %v714
      %v859 = vpop.f32.mrb[0].mxu0
      %v860 = vadd.f32 %v644, %v859
      %v861 = vpop.f32.mrb[0].mxu0
      %v862 = vpop.f32.mrb[0].mxu0
      %v863 = vadd.f32 %v647, %v862
      %v864 = vpop.f32.mrb[0].mxu0
      %865 = vmatprep.mubr.bf16.mxu0 0
      %866 = vmatmul.mubr.bf16.gmra.mrb[0].mxu0 %v716
      %v867 = vpop.f32.mrb[0].mxu0
      %v868 = vadd.f32 %v652, %v867
      %v869 = vpop.f32.mrb[0].mxu0
      %v870 = vpop.f32.mrb[0].mxu0
      %v871 = vadd.f32 %v655, %v870
      %v872 = vpop.f32.mrb[0].mxu0
      %873 = vmatprep.mubr.bf16.mxu0 0
      %874 = vmatmul.mubr.bf16.gmra.mrb[0].mxu0 %v718
      %v875 = vpop.f32.mrb[0].mxu0
      %v876 = vadd.f32 %v660, %v875
      %v877 = vpop.f32.mrb[0].mxu0
      %v878 = vpop.f32.mrb[0].mxu0
      %v879 = vadd.f32 %v663, %v878
      %v880 = vpop.f32.mrb[0].mxu0
      %881 = vmatprep.mubr.bf16.mxu0 0
      %882 = vmatmul.mubr.bf16.gmra.mrb[0].mxu0 %v720
      %v883 = vpop.f32.mrb[0].mxu0
      %v884 = vadd.f32 %v668, %v883
      %v885 = vpop.f32.mrb[0].mxu0
      %v886 = vpop.f32.mrb[0].mxu0
      %v887 = vadd.f32 %v671, %v886
      %v888 = vpop.f32.mrb[0].mxu0
      %889 = vmatprep.mubr.bf16.mxu0 0
      %890 = vmatmul.mubr.bf16.gmra.mrb[0].mxu0 %v722
      %v891 = vpop.f32.mrb[0].mxu0
      %v892 = vadd.f32 %v676, %v891
      %v893 = vpop.f32.mrb[0].mxu0
      %v894 = vpop.f32.mrb[0].mxu0
      %v895 = vadd.f32 %v679, %v894
      %v896 = vpop.f32.mrb[0].mxu0
      %897 = vmatprep.mubr.bf16.mxu0 0
      %898 = vmatmul.mubr.bf16.gmra.mrb[0].mxu0 %v724
      %v899 = vpop.f32.mrb[0].mxu0
      %v900 = vadd.f32 %v684, %v899
      %v901 = vpop.f32.mrb[0].mxu0
      %v902 = vpop.f32.mrb[0].mxu0
      %v903 = vadd.f32 %v687, %v902
      %v904 = vpop.f32.mrb[0].mxu0
      %905 = vdwg.mxu0
      %v906 = vld [vmem:[%s165] sm:$0xe]
      %s907 = scalar_lea.vmem %s1, 4
      %v908 = vld [vmem:[%s907] sm:$0x3]
      %v910 = vunpack.c.l.b16 %v906
      %v911 = vpack.c.b16 %v250, %v910
      %vm912 = vcmask 1046528
      %v913 = vrot.slane %v911, 1
      %v914 = vrot.slane %v287, 1
      %v915 = vsel %vm912, %v913, %v914
      %v916 = vrot.slane %v288, 1
      %v917 = vsel %vm912, %v914, %v916
      %v918 = vrot.slane %v289, 1
      %v919 = vsel %vm912, %v916, %v918
      %v920 = vrot.slane %v290, 1
      %v921 = vsel %vm912, %v918, %v920
      %v922 = vrot.slane %v291, 1
      %v923 = vsel %vm912, %v920, %v922
      %v924 = vrot.slane %v292, 1
      %v925 = vsel %vm912, %v922, %v924
      %v926 = vrot.slane %v293, 1
      %v927 = vsel %vm912, %v924, %v926
      %v928 = vrot.slane %v294, 1
      %v929 = vsel %vm912, %v926, %v928
      %v930 = vrot.slane %v295, 1
      %v931 = vsel %vm912, %v928, %v930
      %v932 = vrot.slane %v296, 1
      %v933 = vsel %vm912, %v930, %v932
      %v934 = vrot.slane %v297, 1
      %v935 = vsel %vm912, %v932, %v934
      %v936 = vrot.slane %v298, 1
      %v937 = vsel %vm912, %v934, %v936
      %v938 = vrot.slane %v299, 1
      %v939 = vsel %vm912, %v936, %v938
      %v940 = vrot.slane %v300, 1
      %v941 = vsel %vm912, %v938, %v940
      %v942 = vrot.slane %v301, 1
      %v943 = vsel %vm912, %v940, %v942
      %v944 = vrot.slane %v302, 1
      %v945 = vsel %vm912, %v942, %v944
      %v946 = vrot.slane %v303, 1
      %v947 = vsel %vm912, %v944, %v946
      %v948 = vrot.slane %v304, 1
      %v949 = vsel %vm912, %v946, %v948
      %v951 = vsel %vm454, %v915, 0
      %v954 = vsel %vm454, %v917, 0
      %v957 = vsel %vm454, %v919, 0
      %v960 = vsel %vm454, %v921, 0
      %v963 = vsel %vm454, %v923, 0
      %v966 = vsel %vm454, %v925, 0
      %v969 = vsel %vm454, %v927, 0
      %v972 = vsel %vm454, %v929, 0
      %v975 = vsel %vm454, %v931, 0
      %v978 = vsel %vm454, %v933, 0
      %v981 = vsel %vm454, %v935, 0
      %v984 = vsel %vm454, %v937, 0
      %v987 = vsel %vm454, %v939, 0
      %v990 = vsel %vm454, %v941, 0
      %v993 = vsel %vm454, %v943, 0
      %v996 = vsel %vm454, %v945, 0
      %v999 = vsel %vm454, %v947, 0
      %v1002 = vsel %vm454, %v949, 0
      %v1005 = vsel %vm509, %v908, 0
      %1007 = vmatprep.subr.bf16.mxu0 0
      %1008 = vmatpush1.bf16.msra.mxu0 %v1005
      %1009 = vmatprep.subr.bf16.mxu0 0
      %1010 = vmatpush1.bf16.msra.mxu0 0
      %1011 = vmatprep.subr.bf16.mxu0 0
      %1012 = vmatpush1.bf16.msra.mxu0 0
      %1013 = vmatprep.subr.bf16.mxu0 0
      %1014 = vmatpush1.bf16.msra.mxu0 0
      %1015 = vmatprep.subr.bf16.mxu0 0
      %1016 = vmatpush1.bf16.msra.mxu0 0
      %1017 = vmatprep.subr.bf16.mxu0 0
      %1018 = vmatpush1.bf16.msra.mxu0 0
      %1019 = vmatprep.subr.bf16.mxu0 0
      %1020 = vmatpush1.bf16.msra.mxu0 0
      %1021 = vmatprep.subr.bf16.mxu0 0
      %1022 = vmatpush1.bf16.msra.mxu0 0
      %1023 = vmatprep.subr.bf16.mxu0 0
      %1024 = vmatpush1.bf16.msra.mxu0 0
      %1025 = vmatprep.subr.bf16.mxu0 0
      %1026 = vmatpush1.bf16.msra.mxu0 0
      %1027 = vmatprep.subr.bf16.mxu0 0
      %1028 = vmatpush1.bf16.msra.mxu0 0
      %1029 = vmatprep.subr.bf16.mxu0 0
      %1030 = vmatpush1.bf16.msra.mxu0 0
      %1031 = vmatprep.subr.bf16.mxu0 0
      %1032 = vmatpush1.bf16.msra.mxu0 0
      %1033 = vmatprep.subr.bf16.mxu0 0
      %1034 = vmatpush1.bf16.msra.mxu0 0
      %1035 = vmatprep.subr.bf16.mxu0 0
      %1036 = vmatpush1.bf16.msra.mxu0 0
      %1037 = vmatprep.subr.bf16.mxu0 0
      %1038 = vmatpush1.bf16.msra.mxu0 0
      %1039 = vmatprep.mubr.bf16.mxu0 0
      %1040 = vmatmul.mubr.bf16.gmra.mrb[0].mxu0 %v951
      %v1041 = vpop.f32.mrb[0].mxu0
      %v1042 = vadd.f32 0.0, %v1041
      %v1043 = vpop.f32.mrb[0].mxu0
      %v1044 = vpop.f32.mrb[0].mxu0
      %v1045 = vadd.f32 0.0, %v1044
      %v1046 = vpop.f32.mrb[0].mxu0
      %1047 = vmatprep.mubr.bf16.mxu0 0
      %1048 = vmatmul.mubr.bf16.gmra.mrb[0].mxu0 %v954
      %v1049 = vpop.f32.mrb[0].mxu0
      %v1050 = vadd.f32 0.0, %v1049
      %v1051 = vpop.f32.mrb[0].mxu0
      %v1052 = vpop.f32.mrb[0].mxu0
      %v1053 = vadd.f32 0.0, %v1052
      %v1054 = vpop.f32.mrb[0].mxu0
      %1055 = vmatprep.mubr.bf16.mxu0 0
      %1056 = vmatmul.mubr.bf16.gmra.mrb[0].mxu0 %v957
      %v1057 = vpop.f32.mrb[0].mxu0
      %v1058 = vadd.f32 0.0, %v1057
      %v1059 = vpop.f32.mrb[0].mxu0
      %v1060 = vpop.f32.mrb[0].mxu0
      %v1061 = vadd.f32 0.0, %v1060
      %v1062 = vpop.f32.mrb[0].mxu0
      %1063 = vmatprep.mubr.bf16.mxu0 0
      %1064 = vmatmul.mubr.bf16.gmra.mrb[0].mxu0 %v960
      %v1065 = vpop.f32.mrb[0].mxu0
      %v1066 = vadd.f32 0.0, %v1065
      %v1067 = vpop.f32.mrb[0].mxu0
      %v1068 = vpop.f32.mrb[0].mxu0
      %v1069 = vadd.f32 0.0, %v1068
      %v1070 = vpop.f32.mrb[0].mxu0
      %1071 = vmatprep.mubr.bf16.mxu0 0
      %1072 = vmatmul.mubr.bf16.gmra.mrb[0].mxu0 %v963
      %v1073 = vpop.f32.mrb[0].mxu0
      %v1074 = vadd.f32 0.0, %v1073
      %v1075 = vpop.f32.mrb[0].mxu0
      %v1076 = vpop.f32.mrb[0].mxu0
      %v1077 = vadd.f32 0.0, %v1076
      %v1078 = vpop.f32.mrb[0].mxu0
      %1079 = vmatprep.mubr.bf16.mxu0 0
      %1080 = vmatmul.mubr.bf16.gmra.mrb[0].mxu0 %v966
      %v1081 = vpop.f32.mrb[0].mxu0
      %v1082 = vadd.f32 0.0, %v1081
      %v1083 = vpop.f32.mrb[0].mxu0
      %v1084 = vpop.f32.mrb[0].mxu0
      %v1085 = vadd.f32 0.0, %v1084
      %v1086 = vpop.f32.mrb[0].mxu0
      %1087 = vmatprep.mubr.bf16.mxu0 0
      %1088 = vmatmul.mubr.bf16.gmra.mrb[0].mxu0 %v969
      %v1089 = vpop.f32.mrb[0].mxu0
      %v1090 = vadd.f32 0.0, %v1089
      %v1091 = vpop.f32.mrb[0].mxu0
      %v1092 = vpop.f32.mrb[0].mxu0
      %v1093 = vadd.f32 0.0, %v1092
      %v1094 = vpop.f32.mrb[0].mxu0
      %1095 = vmatprep.mubr.bf16.mxu0 0
      %1096 = vmatmul.mubr.bf16.gmra.mrb[0].mxu0 %v972
      %v1097 = vpop.f32.mrb[0].mxu0
      %v1098 = vadd.f32 0.0, %v1097
      %v1099 = vpop.f32.mrb[0].mxu0
      %v1100 = vpop.f32.mrb[0].mxu0
      %v1101 = vadd.f32 0.0, %v1100
      %v1102 = vpop.f32.mrb[0].mxu0
      %1103 = vmatprep.mubr.bf16.mxu0 0
      %1104 = vmatmul.mubr.bf16.gmra.mrb[0].mxu0 %v975
      %v1105 = vpop.f32.mrb[0].mxu0
      %v1106 = vadd.f32 0.0, %v1105
      %v1107 = vpop.f32.mrb[0].mxu0
      %v1108 = vpop.f32.mrb[0].mxu0
      %v1109 = vadd.f32 0.0, %v1108
      %v1110 = vpop.f32.mrb[0].mxu0
      %1111 = vmatprep.mubr.bf16.mxu0 0
      %1112 = vmatmul.mubr.bf16.gmra.mrb[0].mxu0 %v978
      %v1113 = vpop.f32.mrb[0].mxu0
      %v1114 = vadd.f32 0.0, %v1113
      %v1115 = vpop.f32.mrb[0].mxu0
      %v1116 = vpop.f32.mrb[0].mxu0
      %v1117 = vadd.f32 0.0, %v1116
      %v1118 = vpop.f32.mrb[0].mxu0
      %1119 = vmatprep.mubr.bf16.mxu0 0
      %1120 = vmatmul.mubr.bf16.gmra.mrb[0].mxu0 %v981
      %v1121 = vpop.f32.mrb[0].mxu0
      %v1122 = vadd.f32 0.0, %v1121
      %v1123 = vpop.f32.mrb[0].mxu0
      %v1124 = vpop.f32.mrb[0].mxu0
      %v1125 = vadd.f32 0.0, %v1124
      %v1126 = vpop.f32.mrb[0].mxu0
      %1127 = vmatprep.mubr.bf16.mxu0 0
      %1128 = vmatmul.mubr.bf16.gmra.mrb[0].mxu0 %v984
      %v1129 = vpop.f32.mrb[0].mxu0
      %v1130 = vadd.f32 0.0, %v1129
      %v1131 = vpop.f32.mrb[0].mxu0
      %v1132 = vpop.f32.mrb[0].mxu0
      %v1133 = vadd.f32 0.0, %v1132
      %v1134 = vpop.f32.mrb[0].mxu0
      %1135 = vmatprep.mubr.bf16.mxu0 0
      %1136 = vmatmul.mubr.bf16.gmra.mrb[0].mxu0 %v987
      %v1137 = vpop.f32.mrb[0].mxu0
      %v1138 = vadd.f32 0.0, %v1137
      %v1139 = vpop.f32.mrb[0].mxu0
      %v1140 = vpop.f32.mrb[0].mxu0
      %v1141 = vadd.f32 0.0, %v1140
      %v1142 = vpop.f32.mrb[0].mxu0
      %1143 = vmatprep.mubr.bf16.mxu0 0
      %1144 = vmatmul.mubr.bf16.gmra.mrb[0].mxu0 %v990
      %v1145 = vpop.f32.mrb[0].mxu0
      %v1146 = vadd.f32 0.0, %v1145
      %v1147 = vpop.f32.mrb[0].mxu0
      %v1148 = vpop.f32.mrb[0].mxu0
      %v1149 = vadd.f32 0.0, %v1148
      %v1150 = vpop.f32.mrb[0].mxu0
      %1151 = vmatprep.mubr.bf16.mxu0 0
      %1152 = vmatmul.mubr.bf16.gmra.mrb[0].mxu0 %v993
      %v1153 = vpop.f32.mrb[0].mxu0
      %v1154 = vadd.f32 0.0, %v1153
      %v1155 = vpop.f32.mrb[0].mxu0
      %v1156 = vpop.f32.mrb[0].mxu0
      %v1157 = vadd.f32 0.0, %v1156
      %v1158 = vpop.f32.mrb[0].mxu0
      %1159 = vmatprep.mubr.bf16.mxu0 0
      %1160 = vmatmul.mubr.bf16.gmra.mrb[0].mxu0 %v996
      %v1161 = vpop.f32.mrb[0].mxu0
      %v1162 = vadd.f32 0.0, %v1161
      %v1163 = vpop.f32.mrb[0].mxu0
      %v1164 = vpop.f32.mrb[0].mxu0
      %v1165 = vadd.f32 0.0, %v1164
      %v1166 = vpop.f32.mrb[0].mxu0
      %1167 = vmatprep.mubr.bf16.mxu0 0
      %1168 = vmatmul.mubr.bf16.gmra.mrb[0].mxu0 %v999
      %v1169 = vpop.f32.mrb[0].mxu0
      %v1170 = vadd.f32 0.0, %v1169
      %v1171 = vpop.f32.mrb[0].mxu0
      %v1172 = vpop.f32.mrb[0].mxu0
      %v1173 = vadd.f32 0.0, %v1172
      %v1174 = vpop.f32.mrb[0].mxu0
      %1175 = vmatprep.mubr.bf16.mxu0 0
      %1176 = vmatmul.mubr.bf16.gmra.mrb[0].mxu0 %v1002
      %v1177 = vpop.f32.mrb[0].mxu0
      %v1178 = vadd.f32 0.0, %v1177
      %v1179 = vpop.f32.mrb[0].mxu0
      %v1180 = vpop.f32.mrb[0].mxu0
      %v1181 = vadd.f32 0.0, %v1180
      %v1182 = vpop.f32.mrb[0].mxu0
      %1183 = vdwg.mxu0
      %v1184 = vadd.f32 %v764, %v1042
      %v1185 = vadd.f32 %v767, %v1045
      %v1186 = vadd.f32 %v772, %v1050
      %v1187 = vadd.f32 %v775, %v1053
      %v1188 = vadd.f32 %v780, %v1058
      %v1189 = vadd.f32 %v783, %v1061
      %v1190 = vadd.f32 %v788, %v1066
      %v1191 = vadd.f32 %v791, %v1069
      %v1192 = vadd.f32 %v796, %v1074
      %v1193 = vadd.f32 %v799, %v1077
      %v1194 = vadd.f32 %v804, %v1082
      %v1195 = vadd.f32 %v807, %v1085
      %v1196 = vadd.f32 %v812, %v1090
      %v1197 = vadd.f32 %v815, %v1093
      %v1198 = vadd.f32 %v820, %v1098
      %v1199 = vadd.f32 %v823, %v1101
      %v1200 = vadd.f32 %v828, %v1106
      %v1201 = vadd.f32 %v831, %v1109
      %v1202 = vadd.f32 %v836, %v1114
      %v1203 = vadd.f32 %v839, %v1117
      %v1204 = vadd.f32 %v844, %v1122
      %v1205 = vadd.f32 %v847, %v1125
      %v1206 = vadd.f32 %v852, %v1130
      %v1207 = vadd.f32 %v855, %v1133
      %v1208 = vadd.f32 %v860, %v1138
      %v1209 = vadd.f32 %v863, %v1141
      %v1210 = vadd.f32 %v868, %v1146
      %v1211 = vadd.f32 %v871, %v1149
      %v1212 = vadd.f32 %v876, %v1154
      %v1213 = vadd.f32 %v879, %v1157
      %v1214 = vadd.f32 %v884, %v1162
      %v1215 = vadd.f32 %v887, %v1165
      %v1216 = vadd.f32 %v892, %v1170
      %v1217 = vadd.f32 %v895, %v1173
      %v1218 = vadd.f32 %v900, %v1178
      %v1219 = vadd.f32 %v903, %v1181
      %v1220 = vld [vmem:[%s165 + $0x8] sm:$0xe]
      %v1221 = vld [vmem:[%s165 + $0xc] sm:$0xf]
      %v1222 = vld [vmem:[%s165 + $0x10] sm:$0xf]
      %v1223 = vld [vmem:[%s165 + $0x14] sm:$0xf]
      %v1224 = vld [vmem:[%s165 + $0x18] sm:$0xf]
      %v1225 = vld [vmem:[%s165 + $0x1c] sm:$0xf]
      %v1226 = vld [vmem:[%s165 + $0x20] sm:$0xf]
      %v1227 = vld [vmem:[%s165 + $0x24] sm:$0xf]
      %v1228 = vld [vmem:[%s165 + $0x28] sm:$0xf]
      %v1229 = vld [vmem:[%s165 + $0x2c] sm:$0xf]
      %v1230 = vld [vmem:[%s165 + $0x30] sm:$0xf]
      %v1231 = vld [vmem:[%s165 + $0x34] sm:$0xf]
      %v1232 = vld [vmem:[%s165 + $0x38] sm:$0xf]
      %v1233 = vld [vmem:[%s165 + $0x3c] sm:$0xf]
      %v1234 = vld [vmem:[%s165 + $0x40] sm:$0xf]
      %v1235 = vld [vmem:[%s165 + $0x44] sm:$0xf]
      %v1236 = vld [vmem:[%s165 + $0x48] sm:$0xf]
      %v1237 = vld [vmem:[%s165 + $0x4c] sm:$0xf]
      %v1238 = vld [vmem:[%s165 + $0x50] sm:$0xf]
      %v1239 = vld [vmem:[%s165 + $0x54] sm:$0xf]
      %v1240 = vld [vmem:[%s165 + $0x58] sm:$0xf]
      %v1241 = vld [vmem:[%s165 + $0x5c] sm:$0xf]
      %v1242 = vld [vmem:[%s165 + $0x60] sm:$0xf]
      %v1243 = vld [vmem:[%s165 + $0x64] sm:$0xf]
      %v1244 = vld [vmem:[%s165 + $0x68] sm:$0xf]
      %v1245 = vld [vmem:[%s165 + $0x6c] sm:$0xf]
      %v1246 = vld [vmem:[%s165 + $0x70] sm:$0xf]
      %v1247 = vld [vmem:[%s165 + $0x74] sm:$0xf]
      %v1248 = vld [vmem:[%s165 + $0x78] sm:$0xf]
      %v1249 = vld [vmem:[%s165 + $0x7c] sm:$0xf]
      %v1250 = vld [vmem:[%s165 + $0x80] sm:$0xf]
      %v1251 = vld [vmem:[%s165 + $0x84] sm:$0xf]
      %v1252 = vld [vmem:[%s165 + $0x88] sm:$0xf]
      %v1253 = vld [vmem:[%s165 + $0x8c] sm:$0xf]
      %v1254 = vld [vmem:[%s165 + $0x90] sm:$0xf]
      %v1255 = vld [vmem:[%s165 + $0x94] sm:$0xf]
      %v1256 = vld [vmem:[%s165 + $0x98] sm:$0x1]
      %s1257 = scalar_lea.vmem %s1, 6
      %v1258 = vld [vmem:[%s1257] sm:$0x3]
      %v1296 = vunpack.c.l.b16 %v1220
      %v1297 = vunpack.c.l.b16 %v1221
      %v1298 = vunpack.c.l.b16 %v1222
      %v1299 = vunpack.c.l.b16 %v1223
      %v1300 = vunpack.c.l.b16 %v1224
      %v1301 = vunpack.c.l.b16 %v1225
      %v1302 = vunpack.c.l.b16 %v1226
      %v1303 = vunpack.c.l.b16 %v1227
      %v1304 = vunpack.c.l.b16 %v1228
      %v1305 = vunpack.c.l.b16 %v1229
      %v1306 = vunpack.c.l.b16 %v1230
      %v1307 = vunpack.c.l.b16 %v1231
      %v1308 = vunpack.c.l.b16 %v1232
      %v1309 = vunpack.c.l.b16 %v1233
      %v1310 = vunpack.c.l.b16 %v1234
      %v1311 = vunpack.c.l.b16 %v1235
      %v1312 = vunpack.c.l.b16 %v1236
      %v1313 = vunpack.c.l.b16 %v1237
      %v1314 = vunpack.c.l.b16 %v1238
      %v1315 = vunpack.c.l.b16 %v1239
      %v1316 = vunpack.c.l.b16 %v1240
      %v1317 = vunpack.c.l.b16 %v1241
      %v1318 = vunpack.c.l.b16 %v1242
      %v1319 = vunpack.c.l.b16 %v1243
      %v1320 = vunpack.c.l.b16 %v1244
      %v1321 = vunpack.c.l.b16 %v1245
      %v1322 = vunpack.c.l.b16 %v1246
      %v1323 = vunpack.c.l.b16 %v1247
      %v1324 = vunpack.c.l.b16 %v1248
      %v1325 = vunpack.c.l.b16 %v1249
      %v1326 = vunpack.c.l.b16 %v1250
      %v1327 = vunpack.c.l.b16 %v1251
      %v1328 = vunpack.c.l.b16 %v1252
      %v1329 = vunpack.c.l.b16 %v1253
      %v1330 = vunpack.c.l.b16 %v1254
      %v1331 = vunpack.c.l.b16 %v1255
      %v1332 = vunpack.c.l.b16 %v1256
      %v1333 = vpack.c.b16 %v1297, %v1296
      %v1334 = vpack.c.b16 %v1299, %v1298
      %v1335 = vpack.c.b16 %v1301, %v1300
      %v1336 = vpack.c.b16 %v1303, %v1302
      %v1337 = vpack.c.b16 %v1305, %v1304
      %v1338 = vpack.c.b16 %v1307, %v1306
      %v1339 = vpack.c.b16 %v1309, %v1308
      %v1340 = vpack.c.b16 %v1311, %v1310
      %v1341 = vpack.c.b16 %v1313, %v1312
      %v1342 = vpack.c.b16 %v1315, %v1314
      %v1343 = vpack.c.b16 %v1317, %v1316
      %v1344 = vpack.c.b16 %v1319, %v1318
      %v1345 = vpack.c.b16 %v1321, %v1320
      %v1346 = vpack.c.b16 %v1323, %v1322
      %v1347 = vpack.c.b16 %v1325, %v1324
      %v1348 = vpack.c.b16 %v1327, %v1326
      %v1349 = vpack.c.b16 %v1329, %v1328
      %v1350 = vpack.c.b16 %v1331, %v1330
      %v1351 = vpack.c.b16 %v1332, %v1332
      %v1352 = vrot.slane %v1333, 1
      %v1353 = vrot.slane %v1334, 1
      %v1354 = vsel %vm912, %v1352, %v1353
      %v1355 = vrot.slane %v1335, 1
      %v1356 = vsel %vm912, %v1353, %v1355
      %v1357 = vrot.slane %v1336, 1
      %v1358 = vsel %vm912, %v1355, %v1357
      %v1359 = vrot.slane %v1337, 1
      %v1360 = vsel %vm912, %v1357, %v1359
      %v1361 = vrot.slane %v1338, 1
      %v1362 = vsel %vm912, %v1359, %v1361
      %v1363 = vrot.slane %v1339, 1
      %v1364 = vsel %vm912, %v1361, %v1363
      %v1365 = vrot.slane %v1340, 1
      %v1366 = vsel %vm912, %v1363, %v1365
      %v1367 = vrot.slane %v1341, 1
      %v1368 = vsel %vm912, %v1365, %v1367
      %v1369 = vrot.slane %v1342, 1
      %v1370 = vsel %vm912, %v1367, %v1369
      %v1371 = vrot.slane %v1343, 1
      %v1372 = vsel %vm912, %v1369, %v1371
      %v1373 = vrot.slane %v1344, 1
      %v1374 = vsel %vm912, %v1371, %v1373
      %v1375 = vrot.slane %v1345, 1
      %v1376 = vsel %vm912, %v1373, %v1375
      %v1377 = vrot.slane %v1346, 1
      %v1378 = vsel %vm912, %v1375, %v1377
      %v1379 = vrot.slane %v1347, 1
      %v1380 = vsel %vm912, %v1377, %v1379
      %v1381 = vrot.slane %v1348, 1
      %v1382 = vsel %vm912, %v1379, %v1381
      %v1383 = vrot.slane %v1349, 1
      %v1384 = vsel %vm912, %v1381, %v1383
      %v1385 = vrot.slane %v1350, 1
      %v1386 = vsel %vm912, %v1383, %v1385
      %v1387 = vrot.slane %v1351, 1
      %v1388 = vsel %vm912, %v1385, %v1387
      %v1390 = vsel %vm454, %v1354, 0
      %v1393 = vsel %vm454, %v1356, 0
      %v1396 = vsel %vm454, %v1358, 0
      %v1399 = vsel %vm454, %v1360, 0
      %v1402 = vsel %vm454, %v1362, 0
      %v1405 = vsel %vm454, %v1364, 0
      %v1408 = vsel %vm454, %v1366, 0
      %v1411 = vsel %vm454, %v1368, 0
      %v1414 = vsel %vm454, %v1370, 0
      %v1417 = vsel %vm454, %v1372, 0
      %v1420 = vsel %vm454, %v1374, 0
      %v1423 = vsel %vm454, %v1376, 0
      %v1426 = vsel %vm454, %v1378, 0
      %v1429 = vsel %vm454, %v1380, 0
      %v1432 = vsel %vm454, %v1382, 0
      %v1435 = vsel %vm454, %v1384, 0
      %v1438 = vsel %vm454, %v1386, 0
      %v1441 = vsel %vm454, %v1388, 0
      %v1444 = vsel %vm509, %v1258, 0
      %1446 = vmatprep.subr.bf16.mxu0 0
      %1447 = vmatpush1.bf16.msra.mxu0 %v1444
      %1448 = vmatprep.subr.bf16.mxu0 0
      %1449 = vmatpush1.bf16.msra.mxu0 0
      %1450 = vmatprep.subr.bf16.mxu0 0
      %1451 = vmatpush1.bf16.msra.mxu0 0
      %1452 = vmatprep.subr.bf16.mxu0 0
      %1453 = vmatpush1.bf16.msra.mxu0 0
      %1454 = vmatprep.subr.bf16.mxu0 0
      %1455 = vmatpush1.bf16.msra.mxu0 0
      %1456 = vmatprep.subr.bf16.mxu0 0
      %1457 = vmatpush1.bf16.msra.mxu0 0
      %1458 = vmatprep.subr.bf16.mxu0 0
      %1459 = vmatpush1.bf16.msra.mxu0 0
      %1460 = vmatprep.subr.bf16.mxu0 0
      %1461 = vmatpush1.bf16.msra.mxu0 0
      %1462 = vmatprep.subr.bf16.mxu0 0
      %1463 = vmatpush1.bf16.msra.mxu0 0
      %1464 = vmatprep.subr.bf16.mxu0 0
      %1465 = vmatpush1.bf16.msra.mxu0 0
      %1466 = vmatprep.subr.bf16.mxu0 0
      %1467 = vmatpush1.bf16.msra.mxu0 0
      %1468 = vmatprep.subr.bf16.mxu0 0
      %1469 = vmatpush1.bf16.msra.mxu0 0
      %1470 = vmatprep.subr.bf16.mxu0 0
      %1471 = vmatpush1.bf16.msra.mxu0 0
      %1472 = vmatprep.subr.bf16.mxu0 0
      %1473 = vmatpush1.bf16.msra.mxu0 0
      %1474 = vmatprep.subr.bf16.mxu0 0
      %1475 = vmatpush1.bf16.msra.mxu0 0
      %1476 = vmatprep.subr.bf16.mxu0 0
      %1477 = vmatpush1.bf16.msra.mxu0 0
      %1478 = vmatprep.mubr.bf16.mxu0 0
      %1479 = vmatmul.mubr.bf16.gmra.mrb[0].mxu0 %v1390
      %v1480 = vpop.f32.mrb[0].mxu0
      %v1481 = vadd.f32 0.0, %v1480
      %v1482 = vpop.f32.mrb[0].mxu0
      %v1483 = vpop.f32.mrb[0].mxu0
      %v1484 = vadd.f32 0.0, %v1483
      %v1485 = vpop.f32.mrb[0].mxu0
      %1486 = vmatprep.mubr.bf16.mxu0 0
      %1487 = vmatmul.mubr.bf16.gmra.mrb[0].mxu0 %v1393
      %v1488 = vpop.f32.mrb[0].mxu0
      %v1489 = vadd.f32 0.0, %v1488
      %v1490 = vpop.f32.mrb[0].mxu0
      %v1491 = vpop.f32.mrb[0].mxu0
      %v1492 = vadd.f32 0.0, %v1491
      %v1493 = vpop.f32.mrb[0].mxu0
      %1494 = vmatprep.mubr.bf16.mxu0 0
      %1495 = vmatmul.mubr.bf16.gmra.mrb[0].mxu0 %v1396
      %v1496 = vpop.f32.mrb[0].mxu0
      %v1497 = vadd.f32 0.0, %v1496
      %v1498 = vpop.f32.mrb[0].mxu0
      %v1499 = vpop.f32.mrb[0].mxu0
      %v1500 = vadd.f32 0.0, %v1499
      %v1501 = vpop.f32.mrb[0].mxu0
      %1502 = vmatprep.mubr.bf16.mxu0 0
      %1503 = vmatmul.mubr.bf16.gmra.mrb[0].mxu0 %v1399
      %v1504 = vpop.f32.mrb[0].mxu0
      %v1505 = vadd.f32 0.0, %v1504
      %v1506 = vpop.f32.mrb[0].mxu0
      %v1507 = vpop.f32.mrb[0].mxu0
      %v1508 = vadd.f32 0.0, %v1507
      %v1509 = vpop.f32.mrb[0].mxu0
      %1510 = vmatprep.mubr.bf16.mxu0 0
      %1511 = vmatmul.mubr.bf16.gmra.mrb[0].mxu0 %v1402
      %v1512 = vpop.f32.mrb[0].mxu0
      %v1513 = vadd.f32 0.0, %v1512
      %v1514 = vpop.f32.mrb[0].mxu0
      %v1515 = vpop.f32.mrb[0].mxu0
      %v1516 = vadd.f32 0.0, %v1515
      %v1517 = vpop.f32.mrb[0].mxu0
      %1518 = vmatprep.mubr.bf16.mxu0 0
      %1519 = vmatmul.mubr.bf16.gmra.mrb[0].mxu0 %v1405
      %v1520 = vpop.f32.mrb[0].mxu0
      %v1521 = vadd.f32 0.0, %v1520
      %v1522 = vpop.f32.mrb[0].mxu0
      %v1523 = vpop.f32.mrb[0].mxu0
      %v1524 = vadd.f32 0.0, %v1523
      %v1525 = vpop.f32.mrb[0].mxu0
      %1526 = vmatprep.mubr.bf16.mxu0 0
      %1527 = vmatmul.mubr.bf16.gmra.mrb[0].mxu0 %v1408
      %v1528 = vpop.f32.mrb[0].mxu0
      %v1529 = vadd.f32 0.0, %v1528
      %v1530 = vpop.f32.mrb[0].mxu0
      %v1531 = vpop.f32.mrb[0].mxu0
      %v1532 = vadd.f32 0.0, %v1531
      %v1533 = vpop.f32.mrb[0].mxu0
      %1534 = vmatprep.mubr.bf16.mxu0 0
      %1535 = vmatmul.mubr.bf16.gmra.mrb[0].mxu0 %v1411
      %v1536 = vpop.f32.mrb[0].mxu0
      %v1537 = vadd.f32 0.0, %v1536
      %v1538 = vpop.f32.mrb[0].mxu0
      %v1539 = vpop.f32.mrb[0].mxu0
      %v1540 = vadd.f32 0.0, %v1539
      %v1541 = vpop.f32.mrb[0].mxu0
      %1542 = vmatprep.mubr.bf16.mxu0 0
      %1543 = vmatmul.mubr.bf16.gmra.mrb[0].mxu0 %v1414
      %v1544 = vpop.f32.mrb[0].mxu0
      %v1545 = vadd.f32 0.0, %v1544
      %v1546 = vpop.f32.mrb[0].mxu0
      %v1547 = vpop.f32.mrb[0].mxu0
      %v1548 = vadd.f32 0.0, %v1547
      %v1549 = vpop.f32.mrb[0].mxu0
      %1550 = vmatprep.mubr.bf16.mxu0 0
      %1551 = vmatmul.mubr.bf16.gmra.mrb[0].mxu0 %v1417
      %v1552 = vpop.f32.mrb[0].mxu0
      %v1553 = vadd.f32 0.0, %v1552
      %v1554 = vpop.f32.mrb[0].mxu0
      %v1555 = vpop.f32.mrb[0].mxu0
      %v1556 = vadd.f32 0.0, %v1555
      %v1557 = vpop.f32.mrb[0].mxu0
      %1558 = vmatprep.mubr.bf16.mxu0 0
      %1559 = vmatmul.mubr.bf16.gmra.mrb[0].mxu0 %v1420
      %v1560 = vpop.f32.mrb[0].mxu0
      %v1561 = vadd.f32 0.0, %v1560
      %v1562 = vpop.f32.mrb[0].mxu0
      %v1563 = vpop.f32.mrb[0].mxu0
      %v1564 = vadd.f32 0.0, %v1563
      %v1565 = vpop.f32.mrb[0].mxu0
      %1566 = vmatprep.mubr.bf16.mxu0 0
      %1567 = vmatmul.mubr.bf16.gmra.mrb[0].mxu0 %v1423
      %v1568 = vpop.f32.mrb[0].mxu0
      %v1569 = vadd.f32 0.0, %v1568
      %v1570 = vpop.f32.mrb[0].mxu0
      %v1571 = vpop.f32.mrb[0].mxu0
      %v1572 = vadd.f32 0.0, %v1571
      %v1573 = vpop.f32.mrb[0].mxu0
      %1574 = vmatprep.mubr.bf16.mxu0 0
      %1575 = vmatmul.mubr.bf16.gmra.mrb[0].mxu0 %v1426
      %v1576 = vpop.f32.mrb[0].mxu0
      %v1577 = vadd.f32 0.0, %v1576
      %v1578 = vpop.f32.mrb[0].mxu0
      %v1579 = vpop.f32.mrb[0].mxu0
      %v1580 = vadd.f32 0.0, %v1579
      %v1581 = vpop.f32.mrb[0].mxu0
      %1582 = vmatprep.mubr.bf16.mxu0 0
      %1583 = vmatmul.mubr.bf16.gmra.mrb[0].mxu0 %v1429
      %v1584 = vpop.f32.mrb[0].mxu0
      %v1585 = vadd.f32 0.0, %v1584
      %v1586 = vpop.f32.mrb[0].mxu0
      %v1587 = vpop.f32.mrb[0].mxu0
      %v1588 = vadd.f32 0.0, %v1587
      %v1589 = vpop.f32.mrb[0].mxu0
      %1590 = vmatprep.mubr.bf16.mxu0 0
      %1591 = vmatmul.mubr.bf16.gmra.mrb[0].mxu0 %v1432
      %v1592 = vpop.f32.mrb[0].mxu0
      %v1593 = vadd.f32 0.0, %v1592
      %v1594 = vpop.f32.mrb[0].mxu0
      %v1595 = vpop.f32.mrb[0].mxu0
      %v1596 = vadd.f32 0.0, %v1595
      %v1597 = vpop.f32.mrb[0].mxu0
      %1598 = vmatprep.mubr.bf16.mxu0 0
      %1599 = vmatmul.mubr.bf16.gmra.mrb[0].mxu0 %v1435
      %v1600 = vpop.f32.mrb[0].mxu0
      %v1601 = vadd.f32 0.0, %v1600
      %v1602 = vpop.f32.mrb[0].mxu0
      %v1603 = vpop.f32.mrb[0].mxu0
      %v1604 = vadd.f32 0.0, %v1603
      %v1605 = vpop.f32.mrb[0].mxu0
      %1606 = vmatprep.mubr.bf16.mxu0 0
      %1607 = vmatmul.mubr.bf16.gmra.mrb[0].mxu0 %v1438
      %v1608 = vpop.f32.mrb[0].mxu0
      %v1609 = vadd.f32 0.0, %v1608
      %v1610 = vpop.f32.mrb[0].mxu0
      %v1611 = vpop.f32.mrb[0].mxu0
      %v1612 = vadd.f32 0.0, %v1611
      %v1613 = vpop.f32.mrb[0].mxu0
      %1614 = vmatprep.mubr.bf16.mxu0 0
      %1615 = vmatmul.mubr.bf16.gmra.mrb[0].mxu0 %v1441
      %v1616 = vpop.f32.mrb[0].mxu0
      %v1617 = vadd.f32 0.0, %v1616
      %v1618 = vpop.f32.mrb[0].mxu0
      %v1619 = vpop.f32.mrb[0].mxu0
      %v1620 = vadd.f32 0.0, %v1619
      %v1621 = vpop.f32.mrb[0].mxu0
      %1622 = vdwg.mxu0
      %v1623 = vadd.f32 %v1184, %v1481
      %v1624 = vadd.f32 %v1185, %v1484
      %v1625 = vadd.f32 %v1186, %v1489
      %v1626 = vadd.f32 %v1187, %v1492
      %v1627 = vadd.f32 %v1188, %v1497
      %v1628 = vadd.f32 %v1189, %v1500
      %v1629 = vadd.f32 %v1190, %v1505
      %v1630 = vadd.f32 %v1191, %v1508
      %v1631 = vadd.f32 %v1192, %v1513
      %v1632 = vadd.f32 %v1193, %v1516
      %v1633 = vadd.f32 %v1194, %v1521
      %v1634 = vadd.f32 %v1195, %v1524
      %v1635 = vadd.f32 %v1196, %v1529
      %v1636 = vadd.f32 %v1197, %v1532
      %v1637 = vadd.f32 %v1198, %v1537
      %v1638 = vadd.f32 %v1199, %v1540
      %v1639 = vadd.f32 %v1200, %v1545
      %v1640 = vadd.f32 %v1201, %v1548
      %v1641 = vadd.f32 %v1202, %v1553
      %v1642 = vadd.f32 %v1203, %v1556
      %v1643 = vadd.f32 %v1204, %v1561
      %v1644 = vadd.f32 %v1205, %v1564
      %v1645 = vadd.f32 %v1206, %v1569
      %v1646 = vadd.f32 %v1207, %v1572
      %v1647 = vadd.f32 %v1208, %v1577
      %v1648 = vadd.f32 %v1209, %v1580
      %v1649 = vadd.f32 %v1210, %v1585
      %v1650 = vadd.f32 %v1211, %v1588
      %v1651 = vadd.f32 %v1212, %v1593
      %v1652 = vadd.f32 %v1213, %v1596
      %v1653 = vadd.f32 %v1214, %v1601
      %v1654 = vadd.f32 %v1215, %v1604
      %v1655 = vadd.f32 %v1216, %v1609
      %v1656 = vadd.f32 %v1217, %v1612
      %v1657 = vadd.f32 %v1218, %v1617
      %v1658 = vadd.f32 %v1219, %v1620
      %v1659 = vld [vmem:[%s165 + $0x98] sm:$0x3]
      %s1660 = scalar_lea.vmem %s1, 8
      %v1661 = vld [vmem:[%s1660] sm:$0x3]
      %v1663 = vunpack.c.l.b16 %v1659
      %v1664 = vpack.c.b16 %v1663, %v1663
      %vm1665 = vsmask.f32 6400
      %v1667 = vshrl.u32 %v1333, 16
      %v1669 = vrot.slane %v1667, 1
      %v1670 = vshll.u32 %v1333, 16
      %v1672 = vrot.slane %v1670, 2
      %v1673 = vor.u32 %v1669, %v1672
      %v1675 = vshrl.u32 %v1334, 16
      %v1677 = vrot.slane %v1675, 1
      %v1678 = vshll.u32 %v1334, 16
      %v1680 = vrot.slane %v1678, 2
      %v1681 = vor.u32 %v1677, %v1680
      %v1682 = vsel %vm1665, %v1673, %v1681
      %v1684 = vshrl.u32 %v1335, 16
      %v1686 = vrot.slane %v1684, 1
      %v1687 = vshll.u32 %v1335, 16
      %v1689 = vrot.slane %v1687, 2
      %v1690 = vor.u32 %v1686, %v1689
      %v1691 = vsel %vm1665, %v1681, %v1690
      %v1693 = vshrl.u32 %v1336, 16
      %v1695 = vrot.slane %v1693, 1
      %v1696 = vshll.u32 %v1336, 16
      %v1698 = vrot.slane %v1696, 2
      %v1699 = vor.u32 %v1695, %v1698
      %v1700 = vsel %vm1665, %v1690, %v1699
      %v1702 = vshrl.u32 %v1337, 16
      %v1704 = vrot.slane %v1702, 1
      %v1705 = vshll.u32 %v1337, 16
      %v1707 = vrot.slane %v1705, 2
      %v1708 = vor.u32 %v1704, %v1707
      %v1709 = vsel %vm1665, %v1699, %v1708
      %v1711 = vshrl.u32 %v1338, 16
      %v1713 = vrot.slane %v1711, 1
      %v1714 = vshll.u32 %v1338, 16
      %v1716 = vrot.slane %v1714, 2
      %v1717 = vor.u32 %v1713, %v1716
      %v1718 = vsel %vm1665, %v1708, %v1717
      %v1720 = vshrl.u32 %v1339, 16
      %v1722 = vrot.slane %v1720, 1
      %v1723 = vshll.u32 %v1339, 16
      %v1725 = vrot.slane %v1723, 2
      %v1726 = vor.u32 %v1722, %v1725
      %v1727 = vsel %vm1665, %v1717, %v1726
      %v1729 = vshrl.u32 %v1340, 16
      %v1731 = vrot.slane %v1729, 1
      %v1732 = vshll.u32 %v1340, 16
      %v1734 = vrot.slane %v1732, 2
      %v1735 = vor.u32 %v1731, %v1734
      %v1736 = vsel %vm1665, %v1726, %v1735
      %v1738 = vshrl.u32 %v1341, 16
      %v1740 = vrot.slane %v1738, 1
      %v1741 = vshll.u32 %v1341, 16
      %v1743 = vrot.slane %v1741, 2
      %v1744 = vor.u32 %v1740, %v1743
      %v1745 = vsel %vm1665, %v1735, %v1744
      %v1747 = vshrl.u32 %v1342, 16
      %v1749 = vrot.slane %v1747, 1
      %v1750 = vshll.u32 %v1342, 16
      %v1752 = vrot.slane %v1750, 2
      %v1753 = vor.u32 %v1749, %v1752
      %v1754 = vsel %vm1665, %v1744, %v1753
      %v1756 = vshrl.u32 %v1343, 16
      %v1758 = vrot.slane %v1756, 1
      %v1759 = vshll.u32 %v1343, 16
      %v1761 = vrot.slane %v1759, 2
      %v1762 = vor.u32 %v1758, %v1761
      %v1763 = vsel %vm1665, %v1753, %v1762
      %v1765 = vshrl.u32 %v1344, 16
      %v1767 = vrot.slane %v1765, 1
      %v1768 = vshll.u32 %v1344, 16
      %v1770 = vrot.slane %v1768, 2
      %v1771 = vor.u32 %v1767, %v1770
      %v1772 = vsel %vm1665, %v1762, %v1771
      %v1774 = vshrl.u32 %v1345, 16
      %v1776 = vrot.slane %v1774, 1
      %v1777 = vshll.u32 %v1345, 16
      %v1779 = vrot.slane %v1777, 2
      %v1780 = vor.u32 %v1776, %v1779
      %v1781 = vsel %vm1665, %v1771, %v1780
      %v1783 = vshrl.u32 %v1346, 16
      %v1785 = vrot.slane %v1783, 1
      %v1786 = vshll.u32 %v1346, 16
      %v1788 = vrot.slane %v1786, 2
      %v1789 = vor.u32 %v1785, %v1788
      %v1790 = vsel %vm1665, %v1780, %v1789
      %v1792 = vshrl.u32 %v1347, 16
      %v1794 = vrot.slane %v1792, 1
      %v1795 = vshll.u32 %v1347, 16
      %v1797 = vrot.slane %v1795, 2
      %v1798 = vor.u32 %v1794, %v1797
      %v1799 = vsel %vm1665, %v1789, %v1798
      %v1801 = vshrl.u32 %v1348, 16
      %v1803 = vrot.slane %v1801, 1
      %v1804 = vshll.u32 %v1348, 16
      %v1806 = vrot.slane %v1804, 2
      %v1807 = vor.u32 %v1803, %v1806
      %v1808 = vsel %vm1665, %v1798, %v1807
      %v1810 = vshrl.u32 %v1349, 16
      %v1812 = vrot.slane %v1810, 1
      %v1813 = vshll.u32 %v1349, 16
      %v1815 = vrot.slane %v1813, 2
      %v1816 = vor.u32 %v1812, %v1815
      %v1817 = vsel %vm1665, %v1807, %v1816
      %v1819 = vshrl.u32 %v1350, 16
      %v1821 = vrot.slane %v1819, 1
      %v1822 = vshll.u32 %v1350, 16
      %v1824 = vrot.slane %v1822, 2
      %v1825 = vor.u32 %v1821, %v1824
      %v1826 = vsel %vm1665, %v1816, %v1825
      %v1828 = vshrl.u32 %v1664, 16
      %v1830 = vrot.slane %v1828, 1
      %v1831 = vshll.u32 %v1664, 16
      %v1833 = vrot.slane %v1831, 2
      %v1834 = vor.u32 %v1830, %v1833
      %v1835 = vsel %vm1665, %v1825, %v1834
      %v1837 = vsel %vm454, %v1682, 0
      %v1840 = vsel %vm454, %v1691, 0
      %v1843 = vsel %vm454, %v1700, 0
      %v1846 = vsel %vm454, %v1709, 0
      %v1849 = vsel %vm454, %v1718, 0
      %v1852 = vsel %vm454, %v1727, 0
      %v1855 = vsel %vm454, %v1736, 0
      %v1858 = vsel %vm454, %v1745, 0
      %v1861 = vsel %vm454, %v1754, 0
      %v1864 = vsel %vm454, %v1763, 0
      %v1867 = vsel %vm454, %v1772, 0
      %v1870 = vsel %vm454, %v1781, 0
      %v1873 = vsel %vm454, %v1790, 0
      %v1876 = vsel %vm454, %v1799, 0
      %v1879 = vsel %vm454, %v1808, 0
      %v1882 = vsel %vm454, %v1817, 0
      %v1885 = vsel %vm454, %v1826, 0
      %v1888 = vsel %vm454, %v1835, 0
      %v1891 = vsel %vm509, %v1661, 0
      %1893 = vmatprep.subr.bf16.mxu0 0
      %1894 = vmatpush1.bf16.msra.mxu0 %v1891
      %1895 = vmatprep.subr.bf16.mxu0 0
      %1896 = vmatpush1.bf16.msra.mxu0 0
      %1897 = vmatprep.subr.bf16.mxu0 0
      %1898 = vmatpush1.bf16.msra.mxu0 0
      %1899 = vmatprep.subr.bf16.mxu0 0
      %1900 = vmatpush1.bf16.msra.mxu0 0
      %1901 = vmatprep.subr.bf16.mxu0 0
      %1902 = vmatpush1.bf16.msra.mxu0 0
      %1903 = vmatprep.subr.bf16.mxu0 0
      %1904 = vmatpush1.bf16.msra.mxu0 0
      %1905 = vmatprep.subr.bf16.mxu0 0
      %1906 = vmatpush1.bf16.msra.mxu0 0
      %1907 = vmatprep.subr.bf16.mxu0 0
      %1908 = vmatpush1.bf16.msra.mxu0 0
      %1909 = vmatprep.subr.bf16.mxu0 0
      %1910 = vmatpush1.bf16.msra.mxu0 0
      %1911 = vmatprep.subr.bf16.mxu0 0
      %1912 = vmatpush1.bf16.msra.mxu0 0
      %1913 = vmatprep.subr.bf16.mxu0 0
      %1914 = vmatpush1.bf16.msra.mxu0 0
      %1915 = vmatprep.subr.bf16.mxu0 0
      %1916 = vmatpush1.bf16.msra.mxu0 0
      %1917 = vmatprep.subr.bf16.mxu0 0
      %1918 = vmatpush1.bf16.msra.mxu0 0
      %1919 = vmatprep.subr.bf16.mxu0 0
      %1920 = vmatpush1.bf16.msra.mxu0 0
      %1921 = vmatprep.subr.bf16.mxu0 0
      %1922 = vmatpush1.bf16.msra.mxu0 0
      %1923 = vmatprep.subr.bf16.mxu0 0
      %1924 = vmatpush1.bf16.msra.mxu0 0
      %1925 = vmatprep.mubr.bf16.mxu0 0
      %1926 = vmatmul.mubr.bf16.gmra.mrb[0].mxu0 %v1837
      %v1927 = vpop.f32.mrb[0].mxu0
      %v1928 = vadd.f32 0.0, %v1927
      %v1929 = vpop.f32.mrb[0].mxu0
      %v1930 = vpop.f32.mrb[0].mxu0
      %v1931 = vadd.f32 0.0, %v1930
      %v1932 = vpop.f32.mrb[0].mxu0
      %1933 = vmatprep.mubr.bf16.mxu0 0
      %1934 = vmatmul.mubr.bf16.gmra.mrb[0].mxu0 %v1840
      %v1935 = vpop.f32.mrb[0].mxu0
      %v1936 = vadd.f32 0.0, %v1935
      %v1937 = vpop.f32.mrb[0].mxu0
      %v1938 = vpop.f32.mrb[0].mxu0
      %v1939 = vadd.f32 0.0, %v1938
      %v1940 = vpop.f32.mrb[0].mxu0
      %1941 = vmatprep.mubr.bf16.mxu0 0
      %1942 = vmatmul.mubr.bf16.gmra.mrb[0].mxu0 %v1843
      %v1943 = vpop.f32.mrb[0].mxu0
      %v1944 = vadd.f32 0.0, %v1943
      %v1945 = vpop.f32.mrb[0].mxu0
      %v1946 = vpop.f32.mrb[0].mxu0
      %v1947 = vadd.f32 0.0, %v1946
      %v1948 = vpop.f32.mrb[0].mxu0
      %1949 = vmatprep.mubr.bf16.mxu0 0
      %1950 = vmatmul.mubr.bf16.gmra.mrb[0].mxu0 %v1846
      %v1951 = vpop.f32.mrb[0].mxu0
      %v1952 = vadd.f32 0.0, %v1951
      %v1953 = vpop.f32.mrb[0].mxu0
      %v1954 = vpop.f32.mrb[0].mxu0
      %v1955 = vadd.f32 0.0, %v1954
      %v1956 = vpop.f32.mrb[0].mxu0
      %1957 = vmatprep.mubr.bf16.mxu0 0
      %1958 = vmatmul.mubr.bf16.gmra.mrb[0].mxu0 %v1849
      %v1959 = vpop.f32.mrb[0].mxu0
      %v1960 = vadd.f32 0.0, %v1959
      %v1961 = vpop.f32.mrb[0].mxu0
      %v1962 = vpop.f32.mrb[0].mxu0
      %v1963 = vadd.f32 0.0, %v1962
      %v1964 = vpop.f32.mrb[0].mxu0
      %1965 = vmatprep.mubr.bf16.mxu0 0
      %1966 = vmatmul.mubr.bf16.gmra.mrb[0].mxu0 %v1852
      %v1967 = vpop.f32.mrb[0].mxu0
      %v1968 = vadd.f32 0.0, %v1967
      %v1969 = vpop.f32.mrb[0].mxu0
      %v1970 = vpop.f32.mrb[0].mxu0
      %v1971 = vadd.f32 0.0, %v1970
      %v1972 = vpop.f32.mrb[0].mxu0
      %1973 = vmatprep.mubr.bf16.mxu0 0
      %1974 = vmatmul.mubr.bf16.gmra.mrb[0].mxu0 %v1855
      %v1975 = vpop.f32.mrb[0].mxu0
      %v1976 = vadd.f32 0.0, %v1975
      %v1977 = vpop.f32.mrb[0].mxu0
      %v1978 = vpop.f32.mrb[0].mxu0
      %v1979 = vadd.f32 0.0, %v1978
      %v1980 = vpop.f32.mrb[0].mxu0
      %1981 = vmatprep.mubr.bf16.mxu0 0
      %1982 = vmatmul.mubr.bf16.gmra.mrb[0].mxu0 %v1858
      %v1983 = vpop.f32.mrb[0].mxu0
      %v1984 = vadd.f32 0.0, %v1983
      %v1985 = vpop.f32.mrb[0].mxu0
      %v1986 = vpop.f32.mrb[0].mxu0
      %v1987 = vadd.f32 0.0, %v1986
      %v1988 = vpop.f32.mrb[0].mxu0
      %1989 = vmatprep.mubr.bf16.mxu0 0
      %1990 = vmatmul.mubr.bf16.gmra.mrb[0].mxu0 %v1861
      %v1991 = vpop.f32.mrb[0].mxu0
      %v1992 = vadd.f32 0.0, %v1991
      %v1993 = vpop.f32.mrb[0].mxu0
      %v1994 = vpop.f32.mrb[0].mxu0
      %v1995 = vadd.f32 0.0, %v1994
      %v1996 = vpop.f32.mrb[0].mxu0
      %1997 = vmatprep.mubr.bf16.mxu0 0
      %1998 = vmatmul.mubr.bf16.gmra.mrb[0].mxu0 %v1864
      %v1999 = vpop.f32.mrb[0].mxu0
      %v2000 = vadd.f32 0.0, %v1999
      %v2001 = vpop.f32.mrb[0].mxu0
      %v2002 = vpop.f32.mrb[0].mxu0
      %v2003 = vadd.f32 0.0, %v2002
      %v2004 = vpop.f32.mrb[0].mxu0
      %2005 = vmatprep.mubr.bf16.mxu0 0
      %2006 = vmatmul.mubr.bf16.gmra.mrb[0].mxu0 %v1867
      %v2007 = vpop.f32.mrb[0].mxu0
      %v2008 = vadd.f32 0.0, %v2007
      %v2009 = vpop.f32.mrb[0].mxu0
      %v2010 = vpop.f32.mrb[0].mxu0
      %v2011 = vadd.f32 0.0, %v2010
      %v2012 = vpop.f32.mrb[0].mxu0
      %2013 = vmatprep.mubr.bf16.mxu0 0
      %2014 = vmatmul.mubr.bf16.gmra.mrb[0].mxu0 %v1870
      %v2015 = vpop.f32.mrb[0].mxu0
      %v2016 = vadd.f32 0.0, %v2015
      %v2017 = vpop.f32.mrb[0].mxu0
      %v2018 = vpop.f32.mrb[0].mxu0
      %v2019 = vadd.f32 0.0, %v2018
      %v2020 = vpop.f32.mrb[0].mxu0
      %2021 = vmatprep.mubr.bf16.mxu0 0
      %2022 = vmatmul.mubr.bf16.gmra.mrb[0].mxu0 %v1873
      %v2023 = vpop.f32.mrb[0].mxu0
      %v2024 = vadd.f32 0.0, %v2023
      %v2025 = vpop.f32.mrb[0].mxu0
      %v2026 = vpop.f32.mrb[0].mxu0
      %v2027 = vadd.f32 0.0, %v2026
      %v2028 = vpop.f32.mrb[0].mxu0
      %2029 = vmatprep.mubr.bf16.mxu0 0
      %2030 = vmatmul.mubr.bf16.gmra.mrb[0].mxu0 %v1876
      %v2031 = vpop.f32.mrb[0].mxu0
      %v2032 = vadd.f32 0.0, %v2031
      %v2033 = vpop.f32.mrb[0].mxu0
      %v2034 = vpop.f32.mrb[0].mxu0
      %v2035 = vadd.f32 0.0, %v2034
      %v2036 = vpop.f32.mrb[0].mxu0
      %2037 = vmatprep.mubr.bf16.mxu0 0
      %2038 = vmatmul.mubr.bf16.gmra.mrb[0].mxu0 %v1879
      %v2039 = vpop.f32.mrb[0].mxu0
      %v2040 = vadd.f32 0.0, %v2039
      %v2041 = vpop.f32.mrb[0].mxu0
      %v2042 = vpop.f32.mrb[0].mxu0
      %v2043 = vadd.f32 0.0, %v2042
      %v2044 = vpop.f32.mrb[0].mxu0
      %2045 = vmatprep.mubr.bf16.mxu0 0
      %2046 = vmatmul.mubr.bf16.gmra.mrb[0].mxu0 %v1882
      %v2047 = vpop.f32.mrb[0].mxu0
      %v2048 = vadd.f32 0.0, %v2047
      %v2049 = vpop.f32.mrb[0].mxu0
      %v2050 = vpop.f32.mrb[0].mxu0
      %v2051 = vadd.f32 0.0, %v2050
      %v2052 = vpop.f32.mrb[0].mxu0
      %2053 = vmatprep.mubr.bf16.mxu0 0
      %2054 = vmatmul.mubr.bf16.gmra.mrb[0].mxu0 %v1885
      %v2055 = vpop.f32.mrb[0].mxu0
      %v2056 = vadd.f32 0.0, %v2055
      %v2057 = vpop.f32.mrb[0].mxu0
      %v2058 = vpop.f32.mrb[0].mxu0
      %v2059 = vadd.f32 0.0, %v2058
      %v2060 = vpop.f32.mrb[0].mxu0
      %2061 = vmatprep.mubr.bf16.mxu0 0
      %2062 = vmatmul.mubr.bf16.gmra.mrb[0].mxu0 %v1888
      %v2063 = vpop.f32.mrb[0].mxu0
      %v2064 = vadd.f32 0.0, %v2063
      %v2065 = vpop.f32.mrb[0].mxu0
      %v2066 = vpop.f32.mrb[0].mxu0
      %v2067 = vadd.f32 0.0, %v2066
      %v2068 = vpop.f32.mrb[0].mxu0
      %2069 = vdwg.mxu0
      %v2070 = vadd.f32 %v1623, %v1928
      %v2071 = vadd.f32 %v1624, %v1931
      %v2072 = vadd.f32 %v1625, %v1936
      %v2073 = vadd.f32 %v1626, %v1939
      %v2074 = vadd.f32 %v1627, %v1944
      %v2075 = vadd.f32 %v1628, %v1947
      %v2076 = vadd.f32 %v1629, %v1952
      %v2077 = vadd.f32 %v1630, %v1955
      %v2078 = vadd.f32 %v1631, %v1960
      %v2079 = vadd.f32 %v1632, %v1963
      %v2080 = vadd.f32 %v1633, %v1968
      %v2081 = vadd.f32 %v1634, %v1971
      %v2082 = vadd.f32 %v1635, %v1976
      %v2083 = vadd.f32 %v1636, %v1979
      %v2084 = vadd.f32 %v1637, %v1984
      %v2085 = vadd.f32 %v1638, %v1987
      %v2086 = vadd.f32 %v1639, %v1992
      %v2087 = vadd.f32 %v1640, %v1995
      %v2088 = vadd.f32 %v1641, %v2000
      %v2089 = vadd.f32 %v1642, %v2003
      %v2090 = vadd.f32 %v1643, %v2008
      %v2091 = vadd.f32 %v1644, %v2011
      %v2092 = vadd.f32 %v1645, %v2016
      %v2093 = vadd.f32 %v1646, %v2019
      %v2094 = vadd.f32 %v1647, %v2024
      %v2095 = vadd.f32 %v1648, %v2027
      %v2096 = vadd.f32 %v1649, %v2032
      %v2097 = vadd.f32 %v1650, %v2035
      %v2098 = vadd.f32 %v1651, %v2040
      %v2099 = vadd.f32 %v1652, %v2043
      %v2100 = vadd.f32 %v1653, %v2048
      %v2101 = vadd.f32 %v1654, %v2051
      %v2102 = vadd.f32 %v1655, %v2056
      %v2103 = vadd.f32 %v1656, %v2059
      %v2104 = vadd.f32 %v1657, %v2064
      %v2105 = vadd.f32 %v1658, %v2067
      %v2106 = vld [vmem:[%s165 + $0x8] sm:$0xc]
      %s2107 = scalar_lea.vmem %s1, 10
      %v2108 = vld [vmem:[%s2107] sm:$0x3]
      %v2110 = vunpack.c.l.b16 %v2106
      %v2111 = vpack.c.b16 %v1297, %v2110
      %vm2112 = vcmask 1045504
      %v2113 = vrot.slane %v2111, 2
      %v2114 = vrot.slane %v1334, 2
      %v2115 = vsel %vm2112, %v2113, %v2114
      %v2116 = vrot.slane %v1335, 2
      %v2117 = vsel %vm2112, %v2114, %v2116
      %v2118 = vrot.slane %v1336, 2
      %v2119 = vsel %vm2112, %v2116, %v2118
      %v2120 = vrot.slane %v1337, 2
      %v2121 = vsel %vm2112, %v2118, %v2120
      %v2122 = vrot.slane %v1338, 2
      %v2123 = vsel %vm2112, %v2120, %v2122
      %v2124 = vrot.slane %v1339, 2
      %v2125 = vsel %vm2112, %v2122, %v2124
      %v2126 = vrot.slane %v1340, 2
      %v2127 = vsel %vm2112, %v2124, %v2126
      %v2128 = vrot.slane %v1341, 2
      %v2129 = vsel %vm2112, %v2126, %v2128
      %v2130 = vrot.slane %v1342, 2
      %v2131 = vsel %vm2112, %v2128, %v2130
      %v2132 = vrot.slane %v1343, 2
      %v2133 = vsel %vm2112, %v2130, %v2132
      %v2134 = vrot.slane %v1344, 2
      %v2135 = vsel %vm2112, %v2132, %v2134
      %v2136 = vrot.slane %v1345, 2
      %v2137 = vsel %vm2112, %v2134, %v2136
      %v2138 = vrot.slane %v1346, 2
      %v2139 = vsel %vm2112, %v2136, %v2138
      %v2140 = vrot.slane %v1347, 2
      %v2141 = vsel %vm2112, %v2138, %v2140
      %v2142 = vrot.slane %v1348, 2
      %v2143 = vsel %vm2112, %v2140, %v2142
      %v2144 = vrot.slane %v1349, 2
      %v2145 = vsel %vm2112, %v2142, %v2144
      %v2146 = vrot.slane %v1350, 2
      %v2147 = vsel %vm2112, %v2144, %v2146
      %v2148 = vrot.slane %v1664, 2
      %v2149 = vsel %vm2112, %v2146, %v2148
      %v2151 = vsel %vm454, %v2115, 0
      %v2154 = vsel %vm454, %v2117, 0
      %v2157 = vsel %vm454, %v2119, 0
      %v2160 = vsel %vm454, %v2121, 0
      %v2163 = vsel %vm454, %v2123, 0
      %v2166 = vsel %vm454, %v2125, 0
      %v2169 = vsel %vm454, %v2127, 0
      %v2172 = vsel %vm454, %v2129, 0
      %v2175 = vsel %vm454, %v2131, 0
      %v2178 = vsel %vm454, %v2133, 0
      %v2181 = vsel %vm454, %v2135, 0
      %v2184 = vsel %vm454, %v2137, 0
      %v2187 = vsel %vm454, %v2139, 0
      %v2190 = vsel %vm454, %v2141, 0
      %v2193 = vsel %vm454, %v2143, 0
      %v2196 = vsel %vm454, %v2145, 0
      %v2199 = vsel %vm454, %v2147, 0
      %v2202 = vsel %vm454, %v2149, 0
      %v2205 = vsel %vm509, %v2108, 0
      %2207 = vmatprep.subr.bf16.mxu0 0
      %2208 = vmatpush1.bf16.msra.mxu0 %v2205
      %2209 = vmatprep.subr.bf16.mxu0 0
      %2210 = vmatpush1.bf16.msra.mxu0 0
      %2211 = vmatprep.subr.bf16.mxu0 0
      %2212 = vmatpush1.bf16.msra.mxu0 0
      %2213 = vmatprep.subr.bf16.mxu0 0
      %2214 = vmatpush1.bf16.msra.mxu0 0
      %2215 = vmatprep.subr.bf16.mxu0 0
      %2216 = vmatpush1.bf16.msra.mxu0 0
      %2217 = vmatprep.subr.bf16.mxu0 0
      %2218 = vmatpush1.bf16.msra.mxu0 0
      %2219 = vmatprep.subr.bf16.mxu0 0
      %2220 = vmatpush1.bf16.msra.mxu0 0
      %2221 = vmatprep.subr.bf16.mxu0 0
      %2222 = vmatpush1.bf16.msra.mxu0 0
      %2223 = vmatprep.subr.bf16.mxu0 0
      %2224 = vmatpush1.bf16.msra.mxu0 0
      %2225 = vmatprep.subr.bf16.mxu0 0
      %2226 = vmatpush1.bf16.msra.mxu0 0
      %2227 = vmatprep.subr.bf16.mxu0 0
      %2228 = vmatpush1.bf16.msra.mxu0 0
      %2229 = vmatprep.subr.bf16.mxu0 0
      %2230 = vmatpush1.bf16.msra.mxu0 0
      %2231 = vmatprep.subr.bf16.mxu0 0
      %2232 = vmatpush1.bf16.msra.mxu0 0
      %2233 = vmatprep.subr.bf16.mxu0 0
      %2234 = vmatpush1.bf16.msra.mxu0 0
      %2235 = vmatprep.subr.bf16.mxu0 0
      %2236 = vmatpush1.bf16.msra.mxu0 0
      %2237 = vmatprep.subr.bf16.mxu0 0
      %2238 = vmatpush1.bf16.msra.mxu0 0
      %2239 = vmatprep.mubr.bf16.mxu0 0
      %2240 = vmatmul.mubr.bf16.gmra.mrb[0].mxu0 %v2151
      %v2241 = vpop.f32.mrb[0].mxu0
      %v2242 = vadd.f32 0.0, %v2241
      %v2243 = vpop.f32.mrb[0].mxu0
      %v2244 = vpop.f32.mrb[0].mxu0
      %v2245 = vadd.f32 0.0, %v2244
      %v2246 = vpop.f32.mrb[0].mxu0
      %2247 = vmatprep.mubr.bf16.mxu0 0
      %2248 = vmatmul.mubr.bf16.gmra.mrb[0].mxu0 %v2154
      %v2249 = vpop.f32.mrb[0].mxu0
      %v2250 = vadd.f32 0.0, %v2249
      %v2251 = vpop.f32.mrb[0].mxu0
      %v2252 = vpop.f32.mrb[0].mxu0
      %v2253 = vadd.f32 0.0, %v2252
      %v2254 = vpop.f32.mrb[0].mxu0
      %2255 = vmatprep.mubr.bf16.mxu0 0
      %2256 = vmatmul.mubr.bf16.gmra.mrb[0].mxu0 %v2157
      %v2257 = vpop.f32.mrb[0].mxu0
      %v2258 = vadd.f32 0.0, %v2257
      %v2259 = vpop.f32.mrb[0].mxu0
      %v2260 = vpop.f32.mrb[0].mxu0
      %v2261 = vadd.f32 0.0, %v2260
      %v2262 = vpop.f32.mrb[0].mxu0
      %2263 = vmatprep.mubr.bf16.mxu0 0
      %2264 = vmatmul.mubr.bf16.gmra.mrb[0].mxu0 %v2160
      %v2265 = vpop.f32.mrb[0].mxu0
      %v2266 = vadd.f32 0.0, %v2265
      %v2267 = vpop.f32.mrb[0].mxu0
      %v2268 = vpop.f32.mrb[0].mxu0
      %v2269 = vadd.f32 0.0, %v2268
      %v2270 = vpop.f32.mrb[0].mxu0
      %2271 = vmatprep.mubr.bf16.mxu0 0
      %2272 = vmatmul.mubr.bf16.gmra.mrb[0].mxu0 %v2163
      %v2273 = vpop.f32.mrb[0].mxu0
      %v2274 = vadd.f32 0.0, %v2273
      %v2275 = vpop.f32.mrb[0].mxu0
      %v2276 = vpop.f32.mrb[0].mxu0
      %v2277 = vadd.f32 0.0, %v2276
      %v2278 = vpop.f32.mrb[0].mxu0
      %2279 = vmatprep.mubr.bf16.mxu0 0
      %2280 = vmatmul.mubr.bf16.gmra.mrb[0].mxu0 %v2166
      %v2281 = vpop.f32.mrb[0].mxu0
      %v2282 = vadd.f32 0.0, %v2281
      %v2283 = vpop.f32.mrb[0].mxu0
      %v2284 = vpop.f32.mrb[0].mxu0
      %v2285 = vadd.f32 0.0, %v2284
      %v2286 = vpop.f32.mrb[0].mxu0
      %2287 = vmatprep.mubr.bf16.mxu0 0
      %2288 = vmatmul.mubr.bf16.gmra.mrb[0].mxu0 %v2169
      %v2289 = vpop.f32.mrb[0].mxu0
      %v2290 = vadd.f32 0.0, %v2289
      %v2291 = vpop.f32.mrb[0].mxu0
      %v2292 = vpop.f32.mrb[0].mxu0
      %v2293 = vadd.f32 0.0, %v2292
      %v2294 = vpop.f32.mrb[0].mxu0
      %2295 = vmatprep.mubr.bf16.mxu0 0
      %2296 = vmatmul.mubr.bf16.gmra.mrb[0].mxu0 %v2172
      %v2297 = vpop.f32.mrb[0].mxu0
      %v2298 = vadd.f32 0.0, %v2297
      %v2299 = vpop.f32.mrb[0].mxu0
      %v2300 = vpop.f32.mrb[0].mxu0
      %v2301 = vadd.f32 0.0, %v2300
      %v2302 = vpop.f32.mrb[0].mxu0
      %2303 = vmatprep.mubr.bf16.mxu0 0
      %2304 = vmatmul.mubr.bf16.gmra.mrb[0].mxu0 %v2175
      %v2305 = vpop.f32.mrb[0].mxu0
      %v2306 = vadd.f32 0.0, %v2305
      %v2307 = vpop.f32.mrb[0].mxu0
      %v2308 = vpop.f32.mrb[0].mxu0
      %v2309 = vadd.f32 0.0, %v2308
      %v2310 = vpop.f32.mrb[0].mxu0
      %2311 = vmatprep.mubr.bf16.mxu0 0
      %2312 = vmatmul.mubr.bf16.gmra.mrb[0].mxu0 %v2178
      %v2313 = vpop.f32.mrb[0].mxu0
      %v2314 = vadd.f32 0.0, %v2313
      %v2315 = vpop.f32.mrb[0].mxu0
      %v2316 = vpop.f32.mrb[0].mxu0
      %v2317 = vadd.f32 0.0, %v2316
      %v2318 = vpop.f32.mrb[0].mxu0
      %2319 = vmatprep.mubr.bf16.mxu0 0
      %2320 = vmatmul.mubr.bf16.gmra.mrb[0].mxu0 %v2181
      %v2321 = vpop.f32.mrb[0].mxu0
      %v2322 = vadd.f32 0.0, %v2321
      %v2323 = vpop.f32.mrb[0].mxu0
      %v2324 = vpop.f32.mrb[0].mxu0
      %v2325 = vadd.f32 0.0, %v2324
      %v2326 = vpop.f32.mrb[0].mxu0
      %2327 = vmatprep.mubr.bf16.mxu0 0
      %2328 = vmatmul.mubr.bf16.gmra.mrb[0].mxu0 %v2184
      %v2329 = vpop.f32.mrb[0].mxu0
      %v2330 = vadd.f32 0.0, %v2329
      %v2331 = vpop.f32.mrb[0].mxu0
      %v2332 = vpop.f32.mrb[0].mxu0
      %v2333 = vadd.f32 0.0, %v2332
      %v2334 = vpop.f32.mrb[0].mxu0
      %2335 = vmatprep.mubr.bf16.mxu0 0
      %2336 = vmatmul.mubr.bf16.gmra.mrb[0].mxu0 %v2187
      %v2337 = vpop.f32.mrb[0].mxu0
      %v2338 = vadd.f32 0.0, %v2337
      %v2339 = vpop.f32.mrb[0].mxu0
      %v2340 = vpop.f32.mrb[0].mxu0
      %v2341 = vadd.f32 0.0, %v2340
      %v2342 = vpop.f32.mrb[0].mxu0
      %2343 = vmatprep.mubr.bf16.mxu0 0
      %2344 = vmatmul.mubr.bf16.gmra.mrb[0].mxu0 %v2190
      %v2345 = vpop.f32.mrb[0].mxu0
      %v2346 = vadd.f32 0.0, %v2345
      %v2347 = vpop.f32.mrb[0].mxu0
      %v2348 = vpop.f32.mrb[0].mxu0
      %v2349 = vadd.f32 0.0, %v2348
      %v2350 = vpop.f32.mrb[0].mxu0
      %2351 = vmatprep.mubr.bf16.mxu0 0
      %2352 = vmatmul.mubr.bf16.gmra.mrb[0].mxu0 %v2193
      %v2353 = vpop.f32.mrb[0].mxu0
      %v2354 = vadd.f32 0.0, %v2353
      %v2355 = vpop.f32.mrb[0].mxu0
      %v2356 = vpop.f32.mrb[0].mxu0
      %v2357 = vadd.f32 0.0, %v2356
      %v2358 = vpop.f32.mrb[0].mxu0
      %2359 = vmatprep.mubr.bf16.mxu0 0
      %2360 = vmatmul.mubr.bf16.gmra.mrb[0].mxu0 %v2196
      %v2361 = vpop.f32.mrb[0].mxu0
      %v2362 = vadd.f32 0.0, %v2361
      %v2363 = vpop.f32.mrb[0].mxu0
      %v2364 = vpop.f32.mrb[0].mxu0
      %v2365 = vadd.f32 0.0, %v2364
      %v2366 = vpop.f32.mrb[0].mxu0
      %2367 = vmatprep.mubr.bf16.mxu0 0
      %2368 = vmatmul.mubr.bf16.gmra.mrb[0].mxu0 %v2199
      %v2369 = vpop.f32.mrb[0].mxu0
      %v2370 = vadd.f32 0.0, %v2369
      %v2371 = vpop.f32.mrb[0].mxu0
      %v2372 = vpop.f32.mrb[0].mxu0
      %v2373 = vadd.f32 0.0, %v2372
      %v2374 = vpop.f32.mrb[0].mxu0
      %2375 = vmatprep.mubr.bf16.mxu0 0
      %2376 = vmatmul.mubr.bf16.gmra.mrb[0].mxu0 %v2202
      %v2377 = vpop.f32.mrb[0].mxu0
      %v2378 = vadd.f32 0.0, %v2377
      %v2379 = vpop.f32.mrb[0].mxu0
      %v2380 = vpop.f32.mrb[0].mxu0
      %v2381 = vadd.f32 0.0, %v2380
      %v2382 = vpop.f32.mrb[0].mxu0
      %2383 = vdwg.mxu0
      %v2384 = vadd.f32 %v2070, %v2242
      %v2385 = vadd.f32 %v2071, %v2245
      %v2386 = vadd.f32 %v2072, %v2250
      %v2387 = vadd.f32 %v2073, %v2253
      %v2388 = vadd.f32 %v2074, %v2258
      %v2389 = vadd.f32 %v2075, %v2261
      %v2390 = vadd.f32 %v2076, %v2266
      %v2391 = vadd.f32 %v2077, %v2269
      %v2392 = vadd.f32 %v2078, %v2274
      %v2393 = vadd.f32 %v2079, %v2277
      %v2394 = vadd.f32 %v2080, %v2282
      %v2395 = vadd.f32 %v2081, %v2285
      %v2396 = vadd.f32 %v2082, %v2290
      %v2397 = vadd.f32 %v2083, %v2293
      %v2398 = vadd.f32 %v2084, %v2298
      %v2399 = vadd.f32 %v2085, %v2301
      %v2400 = vadd.f32 %v2086, %v2306
      %v2401 = vadd.f32 %v2087, %v2309
      %v2402 = vadd.f32 %v2088, %v2314
      %v2403 = vadd.f32 %v2089, %v2317
      %v2404 = vadd.f32 %v2090, %v2322
      %v2405 = vadd.f32 %v2091, %v2325
      %v2406 = vadd.f32 %v2092, %v2330
      %v2407 = vadd.f32 %v2093, %v2333
      %v2408 = vadd.f32 %v2094, %v2338
      %v2409 = vadd.f32 %v2095, %v2341
      %v2410 = vadd.f32 %v2096, %v2346
      %v2411 = vadd.f32 %v2097, %v2349
      %v2412 = vadd.f32 %v2098, %v2354
      %v2413 = vadd.f32 %v2099, %v2357
      %v2414 = vadd.f32 %v2100, %v2362
      %v2415 = vadd.f32 %v2101, %v2365
      %v2416 = vadd.f32 %v2102, %v2370
      %v2417 = vadd.f32 %v2103, %v2373
      %v2418 = vadd.f32 %v2104, %v2378
      %v2419 = vadd.f32 %v2105, %v2381
      %v2420 = vld [vmem:[%s165 + $0x10] sm:$0xc]
      %v2421 = vld [vmem:[%s165 + $0x14] sm:$0xf]
      %v2422 = vld [vmem:[%s165 + $0x18] sm:$0xf]
      %v2423 = vld [vmem:[%s165 + $0x1c] sm:$0xf]
      %v2424 = vld [vmem:[%s165 + $0x20] sm:$0xf]
      %v2425 = vld [vmem:[%s165 + $0x24] sm:$0xf]
      %v2426 = vld [vmem:[%s165 + $0x28] sm:$0xf]
      %v2427 = vld [vmem:[%s165 + $0x2c] sm:$0xf]
      %v2428 = vld [vmem:[%s165 + $0x30] sm:$0xf]
      %v2429 = vld [vmem:[%s165 + $0x34] sm:$0xf]
      %v2430 = vld [vmem:[%s165 + $0x38] sm:$0xf]
      %v2431 = vld [vmem:[%s165 + $0x3c] sm:$0xf]
      %v2432 = vld [vmem:[%s165 + $0x40] sm:$0xf]
      %v2433 = vld [vmem:[%s165 + $0x44] sm:$0xf]
      %v2434 = vld [vmem:[%s165 + $0x48] sm:$0xf]
      %v2435 = vld [vmem:[%s165 + $0x4c] sm:$0xf]
      %v2436 = vld [vmem:[%s165 + $0x50] sm:$0xf]
      %v2437 = vld [vmem:[%s165 + $0x54] sm:$0xf]
      %v2438 = vld [vmem:[%s165 + $0x58] sm:$0xf]
      %v2439 = vld [vmem:[%s165 + $0x5c] sm:$0xf]
      %v2440 = vld [vmem:[%s165 + $0x60] sm:$0xf]
      %v2441 = vld [vmem:[%s165 + $0x64] sm:$0xf]
      %v2442 = vld [vmem:[%s165 + $0x68] sm:$0xf]
      %v2443 = vld [vmem:[%s165 + $0x6c] sm:$0xf]
      %v2444 = vld [vmem:[%s165 + $0x70] sm:$0xf]
      %v2445 = vld [vmem:[%s165 + $0x74] sm:$0xf]
      %v2446 = vld [vmem:[%s165 + $0x78] sm:$0xf]
      %v2447 = vld [vmem:[%s165 + $0x7c] sm:$0xf]
      %v2448 = vld [vmem:[%s165 + $0x80] sm:$0xf]
      %v2449 = vld [vmem:[%s165 + $0x84] sm:$0xf]
      %v2450 = vld [vmem:[%s165 + $0x88] sm:$0xf]
      %v2451 = vld [vmem:[%s165 + $0x8c] sm:$0xf]
      %v2452 = vld [vmem:[%s165 + $0x90] sm:$0xf]
      %v2453 = vld [vmem:[%s165 + $0x94] sm:$0xf]
      %v2454 = vld [vmem:[%s165 + $0x98] sm:$0xf]
      %v2455 = vld [vmem:[%s165 + $0x9c] sm:$0xf]
      %v2456 = vld [vmem:[%s165 + $0xa0] sm:$0x3]
      %s2457 = scalar_lea.vmem %s1, 12
      %v2458 = vld [vmem:[%s2457] sm:$0x3]
      %v2496 = vunpack.c.l.b16 %v2420
      %v2497 = vunpack.c.l.b16 %v2421
      %v2498 = vunpack.c.l.b16 %v2422
      %v2499 = vunpack.c.l.b16 %v2423
      %v2500 = vunpack.c.l.b16 %v2424
      %v2501 = vunpack.c.l.b16 %v2425
      %v2502 = vunpack.c.l.b16 %v2426
      %v2503 = vunpack.c.l.b16 %v2427
      %v2504 = vunpack.c.l.b16 %v2428
      %v2505 = vunpack.c.l.b16 %v2429
      %v2506 = vunpack.c.l.b16 %v2430
      %v2507 = vunpack.c.l.b16 %v2431
      %v2508 = vunpack.c.l.b16 %v2432
      %v2509 = vunpack.c.l.b16 %v2433
      %v2510 = vunpack.c.l.b16 %v2434
      %v2511 = vunpack.c.l.b16 %v2435
      %v2512 = vunpack.c.l.b16 %v2436
      %v2513 = vunpack.c.l.b16 %v2437
      %v2514 = vunpack.c.l.b16 %v2438
      %v2515 = vunpack.c.l.b16 %v2439
      %v2516 = vunpack.c.l.b16 %v2440
      %v2517 = vunpack.c.l.b16 %v2441
      %v2518 = vunpack.c.l.b16 %v2442
      %v2519 = vunpack.c.l.b16 %v2443
      %v2520 = vunpack.c.l.b16 %v2444
      %v2521 = vunpack.c.l.b16 %v2445
      %v2522 = vunpack.c.l.b16 %v2446
      %v2523 = vunpack.c.l.b16 %v2447
      %v2524 = vunpack.c.l.b16 %v2448
      %v2525 = vunpack.c.l.b16 %v2449
      %v2526 = vunpack.c.l.b16 %v2450
      %v2527 = vunpack.c.l.b16 %v2451
      %v2528 = vunpack.c.l.b16 %v2452
      %v2529 = vunpack.c.l.b16 %v2453
      %v2530 = vunpack.c.l.b16 %v2454
      %v2531 = vunpack.c.l.b16 %v2455
      %v2532 = vunpack.c.l.b16 %v2456
      %v2533 = vpack.c.b16 %v2497, %v2496
      %v2534 = vpack.c.b16 %v2499, %v2498
      %v2535 = vpack.c.b16 %v2501, %v2500
      %v2536 = vpack.c.b16 %v2503, %v2502
      %v2537 = vpack.c.b16 %v2505, %v2504
      %v2538 = vpack.c.b16 %v2507, %v2506
      %v2539 = vpack.c.b16 %v2509, %v2508
      %v2540 = vpack.c.b16 %v2511, %v2510
      %v2541 = vpack.c.b16 %v2513, %v2512
      %v2542 = vpack.c.b16 %v2515, %v2514
      %v2543 = vpack.c.b16 %v2517, %v2516
      %v2544 = vpack.c.b16 %v2519, %v2518
      %v2545 = vpack.c.b16 %v2521, %v2520
      %v2546 = vpack.c.b16 %v2523, %v2522
      %v2547 = vpack.c.b16 %v2525, %v2524
      %v2548 = vpack.c.b16 %v2527, %v2526
      %v2549 = vpack.c.b16 %v2529, %v2528
      %v2550 = vpack.c.b16 %v2531, %v2530
      %v2551 = vpack.c.b16 %v2532, %v2532
      %v2552 = vrot.slane %v2533, 2
      %v2553 = vrot.slane %v2534, 2
      %v2554 = vsel %vm2112, %v2552, %v2553
      %v2555 = vrot.slane %v2535, 2
      %v2556 = vsel %vm2112, %v2553, %v2555
      %v2557 = vrot.slane %v2536, 2
      %v2558 = vsel %vm2112, %v2555, %v2557
      %v2559 = vrot.slane %v2537, 2
      %v2560 = vsel %vm2112, %v2557, %v2559
      %v2561 = vrot.slane %v2538, 2
      %v2562 = vsel %vm2112, %v2559, %v2561
      %v2563 = vrot.slane %v2539, 2
      %v2564 = vsel %vm2112, %v2561, %v2563
      %v2565 = vrot.slane %v2540, 2
      %v2566 = vsel %vm2112, %v2563, %v2565
      %v2567 = vrot.slane %v2541, 2
      %v2568 = vsel %vm2112, %v2565, %v2567
      %v2569 = vrot.slane %v2542, 2
      %v2570 = vsel %vm2112, %v2567, %v2569
      %v2571 = vrot.slane %v2543, 2
      %v2572 = vsel %vm2112, %v2569, %v2571
      %v2573 = vrot.slane %v2544, 2
      %v2574 = vsel %vm2112, %v2571, %v2573
      %v2575 = vrot.slane %v2545, 2
      %v2576 = vsel %vm2112, %v2573, %v2575
      %v2577 = vrot.slane %v2546, 2
      %v2578 = vsel %vm2112, %v2575, %v2577
      %v2579 = vrot.slane %v2547, 2
      %v2580 = vsel %vm2112, %v2577, %v2579
      %v2581 = vrot.slane %v2548, 2
      %v2582 = vsel %vm2112, %v2579, %v2581
      %v2583 = vrot.slane %v2549, 2
      %v2584 = vsel %vm2112, %v2581, %v2583
      %v2585 = vrot.slane %v2550, 2
      %v2586 = vsel %vm2112, %v2583, %v2585
      %v2587 = vrot.slane %v2551, 2
      %v2588 = vsel %vm2112, %v2585, %v2587
      %v2590 = vsel %vm454, %v2554, 0
      %v2593 = vsel %vm454, %v2556, 0
      %v2596 = vsel %vm454, %v2558, 0
      %v2599 = vsel %vm454, %v2560, 0
      %v2602 = vsel %vm454, %v2562, 0
      %v2605 = vsel %vm454, %v2564, 0
      %v2608 = vsel %vm454, %v2566, 0
      %v2611 = vsel %vm454, %v2568, 0
      %v2614 = vsel %vm454, %v2570, 0
      %v2617 = vsel %vm454, %v2572, 0
      %v2620 = vsel %vm454, %v2574, 0
      %v2623 = vsel %vm454, %v2576, 0
      %v2626 = vsel %vm454, %v2578, 0
      %v2629 = vsel %vm454, %v2580, 0
      %v2632 = vsel %vm454, %v2582, 0
      %v2635 = vsel %vm454, %v2584, 0
      %v2638 = vsel %vm454, %v2586, 0
      %v2641 = vsel %vm454, %v2588, 0
      %v2644 = vsel %vm509, %v2458, 0
      %2646 = vmatprep.subr.bf16.mxu0 0
      %2647 = vmatpush1.bf16.msra.mxu0 %v2644
      %2648 = vmatprep.subr.bf16.mxu0 0
      %2649 = vmatpush1.bf16.msra.mxu0 0
      %2650 = vmatprep.subr.bf16.mxu0 0
      %2651 = vmatpush1.bf16.msra.mxu0 0
      %2652 = vmatprep.subr.bf16.mxu0 0
      %2653 = vmatpush1.bf16.msra.mxu0 0
      %2654 = vmatprep.subr.bf16.mxu0 0
      %2655 = vmatpush1.bf16.msra.mxu0 0
      %2656 = vmatprep.subr.bf16.mxu0 0
      %2657 = vmatpush1.bf16.msra.mxu0 0
      %2658 = vmatprep.subr.bf16.mxu0 0
      %2659 = vmatpush1.bf16.msra.mxu0 0
      %2660 = vmatprep.subr.bf16.mxu0 0
      %2661 = vmatpush1.bf16.msra.mxu0 0
      %2662 = vmatprep.subr.bf16.mxu0 0
      %2663 = vmatpush1.bf16.msra.mxu0 0
      %2664 = vmatprep.subr.bf16.mxu0 0
      %2665 = vmatpush1.bf16.msra.mxu0 0
      %2666 = vmatprep.subr.bf16.mxu0 0
      %2667 = vmatpush1.bf16.msra.mxu0 0
      %2668 = vmatprep.subr.bf16.mxu0 0
      %2669 = vmatpush1.bf16.msra.mxu0 0
      %2670 = vmatprep.subr.bf16.mxu0 0
      %2671 = vmatpush1.bf16.msra.mxu0 0
      %2672 = vmatprep.subr.bf16.mxu0 0
      %2673 = vmatpush1.bf16.msra.mxu0 0
      %2674 = vmatprep.subr.bf16.mxu0 0
      %2675 = vmatpush1.bf16.msra.mxu0 0
      %2676 = vmatprep.subr.bf16.mxu0 0
      %2677 = vmatpush1.bf16.msra.mxu0 0
      %2678 = vmatprep.mubr.bf16.mxu0 0
      %2679 = vmatmul.mubr.bf16.gmra.mrb[0].mxu0 %v2590
      %v2680 = vpop.f32.mrb[0].mxu0
      %v2681 = vadd.f32 0.0, %v2680
      %v2682 = vpop.f32.mrb[0].mxu0
      %v2683 = vpop.f32.mrb[0].mxu0
      %v2684 = vadd.f32 0.0, %v2683
      %v2685 = vpop.f32.mrb[0].mxu0
      %2686 = vmatprep.mubr.bf16.mxu0 0
      %2687 = vmatmul.mubr.bf16.gmra.mrb[0].mxu0 %v2593
      %v2688 = vpop.f32.mrb[0].mxu0
      %v2689 = vadd.f32 0.0, %v2688
      %v2690 = vpop.f32.mrb[0].mxu0
      %v2691 = vpop.f32.mrb[0].mxu0
      %v2692 = vadd.f32 0.0, %v2691
      %v2693 = vpop.f32.mrb[0].mxu0
      %2694 = vmatprep.mubr.bf16.mxu0 0
      %2695 = vmatmul.mubr.bf16.gmra.mrb[0].mxu0 %v2596
      %v2696 = vpop.f32.mrb[0].mxu0
      %v2697 = vadd.f32 0.0, %v2696
      %v2698 = vpop.f32.mrb[0].mxu0
      %v2699 = vpop.f32.mrb[0].mxu0
      %v2700 = vadd.f32 0.0, %v2699
      %v2701 = vpop.f32.mrb[0].mxu0
      %2702 = vmatprep.mubr.bf16.mxu0 0
      %2703 = vmatmul.mubr.bf16.gmra.mrb[0].mxu0 %v2599
      %v2704 = vpop.f32.mrb[0].mxu0
      %v2705 = vadd.f32 0.0, %v2704
      %v2706 = vpop.f32.mrb[0].mxu0
      %v2707 = vpop.f32.mrb[0].mxu0
      %v2708 = vadd.f32 0.0, %v2707
      %v2709 = vpop.f32.mrb[0].mxu0
      %2710 = vmatprep.mubr.bf16.mxu0 0
      %2711 = vmatmul.mubr.bf16.gmra.mrb[0].mxu0 %v2602
      %v2712 = vpop.f32.mrb[0].mxu0
      %v2713 = vadd.f32 0.0, %v2712
      %v2714 = vpop.f32.mrb[0].mxu0
      %v2715 = vpop.f32.mrb[0].mxu0
      %v2716 = vadd.f32 0.0, %v2715
      %v2717 = vpop.f32.mrb[0].mxu0
      %2718 = vmatprep.mubr.bf16.mxu0 0
      %2719 = vmatmul.mubr.bf16.gmra.mrb[0].mxu0 %v2605
      %v2720 = vpop.f32.mrb[0].mxu0
      %v2721 = vadd.f32 0.0, %v2720
      %v2722 = vpop.f32.mrb[0].mxu0
      %v2723 = vpop.f32.mrb[0].mxu0
      %v2724 = vadd.f32 0.0, %v2723
      %v2725 = vpop.f32.mrb[0].mxu0
      %2726 = vmatprep.mubr.bf16.mxu0 0
      %2727 = vmatmul.mubr.bf16.gmra.mrb[0].mxu0 %v2608
      %v2728 = vpop.f32.mrb[0].mxu0
      %v2729 = vadd.f32 0.0, %v2728
      %v2730 = vpop.f32.mrb[0].mxu0
      %v2731 = vpop.f32.mrb[0].mxu0
      %v2732 = vadd.f32 0.0, %v2731
      %v2733 = vpop.f32.mrb[0].mxu0
      %2734 = vmatprep.mubr.bf16.mxu0 0
      %2735 = vmatmul.mubr.bf16.gmra.mrb[0].mxu0 %v2611
      %v2736 = vpop.f32.mrb[0].mxu0
      %v2737 = vadd.f32 0.0, %v2736
      %v2738 = vpop.f32.mrb[0].mxu0
      %v2739 = vpop.f32.mrb[0].mxu0
      %v2740 = vadd.f32 0.0, %v2739
      %v2741 = vpop.f32.mrb[0].mxu0
      %2742 = vmatprep.mubr.bf16.mxu0 0
      %2743 = vmatmul.mubr.bf16.gmra.mrb[0].mxu0 %v2614
      %v2744 = vpop.f32.mrb[0].mxu0
      %v2745 = vadd.f32 0.0, %v2744
      %v2746 = vpop.f32.mrb[0].mxu0
      %v2747 = vpop.f32.mrb[0].mxu0
      %v2748 = vadd.f32 0.0, %v2747
      %v2749 = vpop.f32.mrb[0].mxu0
      %2750 = vmatprep.mubr.bf16.mxu0 0
      %2751 = vmatmul.mubr.bf16.gmra.mrb[0].mxu0 %v2617
      %v2752 = vpop.f32.mrb[0].mxu0
      %v2753 = vadd.f32 0.0, %v2752
      %v2754 = vpop.f32.mrb[0].mxu0
      %v2755 = vpop.f32.mrb[0].mxu0
      %v2756 = vadd.f32 0.0, %v2755
      %v2757 = vpop.f32.mrb[0].mxu0
      %2758 = vmatprep.mubr.bf16.mxu0 0
      %2759 = vmatmul.mubr.bf16.gmra.mrb[0].mxu0 %v2620
      %v2760 = vpop.f32.mrb[0].mxu0
      %v2761 = vadd.f32 0.0, %v2760
      %v2762 = vpop.f32.mrb[0].mxu0
      %v2763 = vpop.f32.mrb[0].mxu0
      %v2764 = vadd.f32 0.0, %v2763
      %v2765 = vpop.f32.mrb[0].mxu0
      %2766 = vmatprep.mubr.bf16.mxu0 0
      %2767 = vmatmul.mubr.bf16.gmra.mrb[0].mxu0 %v2623
      %v2768 = vpop.f32.mrb[0].mxu0
      %v2769 = vadd.f32 0.0, %v2768
      %v2770 = vpop.f32.mrb[0].mxu0
      %v2771 = vpop.f32.mrb[0].mxu0
      %v2772 = vadd.f32 0.0, %v2771
      %v2773 = vpop.f32.mrb[0].mxu0
      %2774 = vmatprep.mubr.bf16.mxu0 0
      %2775 = vmatmul.mubr.bf16.gmra.mrb[0].mxu0 %v2626
      %v2776 = vpop.f32.mrb[0].mxu0
      %v2777 = vadd.f32 0.0, %v2776
      %v2778 = vpop.f32.mrb[0].mxu0
      %v2779 = vpop.f32.mrb[0].mxu0
      %v2780 = vadd.f32 0.0, %v2779
      %v2781 = vpop.f32.mrb[0].mxu0
      %2782 = vmatprep.mubr.bf16.mxu0 0
      %2783 = vmatmul.mubr.bf16.gmra.mrb[0].mxu0 %v2629
      %v2784 = vpop.f32.mrb[0].mxu0
      %v2785 = vadd.f32 0.0, %v2784
      %v2786 = vpop.f32.mrb[0].mxu0
      %v2787 = vpop.f32.mrb[0].mxu0
      %v2788 = vadd.f32 0.0, %v2787
      %v2789 = vpop.f32.mrb[0].mxu0
      %2790 = vmatprep.mubr.bf16.mxu0 0
      %2791 = vmatmul.mubr.bf16.gmra.mrb[0].mxu0 %v2632
      %v2792 = vpop.f32.mrb[0].mxu0
      %v2793 = vadd.f32 0.0, %v2792
      %v2794 = vpop.f32.mrb[0].mxu0
      %v2795 = vpop.f32.mrb[0].mxu0
      %v2796 = vadd.f32 0.0, %v2795
      %v2797 = vpop.f32.mrb[0].mxu0
      %2798 = vmatprep.mubr.bf16.mxu0 0
      %2799 = vmatmul.mubr.bf16.gmra.mrb[0].mxu0 %v2635
      %v2800 = vpop.f32.mrb[0].mxu0
      %v2801 = vadd.f32 0.0, %v2800
      %v2802 = vpop.f32.mrb[0].mxu0
      %v2803 = vpop.f32.mrb[0].mxu0
      %v2804 = vadd.f32 0.0, %v2803
      %v2805 = vpop.f32.mrb[0].mxu0
      %2806 = vmatprep.mubr.bf16.mxu0 0
      %2807 = vmatmul.mubr.bf16.gmra.mrb[0].mxu0 %v2638
      %v2808 = vpop.f32.mrb[0].mxu0
      %v2809 = vadd.f32 0.0, %v2808
      %v2810 = vpop.f32.mrb[0].mxu0
      %v2811 = vpop.f32.mrb[0].mxu0
      %v2812 = vadd.f32 0.0, %v2811
      %v2813 = vpop.f32.mrb[0].mxu0
      %2814 = vmatprep.mubr.bf16.mxu0 0
      %2815 = vmatmul.mubr.bf16.gmra.mrb[0].mxu0 %v2641
      %v2816 = vpop.f32.mrb[0].mxu0
      %v2817 = vadd.f32 0.0, %v2816
      %v2818 = vpop.f32.mrb[0].mxu0
      %v2819 = vpop.f32.mrb[0].mxu0
      %v2820 = vadd.f32 0.0, %v2819
      %v2821 = vpop.f32.mrb[0].mxu0
      %2822 = vdwg.mxu0
      %v2823 = vadd.f32 %v2384, %v2681
      %v2824 = vadd.f32 %v2385, %v2684
      %v2825 = vadd.f32 %v2386, %v2689
      %v2826 = vadd.f32 %v2387, %v2692
      %v2827 = vadd.f32 %v2388, %v2697
      %v2828 = vadd.f32 %v2389, %v2700
      %v2829 = vadd.f32 %v2390, %v2705
      %v2830 = vadd.f32 %v2391, %v2708
      %v2831 = vadd.f32 %v2392, %v2713
      %v2832 = vadd.f32 %v2393, %v2716
      %v2833 = vadd.f32 %v2394, %v2721
      %v2834 = vadd.f32 %v2395, %v2724
      %v2835 = vadd.f32 %v2396, %v2729
      %v2836 = vadd.f32 %v2397, %v2732
      %v2837 = vadd.f32 %v2398, %v2737
      %v2838 = vadd.f32 %v2399, %v2740
      %v2839 = vadd.f32 %v2400, %v2745
      %v2840 = vadd.f32 %v2401, %v2748
      %v2841 = vadd.f32 %v2402, %v2753
      %v2842 = vadd.f32 %v2403, %v2756
      %v2843 = vadd.f32 %v2404, %v2761
      %v2844 = vadd.f32 %v2405, %v2764
      %v2845 = vadd.f32 %v2406, %v2769
      %v2846 = vadd.f32 %v2407, %v2772
      %v2847 = vadd.f32 %v2408, %v2777
      %v2848 = vadd.f32 %v2409, %v2780
      %v2849 = vadd.f32 %v2410, %v2785
      %v2850 = vadd.f32 %v2411, %v2788
      %v2851 = vadd.f32 %v2412, %v2793
      %v2852 = vadd.f32 %v2413, %v2796
      %v2853 = vadd.f32 %v2414, %v2801
      %v2854 = vadd.f32 %v2415, %v2804
      %v2855 = vadd.f32 %v2416, %v2809
      %v2856 = vadd.f32 %v2417, %v2812
      %v2857 = vadd.f32 %v2418, %v2817
      %v2858 = vadd.f32 %v2419, %v2820
      %v2859 = vld [vmem:[%s165 + $0xa0] sm:$0x7]
      %s2860 = scalar_lea.vmem %s1, 14
      %v2861 = vld [vmem:[%s2860] sm:$0x3]
      %v2863 = vunpack.c.l.b16 %v2859
      %v2864 = vpack.c.b16 %v2863, %v2863
      %vm2865 = vsmask.f32 5376
      %v2867 = vshrl.u32 %v2533, 16
      %v2869 = vrot.slane %v2867, 2
      %v2870 = vshll.u32 %v2533, 16
      %v2872 = vrot.slane %v2870, 3
      %v2873 = vor.u32 %v2869, %v2872
      %v2875 = vshrl.u32 %v2534, 16
      %v2877 = vrot.slane %v2875, 2
      %v2878 = vshll.u32 %v2534, 16
      %v2880 = vrot.slane %v2878, 3
      %v2881 = vor.u32 %v2877, %v2880
      %v2882 = vsel %vm2865, %v2873, %v2881
      %v2884 = vshrl.u32 %v2535, 16
      %v2886 = vrot.slane %v2884, 2
      %v2887 = vshll.u32 %v2535, 16
      %v2889 = vrot.slane %v2887, 3
      %v2890 = vor.u32 %v2886, %v2889
      %v2891 = vsel %vm2865, %v2881, %v2890
      %v2893 = vshrl.u32 %v2536, 16
      %v2895 = vrot.slane %v2893, 2
      %v2896 = vshll.u32 %v2536, 16
      %v2898 = vrot.slane %v2896, 3
      %v2899 = vor.u32 %v2895, %v2898
      %v2900 = vsel %vm2865, %v2890, %v2899
      %v2902 = vshrl.u32 %v2537, 16
      %v2904 = vrot.slane %v2902, 2
      %v2905 = vshll.u32 %v2537, 16
      %v2907 = vrot.slane %v2905, 3
      %v2908 = vor.u32 %v2904, %v2907
      %v2909 = vsel %vm2865, %v2899, %v2908
      %v2911 = vshrl.u32 %v2538, 16
      %v2913 = vrot.slane %v2911, 2
      %v2914 = vshll.u32 %v2538, 16
      %v2916 = vrot.slane %v2914, 3
      %v2917 = vor.u32 %v2913, %v2916
      %v2918 = vsel %vm2865, %v2908, %v2917
      %v2920 = vshrl.u32 %v2539, 16
      %v2922 = vrot.slane %v2920, 2
      %v2923 = vshll.u32 %v2539, 16
      %v2925 = vrot.slane %v2923, 3
      %v2926 = vor.u32 %v2922, %v2925
      %v2927 = vsel %vm2865, %v2917, %v2926
      %v2929 = vshrl.u32 %v2540, 16
      %v2931 = vrot.slane %v2929, 2
      %v2932 = vshll.u32 %v2540, 16
      %v2934 = vrot.slane %v2932, 3
      %v2935 = vor.u32 %v2931, %v2934
      %v2936 = vsel %vm2865, %v2926, %v2935
      %v2938 = vshrl.u32 %v2541, 16
      %v2940 = vrot.slane %v2938, 2
      %v2941 = vshll.u32 %v2541, 16
      %v2943 = vrot.slane %v2941, 3
      %v2944 = vor.u32 %v2940, %v2943
      %v2945 = vsel %vm2865, %v2935, %v2944
      %v2947 = vshrl.u32 %v2542, 16
      %v2949 = vrot.slane %v2947, 2
      %v2950 = vshll.u32 %v2542, 16
      %v2952 = vrot.slane %v2950, 3
      %v2953 = vor.u32 %v2949, %v2952
      %v2954 = vsel %vm2865, %v2944, %v2953
      %v2956 = vshrl.u32 %v2543, 16
      %v2958 = vrot.slane %v2956, 2
      %v2959 = vshll.u32 %v2543, 16
      %v2961 = vrot.slane %v2959, 3
      %v2962 = vor.u32 %v2958, %v2961
      %v2963 = vsel %vm2865, %v2953, %v2962
      %v2965 = vshrl.u32 %v2544, 16
      %v2967 = vrot.slane %v2965, 2
      %v2968 = vshll.u32 %v2544, 16
      %v2970 = vrot.slane %v2968, 3
      %v2971 = vor.u32 %v2967, %v2970
      %v2972 = vsel %vm2865, %v2962, %v2971
      %v2974 = vshrl.u32 %v2545, 16
      %v2976 = vrot.slane %v2974, 2
      %v2977 = vshll.u32 %v2545, 16
      %v2979 = vrot.slane %v2977, 3
      %v2980 = vor.u32 %v2976, %v2979
      %v2981 = vsel %vm2865, %v2971, %v2980
      %v2983 = vshrl.u32 %v2546, 16
      %v2985 = vrot.slane %v2983, 2
      %v2986 = vshll.u32 %v2546, 16
      %v2988 = vrot.slane %v2986, 3
      %v2989 = vor.u32 %v2985, %v2988
      %v2990 = vsel %vm2865, %v2980, %v2989
      %v2992 = vshrl.u32 %v2547, 16
      %v2994 = vrot.slane %v2992, 2
      %v2995 = vshll.u32 %v2547, 16
      %v2997 = vrot.slane %v2995, 3
      %v2998 = vor.u32 %v2994, %v2997
      %v2999 = vsel %vm2865, %v2989, %v2998
      %v3001 = vshrl.u32 %v2548, 16
      %v3003 = vrot.slane %v3001, 2
      %v3004 = vshll.u32 %v2548, 16
      %v3006 = vrot.slane %v3004, 3
      %v3007 = vor.u32 %v3003, %v3006
      %v3008 = vsel %vm2865, %v2998, %v3007
      %v3010 = vshrl.u32 %v2549, 16
      %v3012 = vrot.slane %v3010, 2
      %v3013 = vshll.u32 %v2549, 16
      %v3015 = vrot.slane %v3013, 3
      %v3016 = vor.u32 %v3012, %v3015
      %v3017 = vsel %vm2865, %v3007, %v3016
      %v3019 = vshrl.u32 %v2550, 16
      %v3021 = vrot.slane %v3019, 2
      %v3022 = vshll.u32 %v2550, 16
      %v3024 = vrot.slane %v3022, 3
      %v3025 = vor.u32 %v3021, %v3024
      %v3026 = vsel %vm2865, %v3016, %v3025
      %v3028 = vshrl.u32 %v2864, 16
      %v3030 = vrot.slane %v3028, 2
      %v3031 = vshll.u32 %v2864, 16
      %v3033 = vrot.slane %v3031, 3
      %v3034 = vor.u32 %v3030, %v3033
      %v3035 = vsel %vm2865, %v3025, %v3034
      %v3037 = vsel %vm454, %v2882, 0
      %v3040 = vsel %vm454, %v2891, 0
      %v3043 = vsel %vm454, %v2900, 0
      %v3046 = vsel %vm454, %v2909, 0
      %v3049 = vsel %vm454, %v2918, 0
      %v3052 = vsel %vm454, %v2927, 0
      %v3055 = vsel %vm454, %v2936, 0
      %v3058 = vsel %vm454, %v2945, 0
      %v3061 = vsel %vm454, %v2954, 0
      %v3064 = vsel %vm454, %v2963, 0
      %v3067 = vsel %vm454, %v2972, 0
      %v3070 = vsel %vm454, %v2981, 0
      %v3073 = vsel %vm454, %v2990, 0
      %v3076 = vsel %vm454, %v2999, 0
      %v3079 = vsel %vm454, %v3008, 0
      %v3082 = vsel %vm454, %v3017, 0
      %v3085 = vsel %vm454, %v3026, 0
      %v3088 = vsel %vm454, %v3035, 0
      %v3091 = vsel %vm509, %v2861, 0
      %3093 = vmatprep.subr.bf16.mxu0 0
      %3094 = vmatpush1.bf16.msra.mxu0 %v3091
      %3095 = vmatprep.subr.bf16.mxu0 0
      %3096 = vmatpush1.bf16.msra.mxu0 0
      %3097 = vmatprep.subr.bf16.mxu0 0
      %3098 = vmatpush1.bf16.msra.mxu0 0
      %3099 = vmatprep.subr.bf16.mxu0 0
      %3100 = vmatpush1.bf16.msra.mxu0 0
      %3101 = vmatprep.subr.bf16.mxu0 0
      %3102 = vmatpush1.bf16.msra.mxu0 0
      %3103 = vmatprep.subr.bf16.mxu0 0
      %3104 = vmatpush1.bf16.msra.mxu0 0
      %3105 = vmatprep.subr.bf16.mxu0 0
      %3106 = vmatpush1.bf16.msra.mxu0 0
      %3107 = vmatprep.subr.bf16.mxu0 0
      %3108 = vmatpush1.bf16.msra.mxu0 0
      %3109 = vmatprep.subr.bf16.mxu0 0
      %3110 = vmatpush1.bf16.msra.mxu0 0
      %3111 = vmatprep.subr.bf16.mxu0 0
      %3112 = vmatpush1.bf16.msra.mxu0 0
      %3113 = vmatprep.subr.bf16.mxu0 0
      %3114 = vmatpush1.bf16.msra.mxu0 0
      %3115 = vmatprep.subr.bf16.mxu0 0
      %3116 = vmatpush1.bf16.msra.mxu0 0
      %3117 = vmatprep.subr.bf16.mxu0 0
      %3118 = vmatpush1.bf16.msra.mxu0 0
      %3119 = vmatprep.subr.bf16.mxu0 0
      %3120 = vmatpush1.bf16.msra.mxu0 0
      %3121 = vmatprep.subr.bf16.mxu0 0
      %3122 = vmatpush1.bf16.msra.mxu0 0
      %3123 = vmatprep.subr.bf16.mxu0 0
      %3124 = vmatpush1.bf16.msra.mxu0 0
      %3125 = vmatprep.mubr.bf16.mxu0 0
      %3126 = vmatmul.mubr.bf16.gmra.mrb[0].mxu0 %v3037
      %v3127 = vpop.f32.mrb[0].mxu0
      %v3128 = vadd.f32 0.0, %v3127
      %v3129 = vpop.f32.mrb[0].mxu0
      %v3130 = vpop.f32.mrb[0].mxu0
      %v3131 = vadd.f32 0.0, %v3130
      %v3132 = vpop.f32.mrb[0].mxu0
      %3133 = vmatprep.mubr.bf16.mxu0 0
      %3134 = vmatmul.mubr.bf16.gmra.mrb[0].mxu0 %v3040
      %v3135 = vpop.f32.mrb[0].mxu0
      %v3136 = vadd.f32 0.0, %v3135
      %v3137 = vpop.f32.mrb[0].mxu0
      %v3138 = vpop.f32.mrb[0].mxu0
      %v3139 = vadd.f32 0.0, %v3138
      %v3140 = vpop.f32.mrb[0].mxu0
      %3141 = vmatprep.mubr.bf16.mxu0 0
      %3142 = vmatmul.mubr.bf16.gmra.mrb[0].mxu0 %v3043
      %v3143 = vpop.f32.mrb[0].mxu0
      %v3144 = vadd.f32 0.0, %v3143
      %v3145 = vpop.f32.mrb[0].mxu0
      %v3146 = vpop.f32.mrb[0].mxu0
      %v3147 = vadd.f32 0.0, %v3146
      %v3148 = vpop.f32.mrb[0].mxu0
      %3149 = vmatprep.mubr.bf16.mxu0 0
      %3150 = vmatmul.mubr.bf16.gmra.mrb[0].mxu0 %v3046
      %v3151 = vpop.f32.mrb[0].mxu0
      %v3152 = vadd.f32 0.0, %v3151
      %v3153 = vpop.f32.mrb[0].mxu0
      %v3154 = vpop.f32.mrb[0].mxu0
      %v3155 = vadd.f32 0.0, %v3154
      %v3156 = vpop.f32.mrb[0].mxu0
      %3157 = vmatprep.mubr.bf16.mxu0 0
      %3158 = vmatmul.mubr.bf16.gmra.mrb[0].mxu0 %v3049
      %v3159 = vpop.f32.mrb[0].mxu0
      %v3160 = vadd.f32 0.0, %v3159
      %v3161 = vpop.f32.mrb[0].mxu0
      %v3162 = vpop.f32.mrb[0].mxu0
      %v3163 = vadd.f32 0.0, %v3162
      %v3164 = vpop.f32.mrb[0].mxu0
      %3165 = vmatprep.mubr.bf16.mxu0 0
      %3166 = vmatmul.mubr.bf16.gmra.mrb[0].mxu0 %v3052
      %v3167 = vpop.f32.mrb[0].mxu0
      %v3168 = vadd.f32 0.0, %v3167
      %v3169 = vpop.f32.mrb[0].mxu0
      %v3170 = vpop.f32.mrb[0].mxu0
      %v3171 = vadd.f32 0.0, %v3170
      %v3172 = vpop.f32.mrb[0].mxu0
      %3173 = vmatprep.mubr.bf16.mxu0 0
      %3174 = vmatmul.mubr.bf16.gmra.mrb[0].mxu0 %v3055
      %v3175 = vpop.f32.mrb[0].mxu0
      %v3176 = vadd.f32 0.0, %v3175
      %v3177 = vpop.f32.mrb[0].mxu0
      %v3178 = vpop.f32.mrb[0].mxu0
      %v3179 = vadd.f32 0.0, %v3178
      %v3180 = vpop.f32.mrb[0].mxu0
      %3181 = vmatprep.mubr.bf16.mxu0 0
      %3182 = vmatmul.mubr.bf16.gmra.mrb[0].mxu0 %v3058
      %v3183 = vpop.f32.mrb[0].mxu0
      %v3184 = vadd.f32 0.0, %v3183
      %v3185 = vpop.f32.mrb[0].mxu0
      %v3186 = vpop.f32.mrb[0].mxu0
      %v3187 = vadd.f32 0.0, %v3186
      %v3188 = vpop.f32.mrb[0].mxu0
      %3189 = vmatprep.mubr.bf16.mxu0 0
      %3190 = vmatmul.mubr.bf16.gmra.mrb[0].mxu0 %v3061
      %v3191 = vpop.f32.mrb[0].mxu0
      %v3192 = vadd.f32 0.0, %v3191
      %v3193 = vpop.f32.mrb[0].mxu0
      %v3194 = vpop.f32.mrb[0].mxu0
      %v3195 = vadd.f32 0.0, %v3194
      %v3196 = vpop.f32.mrb[0].mxu0
      %3197 = vmatprep.mubr.bf16.mxu0 0
      %3198 = vmatmul.mubr.bf16.gmra.mrb[0].mxu0 %v3064
      %v3199 = vpop.f32.mrb[0].mxu0
      %v3200 = vadd.f32 0.0, %v3199
      %v3201 = vpop.f32.mrb[0].mxu0
      %v3202 = vpop.f32.mrb[0].mxu0
      %v3203 = vadd.f32 0.0, %v3202
      %v3204 = vpop.f32.mrb[0].mxu0
      %3205 = vmatprep.mubr.bf16.mxu0 0
      %3206 = vmatmul.mubr.bf16.gmra.mrb[0].mxu0 %v3067
      %v3207 = vpop.f32.mrb[0].mxu0
      %v3208 = vadd.f32 0.0, %v3207
      %v3209 = vpop.f32.mrb[0].mxu0
      %v3210 = vpop.f32.mrb[0].mxu0
      %v3211 = vadd.f32 0.0, %v3210
      %v3212 = vpop.f32.mrb[0].mxu0
      %3213 = vmatprep.mubr.bf16.mxu0 0
      %3214 = vmatmul.mubr.bf16.gmra.mrb[0].mxu0 %v3070
      %v3215 = vpop.f32.mrb[0].mxu0
      %v3216 = vadd.f32 0.0, %v3215
      %v3217 = vpop.f32.mrb[0].mxu0
      %v3218 = vpop.f32.mrb[0].mxu0
      %v3219 = vadd.f32 0.0, %v3218
      %v3220 = vpop.f32.mrb[0].mxu0
      %3221 = vmatprep.mubr.bf16.mxu0 0
      %3222 = vmatmul.mubr.bf16.gmra.mrb[0].mxu0 %v3073
      %v3223 = vpop.f32.mrb[0].mxu0
      %v3224 = vadd.f32 0.0, %v3223
      %v3225 = vpop.f32.mrb[0].mxu0
      %v3226 = vpop.f32.mrb[0].mxu0
      %v3227 = vadd.f32 0.0, %v3226
      %v3228 = vpop.f32.mrb[0].mxu0
      %3229 = vmatprep.mubr.bf16.mxu0 0
      %3230 = vmatmul.mubr.bf16.gmra.mrb[0].mxu0 %v3076
      %v3231 = vpop.f32.mrb[0].mxu0
      %v3232 = vadd.f32 0.0, %v3231
      %v3233 = vpop.f32.mrb[0].mxu0
      %v3234 = vpop.f32.mrb[0].mxu0
      %v3235 = vadd.f32 0.0, %v3234
      %v3236 = vpop.f32.mrb[0].mxu0
      %3237 = vmatprep.mubr.bf16.mxu0 0
      %3238 = vmatmul.mubr.bf16.gmra.mrb[0].mxu0 %v3079
      %v3239 = vpop.f32.mrb[0].mxu0
      %v3240 = vadd.f32 0.0, %v3239
      %v3241 = vpop.f32.mrb[0].mxu0
      %v3242 = vpop.f32.mrb[0].mxu0
      %v3243 = vadd.f32 0.0, %v3242
      %v3244 = vpop.f32.mrb[0].mxu0
      %3245 = vmatprep.mubr.bf16.mxu0 0
      %3246 = vmatmul.mubr.bf16.gmra.mrb[0].mxu0 %v3082
      %v3247 = vpop.f32.mrb[0].mxu0
      %v3248 = vadd.f32 0.0, %v3247
      %v3249 = vpop.f32.mrb[0].mxu0
      %v3250 = vpop.f32.mrb[0].mxu0
      %v3251 = vadd.f32 0.0, %v3250
      %v3252 = vpop.f32.mrb[0].mxu0
      %3253 = vmatprep.mubr.bf16.mxu0 0
      %3254 = vmatmul.mubr.bf16.gmra.mrb[0].mxu0 %v3085
      %v3255 = vpop.f32.mrb[0].mxu0
      %v3256 = vadd.f32 0.0, %v3255
      %v3257 = vpop.f32.mrb[0].mxu0
      %v3258 = vpop.f32.mrb[0].mxu0
      %v3259 = vadd.f32 0.0, %v3258
      %v3260 = vpop.f32.mrb[0].mxu0
      %3261 = vmatprep.mubr.bf16.mxu0 0
      %3262 = vmatmul.mubr.bf16.gmra.mrb[0].mxu0 %v3088
      %v3263 = vpop.f32.mrb[0].mxu0
      %v3264 = vadd.f32 0.0, %v3263
      %v3265 = vpop.f32.mrb[0].mxu0
      %v3266 = vpop.f32.mrb[0].mxu0
      %v3267 = vadd.f32 0.0, %v3266
      %v3268 = vpop.f32.mrb[0].mxu0
      %3269 = vdwg.mxu0
      %v3270 = vadd.f32 %v2823, %v3128
      %v3271 = vadd.f32 %v2824, %v3131
      %v3272 = vadd.f32 %v2825, %v3136
      %v3273 = vadd.f32 %v2826, %v3139
      %v3274 = vadd.f32 %v2827, %v3144
      %v3275 = vadd.f32 %v2828, %v3147
      %v3276 = vadd.f32 %v2829, %v3152
      %v3277 = vadd.f32 %v2830, %v3155
      %v3278 = vadd.f32 %v2831, %v3160
      %v3279 = vadd.f32 %v2832, %v3163
      %v3280 = vadd.f32 %v2833, %v3168
      %v3281 = vadd.f32 %v2834, %v3171
      %v3282 = vadd.f32 %v2835, %v3176
      %v3283 = vadd.f32 %v2836, %v3179
      %v3284 = vadd.f32 %v2837, %v3184
      %v3285 = vadd.f32 %v2838, %v3187
      %v3286 = vadd.f32 %v2839, %v3192
      %v3287 = vadd.f32 %v2840, %v3195
      %v3288 = vadd.f32 %v2841, %v3200
      %v3289 = vadd.f32 %v2842, %v3203
      %v3290 = vadd.f32 %v2843, %v3208
      %v3291 = vadd.f32 %v2844, %v3211
      %v3292 = vadd.f32 %v2845, %v3216
      %v3293 = vadd.f32 %v2846, %v3219
      %v3294 = vadd.f32 %v2847, %v3224
      %v3295 = vadd.f32 %v2848, %v3227
      %v3296 = vadd.f32 %v2849, %v3232
      %v3297 = vadd.f32 %v2850, %v3235
      %v3298 = vadd.f32 %v2851, %v3240
      %v3299 = vadd.f32 %v2852, %v3243
      %v3300 = vadd.f32 %v2853, %v3248
      %v3301 = vadd.f32 %v2854, %v3251
      %v3302 = vadd.f32 %v2855, %v3256
      %v3303 = vadd.f32 %v2856, %v3259
      %v3304 = vadd.f32 %v2857, %v3264
      %v3305 = vadd.f32 %v2858, %v3267
      %v3306 = vld [vmem:[%s165 + $0x10] sm:$0x8]
      %s3307 = scalar_lea.vmem %s1, 16
      %v3308 = vld [vmem:[%s3307] sm:$0x3]
      %v3310 = vunpack.c.l.b16 %v3306
      %v3311 = vpack.c.b16 %v2497, %v3310
      %vm3312 = vcmask 1044480
      %v3313 = vrot.slane %v3311, 3
      %v3314 = vrot.slane %v2534, 3
      %v3315 = vsel %vm3312, %v3313, %v3314
      %v3316 = vrot.slane %v2535, 3
      %v3317 = vsel %vm3312, %v3314, %v3316
      %v3318 = vrot.slane %v2536, 3
      %v3319 = vsel %vm3312, %v3316, %v3318
      %v3320 = vrot.slane %v2537, 3
      %v3321 = vsel %vm3312, %v3318, %v3320
      %v3322 = vrot.slane %v2538, 3
      %v3323 = vsel %vm3312, %v3320, %v3322
      %v3324 = vrot.slane %v2539, 3
      %v3325 = vsel %vm3312, %v3322, %v3324
      %v3326 = vrot.slane %v2540, 3
      %v3327 = vsel %vm3312, %v3324, %v3326
      %v3328 = vrot.slane %v2541, 3
      %v3329 = vsel %vm3312, %v3326, %v3328
      %v3330 = vrot.slane %v2542, 3
      %v3331 = vsel %vm3312, %v3328, %v3330
      %v3332 = vrot.slane %v2543, 3
      %v3333 = vsel %vm3312, %v3330, %v3332
      %v3334 = vrot.slane %v2544, 3
      %v3335 = vsel %vm3312, %v3332, %v3334
      %v3336 = vrot.slane %v2545, 3
      %v3337 = vsel %vm3312, %v3334, %v3336
      %v3338 = vrot.slane %v2546, 3
      %v3339 = vsel %vm3312, %v3336, %v3338
      %v3340 = vrot.slane %v2547, 3
      %v3341 = vsel %vm3312, %v3338, %v3340
      %v3342 = vrot.slane %v2548, 3
      %v3343 = vsel %vm3312, %v3340, %v3342
      %v3344 = vrot.slane %v2549, 3
      %v3345 = vsel %vm3312, %v3342, %v3344
      %v3346 = vrot.slane %v2550, 3
      %v3347 = vsel %vm3312, %v3344, %v3346
      %v3348 = vrot.slane %v2864, 3
      %v3349 = vsel %vm3312, %v3346, %v3348
      %v3351 = vsel %vm454, %v3315, 0
      %v3354 = vsel %vm454, %v3317, 0
      %v3357 = vsel %vm454, %v3319, 0
      %v3360 = vsel %vm454, %v3321, 0
      %v3363 = vsel %vm454, %v3323, 0
      %v3366 = vsel %vm454, %v3325, 0
      %v3369 = vsel %vm454, %v3327, 0
      %v3372 = vsel %vm454, %v3329, 0
      %v3375 = vsel %vm454, %v3331, 0
      %v3378 = vsel %vm454, %v3333, 0
      %v3381 = vsel %vm454, %v3335, 0
      %v3384 = vsel %vm454, %v3337, 0
      %v3387 = vsel %vm454, %v3339, 0
      %v3390 = vsel %vm454, %v3341, 0
      %v3393 = vsel %vm454, %v3343, 0
      %v3396 = vsel %vm454, %v3345, 0
      %v3399 = vsel %vm454, %v3347, 0
      %v3402 = vsel %vm454, %v3349, 0
      %v3405 = vsel %vm509, %v3308, 0
      %3407 = vmatprep.subr.bf16.mxu0 0
      %3408 = vmatpush1.bf16.msra.mxu0 %v3405
      %3409 = vmatprep.subr.bf16.mxu0 0
      %3410 = vmatpush1.bf16.msra.mxu0 0
      %3411 = vmatprep.subr.bf16.mxu0 0
      %3412 = vmatpush1.bf16.msra.mxu0 0
      %3413 = vmatprep.subr.bf16.mxu0 0
      %3414 = vmatpush1.bf16.msra.mxu0 0
      %3415 = vmatprep.subr.bf16.mxu0 0
      %3416 = vmatpush1.bf16.msra.mxu0 0
      %3417 = vmatprep.subr.bf16.mxu0 0
      %3418 = vmatpush1.bf16.msra.mxu0 0
      %3419 = vmatprep.subr.bf16.mxu0 0
      %3420 = vmatpush1.bf16.msra.mxu0 0
      %3421 = vmatprep.subr.bf16.mxu0 0
      %3422 = vmatpush1.bf16.msra.mxu0 0
      %3423 = vmatprep.subr.bf16.mxu0 0
      %3424 = vmatpush1.bf16.msra.mxu0 0
      %3425 = vmatprep.subr.bf16.mxu0 0
      %3426 = vmatpush1.bf16.msra.mxu0 0
      %3427 = vmatprep.subr.bf16.mxu0 0
      %3428 = vmatpush1.bf16.msra.mxu0 0
      %3429 = vmatprep.subr.bf16.mxu0 0
      %3430 = vmatpush1.bf16.msra.mxu0 0
      %3431 = vmatprep.subr.bf16.mxu0 0
      %3432 = vmatpush1.bf16.msra.mxu0 0
      %3433 = vmatprep.subr.bf16.mxu0 0
      %3434 = vmatpush1.bf16.msra.mxu0 0
      %3435 = vmatprep.subr.bf16.mxu0 0
      %3436 = vmatpush1.bf16.msra.mxu0 0
      %3437 = vmatprep.subr.bf16.mxu0 0
      %3438 = vmatpush1.bf16.msra.mxu0 0
      %3439 = vmatprep.mubr.bf16.mxu0 0
      %3440 = vmatmul.mubr.bf16.gmra.mrb[0].mxu0 %v3351
      %v3441 = vpop.f32.mrb[0].mxu0
      %v3442 = vadd.f32 0.0, %v3441
      %v3443 = vpop.f32.mrb[0].mxu0
      %v3444 = vpop.f32.mrb[0].mxu0
      %v3445 = vadd.f32 0.0, %v3444
      %v3446 = vpop.f32.mrb[0].mxu0
      %3447 = vmatprep.mubr.bf16.mxu0 0
      %3448 = vmatmul.mubr.bf16.gmra.mrb[0].mxu0 %v3354
      %v3449 = vpop.f32.mrb[0].mxu0
      %v3450 = vadd.f32 0.0, %v3449
      %v3451 = vpop.f32.mrb[0].mxu0
      %v3452 = vpop.f32.mrb[0].mxu0
      %v3453 = vadd.f32 0.0, %v3452
      %v3454 = vpop.f32.mrb[0].mxu0
      %3455 = vmatprep.mubr.bf16.mxu0 0
      %3456 = vmatmul.mubr.bf16.gmra.mrb[0].mxu0 %v3357
      %v3457 = vpop.f32.mrb[0].mxu0
      %v3458 = vadd.f32 0.0, %v3457
      %v3459 = vpop.f32.mrb[0].mxu0
      %v3460 = vpop.f32.mrb[0].mxu0
      %v3461 = vadd.f32 0.0, %v3460
      %v3462 = vpop.f32.mrb[0].mxu0
      %3463 = vmatprep.mubr.bf16.mxu0 0
      %3464 = vmatmul.mubr.bf16.gmra.mrb[0].mxu0 %v3360
      %v3465 = vpop.f32.mrb[0].mxu0
      %v3466 = vadd.f32 0.0, %v3465
      %v3467 = vpop.f32.mrb[0].mxu0
      %v3468 = vpop.f32.mrb[0].mxu0
      %v3469 = vadd.f32 0.0, %v3468
      %v3470 = vpop.f32.mrb[0].mxu0
      %3471 = vmatprep.mubr.bf16.mxu0 0
      %3472 = vmatmul.mubr.bf16.gmra.mrb[0].mxu0 %v3363
      %v3473 = vpop.f32.mrb[0].mxu0
      %v3474 = vadd.f32 0.0, %v3473
      %v3475 = vpop.f32.mrb[0].mxu0
      %v3476 = vpop.f32.mrb[0].mxu0
      %v3477 = vadd.f32 0.0, %v3476
      %v3478 = vpop.f32.mrb[0].mxu0
      %3479 = vmatprep.mubr.bf16.mxu0 0
      %3480 = vmatmul.mubr.bf16.gmra.mrb[0].mxu0 %v3366
      %v3481 = vpop.f32.mrb[0].mxu0
      %v3482 = vadd.f32 0.0, %v3481
      %v3483 = vpop.f32.mrb[0].mxu0
      %v3484 = vpop.f32.mrb[0].mxu0
      %v3485 = vadd.f32 0.0, %v3484
      %v3486 = vpop.f32.mrb[0].mxu0
      %3487 = vmatprep.mubr.bf16.mxu0 0
      %3488 = vmatmul.mubr.bf16.gmra.mrb[0].mxu0 %v3369
      %v3489 = vpop.f32.mrb[0].mxu0
      %v3490 = vadd.f32 0.0, %v3489
      %v3491 = vpop.f32.mrb[0].mxu0
      %v3492 = vpop.f32.mrb[0].mxu0
      %v3493 = vadd.f32 0.0, %v3492
      %v3494 = vpop.f32.mrb[0].mxu0
      %3495 = vmatprep.mubr.bf16.mxu0 0
      %3496 = vmatmul.mubr.bf16.gmra.mrb[0].mxu0 %v3372
      %v3497 = vpop.f32.mrb[0].mxu0
      %v3498 = vadd.f32 0.0, %v3497
      %v3499 = vpop.f32.mrb[0].mxu0
      %v3500 = vpop.f32.mrb[0].mxu0
      %v3501 = vadd.f32 0.0, %v3500
      %v3502 = vpop.f32.mrb[0].mxu0
      %3503 = vmatprep.mubr.bf16.mxu0 0
      %3504 = vmatmul.mubr.bf16.gmra.mrb[0].mxu0 %v3375
      %v3505 = vpop.f32.mrb[0].mxu0
      %v3506 = vadd.f32 0.0, %v3505
      %v3507 = vpop.f32.mrb[0].mxu0
      %v3508 = vpop.f32.mrb[0].mxu0
      %v3509 = vadd.f32 0.0, %v3508
      %v3510 = vpop.f32.mrb[0].mxu0
      %3511 = vmatprep.mubr.bf16.mxu0 0
      %3512 = vmatmul.mubr.bf16.gmra.mrb[0].mxu0 %v3378
      %v3513 = vpop.f32.mrb[0].mxu0
      %v3514 = vadd.f32 0.0, %v3513
      %v3515 = vpop.f32.mrb[0].mxu0
      %v3516 = vpop.f32.mrb[0].mxu0
      %v3517 = vadd.f32 0.0, %v3516
      %v3518 = vpop.f32.mrb[0].mxu0
      %3519 = vmatprep.mubr.bf16.mxu0 0
      %3520 = vmatmul.mubr.bf16.gmra.mrb[0].mxu0 %v3381
      %v3521 = vpop.f32.mrb[0].mxu0
      %v3522 = vadd.f32 0.0, %v3521
      %v3523 = vpop.f32.mrb[0].mxu0
      %v3524 = vpop.f32.mrb[0].mxu0
      %v3525 = vadd.f32 0.0, %v3524
      %v3526 = vpop.f32.mrb[0].mxu0
      %3527 = vmatprep.mubr.bf16.mxu0 0
      %3528 = vmatmul.mubr.bf16.gmra.mrb[0].mxu0 %v3384
      %v3529 = vpop.f32.mrb[0].mxu0
      %v3530 = vadd.f32 0.0, %v3529
      %v3531 = vpop.f32.mrb[0].mxu0
      %v3532 = vpop.f32.mrb[0].mxu0
      %v3533 = vadd.f32 0.0, %v3532
      %v3534 = vpop.f32.mrb[0].mxu0
      %3535 = vmatprep.mubr.bf16.mxu0 0
      %3536 = vmatmul.mubr.bf16.gmra.mrb[0].mxu0 %v3387
      %v3537 = vpop.f32.mrb[0].mxu0
      %v3538 = vadd.f32 0.0, %v3537
      %v3539 = vpop.f32.mrb[0].mxu0
      %v3540 = vpop.f32.mrb[0].mxu0
      %v3541 = vadd.f32 0.0, %v3540
      %v3542 = vpop.f32.mrb[0].mxu0
      %3543 = vmatprep.mubr.bf16.mxu0 0
      %3544 = vmatmul.mubr.bf16.gmra.mrb[0].mxu0 %v3390
      %v3545 = vpop.f32.mrb[0].mxu0
      %v3546 = vadd.f32 0.0, %v3545
      %v3547 = vpop.f32.mrb[0].mxu0
      %v3548 = vpop.f32.mrb[0].mxu0
      %v3549 = vadd.f32 0.0, %v3548
      %v3550 = vpop.f32.mrb[0].mxu0
      %3551 = vmatprep.mubr.bf16.mxu0 0
      %3552 = vmatmul.mubr.bf16.gmra.mrb[0].mxu0 %v3393
      %v3553 = vpop.f32.mrb[0].mxu0
      %v3554 = vadd.f32 0.0, %v3553
      %v3555 = vpop.f32.mrb[0].mxu0
      %v3556 = vpop.f32.mrb[0].mxu0
      %v3557 = vadd.f32 0.0, %v3556
      %v3558 = vpop.f32.mrb[0].mxu0
      %3559 = vmatprep.mubr.bf16.mxu0 0
      %3560 = vmatmul.mubr.bf16.gmra.mrb[0].mxu0 %v3396
      %v3561 = vpop.f32.mrb[0].mxu0
      %v3562 = vadd.f32 0.0, %v3561
      %v3563 = vpop.f32.mrb[0].mxu0
      %v3564 = vpop.f32.mrb[0].mxu0
      %v3565 = vadd.f32 0.0, %v3564
      %v3566 = vpop.f32.mrb[0].mxu0
      %3567 = vmatprep.mubr.bf16.mxu0 0
      %3568 = vmatmul.mubr.bf16.gmra.mrb[0].mxu0 %v3399
      %v3569 = vpop.f32.mrb[0].mxu0
      %v3570 = vadd.f32 0.0, %v3569
      %v3571 = vpop.f32.mrb[0].mxu0
      %v3572 = vpop.f32.mrb[0].mxu0
      %v3573 = vadd.f32 0.0, %v3572
      %v3574 = vpop.f32.mrb[0].mxu0
      %3575 = vmatprep.mubr.bf16.mxu0 0
      %3576 = vmatmul.mubr.bf16.gmra.mrb[0].mxu0 %v3402
      %v3577 = vpop.f32.mrb[0].mxu0
      %v3578 = vadd.f32 0.0, %v3577
      %v3579 = vpop.f32.mrb[0].mxu0
      %v3580 = vpop.f32.mrb[0].mxu0
      %v3581 = vadd.f32 0.0, %v3580
      %v3582 = vpop.f32.mrb[0].mxu0
      %3583 = vdwg.mxu0
      %v3584 = vadd.f32 %v3270, %v3442
      %v3585 = vadd.f32 %v3271, %v3445
      %v3586 = vadd.f32 %v3272, %v3450
      %v3587 = vadd.f32 %v3273, %v3453
      %v3588 = vadd.f32 %v3274, %v3458
      %v3589 = vadd.f32 %v3275, %v3461
      %v3590 = vadd.f32 %v3276, %v3466
      %v3591 = vadd.f32 %v3277, %v3469
      %v3592 = vadd.f32 %v3278, %v3474
      %v3593 = vadd.f32 %v3279, %v3477
      %v3594 = vadd.f32 %v3280, %v3482
      %v3595 = vadd.f32 %v3281, %v3485
      %v3596 = vadd.f32 %v3282, %v3490
      %v3597 = vadd.f32 %v3283, %v3493
      %v3598 = vadd.f32 %v3284, %v3498
      %v3599 = vadd.f32 %v3285, %v3501
      %v3600 = vadd.f32 %v3286, %v3506
      %v3601 = vadd.f32 %v3287, %v3509
      %v3602 = vadd.f32 %v3288, %v3514
      %v3603 = vadd.f32 %v3289, %v3517
      %v3604 = vadd.f32 %v3290, %v3522
      %v3605 = vadd.f32 %v3291, %v3525
      %v3606 = vadd.f32 %v3292, %v3530
      %v3607 = vadd.f32 %v3293, %v3533
      %v3608 = vadd.f32 %v3294, %v3538
      %v3609 = vadd.f32 %v3295, %v3541
      %v3610 = vadd.f32 %v3296, %v3546
      %v3611 = vadd.f32 %v3297, %v3549
      %v3612 = vadd.f32 %v3298, %v3554
      %v3613 = vadd.f32 %v3299, %v3557
      %v3614 = vadd.f32 %v3300, %v3562
      %v3615 = vadd.f32 %v3301, %v3565
      %v3616 = vadd.f32 %v3302, %v3570
      %v3617 = vadd.f32 %v3303, %v3573
      %v3618 = vadd.f32 %v3304, %v3578
      %v3619 = vadd.f32 %v3305, %v3581
      %v3620 = vld [vmem:[%s2] sm:$0x1]
      %v3622 = vlaneseq
      %v3623 = vshrl.u32 %v3622, 7
      %v3624 = vsub.s32 0, %v3623
      %v3625 = vrot.slane %v3620, %v3624
      %v3627 = vadd.f32 %v3584, %v3625
      %v3628 = vadd.f32 %v3585, %v3625
      %v3629 = vadd.f32 %v3586, %v3625
      %v3630 = vadd.f32 %v3587, %v3625
      %v3631 = vadd.f32 %v3588, %v3625
      %v3632 = vadd.f32 %v3589, %v3625
      %v3633 = vadd.f32 %v3590, %v3625
      %v3634 = vadd.f32 %v3591, %v3625
      %v3635 = vadd.f32 %v3592, %v3625
      %v3636 = vadd.f32 %v3593, %v3625
      %v3637 = vadd.f32 %v3594, %v3625
      %v3638 = vadd.f32 %v3595, %v3625
      %v3639 = vadd.f32 %v3596, %v3625
      %v3640 = vadd.f32 %v3597, %v3625
      %v3641 = vadd.f32 %v3598, %v3625
      %v3642 = vadd.f32 %v3599, %v3625
      %v3643 = vadd.f32 %v3600, %v3625
      %v3644 = vadd.f32 %v3601, %v3625
      %v3645 = vadd.f32 %v3602, %v3625
      %v3646 = vadd.f32 %v3603, %v3625
      %v3647 = vadd.f32 %v3604, %v3625
      %v3648 = vadd.f32 %v3605, %v3625
      %v3649 = vadd.f32 %v3606, %v3625
      %v3650 = vadd.f32 %v3607, %v3625
      %v3651 = vadd.f32 %v3608, %v3625
      %v3652 = vadd.f32 %v3609, %v3625
      %v3653 = vadd.f32 %v3610, %v3625
      %v3654 = vadd.f32 %v3611, %v3625
      %v3655 = vadd.f32 %v3612, %v3625
      %v3656 = vadd.f32 %v3613, %v3625
      %v3657 = vadd.f32 %v3614, %v3625
      %v3658 = vadd.f32 %v3615, %v3625
      %v3659 = vadd.f32 %v3616, %v3625
      %v3660 = vadd.f32 %v3617, %v3625
      %v3661 = vadd.f32 %v3618, %v3625
      %v3662 = vadd.f32 %v3619, %v3625
      %vm3663 = vcmask 130048
      %3664 = vst.msk [vmem:[%s170] sm:$0xff] %vm3663, %v3627
      %3665 = vst.msk [vmem:[%s170 + $0x8] sm:$0xff] %vm3663, %v3628
      %3666 = vst.msk [vmem:[%s170 + $0x10] sm:$0xff] %vm3663, %v3629
      %3667 = vst.msk [vmem:[%s170 + $0x18] sm:$0xff] %vm3663, %v3630
      %3668 = vst.msk [vmem:[%s170 + $0x20] sm:$0xff] %vm3663, %v3631
      %3669 = vst.msk [vmem:[%s170 + $0x28] sm:$0xff] %vm3663, %v3632
      %3670 = vst.msk [vmem:[%s170 + $0x30] sm:$0xff] %vm3663, %v3633
      %3671 = vst.msk [vmem:[%s170 + $0x38] sm:$0xff] %vm3663, %v3634
      %3672 = vst.msk [vmem:[%s170 + $0x40] sm:$0xff] %vm3663, %v3635
      %3673 = vst.msk [vmem:[%s170 + $0x48] sm:$0xff] %vm3663, %v3636
      %3674 = vst.msk [vmem:[%s170 + $0x50] sm:$0xff] %vm3663, %v3637
      %3675 = vst.msk [vmem:[%s170 + $0x58] sm:$0xff] %vm3663, %v3638
      %3676 = vst.msk [vmem:[%s170 + $0x60] sm:$0xff] %vm3663, %v3639
      %3677 = vst.msk [vmem:[%s170 + $0x68] sm:$0xff] %vm3663, %v3640
      %3678 = vst.msk [vmem:[%s170 + $0x70] sm:$0xff] %vm3663, %v3641
      %3679 = vst.msk [vmem:[%s170 + $0x78] sm:$0xff] %vm3663, %v3642
      %3680 = vst.msk [vmem:[%s170 + $0x80] sm:$0xff] %vm3663, %v3643
      %3681 = vst.msk [vmem:[%s170 + $0x88] sm:$0xff] %vm3663, %v3644
      %3682 = vst.msk [vmem:[%s170 + $0x90] sm:$0xff] %vm3663, %v3645
      %3683 = vst.msk [vmem:[%s170 + $0x98] sm:$0xff] %vm3663, %v3646
      %3684 = vst.msk [vmem:[%s170 + $0xa0] sm:$0xff] %vm3663, %v3647
      %3685 = vst.msk [vmem:[%s170 + $0xa8] sm:$0xff] %vm3663, %v3648
      %3686 = vst.msk [vmem:[%s170 + $0xb0] sm:$0xff] %vm3663, %v3649
      %3687 = vst.msk [vmem:[%s170 + $0xb8] sm:$0xff] %vm3663, %v3650
      %3688 = vst.msk [vmem:[%s170 + $0xc0] sm:$0xff] %vm3663, %v3651
      %3689 = vst.msk [vmem:[%s170 + $0xc8] sm:$0xff] %vm3663, %v3652
      %3690 = vst.msk [vmem:[%s170 + $0xd0] sm:$0xff] %vm3663, %v3653
      %3691 = vst.msk [vmem:[%s170 + $0xd8] sm:$0xff] %vm3663, %v3654
      %3692 = vst.msk [vmem:[%s170 + $0xe0] sm:$0xff] %vm3663, %v3655
      %3693 = vst.msk [vmem:[%s170 + $0xe8] sm:$0xff] %vm3663, %v3656
      %3694 = vst.msk [vmem:[%s170 + $0xf0] sm:$0xff] %vm3663, %v3657
      %3695 = vst.msk [vmem:[%s170 + $0xf8] sm:$0xff] %vm3663, %v3658
      %3696 = vst.msk [vmem:[%s170 + $0x100] sm:$0xff] %vm3663, %v3659
      %3697 = vst.msk [vmem:[%s170 + $0x108] sm:$0xff] %vm3663, %v3660
      %3698 = vst.msk [vmem:[%s170 + $0x110] sm:$0xff] %vm3663, %v3661
      %3699 = vst.msk [vmem:[%s170 + $0x118] sm:$0xff] %vm3663, %v3662
      %p3700 = scmp.lt.s32.totalorder %s14, 1
      %s3701 = scalar_select %p3700, %s14, 1
      %s3702 = smul.addr %s3701, 36
      %s3703 = smul.addr %s3702, 8
      %s3704 = scalar_lea.vmem %s3, %s3703
      // Predicated region
      $region33: #{vae_forward.13} parent=31 // pred_check
        %p3705 = pneg %p100
      $region34: #{vae_forward.13} parent=31 // pred_check_branch
        %3707 = sbr.rel (%p3705) target = $region36
      $region35: #{vae_forward.13} parent=31 // pred_region
        _
      $region36: #{vae_forward.13} parent=31 // pred_fallthru
        _
    $region32: #{vae_forward.13} parent=5 // pred_fallthru
      _
    %p3708 = scmp.le.s32.totalorder 2, %s9
    // Predicated region
    $region37: #{vae_forward.13} parent=5 // pred_check
      %p3709 = pneg %p3708
    $region38: #{vae_forward.13} parent=5 // pred_check_branch
      %3711 = sbr.rel (%p3709) target = $region40
    $region39: #{vae_forward.13} parent=5 // pred_region
      %s3712 = ssub.s32 %s9, 2
      // Predicated region
      $region41: #{vae_forward.13} parent=39 // pred_check
        %p3713 = pneg %p106
      $region42: #{vae_forward.13} parent=39 // pred_check_branch
        %3715 = sbr.rel (%p3713) target = $region44
      $region43: #{vae_forward.13} parent=39 // pred_region
        %p3716 = scmp.lt.s32.totalorder %s15, 1
        %s3717 = scalar_select %p3716, %s15, 1
        %s3718 = smul.addr %s3717, 36
        %s3719 = smul.addr %s3718, 8
        %s3720 = scalar_lea.vmem %s3, %s3719
      $region44: #{vae_forward.13} parent=39 // pred_fallthru
        _
    $region40: #{vae_forward.13} parent=5 // pred_fallthru
      _
  $region6: #{vae_forward.13} parent=0 // loop_footer
    %s13 = sadd.s32 1, %s9
  $region7: #{vae_forward.13} parent=0 // loop_footer_branch
    %8 = sbr.rel target = $region3
  $region8: #{vae_forward.13} parent=0 // loop_exit
    _

</llo_original>
